<compile_context>
chip_gen: v6e
topology: v6e:2x2x1
jax: 0.10.0
libtpu: 0.0.40
codegen_flags: <defaults>
</compile_context>

<pallas_src>
import functools

import jax
import jax.numpy as jnp
from jax.experimental import pallas as pl
from jax.experimental.pallas import tpu as pltpu

ODE_UNFOLDS = 6
LANE = 128


# ---------------------------------------------------------------------------
# In-kernel building blocks
# ---------------------------------------------------------------------------
def _fast_sigmoid(x):
    """sigmoid(x) == 0.5*tanh(0.5*x)+0.5 : guaranteed single EUP op (tanh)."""
    return 0.5 * jnp.tanh(0.5 * x) + 0.5


def _chunked_synapse_reduction(pre, w_ref, sigma_ref, mu_ref, we_ref, chunk):
    """Fused reduction over the presynaptic axis j.

      sig[b,j,n]  = sigmoid(sigma[j,n]*(pre[b,j]-mu[j,n]))
      w_num[b,n]  = sum_j (erev*W)[j,n] * sig[b,j,n]      (we = erev*W, host-side)
      w_den[b,n]  = sum_j        W[j,n] * sig[b,j,n]

    Weight refs are [J, N] VMEM refs read chunk-by-chunk so the live 3-D
    temporaries stay at [bs, chunk, N] (inside the vreg file), never [bs,J,N].
    Tables may be stored in bf16; all math/accumulation is f32.
    """
    J, N = w_ref.shape
    bs = pre.shape[0]
    w_num = jnp.zeros((bs, N), jnp.float32)
    w_den = jnp.zeros((bs, N), jnp.float32)
    for j0 in range(0, J, chunk):
        cj = min(chunk, J - j0)
        wj = w_ref[pl.ds(j0, cj), :].astype(jnp.float32)
        sj = sigma_ref[pl.ds(j0, cj), :].astype(jnp.float32)
        mj = mu_ref[pl.ds(j0, cj), :].astype(jnp.float32)
        wej = we_ref[pl.ds(j0, cj), :].astype(jnp.float32)
        pj = pre[:, j0:j0 + cj]                               # [bs, cj]
        sig = _fast_sigmoid(sj[None] * (pj[:, :, None] - mj[None]))  # [bs,cj,N]
        w_den = w_den + jnp.sum(wj[None] * sig, axis=1)
        w_num = w_num + jnp.sum(wej[None] * sig, axis=1)
    return w_num, w_den


def _ltc_step_block(x, v,
                    s_mu_ref, s_sigma_ref, s_w_ref, s_we_ref,
                    mu_ref, sigma_ref, w_ref, we_ref,
                    cm_b, num_const, den_const,
                    pre_chunk, unfolds):
    """One full LTC cell step (sensory reduction + semi-implicit unroll) on a
    [bs, N] block.  cm_b / num_const / den_const are pre-broadcast [bs, N]."""
    w_num_s, w_den_s = _chunked_synapse_reduction(
        x, s_w_ref, s_sigma_ref, s_mu_ref, s_we_ref, pre_chunk)
    num_base = num_const + w_num_s            # hoisted out of the unroll
    den_base = den_const + w_den_s
    for _ in range(unfolds):
        w_num, w_den = _chunked_synapse_reduction(
            v, w_ref, sigma_ref, mu_ref, we_ref, pre_chunk)
        v = (cm_b * v + num_base + w_num) / (den_base + w_den)
    return v


# ---------------------------------------------------------------------------
# Kernels
# ---------------------------------------------------------------------------
def _ltc_cell_kernel(x_ref, v_ref,
                     input_w_ref, input_b_ref,
                     s_mu_ref, s_sigma_ref, s_w_ref, s_we_ref,
                     mu_ref, sigma_ref, w_ref, we_ref,
                     vleak_ref, gleak_ref, cm_ref,
                     out_ref, *, sub_batch, pre_chunk, unfolds):
    TB = x_ref.shape[0]
    n_out = out_ref.shape[-1]

    cm = cm_ref[...]                                          # [1, Npad]
    gleak = gleak_ref[...]
    gv = gleak * vleak_ref[...]
    cg = cm + gleak
    iw = input_w_ref[...]                                     # [1, I]
    ib = input_b_ref[...]

    for b0 in range(0, TB, sub_batch):
        bs = min(sub_batch, TB - b0)
        x = x_ref[pl.ds(b0, bs), :].astype(jnp.float32) * iw + ib   # Affine
        v = v_ref[pl.ds(b0, bs), :].astype(jnp.float32)
        # Loop-invariant broadcasts hoisted (JAX does not CSE broadcast_in_dim)
        cm_b = jnp.broadcast_to(cm, (bs, n_out))
        num_const = jnp.broadcast_to(gv, (bs, n_out))
        den_const = jnp.broadcast_to(cg, (bs, n_out))
        v = _ltc_step_block(x, v,
                            s_mu_ref, s_sigma_ref, s_w_ref, s_we_ref,
                            mu_ref, sigma_ref, w_ref, we_ref,
                            cm_b, num_const, den_const, pre_chunk, unfolds)
        out_ref[pl.ds(b0, bs), :] = v.astype(out_ref.dtype)


def _ltc_seq_kernel(x_ref, v0_ref,
                    input_w_ref, input_b_ref,
                    s_mu_ref, s_sigma_ref, s_w_ref, s_we_ref,
                    mu_ref, sigma_ref, w_ref, we_ref,
                    vleak_ref, gleak_ref, cm_ref,
                    out_ref, v_scr, *, sub_batch, pre_chunk, unfolds):
    """Grid = (batch_block "parallel", time "arbitrary").  Each grid step runs
    `time_tile` timesteps for one batch block; hidden state lives in a per
    batch-block (per-core on v7x) VMEM scratch."""
    time_tile = x_ref.shape[0]
    Bb = x_ref.shape[1]
    n_out = out_ref.shape[-1]

    @pl.when(pl.program_id(1) == 0)
    def _():
        v_scr[...] = v0_ref[...].astype(jnp.float32)

    cm = cm_ref[...]
    gleak = gleak_ref[...]
    gv = gleak * vleak_ref[...]
    cg = cm + gleak
    iw = input_w_ref[...]
    ib = input_b_ref[...]

    for tt in range(time_tile):
        x_all = x_ref[tt].astype(jnp.float32) * iw + ib       # [Bb, I]
        for b0 in range(0, Bb, sub_batch):
            bs = min(sub_batch, Bb - b0)
            x = x_all[b0:b0 + bs, :]
            v = v_scr[pl.ds(b0, bs), :]
            cm_b = jnp.broadcast_to(cm, (bs, n_out))
            num_const = jnp.broadcast_to(gv, (bs, n_out))
            den_const = jnp.broadcast_to(cg, (bs, n_out))
            v = _ltc_step_block(x, v,
                                s_mu_ref, s_sigma_ref, s_w_ref, s_we_ref,
                                mu_ref, sigma_ref, w_ref, we_ref,
                                cm_b, num_const, den_const, pre_chunk, unfolds)
            v_scr[pl.ds(b0, bs), :] = v
        out_ref[tt] = v_scr[...].astype(out_ref.dtype)        # lane-dense slab


# ---------------------------------------------------------------------------
# Host-side helpers
# ---------------------------------------------------------------------------
_PARAM_ORDER = ("input_w", "input_b",
                "sensory_mu", "sensory_sigma", "sensory_W", "sensory_We",
                "mu", "sigma", "W", "We",
                "vleak", "gleak", "cm_t")

_BIG_TABLES = ("sensory_mu", "sensory_sigma", "sensory_W", "sensory_We",
               "mu", "sigma", "W", "We")


def _pad_last(a, n_pad, fill):
    n = a.shape[-1]
    if n == n_pad:
        return a
    pad = [(0, 0)] * (a.ndim - 1) + [(0, n_pad - n)]
    return jnp.pad(a, pad, constant_values=fill)


def _prepare_params(params, n_pad, weight_dtype=None):
    """Precompute erev*W, pad the postsynaptic (lane) dim, optionally store
    the big [J, N] tables in a narrower dtype (f32 accumulation in-kernel).

    Padded synapse columns are 0 so padded units receive nothing; cm/gleak pad
    with 1.0 so padded state lanes keep a nonzero denominator (stay finite).
    The presynaptic reduction only runs over the first J (real) rows, so the
    padded lanes never feed back into real units."""
    p = dict(params)
    p["sensory_We"] = p["sensory_W"] * p["sensory_erev"]
    p["We"] = p["W"] * p["erev"]
    for k in _BIG_TABLES + ("vleak",):
        p[k] = _pad_last(p[k], n_pad, 0.0)
    for k in ("gleak", "cm_t"):
        p[k] = _pad_last(p[k], n_pad, 1.0)
    if weight_dtype is not None:
        for k in _BIG_TABLES:
            p[k] = p[k].astype(weight_dtype)
    return [p[k] for k in _PARAM_ORDER]


def _choose_sub_batch(pre_chunk, n_pad, limit):
    # ~16 KiB (16 vregs) per live [sub, chunk, n_pad] f32 temporary: 2-3 such
    # temps plus the [bs,N] accumulators, broadcasts and weight chunks must fit
    # the 64-vreg file without spilling through the (single) vst slot.
    sub = max(1, (16 * 1024) // (pre_chunk * n_pad))
    if sub >= 8:
        sub = (sub // 8) * 8
    return min(sub, limit)


def _default_batch_tile(B):
    # Prefer >=2 sublane-aligned tiles so megacore (v7x: 2 TCs) can split the
    # "parallel" grid axis; cap tiles at 256 so single-TC v5e/v6e amortize the
    # ~0.35us per-grid-step overhead over few, large tiles.
    if B >= 16 and B % 8 == 0:
        tile = min(max(B // 2, 8), 256)
        tile = (tile // 8) * 8
        while B % tile:
            tile -= 8
        return max(tile, 8)
    return B


def _vmem_limit_bytes(param_list, extra):
    # Constant-index param blocks are still double-buffered by the pipeline;
    # size the scoped-VMEM cap from the real footprint (defaults are only
    # 16 MiB on v5e / 32 MiB on v6e-v7x) while staying under v7x's 64 MiB.
    param_bytes = sum(int(p.size) * p.dtype.itemsize for p in param_list)
    need = 2 * param_bytes + 2 * int(extra) + (2 << 20)
    return int(min(max(need, 32 << 20), 64 << 20))


# ---------------------------------------------------------------------------
# Public entry points
# ---------------------------------------------------------------------------
def ltc_cell_forward(inputs, state, params, *, batch_tile=None, pre_chunk=8,
                     unfolds=ODE_UNFOLDS, weight_dtype=None):
    """One LTCCell step (Affine mapping + SemiImplicit solver).

    Returns (outputs, next_state), both [B, N]."""
    B, I = inputs.shape
    _, N = state.shape
    n_pad = max(LANE, ((N + LANE - 1) // LANE) * LANE)

    param_list = _prepare_params(params, n_pad, weight_dtype)
    state_p = _pad_last(state, n_pad, 0.0)

    if batch_tile is None:
        batch_tile = _default_batch_tile(B)
    assert B % batch_tile == 0, "B must be a multiple of batch_tile"

    sub_batch = _choose_sub_batch(pre_chunk, n_pad, batch_tile)

    def batch_spec(feat):
        return pl.BlockSpec((batch_tile, feat), lambda i: (i, 0))

    def full_spec(shape):
        nd = len(shape)
        return pl.BlockSpec(shape, lambda i, _nd=nd: (0,) * _nd)

    in_specs = ([batch_spec(I), batch_spec(n_pad)]
                + [full_spec(p.shape) for p in param_list])

    kernel = functools.partial(_ltc_cell_kernel, sub_batch=sub_batch,
                               pre_chunk=pre_chunk, unfolds=unfolds)

    vmem_limit = _vmem_limit_bytes(
        param_list, extra=batch_tile * (I + 2 * n_pad) * 4)

    next_state_p = pl.pallas_call(
        kernel,
        out_shape=jax.ShapeDtypeStruct((B, n_pad), state.dtype),
        grid=(B // batch_tile,),
        in_specs=in_specs,
        out_specs=batch_spec(n_pad),
        input_output_aliases={1: 0},        # state buffer -> next_state buffer
        compiler_params=pltpu.CompilerParams(
            dimension_semantics=("parallel",),
            vmem_limit_bytes=vmem_limit),
    )(inputs, state_p, *param_list)

    next_state = next_state_p[:, :N]
    return next_state, next_state


def ltc_sequence_forward(inputs_seq, state, params, *, batch_blocks=None,
                         time_tile=None, pre_chunk=8, unfolds=ODE_UNFOLDS,
                         weight_dtype=None):
    """Run T LTC cell steps inside a SINGLE pallas_call.

    inputs_seq: [T, B, I].  Grid = (batch_block "parallel", time "arbitrary"):
    batch blocks are independent (v7x's 2 TCs each take a block), time is
    serial with the hidden state held in VMEM scratch.  `time_tile` timesteps
    run per grid step to amortize per-step overhead.

    Returns (all_states [T, B, N], final_state [B, N])."""
    T, B, I = inputs_seq.shape
    _, N = state.shape
    n_pad = max(LANE, ((N + LANE - 1) // LANE) * LANE)

    param_list = _prepare_params(params, n_pad, weight_dtype)
    state_p = _pad_last(state, n_pad, 0.0)

    if batch_blocks is None:
        batch_blocks = 2 if (B >= 16 and B % 16 == 0) else 1
    assert B % batch_blocks == 0
    Bb = B // batch_blocks
    assert Bb == B or Bb % 8 == 0

    if time_tile is None:
        time_tile = next(d for d in (8, 4, 2, 1) if T % d == 0)
    assert T % time_tile == 0

    sub_batch = _choose_sub_batch(pre_chunk, n_pad, Bb)

    def full_spec(shape):
        nd = len(shape)
        return pl.BlockSpec(shape, lambda c, t, _nd=nd: (0,) * _nd)

    in_specs = ([pl.BlockSpec((time_tile, Bb, I), lambda c, t: (t, c, 0)),
                 pl.BlockSpec((Bb, n_pad), lambda c, t: (c, 0))]
                + [full_spec(p.shape) for p in param_list])

    kernel = functools.partial(_ltc_seq_kernel, sub_batch=sub_batch,
                               pre_chunk=pre_chunk, unfolds=unfolds)

    vmem_limit = _vmem_limit_bytes(
        param_list, extra=(time_tile * Bb * (I + n_pad) + 2 * Bb * n_pad) * 4)

    out_seq_p = pl.pallas_call(
        kernel,
        out_shape=jax.ShapeDtypeStruct((T, B, n_pad), state.dtype),
        grid=(batch_blocks, T // time_tile),
        in_specs=in_specs,
        out_specs=pl.BlockSpec((time_tile, Bb, n_pad), lambda c, t: (t, c, 0)),
        scratch_shapes=[pltpu.VMEM((Bb, n_pad), jnp.float32)],
        compiler_params=pltpu.CompilerParams(
            dimension_semantics=("parallel", "arbitrary"),
            vmem_limit_bytes=vmem_limit),
    )(inputs_seq, state_p, *param_list)

    out_seq = out_seq_p[..., :N]
    return out_seq, out_seq[-1]


# ---------------------------------------------------------------------------
# Parameter init + pure-JAX reference
# ---------------------------------------------------------------------------
def init_ltc_params(key, input_size, num_units,
                    w_init_min=0.01, w_init_max=1.0,
                    cm_init=0.5, gleak_init=1.0, erev_init_factor=1.0):
    """Deterministic parameter init mirroring LTCCell._build_parameters."""
    ks = jax.random.split(key, 8)
    I, N = input_size, num_units
    f32 = jnp.float32
    params = {
        "input_w": jnp.ones((1, I), f32),
        "input_b": jnp.zeros((1, I), f32),
        "sensory_mu": jax.random.uniform(ks[0], (I, N), f32, 0.3, 0.8),
        "sensory_sigma": jax.random.uniform(ks[1], (I, N), f32, 3.0, 8.0),
        "sensory_W": jax.random.uniform(ks[2], (I, N), f32,
                                        w_init_min, w_init_max),
        "sensory_erev": (2.0 * jax.random.randint(ks[3], (I, N), 0, 2)
                         .astype(f32) - 1.0) * erev_init_factor,
        "mu": jax.random.uniform(ks[4], (N, N), f32, 0.3, 0.8),
        "sigma": jax.random.uniform(ks[5], (N, N), f32, 3.0, 8.0),
        "W": jax.random.uniform(ks[6], (N, N), f32, w_init_min, w_init_max),
        "erev": (2.0 * jax.random.randint(ks[7], (N, N), 0, 2)
                 .astype(f32) - 1.0) * erev_init_factor,
        "vleak": jax.random.uniform(jax.random.fold_in(key, 99),
                                    (1, N), f32, -0.2, 0.2),
        "gleak": jnp.full((1, N), gleak_init, f32),   # gleak_init_min == max
        "cm_t": jnp.full((1, N), cm_init, f32),       # cm_init_min == max
    }
    return params


def ltc_cell_reference(inputs, state, params):
    """Pure-JAX reference of the PyTorch forward (Affine + SemiImplicit)."""
    p = params
    x = inputs * p["input_w"] + p["input_b"]
    v = state
    sens_act = p["sensory_W"][None] * jax.nn.sigmoid(
        p["sensory_sigma"][None] * (x[:, :, None] - p["sensory_mu"][None]))
    w_num_s = jnp.sum(sens_act * p["sensory_erev"][None], axis=1)
    w_den_s = jnp.sum(sens_act, axis=1)
    for _ in range(ODE_UNFOLDS):
        w_act = p["W"][None] * jax.nn.sigmoid(
            p["sigma"][None] * (v[:, :, None] - p["mu"][None]))
        w_num = jnp.sum(w_act * p["erev"][None], axis=1) + w_num_s
        w_den = jnp.sum(w_act, axis=1) + w_den_s
        num = p["cm_t"] * v + p["gleak"] * p["vleak"] + w_num
        den = p["cm_t"] + p["gleak"] + w_den
        v = num / den
    return v, v


def ltc_sequence_reference(inputs_seq, state, params):
    outs = []
    v = state
    for t in range(inputs_seq.shape[0]):
        _, v = ltc_cell_reference(inputs_seq[t], v, params)
        outs.append(v)
    return jnp.stack(outs, axis=0), v


# ---------------------------------------------------------------------------
if __name__ == "__main__":
    BATCH = 16
    INPUT_SIZE = 16
    NUM_UNITS = 32
    SEQ_LEN = 4

    key = jax.random.PRNGKey(0)
    k_in, k_st, k_par, k_seq = jax.random.split(key, 4)

    inputs = jax.random.normal(k_in, (BATCH, INPUT_SIZE), jnp.float32)
    state = jax.random.normal(k_st, (BATCH, NUM_UNITS), jnp.float32) * 0.1
    params = init_ltc_params(k_par, INPUT_SIZE, NUM_UNITS)

    # --- single LTCCell.forward step -------------------------------------
    out, next_state = jax.jit(ltc_cell_forward)(inputs, state, params)
    jax.block_until_ready(next_state)
    ref_out, ref_state = ltc_cell_reference(inputs, state, params)
    assert out.shape == (BATCH, NUM_UNITS)
    assert jnp.allclose(next_state, ref_state, atol=1e-4, rtol=1e-4), (
        float(jnp.max(jnp.abs(next_state - ref_state))))

    # --- fused multi-step version (whole sequence in one pallas_call) -----
    inputs_seq = jax.random.normal(
        k_seq, (SEQ_LEN, BATCH, INPUT_SIZE), jnp.float32)
    seq_out, seq_final = jax.jit(ltc_sequence_forward)(inputs_seq, state, params)
    jax.block_until_ready(seq_out)
    ref_seq_out, ref_seq_final = ltc_sequence_reference(inputs_seq, state, params)
    assert seq_out.shape == (SEQ_LEN, BATCH, NUM_UNITS)
    assert jnp.allclose(seq_out, ref_seq_out, atol=2e-4, rtol=2e-4), (
        float(jnp.max(jnp.abs(seq_out - ref_seq_out))))

    print("KERNEL_OK")
</pallas_src>

<mosaic_0001>
module attributes {stable_mosaic.version = 11 : i64} {
  func.func @_ltc_cell_kernel(%arg0: i32, %arg1: memref<8x16xf32, #tpu.memory_space<vmem>>, %arg2: memref<8x128xf32, #tpu.memory_space<vmem>>, %arg3: memref<1x16xf32, #tpu.memory_space<vmem>>, %arg4: memref<1x16xf32, #tpu.memory_space<vmem>>, %arg5: memref<16x128xf32, #tpu.memory_space<vmem>>, %arg6: memref<16x128xf32, #tpu.memory_space<vmem>>, %arg7: memref<16x128xf32, #tpu.memory_space<vmem>>, %arg8: memref<16x128xf32, #tpu.memory_space<vmem>>, %arg9: memref<32x128xf32, #tpu.memory_space<vmem>>, %arg10: memref<32x128xf32, #tpu.memory_space<vmem>>, %arg11: memref<32x128xf32, #tpu.memory_space<vmem>>, %arg12: memref<32x128xf32, #tpu.memory_space<vmem>>, %arg13: memref<1x128xf32, #tpu.memory_space<vmem>>, %arg14: memref<1x128xf32, #tpu.memory_space<vmem>>, %arg15: memref<1x128xf32, #tpu.memory_space<vmem>>, %arg16: memref<8x128xf32, #tpu.memory_space<vmem>>) attributes {dimension_semantics = [#tpu.dimension_semantics<parallel>], iteration_bounds = array<i64: 2>, scalar_prefetch = 0 : i64, scratch_operands = 0 : i64, tpu.core_type = #tpu.core_type<tc>, window_params = [{transform_indices = @transform_0, window_bounds = array<i64: 8, 16>}, {transform_indices = @transform_1, window_bounds = array<i64: 8, 128>}, {pipeline_mode = #tpu.pipeline_mode<synchronous>, transform_indices = @transform_2, window_bounds = array<i64: 1, 16>}, {pipeline_mode = #tpu.pipeline_mode<synchronous>, transform_indices = @transform_3, window_bounds = array<i64: 1, 16>}, {pipeline_mode = #tpu.pipeline_mode<synchronous>, transform_indices = @transform_4, window_bounds = array<i64: 16, 128>}, {pipeline_mode = #tpu.pipeline_mode<synchronous>, transform_indices = @transform_5, window_bounds = array<i64: 16, 128>}, {pipeline_mode = #tpu.pipeline_mode<synchronous>, transform_indices = @transform_6, window_bounds = array<i64: 16, 128>}, {pipeline_mode = #tpu.pipeline_mode<synchronous>, transform_indices = @transform_7, window_bounds = array<i64: 16, 128>}, {pipeline_mode = #tpu.pipeline_mode<synchronous>, transform_indices = @transform_8, window_bounds = array<i64: 32, 128>}, {pipeline_mode = #tpu.pipeline_mode<synchronous>, transform_indices = @transform_9, window_bounds = array<i64: 32, 128>}, {pipeline_mode = #tpu.pipeline_mode<synchronous>, transform_indices = @transform_10, window_bounds = array<i64: 32, 128>}, {pipeline_mode = #tpu.pipeline_mode<synchronous>, transform_indices = @transform_11, window_bounds = array<i64: 32, 128>}, {pipeline_mode = #tpu.pipeline_mode<synchronous>, transform_indices = @transform_12, window_bounds = array<i64: 1, 128>}, {pipeline_mode = #tpu.pipeline_mode<synchronous>, transform_indices = @transform_13, window_bounds = array<i64: 1, 128>}, {pipeline_mode = #tpu.pipeline_mode<synchronous>, transform_indices = @transform_14, window_bounds = array<i64: 1, 128>}, {transform_indices = @transform_15, window_bounds = array<i64: 8, 128>}]} {
    %c0 = arith.constant 0 : index
    %c0_0 = arith.constant 0 : index
    %0 = vector.load %arg15[%c0, %c0_0] : memref<1x128xf32, #tpu.memory_space<vmem>>, vector<1x128xf32>
    %c0_1 = arith.constant 0 : index
    %c0_2 = arith.constant 0 : index
    %1 = vector.load %arg14[%c0_1, %c0_2] : memref<1x128xf32, #tpu.memory_space<vmem>>, vector<1x128xf32>
    %c0_3 = arith.constant 0 : index
    %c0_4 = arith.constant 0 : index
    %2 = vector.load %arg13[%c0_3, %c0_4] : memref<1x128xf32, #tpu.memory_space<vmem>>, vector<1x128xf32>
    %3 = arith.mulf %1, %2 : vector<1x128xf32>
    %4 = arith.addf %0, %1 : vector<1x128xf32>
    %c0_5 = arith.constant 0 : index
    %c0_6 = arith.constant 0 : index
    %5 = vector.load %arg3[%c0_5, %c0_6] : memref<1x16xf32, #tpu.memory_space<vmem>>, vector<1x16xf32>
    %c0_7 = arith.constant 0 : index
    %c0_8 = arith.constant 0 : index
    %6 = vector.load %arg4[%c0_7, %c0_8] : memref<1x16xf32, #tpu.memory_space<vmem>>, vector<1x16xf32>
    %c0_9 = arith.constant 0 : index
    %c0_10 = arith.constant 0 : index
    %7 = vector.load %arg1[%c0_9, %c0_10] : memref<8x16xf32, #tpu.memory_space<vmem>>, vector<8x16xf32>
    %8 = vector.broadcast %5 : vector<1x16xf32> to vector<8x16xf32>
    %9 = arith.mulf %7, %8 : vector<8x16xf32>
    %10 = vector.broadcast %6 : vector<1x16xf32> to vector<8x16xf32>
    %11 = arith.addf %9, %10 : vector<8x16xf32>
    %c0_11 = arith.constant 0 : index
    %c0_12 = arith.constant 0 : index
    %12 = vector.load %arg2[%c0_11, %c0_12] : memref<8x128xf32, #tpu.memory_space<vmem>>, vector<8x128xf32>
    %13 = vector.shape_cast %0 : vector<1x128xf32> to vector<1x128xf32>
    %14 = vector.broadcast %13 : vector<1x128xf32> to vector<8x128xf32>
    %15 = vector.shape_cast %3 : vector<1x128xf32> to vector<1x128xf32>
    %16 = vector.broadcast %15 : vector<1x128xf32> to vector<8x128xf32>
    %17 = vector.shape_cast %4 : vector<1x128xf32> to vector<1x128xf32>
    %18 = vector.broadcast %17 : vector<1x128xf32> to vector<8x128xf32>
    %cst = arith.constant 0.000000e+00 : f32
    %19 = vector.broadcast %cst : f32 to vector<8x128xf32>
    %cst_13 = arith.constant 0.000000e+00 : f32
    %20 = vector.broadcast %cst_13 : f32 to vector<8x128xf32>
    %c0_14 = arith.constant 0 : index
    %c0_15 = arith.constant 0 : index
    %21 = vector.load %arg7[%c0_14, %c0_15] : memref<16x128xf32, #tpu.memory_space<vmem>>, vector<8x128xf32>
    %c0_16 = arith.constant 0 : index
    %c0_17 = arith.constant 0 : index
    %22 = vector.load %arg6[%c0_16, %c0_17] : memref<16x128xf32, #tpu.memory_space<vmem>>, vector<8x128xf32>
    %c0_18 = arith.constant 0 : index
    %c0_19 = arith.constant 0 : index
    %23 = vector.load %arg5[%c0_18, %c0_19] : memref<16x128xf32, #tpu.memory_space<vmem>>, vector<8x128xf32>
    %c0_20 = arith.constant 0 : index
    %c0_21 = arith.constant 0 : index
    %24 = vector.load %arg8[%c0_20, %c0_21] : memref<16x128xf32, #tpu.memory_space<vmem>>, vector<8x128xf32>
    %25 = vector.extract_strided_slice %11 {offsets = [0, 0], sizes = [8, 8], strides = [1, 1]} : vector<8x16xf32> to vector<8x8xf32>
    %26 = vector.shape_cast %22 : vector<8x128xf32> to vector<1x8x128xf32>
    %27 = vector.shape_cast %25 : vector<8x8xf32> to vector<8x8x1xf32>
    %28 = vector.shape_cast %23 : vector<8x128xf32> to vector<1x8x128xf32>
    %29 = vector.broadcast %27 : vector<8x8x1xf32> to vector<8x8x128xf32>
    %30 = vector.broadcast %28 : vector<1x8x128xf32> to vector<8x8x128xf32>
    %31 = arith.subf %29, %30 : vector<8x8x128xf32>
    %32 = vector.broadcast %26 : vector<1x8x128xf32> to vector<8x8x128xf32>
    %33 = arith.mulf %32, %31 : vector<8x8x128xf32>
    %cst_22 = arith.constant 5.000000e-01 : f32
    %34 = vector.broadcast %cst_22 : f32 to vector<8x8x128xf32>
    %35 = arith.mulf %34, %33 : vector<8x8x128xf32>
    %36 = math.tanh %35 : vector<8x8x128xf32>
    %cst_23 = arith.constant 5.000000e-01 : f32
    %37 = vector.broadcast %cst_23 : f32 to vector<8x8x128xf32>
    %38 = arith.mulf %37, %36 : vector<8x8x128xf32>
    %cst_24 = arith.constant 5.000000e-01 : f32
    %39 = vector.broadcast %cst_24 : f32 to vector<8x8x128xf32>
    %40 = arith.addf %38, %39 : vector<8x8x128xf32>
    %41 = vector.shape_cast %21 : vector<8x128xf32> to vector<1x8x128xf32>
    %42 = vector.broadcast %41 : vector<1x8x128xf32> to vector<8x8x128xf32>
    %43 = arith.mulf %42, %40 : vector<8x8x128xf32>
    %cst_25 = arith.constant dense<0.000000e+00> : vector<8x128xf32>
    %44 = vector.multi_reduction <add>, %43, %cst_25 [1] : vector<8x8x128xf32> to vector<8x128xf32>
    %45 = arith.addf %20, %44 : vector<8x128xf32>
    %46 = vector.shape_cast %24 : vector<8x128xf32> to vector<1x8x128xf32>
    %47 = vector.broadcast %46 : vector<1x8x128xf32> to vector<8x8x128xf32>
    %48 = arith.mulf %47, %40 : vector<8x8x128xf32>
    %cst_26 = arith.constant dense<0.000000e+00> : vector<8x128xf32>
    %49 = vector.multi_reduction <add>, %48, %cst_26 [1] : vector<8x8x128xf32> to vector<8x128xf32>
    %50 = arith.addf %19, %49 : vector<8x128xf32>
    %c8 = arith.constant 8 : index
    %c0_27 = arith.constant 0 : index
    %51 = vector.load %arg7[%c8, %c0_27] : memref<16x128xf32, #tpu.memory_space<vmem>>, vector<8x128xf32>
    %c8_28 = arith.constant 8 : index
    %c0_29 = arith.constant 0 : index
    %52 = vector.load %arg6[%c8_28, %c0_29] : memref<16x128xf32, #tpu.memory_space<vmem>>, vector<8x128xf32>
    %c8_30 = arith.constant 8 : index
    %c0_31 = arith.constant 0 : index
    %53 = vector.load %arg5[%c8_30, %c0_31] : memref<16x128xf32, #tpu.memory_space<vmem>>, vector<8x128xf32>
    %c8_32 = arith.constant 8 : index
    %c0_33 = arith.constant 0 : index
    %54 = vector.load %arg8[%c8_32, %c0_33] : memref<16x128xf32, #tpu.memory_space<vmem>>, vector<8x128xf32>
    %55 = vector.extract_strided_slice %11 {offsets = [0, 8], sizes = [8, 8], strides = [1, 1]} : vector<8x16xf32> to vector<8x8xf32>
    %56 = vector.shape_cast %52 : vector<8x128xf32> to vector<1x8x128xf32>
    %57 = vector.shape_cast %55 : vector<8x8xf32> to vector<8x8x1xf32>
    %58 = vector.shape_cast %53 : vector<8x128xf32> to vector<1x8x128xf32>
    %59 = vector.broadcast %57 : vector<8x8x1xf32> to vector<8x8x128xf32>
    %60 = vector.broadcast %58 : vector<1x8x128xf32> to vector<8x8x128xf32>
    %61 = arith.subf %59, %60 : vector<8x8x128xf32>
    %62 = vector.broadcast %56 : vector<1x8x128xf32> to vector<8x8x128xf32>
    %63 = arith.mulf %62, %61 : vector<8x8x128xf32>
    %cst_34 = arith.constant 5.000000e-01 : f32
    %64 = vector.broadcast %cst_34 : f32 to vector<8x8x128xf32>
    %65 = arith.mulf %64, %63 : vector<8x8x128xf32>
    %66 = math.tanh %65 : vector<8x8x128xf32>
    %cst_35 = arith.constant 5.000000e-01 : f32
    %67 = vector.broadcast %cst_35 : f32 to vector<8x8x128xf32>
    %68 = arith.mulf %67, %66 : vector<8x8x128xf32>
    %cst_36 = arith.constant 5.000000e-01 : f32
    %69 = vector.broadcast %cst_36 : f32 to vector<8x8x128xf32>
    %70 = arith.addf %68, %69 : vector<8x8x128xf32>
    %71 = vector.shape_cast %51 : vector<8x128xf32> to vector<1x8x128xf32>
    %72 = vector.broadcast %71 : vector<1x8x128xf32> to vector<8x8x128xf32>
    %73 = arith.mulf %72, %70 : vector<8x8x128xf32>
    %cst_37 = arith.constant dense<0.000000e+00> : vector<8x128xf32>
    %74 = vector.multi_reduction <add>, %73, %cst_37 [1] : vector<8x8x128xf32> to vector<8x128xf32>
    %75 = arith.addf %45, %74 : vector<8x128xf32>
    %76 = vector.shape_cast %54 : vector<8x128xf32> to vector<1x8x128xf32>
    %77 = vector.broadcast %76 : vector<1x8x128xf32> to vector<8x8x128xf32>
    %78 = arith.mulf %77, %70 : vector<8x8x128xf32>
    %cst_38 = arith.constant dense<0.000000e+00> : vector<8x128xf32>
    %79 = vector.multi_reduction <add>, %78, %cst_38 [1] : vector<8x8x128xf32> to vector<8x128xf32>
    %80 = arith.addf %50, %79 : vector<8x128xf32>
    %81 = arith.addf %16, %80 : vector<8x128xf32>
    %82 = arith.addf %18, %75 : vector<8x128xf32>
    %cst_39 = arith.constant 0.000000e+00 : f32
    %83 = vector.broadcast %cst_39 : f32 to vector<8x128xf32>
    %cst_40 = arith.constant 0.000000e+00 : f32
    %84 = vector.broadcast %cst_40 : f32 to vector<8x128xf32>
    %c0_41 = arith.constant 0 : index
    %c0_42 = arith.constant 0 : index
    %85 = vector.load %arg11[%c0_41, %c0_42] : memref<32x128xf32, #tpu.memory_space<vmem>>, vector<8x128xf32>
    %c0_43 = arith.constant 0 : index
    %c0_44 = arith.constant 0 : index
    %86 = vector.load %arg10[%c0_43, %c0_44] : memref<32x128xf32, #tpu.memory_space<vmem>>, vector<8x128xf32>
    %c0_45 = arith.constant 0 : index
    %c0_46 = arith.constant 0 : index
    %87 = vector.load %arg9[%c0_45, %c0_46] : memref<32x128xf32, #tpu.memory_space<vmem>>, vector<8x128xf32>
    %c0_47 = arith.constant 0 : index
    %c0_48 = arith.constant 0 : index
    %88 = vector.load %arg12[%c0_47, %c0_48] : memref<32x128xf32, #tpu.memory_space<vmem>>, vector<8x128xf32>
    %89 = vector.extract_strided_slice %12 {offsets = [0, 0], sizes = [8, 8], strides = [1, 1]} : vector<8x128xf32> to vector<8x8xf32>
    %90 = vector.shape_cast %86 : vector<8x128xf32> to vector<1x8x128xf32>
    %91 = vector.shape_cast %89 : vector<8x8xf32> to vector<8x8x1xf32>
    %92 = vector.shape_cast %87 : vector<8x128xf32> to vector<1x8x128xf32>
    %93 = vector.broadcast %91 : vector<8x8x1xf32> to vector<8x8x128xf32>
    %94 = vector.broadcast %92 : vector<1x8x128xf32> to vector<8x8x128xf32>
    %95 = arith.subf %93, %94 : vector<8x8x128xf32>
    %96 = vector.broadcast %90 : vector<1x8x128xf32> to vector<8x8x128xf32>
    %97 = arith.mulf %96, %95 : vector<8x8x128xf32>
    %cst_49 = arith.constant 5.000000e-01 : f32
    %98 = vector.broadcast %cst_49 : f32 to vector<8x8x128xf32>
    %99 = arith.mulf %98, %97 : vector<8x8x128xf32>
    %100 = math.tanh %99 : vector<8x8x128xf32>
    %cst_50 = arith.constant 5.000000e-01 : f32
    %101 = vector.broadcast %cst_50 : f32 to vector<8x8x128xf32>
    %102 = arith.mulf %101, %100 : vector<8x8x128xf32>
    %cst_51 = arith.constant 5.000000e-01 : f32
    %103 = vector.broadcast %cst_51 : f32 to vector<8x8x128xf32>
    %104 = arith.addf %102, %103 : vector<8x8x128xf32>
    %105 = vector.shape_cast %85 : vector<8x128xf32> to vector<1x8x128xf32>
    %106 = vector.broadcast %105 : vector<1x8x128xf32> to vector<8x8x128xf32>
    %107 = arith.mulf %106, %104 : vector<8x8x128xf32>
    %cst_52 = arith.constant dense<0.000000e+00> : vector<8x128xf32>
    %108 = vector.multi_reduction <add>, %107, %cst_52 [1] : vector<8x8x128xf32> to vector<8x128xf32>
    %109 = arith.addf %84, %108 : vector<8x128xf32>
    %110 = vector.shape_cast %88 : vector<8x128xf32> to vector<1x8x128xf32>
    %111 = vector.broadcast %110 : vector<1x8x128xf32> to vector<8x8x128xf32>
    %112 = arith.mulf %111, %104 : vector<8x8x128xf32>
    %cst_53 = arith.constant dense<0.000000e+00> : vector<8x128xf32>
    %113 = vector.multi_reduction <add>, %112, %cst_53 [1] : vector<8x8x128xf32> to vector<8x128xf32>
    %114 = arith.addf %83, %113 : vector<8x128xf32>
    %c8_54 = arith.constant 8 : index
    %c0_55 = arith.constant 0 : index
    %115 = vector.load %arg11[%c8_54, %c0_55] : memref<32x128xf32, #tpu.memory_space<vmem>>, vector<8x128xf32>
    %c8_56 = arith.constant 8 : index
    %c0_57 = arith.constant 0 : index
    %116 = vector.load %arg10[%c8_56, %c0_57] : memref<32x128xf32, #tpu.memory_space<vmem>>, vector<8x128xf32>
    %c8_58 = arith.constant 8 : index
    %c0_59 = arith.constant 0 : index
    %117 = vector.load %arg9[%c8_58, %c0_59] : memref<32x128xf32, #tpu.memory_space<vmem>>, vector<8x128xf32>
    %c8_60 = arith.constant 8 : index
    %c0_61 = arith.constant 0 : index
    %118 = vector.load %arg12[%c8_60, %c0_61] : memref<32x128xf32, #tpu.memory_space<vmem>>, vector<8x128xf32>
    %119 = vector.extract_strided_slice %12 {offsets = [0, 8], sizes = [8, 8], strides = [1, 1]} : vector<8x128xf32> to vector<8x8xf32>
    %120 = vector.shape_cast %116 : vector<8x128xf32> to vector<1x8x128xf32>
    %121 = vector.shape_cast %119 : vector<8x8xf32> to vector<8x8x1xf32>
    %122 = vector.shape_cast %117 : vector<8x128xf32> to vector<1x8x128xf32>
    %123 = vector.broadcast %121 : vector<8x8x1xf32> to vector<8x8x128xf32>
    %124 = vector.broadcast %122 : vector<1x8x128xf32> to vector<8x8x128xf32>
    %125 = arith.subf %123, %124 : vector<8x8x128xf32>
    %126 = vector.broadcast %120 : vector<1x8x128xf32> to vector<8x8x128xf32>
    %127 = arith.mulf %126, %125 : vector<8x8x128xf32>
    %cst_62 = arith.constant 5.000000e-01 : f32
    %128 = vector.broadcast %cst_62 : f32 to vector<8x8x128xf32>
    %129 = arith.mulf %128, %127 : vector<8x8x128xf32>
    %130 = math.tanh %129 : vector<8x8x128xf32>
    %cst_63 = arith.constant 5.000000e-01 : f32
    %131 = vector.broadcast %cst_63 : f32 to vector<8x8x128xf32>
    %132 = arith.mulf %131, %130 : vector<8x8x128xf32>
    %cst_64 = arith.constant 5.000000e-01 : f32
    %133 = vector.broadcast %cst_64 : f32 to vector<8x8x128xf32>
    %134 = arith.addf %132, %133 : vector<8x8x128xf32>
    %135 = vector.shape_cast %115 : vector<8x128xf32> to vector<1x8x128xf32>
    %136 = vector.broadcast %135 : vector<1x8x128xf32> to vector<8x8x128xf32>
    %137 = arith.mulf %136, %134 : vector<8x8x128xf32>
    %cst_65 = arith.constant dense<0.000000e+00> : vector<8x128xf32>
    %138 = vector.multi_reduction <add>, %137, %cst_65 [1] : vector<8x8x128xf32> to vector<8x128xf32>
    %139 = arith.addf %109, %138 : vector<8x128xf32>
    %140 = vector.shape_cast %118 : vector<8x128xf32> to vector<1x8x128xf32>
    %141 = vector.broadcast %140 : vector<1x8x128xf32> to vector<8x8x128xf32>
    %142 = arith.mulf %141, %134 : vector<8x8x128xf32>
    %cst_66 = arith.constant dense<0.000000e+00> : vector<8x128xf32>
    %143 = vector.multi_reduction <add>, %142, %cst_66 [1] : vector<8x8x128xf32> to vector<8x128xf32>
    %144 = arith.addf %114, %143 : vector<8x128xf32>
    %c16 = arith.constant 16 : index
    %c0_67 = arith.constant 0 : index
    %145 = vector.load %arg11[%c16, %c0_67] : memref<32x128xf32, #tpu.memory_space<vmem>>, vector<8x128xf32>
    %c16_68 = arith.constant 16 : index
    %c0_69 = arith.constant 0 : index
    %146 = vector.load %arg10[%c16_68, %c0_69] : memref<32x128xf32, #tpu.memory_space<vmem>>, vector<8x128xf32>
    %c16_70 = arith.constant 16 : index
    %c0_71 = arith.constant 0 : index
    %147 = vector.load %arg9[%c16_70, %c0_71] : memref<32x128xf32, #tpu.memory_space<vmem>>, vector<8x128xf32>
    %c16_72 = arith.constant 16 : index
    %c0_73 = arith.constant 0 : index
    %148 = vector.load %arg12[%c16_72, %c0_73] : memref<32x128xf32, #tpu.memory_space<vmem>>, vector<8x128xf32>
    %149 = vector.extract_strided_slice %12 {offsets = [0, 16], sizes = [8, 8], strides = [1, 1]} : vector<8x128xf32> to vector<8x8xf32>
    %150 = vector.shape_cast %146 : vector<8x128xf32> to vector<1x8x128xf32>
    %151 = vector.shape_cast %149 : vector<8x8xf32> to vector<8x8x1xf32>
    %152 = vector.shape_cast %147 : vector<8x128xf32> to vector<1x8x128xf32>
    %153 = vector.broadcast %151 : vector<8x8x1xf32> to vector<8x8x128xf32>
    %154 = vector.broadcast %152 : vector<1x8x128xf32> to vector<8x8x128xf32>
    %155 = arith.subf %153, %154 : vector<8x8x128xf32>
    %156 = vector.broadcast %150 : vector<1x8x128xf32> to vector<8x8x128xf32>
    %157 = arith.mulf %156, %155 : vector<8x8x128xf32>
    %cst_74 = arith.constant 5.000000e-01 : f32
    %158 = vector.broadcast %cst_74 : f32 to vector<8x8x128xf32>
    %159 = arith.mulf %158, %157 : vector<8x8x128xf32>
    %160 = math.tanh %159 : vector<8x8x128xf32>
    %cst_75 = arith.constant 5.000000e-01 : f32
    %161 = vector.broadcast %cst_75 : f32 to vector<8x8x128xf32>
    %162 = arith.mulf %161, %160 : vector<8x8x128xf32>
    %cst_76 = arith.constant 5.000000e-01 : f32
    %163 = vector.broadcast %cst_76 : f32 to vector<8x8x128xf32>
    %164 = arith.addf %162, %163 : vector<8x8x128xf32>
    %165 = vector.shape_cast %145 : vector<8x128xf32> to vector<1x8x128xf32>
    %166 = vector.broadcast %165 : vector<1x8x128xf32> to vector<8x8x128xf32>
    %167 = arith.mulf %166, %164 : vector<8x8x128xf32>
    %cst_77 = arith.constant dense<0.000000e+00> : vector<8x128xf32>
    %168 = vector.multi_reduction <add>, %167, %cst_77 [1] : vector<8x8x128xf32> to vector<8x128xf32>
    %169 = arith.addf %139, %168 : vector<8x128xf32>
    %170 = vector.shape_cast %148 : vector<8x128xf32> to vector<1x8x128xf32>
    %171 = vector.broadcast %170 : vector<1x8x128xf32> to vector<8x8x128xf32>
    %172 = arith.mulf %171, %164 : vector<8x8x128xf32>
    %cst_78 = arith.constant dense<0.000000e+00> : vector<8x128xf32>
    %173 = vector.multi_reduction <add>, %172, %cst_78 [1] : vector<8x8x128xf32> to vector<8x128xf32>
    %174 = arith.addf %144, %173 : vector<8x128xf32>
    %c24 = arith.constant 24 : index
    %c0_79 = arith.constant 0 : index
    %175 = vector.load %arg11[%c24, %c0_79] : memref<32x128xf32, #tpu.memory_space<vmem>>, vector<8x128xf32>
    %c24_80 = arith.constant 24 : index
    %c0_81 = arith.constant 0 : index
    %176 = vector.load %arg10[%c24_80, %c0_81] : memref<32x128xf32, #tpu.memory_space<vmem>>, vector<8x128xf32>
    %c24_82 = arith.constant 24 : index
    %c0_83 = arith.constant 0 : index
    %177 = vector.load %arg9[%c24_82, %c0_83] : memref<32x128xf32, #tpu.memory_space<vmem>>, vector<8x128xf32>
    %c24_84 = arith.constant 24 : index
    %c0_85 = arith.constant 0 : index
    %178 = vector.load %arg12[%c24_84, %c0_85] : memref<32x128xf32, #tpu.memory_space<vmem>>, vector<8x128xf32>
    %179 = vector.extract_strided_slice %12 {offsets = [0, 24], sizes = [8, 8], strides = [1, 1]} : vector<8x128xf32> to vector<8x8xf32>
    %180 = vector.shape_cast %176 : vector<8x128xf32> to vector<1x8x128xf32>
    %181 = vector.shape_cast %179 : vector<8x8xf32> to vector<8x8x1xf32>
    %182 = vector.shape_cast %177 : vector<8x128xf32> to vector<1x8x128xf32>
    %183 = vector.broadcast %181 : vector<8x8x1xf32> to vector<8x8x128xf32>
    %184 = vector.broadcast %182 : vector<1x8x128xf32> to vector<8x8x128xf32>
    %185 = arith.subf %183, %184 : vector<8x8x128xf32>
    %186 = vector.broadcast %180 : vector<1x8x128xf32> to vector<8x8x128xf32>
    %187 = arith.mulf %186, %185 : vector<8x8x128xf32>
    %cst_86 = arith.constant 5.000000e-01 : f32
    %188 = vector.broadcast %cst_86 : f32 to vector<8x8x128xf32>
    %189 = arith.mulf %188, %187 : vector<8x8x128xf32>
    %190 = math.tanh %189 : vector<8x8x128xf32>
    %cst_87 = arith.constant 5.000000e-01 : f32
    %191 = vector.broadcast %cst_87 : f32 to vector<8x8x128xf32>
    %192 = arith.mulf %191, %190 : vector<8x8x128xf32>
    %cst_88 = arith.constant 5.000000e-01 : f32
    %193 = vector.broadcast %cst_88 : f32 to vector<8x8x128xf32>
    %194 = arith.addf %192, %193 : vector<8x8x128xf32>
    %195 = vector.shape_cast %175 : vector<8x128xf32> to vector<1x8x128xf32>
    %196 = vector.broadcast %195 : vector<1x8x128xf32> to vector<8x8x128xf32>
    %197 = arith.mulf %196, %194 : vector<8x8x128xf32>
    %cst_89 = arith.constant dense<0.000000e+00> : vector<8x128xf32>
    %198 = vector.multi_reduction <add>, %197, %cst_89 [1] : vector<8x8x128xf32> to vector<8x128xf32>
    %199 = arith.addf %169, %198 : vector<8x128xf32>
    %200 = vector.shape_cast %178 : vector<8x128xf32> to vector<1x8x128xf32>
    %201 = vector.broadcast %200 : vector<1x8x128xf32> to vector<8x8x128xf32>
    %202 = arith.mulf %201, %194 : vector<8x8x128xf32>
    %cst_90 = arith.constant dense<0.000000e+00> : vector<8x128xf32>
    %203 = vector.multi_reduction <add>, %202, %cst_90 [1] : vector<8x8x128xf32> to vector<8x128xf32>
    %204 = arith.addf %174, %203 : vector<8x128xf32>
    %205 = arith.mulf %14, %12 : vector<8x128xf32>
    %206 = arith.addf %205, %81 : vector<8x128xf32>
    %207 = arith.addf %206, %204 : vector<8x128xf32>
    %208 = arith.addf %82, %199 : vector<8x128xf32>
    %209 = arith.divf %207, %208 : vector<8x128xf32>
    %cst_91 = arith.constant 0.000000e+00 : f32
    %210 = vector.broadcast %cst_91 : f32 to vector<8x128xf32>
    %cst_92 = arith.constant 0.000000e+00 : f32
    %211 = vector.broadcast %cst_92 : f32 to vector<8x128xf32>
    %c0_93 = arith.constant 0 : index
    %c0_94 = arith.constant 0 : index
    %212 = vector.load %arg11[%c0_93, %c0_94] : memref<32x128xf32, #tpu.memory_space<vmem>>, vector<8x128xf32>
    %c0_95 = arith.constant 0 : index
    %c0_96 = arith.constant 0 : index
    %213 = vector.load %arg10[%c0_95, %c0_96] : memref<32x128xf32, #tpu.memory_space<vmem>>, vector<8x128xf32>
    %c0_97 = arith.constant 0 : index
    %c0_98 = arith.constant 0 : index
    %214 = vector.load %arg9[%c0_97, %c0_98] : memref<32x128xf32, #tpu.memory_space<vmem>>, vector<8x128xf32>
    %c0_99 = arith.constant 0 : index
    %c0_100 = arith.constant 0 : index
    %215 = vector.load %arg12[%c0_99, %c0_100] : memref<32x128xf32, #tpu.memory_space<vmem>>, vector<8x128xf32>
    %216 = vector.extract_strided_slice %209 {offsets = [0, 0], sizes = [8, 8], strides = [1, 1]} : vector<8x128xf32> to vector<8x8xf32>
    %217 = vector.shape_cast %213 : vector<8x128xf32> to vector<1x8x128xf32>
    %218 = vector.shape_cast %216 : vector<8x8xf32> to vector<8x8x1xf32>
    %219 = vector.shape_cast %214 : vector<8x128xf32> to vector<1x8x128xf32>
    %220 = vector.broadcast %218 : vector<8x8x1xf32> to vector<8x8x128xf32>
    %221 = vector.broadcast %219 : vector<1x8x128xf32> to vector<8x8x128xf32>
    %222 = arith.subf %220, %221 : vector<8x8x128xf32>
    %223 = vector.broadcast %217 : vector<1x8x128xf32> to vector<8x8x128xf32>
    %224 = arith.mulf %223, %222 : vector<8x8x128xf32>
    %cst_101 = arith.constant 5.000000e-01 : f32
    %225 = vector.broadcast %cst_101 : f32 to vector<8x8x128xf32>
    %226 = arith.mulf %225, %224 : vector<8x8x128xf32>
    %227 = math.tanh %226 : vector<8x8x128xf32>
    %cst_102 = arith.constant 5.000000e-01 : f32
    %228 = vector.broadcast %cst_102 : f32 to vector<8x8x128xf32>
    %229 = arith.mulf %228, %227 : vector<8x8x128xf32>
    %cst_103 = arith.constant 5.000000e-01 : f32
    %230 = vector.broadcast %cst_103 : f32 to vector<8x8x128xf32>
    %231 = arith.addf %229, %230 : vector<8x8x128xf32>
    %232 = vector.shape_cast %212 : vector<8x128xf32> to vector<1x8x128xf32>
    %233 = vector.broadcast %232 : vector<1x8x128xf32> to vector<8x8x128xf32>
    %234 = arith.mulf %233, %231 : vector<8x8x128xf32>
    %cst_104 = arith.constant dense<0.000000e+00> : vector<8x128xf32>
    %235 = vector.multi_reduction <add>, %234, %cst_104 [1] : vector<8x8x128xf32> to vector<8x128xf32>
    %236 = arith.addf %211, %235 : vector<8x128xf32>
    %237 = vector.shape_cast %215 : vector<8x128xf32> to vector<1x8x128xf32>
    %238 = vector.broadcast %237 : vector<1x8x128xf32> to vector<8x8x128xf32>
    %239 = arith.mulf %238, %231 : vector<8x8x128xf32>
    %cst_105 = arith.constant dense<0.000000e+00> : vector<8x128xf32>
    %240 = vector.multi_reduction <add>, %239, %cst_105 [1] : vector<8x8x128xf32> to vector<8x128xf32>
    %241 = arith.addf %210, %240 : vector<8x128xf32>
    %c8_106 = arith.constant 8 : index
    %c0_107 = arith.constant 0 : index
    %242 = vector.load %arg11[%c8_106, %c0_107] : memref<32x128xf32, #tpu.memory_space<vmem>>, vector<8x128xf32>
    %c8_108 = arith.constant 8 : index
    %c0_109 = arith.constant 0 : index
    %243 = vector.load %arg10[%c8_108, %c0_109] : memref<32x128xf32, #tpu.memory_space<vmem>>, vector<8x128xf32>
    %c8_110 = arith.constant 8 : index
    %c0_111 = arith.constant 0 : index
    %244 = vector.load %arg9[%c8_110, %c0_111] : memref<32x128xf32, #tpu.memory_space<vmem>>, vector<8x128xf32>
    %c8_112 = arith.constant 8 : index
    %c0_113 = arith.constant 0 : index
    %245 = vector.load %arg12[%c8_112, %c0_113] : memref<32x128xf32, #tpu.memory_space<vmem>>, vector<8x128xf32>
    %246 = vector.extract_strided_slice %209 {offsets = [0, 8], sizes = [8, 8], strides = [1, 1]} : vector<8x128xf32> to vector<8x8xf32>
    %247 = vector.shape_cast %243 : vector<8x128xf32> to vector<1x8x128xf32>
    %248 = vector.shape_cast %246 : vector<8x8xf32> to vector<8x8x1xf32>
    %249 = vector.shape_cast %244 : vector<8x128xf32> to vector<1x8x128xf32>
    %250 = vector.broadcast %248 : vector<8x8x1xf32> to vector<8x8x128xf32>
    %251 = vector.broadcast %249 : vector<1x8x128xf32> to vector<8x8x128xf32>
    %252 = arith.subf %250, %251 : vector<8x8x128xf32>
    %253 = vector.broadcast %247 : vector<1x8x128xf32> to vector<8x8x128xf32>
    %254 = arith.mulf %253, %252 : vector<8x8x128xf32>
    %cst_114 = arith.constant 5.000000e-01 : f32
    %255 = vector.broadcast %cst_114 : f32 to vector<8x8x128xf32>
    %256 = arith.mulf %255, %254 : vector<8x8x128xf32>
    %257 = math.tanh %256 : vector<8x8x128xf32>
    %cst_115 = arith.constant 5.000000e-01 : f32
    %258 = vector.broadcast %cst_115 : f32 to vector<8x8x128xf32>
    %259 = arith.mulf %258, %257 : vector<8x8x128xf32>
    %cst_116 = arith.constant 5.000000e-01 : f32
    %260 = vector.broadcast %cst_116 : f32 to vector<8x8x128xf32>
    %261 = arith.addf %259, %260 : vector<8x8x128xf32>
    %262 = vector.shape_cast %242 : vector<8x128xf32> to vector<1x8x128xf32>
    %263 = vector.broadcast %262 : vector<1x8x128xf32> to vector<8x8x128xf32>
    %264 = arith.mulf %263, %261 : vector<8x8x128xf32>
    %cst_117 = arith.constant dense<0.000000e+00> : vector<8x128xf32>
    %265 = vector.multi_reduction <add>, %264, %cst_117 [1] : vector<8x8x128xf32> to vector<8x128xf32>
    %266 = arith.addf %236, %265 : vector<8x128xf32>
    %267 = vector.shape_cast %245 : vector<8x128xf32> to vector<1x8x128xf32>
    %268 = vector.broadcast %267 : vector<1x8x128xf32> to vector<8x8x128xf32>
    %269 = arith.mulf %268, %261 : vector<8x8x128xf32>
    %cst_118 = arith.constant dense<0.000000e+00> : vector<8x128xf32>
    %270 = vector.multi_reduction <add>, %269, %cst_118 [1] : vector<8x8x128xf32> to vector<8x128xf32>
    %271 = arith.addf %241, %270 : vector<8x128xf32>
    %c16_119 = arith.constant 16 : index
    %c0_120 = arith.constant 0 : index
    %272 = vector.load %arg11[%c16_119, %c0_120] : memref<32x128xf32, #tpu.memory_space<vmem>>, vector<8x128xf32>
    %c16_121 = arith.constant 16 : index
    %c0_122 = arith.constant 0 : index
    %273 = vector.load %arg10[%c16_121, %c0_122] : memref<32x128xf32, #tpu.memory_space<vmem>>, vector<8x128xf32>
    %c16_123 = arith.constant 16 : index
    %c0_124 = arith.constant 0 : index
    %274 = vector.load %arg9[%c16_123, %c0_124] : memref<32x128xf32, #tpu.memory_space<vmem>>, vector<8x128xf32>
    %c16_125 = arith.constant 16 : index
    %c0_126 = arith.constant 0 : index
    %275 = vector.load %arg12[%c16_125, %c0_126] : memref<32x128xf32, #tpu.memory_space<vmem>>, vector<8x128xf32>
    %276 = vector.extract_strided_slice %209 {offsets = [0, 16], sizes = [8, 8], strides = [1, 1]} : vector<8x128xf32> to vector<8x8xf32>
    %277 = vector.shape_cast %273 : vector<8x128xf32> to vector<1x8x128xf32>
    %278 = vector.shape_cast %276 : vector<8x8xf32> to vector<8x8x1xf32>
    %279 = vector.shape_cast %274 : vector<8x128xf32> to vector<1x8x128xf32>
    %280 = vector.broadcast %278 : vector<8x8x1xf32> to vector<8x8x128xf32>
    %281 = vector.broadcast %279 : vector<1x8x128xf32> to vector<8x8x128xf32>
    %282 = arith.subf %280, %281 : vector<8x8x128xf32>
    %283 = vector.broadcast %277 : vector<1x8x128xf32> to vector<8x8x128xf32>
    %284 = arith.mulf %283, %282 : vector<8x8x128xf32>
    %cst_127 = arith.constant 5.000000e-01 : f32
    %285 = vector.broadcast %cst_127 : f32 to vector<8x8x128xf32>
    %286 = arith.mulf %285, %284 : vector<8x8x128xf32>
    %287 = math.tanh %286 : vector<8x8x128xf32>
    %cst_128 = arith.constant 5.000000e-01 : f32
    %288 = vector.broadcast %cst_128 : f32 to vector<8x8x128xf32>
    %289 = arith.mulf %288, %287 : vector<8x8x128xf32>
    %cst_129 = arith.constant 5.000000e-01 : f32
    %290 = vector.broadcast %cst_129 : f32 to vector<8x8x128xf32>
    %291 = arith.addf %289, %290 : vector<8x8x128xf32>
    %292 = vector.shape_cast %272 : vector<8x128xf32> to vector<1x8x128xf32>
    %293 = vector.broadcast %292 : vector<1x8x128xf32> to vector<8x8x128xf32>
    %294 = arith.mulf %293, %291 : vector<8x8x128xf32>
    %cst_130 = arith.constant dense<0.000000e+00> : vector<8x128xf32>
    %295 = vector.multi_reduction <add>, %294, %cst_130 [1] : vector<8x8x128xf32> to vector<8x128xf32>
    %296 = arith.addf %266, %295 : vector<8x128xf32>
    %297 = vector.shape_cast %275 : vector<8x128xf32> to vector<1x8x128xf32>
    %298 = vector.broadcast %297 : vector<1x8x128xf32> to vector<8x8x128xf32>
    %299 = arith.mulf %298, %291 : vector<8x8x128xf32>
    %cst_131 = arith.constant dense<0.000000e+00> : vector<8x128xf32>
    %300 = vector.multi_reduction <add>, %299, %cst_131 [1] : vector<8x8x128xf32> to vector<8x128xf32>
    %301 = arith.addf %271, %300 : vector<8x128xf32>
    %c24_132 = arith.constant 24 : index
    %c0_133 = arith.constant 0 : index
    %302 = vector.load %arg11[%c24_132, %c0_133] : memref<32x128xf32, #tpu.memory_space<vmem>>, vector<8x128xf32>
    %c24_134 = arith.constant 24 : index
    %c0_135 = arith.constant 0 : index
    %303 = vector.load %arg10[%c24_134, %c0_135] : memref<32x128xf32, #tpu.memory_space<vmem>>, vector<8x128xf32>
    %c24_136 = arith.constant 24 : index
    %c0_137 = arith.constant 0 : index
    %304 = vector.load %arg9[%c24_136, %c0_137] : memref<32x128xf32, #tpu.memory_space<vmem>>, vector<8x128xf32>
    %c24_138 = arith.constant 24 : index
    %c0_139 = arith.constant 0 : index
    %305 = vector.load %arg12[%c24_138, %c0_139] : memref<32x128xf32, #tpu.memory_space<vmem>>, vector<8x128xf32>
    %306 = vector.extract_strided_slice %209 {offsets = [0, 24], sizes = [8, 8], strides = [1, 1]} : vector<8x128xf32> to vector<8x8xf32>
    %307 = vector.shape_cast %303 : vector<8x128xf32> to vector<1x8x128xf32>
    %308 = vector.shape_cast %306 : vector<8x8xf32> to vector<8x8x1xf32>
    %309 = vector.shape_cast %304 : vector<8x128xf32> to vector<1x8x128xf32>
    %310 = vector.broadcast %308 : vector<8x8x1xf32> to vector<8x8x128xf32>
    %311 = vector.broadcast %309 : vector<1x8x128xf32> to vector<8x8x128xf32>
    %312 = arith.subf %310, %311 : vector<8x8x128xf32>
    %313 = vector.broadcast %307 : vector<1x8x128xf32> to vector<8x8x128xf32>
    %314 = arith.mulf %313, %312 : vector<8x8x128xf32>
    %cst_140 = arith.constant 5.000000e-01 : f32
    %315 = vector.broadcast %cst_140 : f32 to vector<8x8x128xf32>
    %316 = arith.mulf %315, %314 : vector<8x8x128xf32>
    %317 = math.tanh %316 : vector<8x8x128xf32>
    %cst_141 = arith.constant 5.000000e-01 : f32
    %318 = vector.broadcast %cst_141 : f32 to vector<8x8x128xf32>
    %319 = arith.mulf %318, %317 : vector<8x8x128xf32>
    %cst_142 = arith.constant 5.000000e-01 : f32
    %320 = vector.broadcast %cst_142 : f32 to vector<8x8x128xf32>
    %321 = arith.addf %319, %320 : vector<8x8x128xf32>
    %322 = vector.shape_cast %302 : vector<8x128xf32> to vector<1x8x128xf32>
    %323 = vector.broadcast %322 : vector<1x8x128xf32> to vector<8x8x128xf32>
    %324 = arith.mulf %323, %321 : vector<8x8x128xf32>
    %cst_143 = arith.constant dense<0.000000e+00> : vector<8x128xf32>
    %325 = vector.multi_reduction <add>, %324, %cst_143 [1] : vector<8x8x128xf32> to vector<8x128xf32>
    %326 = arith.addf %296, %325 : vector<8x128xf32>
    %327 = vector.shape_cast %305 : vector<8x128xf32> to vector<1x8x128xf32>
    %328 = vector.broadcast %327 : vector<1x8x128xf32> to vector<8x8x128xf32>
    %329 = arith.mulf %328, %321 : vector<8x8x128xf32>
    %cst_144 = arith.constant dense<0.000000e+00> : vector<8x128xf32>
    %330 = vector.multi_reduction <add>, %329, %cst_144 [1] : vector<8x8x128xf32> to vector<8x128xf32>
    %331 = arith.addf %301, %330 : vector<8x128xf32>
    %332 = arith.mulf %14, %209 : vector<8x128xf32>
    %333 = arith.addf %332, %81 : vector<8x128xf32>
    %334 = arith.addf %333, %331 : vector<8x128xf32>
    %335 = arith.addf %82, %326 : vector<8x128xf32>
    %336 = arith.divf %334, %335 : vector<8x128xf32>
    %cst_145 = arith.constant 0.000000e+00 : f32
    %337 = vector.broadcast %cst_145 : f32 to vector<8x128xf32>
    %cst_146 = arith.constant 0.000000e+00 : f32
    %338 = vector.broadcast %cst_146 : f32 to vector<8x128xf32>
    %c0_147 = arith.constant 0 : index
    %c0_148 = arith.constant 0 : index
    %339 = vector.load %arg11[%c0_147, %c0_148] : memref<32x128xf32, #tpu.memory_space<vmem>>, vector<8x128xf32>
    %c0_149 = arith.constant 0 : index
    %c0_150 = arith.constant 0 : index
    %340 = vector.load %arg10[%c0_149, %c0_150] : memref<32x128xf32, #tpu.memory_space<vmem>>, vector<8x128xf32>
    %c0_151 = arith.constant 0 : index
    %c0_152 = arith.constant 0 : index
    %341 = vector.load %arg9[%c0_151, %c0_152] : memref<32x128xf32, #tpu.memory_space<vmem>>, vector<8x128xf32>
    %c0_153 = arith.constant 0 : index
    %c0_154 = arith.constant 0 : index
    %342 = vector.load %arg12[%c0_153, %c0_154] : memref<32x128xf32, #tpu.memory_space<vmem>>, vector<8x128xf32>
    %343 = vector.extract_strided_slice %336 {offsets = [0, 0], sizes = [8, 8], strides = [1, 1]} : vector<8x128xf32> to vector<8x8xf32>
    %344 = vector.shape_cast %340 : vector<8x128xf32> to vector<1x8x128xf32>
    %345 = vector.shape_cast %343 : vector<8x8xf32> to vector<8x8x1xf32>
    %346 = vector.shape_cast %341 : vector<8x128xf32> to vector<1x8x128xf32>
    %347 = vector.broadcast %345 : vector<8x8x1xf32> to vector<8x8x128xf32>
    %348 = vector.broadcast %346 : vector<1x8x128xf32> to vector<8x8x128xf32>
    %349 = arith.subf %347, %348 : vector<8x8x128xf32>
    %350 = vector.broadcast %344 : vector<1x8x128xf32> to vector<8x8x128xf32>
    %351 = arith.mulf %350, %349 : vector<8x8x128xf32>
    %cst_155 = arith.constant 5.000000e-01 : f32
    %352 = vector.broadcast %cst_155 : f32 to vector<8x8x128xf32>
    %353 = arith.mulf %352, %351 : vector<8x8x128xf32>
    %354 = math.tanh %353 : vector<8x8x128xf32>
    %cst_156 = arith.constant 5.000000e-01 : f32
    %355 = vector.broadcast %cst_156 : f32 to vector<8x8x128xf32>
    %356 = arith.mulf %355, %354 : vector<8x8x128xf32>
    %cst_157 = arith.constant 5.000000e-01 : f32
    %357 = vector.broadcast %cst_157 : f32 to vector<8x8x128xf32>
    %358 = arith.addf %356, %357 : vector<8x8x128xf32>
    %359 = vector.shape_cast %339 : vector<8x128xf32> to vector<1x8x128xf32>
    %360 = vector.broadcast %359 : vector<1x8x128xf32> to vector<8x8x128xf32>
    %361 = arith.mulf %360, %358 : vector<8x8x128xf32>
    %cst_158 = arith.constant dense<0.000000e+00> : vector<8x128xf32>
    %362 = vector.multi_reduction <add>, %361, %cst_158 [1] : vector<8x8x128xf32> to vector<8x128xf32>
    %363 = arith.addf %338, %362 : vector<8x128xf32>
    %364 = vector.shape_cast %342 : vector<8x128xf32> to vector<1x8x128xf32>
    %365 = vector.broadcast %364 : vector<1x8x128xf32> to vector<8x8x128xf32>
    %366 = arith.mulf %365, %358 : vector<8x8x128xf32>
    %cst_159 = arith.constant dense<0.000000e+00> : vector<8x128xf32>
    %367 = vector.multi_reduction <add>, %366, %cst_159 [1] : vector<8x8x128xf32> to vector<8x128xf32>
    %368 = arith.addf %337, %367 : vector<8x128xf32>
    %c8_160 = arith.constant 8 : index
    %c0_161 = arith.constant 0 : index
    %369 = vector.load %arg11[%c8_160, %c0_161] : memref<32x128xf32, #tpu.memory_space<vmem>>, vector<8x128xf32>
    %c8_162 = arith.constant 8 : index
    %c0_163 = arith.constant 0 : index
    %370 = vector.load %arg10[%c8_162, %c0_163] : memref<32x128xf32, #tpu.memory_space<vmem>>, vector<8x128xf32>
    %c8_164 = arith.constant 8 : index
    %c0_165 = arith.constant 0 : index
    %371 = vector.load %arg9[%c8_164, %c0_165] : memref<32x128xf32, #tpu.memory_space<vmem>>, vector<8x128xf32>
    %c8_166 = arith.constant 8 : index
    %c0_167 = arith.constant 0 : index
    %372 = vector.load %arg12[%c8_166, %c0_167] : memref<32x128xf32, #tpu.memory_space<vmem>>, vector<8x128xf32>
    %373 = vector.extract_strided_slice %336 {offsets = [0, 8], sizes = [8, 8], strides = [1, 1]} : vector<8x128xf32> to vector<8x8xf32>
    %374 = vector.shape_cast %370 : vector<8x128xf32> to vector<1x8x128xf32>
    %375 = vector.shape_cast %373 : vector<8x8xf32> to vector<8x8x1xf32>
    %376 = vector.shape_cast %371 : vector<8x128xf32> to vector<1x8x128xf32>
    %377 = vector.broadcast %375 : vector<8x8x1xf32> to vector<8x8x128xf32>
    %378 = vector.broadcast %376 : vector<1x8x128xf32> to vector<8x8x128xf32>
    %379 = arith.subf %377, %378 : vector<8x8x128xf32>
    %380 = vector.broadcast %374 : vector<1x8x128xf32> to vector<8x8x128xf32>
    %381 = arith.mulf %380, %379 : vector<8x8x128xf32>
    %cst_168 = arith.constant 5.000000e-01 : f32
    %382 = vector.broadcast %cst_168 : f32 to vector<8x8x128xf32>
    %383 = arith.mulf %382, %381 : vector<8x8x128xf32>
    %384 = math.tanh %383 : vector<8x8x128xf32>
    %cst_169 = arith.constant 5.000000e-01 : f32
    %385 = vector.broadcast %cst_169 : f32 to vector<8x8x128xf32>
    %386 = arith.mulf %385, %384 : vector<8x8x128xf32>
    %cst_170 = arith.constant 5.000000e-01 : f32
    %387 = vector.broadcast %cst_170 : f32 to vector<8x8x128xf32>
    %388 = arith.addf %386, %387 : vector<8x8x128xf32>
    %389 = vector.shape_cast %369 : vector<8x128xf32> to vector<1x8x128xf32>
    %390 = vector.broadcast %389 : vector<1x8x128xf32> to vector<8x8x128xf32>
    %391 = arith.mulf %390, %388 : vector<8x8x128xf32>
    %cst_171 = arith.constant dense<0.000000e+00> : vector<8x128xf32>
    %392 = vector.multi_reduction <add>, %391, %cst_171 [1] : vector<8x8x128xf32> to vector<8x128xf32>
    %393 = arith.addf %363, %392 : vector<8x128xf32>
    %394 = vector.shape_cast %372 : vector<8x128xf32> to vector<1x8x128xf32>
    %395 = vector.broadcast %394 : vector<1x8x128xf32> to vector<8x8x128xf32>
    %396 = arith.mulf %395, %388 : vector<8x8x128xf32>
    %cst_172 = arith.constant dense<0.000000e+00> : vector<8x128xf32>
    %397 = vector.multi_reduction <add>, %396, %cst_172 [1] : vector<8x8x128xf32> to vector<8x128xf32>
    %398 = arith.addf %368, %397 : vector<8x128xf32>
    %c16_173 = arith.constant 16 : index
    %c0_174 = arith.constant 0 : index
    %399 = vector.load %arg11[%c16_173, %c0_174] : memref<32x128xf32, #tpu.memory_space<vmem>>, vector<8x128xf32>
    %c16_175 = arith.constant 16 : index
    %c0_176 = arith.constant 0 : index
    %400 = vector.load %arg10[%c16_175, %c0_176] : memref<32x128xf32, #tpu.memory_space<vmem>>, vector<8x128xf32>
    %c16_177 = arith.constant 16 : index
    %c0_178 = arith.constant 0 : index
    %401 = vector.load %arg9[%c16_177, %c0_178] : memref<32x128xf32, #tpu.memory_space<vmem>>, vector<8x128xf32>
    %c16_179 = arith.constant 16 : index
    %c0_180 = arith.constant 0 : index
    %402 = vector.load %arg12[%c16_179, %c0_180] : memref<32x128xf32, #tpu.memory_space<vmem>>, vector<8x128xf32>
    %403 = vector.extract_strided_slice %336 {offsets = [0, 16], sizes = [8, 8], strides = [1, 1]} : vector<8x128xf32> to vector<8x8xf32>
    %404 = vector.shape_cast %400 : vector<8x128xf32> to vector<1x8x128xf32>
    %405 = vector.shape_cast %403 : vector<8x8xf32> to vector<8x8x1xf32>
    %406 = vector.shape_cast %401 : vector<8x128xf32> to vector<1x8x128xf32>
    %407 = vector.broadcast %405 : vector<8x8x1xf32> to vector<8x8x128xf32>
    %408 = vector.broadcast %406 : vector<1x8x128xf32> to vector<8x8x128xf32>
    %409 = arith.subf %407, %408 : vector<8x8x128xf32>
    %410 = vector.broadcast %404 : vector<1x8x128xf32> to vector<8x8x128xf32>
    %411 = arith.mulf %410, %409 : vector<8x8x128xf32>
    %cst_181 = arith.constant 5.000000e-01 : f32
    %412 = vector.broadcast %cst_181 : f32 to vector<8x8x128xf32>
    %413 = arith.mulf %412, %411 : vector<8x8x128xf32>
    %414 = math.tanh %413 : vector<8x8x128xf32>
    %cst_182 = arith.constant 5.000000e-01 : f32
    %415 = vector.broadcast %cst_182 : f32 to vector<8x8x128xf32>
    %416 = arith.mulf %415, %414 : vector<8x8x128xf32>
    %cst_183 = arith.constant 5.000000e-01 : f32
    %417 = vector.broadcast %cst_183 : f32 to vector<8x8x128xf32>
    %418 = arith.addf %416, %417 : vector<8x8x128xf32>
    %419 = vector.shape_cast %399 : vector<8x128xf32> to vector<1x8x128xf32>
    %420 = vector.broadcast %419 : vector<1x8x128xf32> to vector<8x8x128xf32>
    %421 = arith.mulf %420, %418 : vector<8x8x128xf32>
    %cst_184 = arith.constant dense<0.000000e+00> : vector<8x128xf32>
    %422 = vector.multi_reduction <add>, %421, %cst_184 [1] : vector<8x8x128xf32> to vector<8x128xf32>
    %423 = arith.addf %393, %422 : vector<8x128xf32>
    %424 = vector.shape_cast %402 : vector<8x128xf32> to vector<1x8x128xf32>
    %425 = vector.broadcast %424 : vector<1x8x128xf32> to vector<8x8x128xf32>
    %426 = arith.mulf %425, %418 : vector<8x8x128xf32>
    %cst_185 = arith.constant dense<0.000000e+00> : vector<8x128xf32>
    %427 = vector.multi_reduction <add>, %426, %cst_185 [1] : vector<8x8x128xf32> to vector<8x128xf32>
    %428 = arith.addf %398, %427 : vector<8x128xf32>
    %c24_186 = arith.constant 24 : index
    %c0_187 = arith.constant 0 : index
    %429 = vector.load %arg11[%c24_186, %c0_187] : memref<32x128xf32, #tpu.memory_space<vmem>>, vector<8x128xf32>
    %c24_188 = arith.constant 24 : index
    %c0_189 = arith.constant 0 : index
    %430 = vector.load %arg10[%c24_188, %c0_189] : memref<32x128xf32, #tpu.memory_space<vmem>>, vector<8x128xf32>
    %c24_190 = arith.constant 24 : index
    %c0_191 = arith.constant 0 : index
    %431 = vector.load %arg9[%c24_190, %c0_191] : memref<32x128xf32, #tpu.memory_space<vmem>>, vector<8x128xf32>
    %c24_192 = arith.constant 24 : index
    %c0_193 = arith.constant 0 : index
    %432 = vector.load %arg12[%c24_192, %c0_193] : memref<32x128xf32, #tpu.memory_space<vmem>>, vector<8x128xf32>
    %433 = vector.extract_strided_slice %336 {offsets = [0, 24], sizes = [8, 8], strides = [1, 1]} : vector<8x128xf32> to vector<8x8xf32>
    %434 = vector.shape_cast %430 : vector<8x128xf32> to vector<1x8x128xf32>
    %435 = vector.shape_cast %433 : vector<8x8xf32> to vector<8x8x1xf32>
    %436 = vector.shape_cast %431 : vector<8x128xf32> to vector<1x8x128xf32>
    %437 = vector.broadcast %435 : vector<8x8x1xf32> to vector<8x8x128xf32>
    %438 = vector.broadcast %436 : vector<1x8x128xf32> to vector<8x8x128xf32>
    %439 = arith.subf %437, %438 : vector<8x8x128xf32>
    %440 = vector.broadcast %434 : vector<1x8x128xf32> to vector<8x8x128xf32>
    %441 = arith.mulf %440, %439 : vector<8x8x128xf32>
    %cst_194 = arith.constant 5.000000e-01 : f32
    %442 = vector.broadcast %cst_194 : f32 to vector<8x8x128xf32>
    %443 = arith.mulf %442, %441 : vector<8x8x128xf32>
    %444 = math.tanh %443 : vector<8x8x128xf32>
    %cst_195 = arith.constant 5.000000e-01 : f32
    %445 = vector.broadcast %cst_195 : f32 to vector<8x8x128xf32>
    %446 = arith.mulf %445, %444 : vector<8x8x128xf32>
    %cst_196 = arith.constant 5.000000e-01 : f32
    %447 = vector.broadcast %cst_196 : f32 to vector<8x8x128xf32>
    %448 = arith.addf %446, %447 : vector<8x8x128xf32>
    %449 = vector.shape_cast %429 : vector<8x128xf32> to vector<1x8x128xf32>
    %450 = vector.broadcast %449 : vector<1x8x128xf32> to vector<8x8x128xf32>
    %451 = arith.mulf %450, %448 : vector<8x8x128xf32>
    %cst_197 = arith.constant dense<0.000000e+00> : vector<8x128xf32>
    %452 = vector.multi_reduction <add>, %451, %cst_197 [1] : vector<8x8x128xf32> to vector<8x128xf32>
    %453 = arith.addf %423, %452 : vector<8x128xf32>
    %454 = vector.shape_cast %432 : vector<8x128xf32> to vector<1x8x128xf32>
    %455 = vector.broadcast %454 : vector<1x8x128xf32> to vector<8x8x128xf32>
    %456 = arith.mulf %455, %448 : vector<8x8x128xf32>
    %cst_198 = arith.constant dense<0.000000e+00> : vector<8x128xf32>
    %457 = vector.multi_reduction <add>, %456, %cst_198 [1] : vector<8x8x128xf32> to vector<8x128xf32>
    %458 = arith.addf %428, %457 : vector<8x128xf32>
    %459 = arith.mulf %14, %336 : vector<8x128xf32>
    %460 = arith.addf %459, %81 : vector<8x128xf32>
    %461 = arith.addf %460, %458 : vector<8x128xf32>
    %462 = arith.addf %82, %453 : vector<8x128xf32>
    %463 = arith.divf %461, %462 : vector<8x128xf32>
    %cst_199 = arith.constant 0.000000e+00 : f32
    %464 = vector.broadcast %cst_199 : f32 to vector<8x128xf32>
    %cst_200 = arith.constant 0.000000e+00 : f32
    %465 = vector.broadcast %cst_200 : f32 to vector<8x128xf32>
    %c0_201 = arith.constant 0 : index
    %c0_202 = arith.constant 0 : index
    %466 = vector.load %arg11[%c0_201, %c0_202] : memref<32x128xf32, #tpu.memory_space<vmem>>, vector<8x128xf32>
    %c0_203 = arith.constant 0 : index
    %c0_204 = arith.constant 0 : index
    %467 = vector.load %arg10[%c0_203, %c0_204] : memref<32x128xf32, #tpu.memory_space<vmem>>, vector<8x128xf32>
    %c0_205 = arith.constant 0 : index
    %c0_206 = arith.constant 0 : index
    %468 = vector.load %arg9[%c0_205, %c0_206] : memref<32x128xf32, #tpu.memory_space<vmem>>, vector<8x128xf32>
    %c0_207 = arith.constant 0 : index
    %c0_208 = arith.constant 0 : index
    %469 = vector.load %arg12[%c0_207, %c0_208] : memref<32x128xf32, #tpu.memory_space<vmem>>, vector<8x128xf32>
    %470 = vector.extract_strided_slice %463 {offsets = [0, 0], sizes = [8, 8], strides = [1, 1]} : vector<8x128xf32> to vector<8x8xf32>
    %471 = vector.shape_cast %467 : vector<8x128xf32> to vector<1x8x128xf32>
    %472 = vector.shape_cast %470 : vector<8x8xf32> to vector<8x8x1xf32>
    %473 = vector.shape_cast %468 : vector<8x128xf32> to vector<1x8x128xf32>
    %474 = vector.broadcast %472 : vector<8x8x1xf32> to vector<8x8x128xf32>
    %475 = vector.broadcast %473 : vector<1x8x128xf32> to vector<8x8x128xf32>
    %476 = arith.subf %474, %475 : vector<8x8x128xf32>
    %477 = vector.broadcast %471 : vector<1x8x128xf32> to vector<8x8x128xf32>
    %478 = arith.mulf %477, %476 : vector<8x8x128xf32>
    %cst_209 = arith.constant 5.000000e-01 : f32
    %479 = vector.broadcast %cst_209 : f32 to vector<8x8x128xf32>
    %480 = arith.mulf %479, %478 : vector<8x8x128xf32>
    %481 = math.tanh %480 : vector<8x8x128xf32>
    %cst_210 = arith.constant 5.000000e-01 : f32
    %482 = vector.broadcast %cst_210 : f32 to vector<8x8x128xf32>
    %483 = arith.mulf %482, %481 : vector<8x8x128xf32>
    %cst_211 = arith.constant 5.000000e-01 : f32
    %484 = vector.broadcast %cst_211 : f32 to vector<8x8x128xf32>
    %485 = arith.addf %483, %484 : vector<8x8x128xf32>
    %486 = vector.shape_cast %466 : vector<8x128xf32> to vector<1x8x128xf32>
    %487 = vector.broadcast %486 : vector<1x8x128xf32> to vector<8x8x128xf32>
    %488 = arith.mulf %487, %485 : vector<8x8x128xf32>
    %cst_212 = arith.constant dense<0.000000e+00> : vector<8x128xf32>
    %489 = vector.multi_reduction <add>, %488, %cst_212 [1] : vector<8x8x128xf32> to vector<8x128xf32>
    %490 = arith.addf %465, %489 : vector<8x128xf32>
    %491 = vector.shape_cast %469 : vector<8x128xf32> to vector<1x8x128xf32>
    %492 = vector.broadcast %491 : vector<1x8x128xf32> to vector<8x8x128xf32>
    %493 = arith.mulf %492, %485 : vector<8x8x128xf32>
    %cst_213 = arith.constant dense<0.000000e+00> : vector<8x128xf32>
    %494 = vector.multi_reduction <add>, %493, %cst_213 [1] : vector<8x8x128xf32> to vector<8x128xf32>
    %495 = arith.addf %464, %494 : vector<8x128xf32>
    %c8_214 = arith.constant 8 : index
    %c0_215 = arith.constant 0 : index
    %496 = vector.load %arg11[%c8_214, %c0_215] : memref<32x128xf32, #tpu.memory_space<vmem>>, vector<8x128xf32>
    %c8_216 = arith.constant 8 : index
    %c0_217 = arith.constant 0 : index
    %497 = vector.load %arg10[%c8_216, %c0_217] : memref<32x128xf32, #tpu.memory_space<vmem>>, vector<8x128xf32>
    %c8_218 = arith.constant 8 : index
    %c0_219 = arith.constant 0 : index
    %498 = vector.load %arg9[%c8_218, %c0_219] : memref<32x128xf32, #tpu.memory_space<vmem>>, vector<8x128xf32>
    %c8_220 = arith.constant 8 : index
    %c0_221 = arith.constant 0 : index
    %499 = vector.load %arg12[%c8_220, %c0_221] : memref<32x128xf32, #tpu.memory_space<vmem>>, vector<8x128xf32>
    %500 = vector.extract_strided_slice %463 {offsets = [0, 8], sizes = [8, 8], strides = [1, 1]} : vector<8x128xf32> to vector<8x8xf32>
    %501 = vector.shape_cast %497 : vector<8x128xf32> to vector<1x8x128xf32>
    %502 = vector.shape_cast %500 : vector<8x8xf32> to vector<8x8x1xf32>
    %503 = vector.shape_cast %498 : vector<8x128xf32> to vector<1x8x128xf32>
    %504 = vector.broadcast %502 : vector<8x8x1xf32> to vector<8x8x128xf32>
    %505 = vector.broadcast %503 : vector<1x8x128xf32> to vector<8x8x128xf32>
    %506 = arith.subf %504, %505 : vector<8x8x128xf32>
    %507 = vector.broadcast %501 : vector<1x8x128xf32> to vector<8x8x128xf32>
    %508 = arith.mulf %507, %506 : vector<8x8x128xf32>
    %cst_222 = arith.constant 5.000000e-01 : f32
    %509 = vector.broadcast %cst_222 : f32 to vector<8x8x128xf32>
    %510 = arith.mulf %509, %508 : vector<8x8x128xf32>
    %511 = math.tanh %510 : vector<8x8x128xf32>
    %cst_223 = arith.constant 5.000000e-01 : f32
    %512 = vector.broadcast %cst_223 : f32 to vector<8x8x128xf32>
    %513 = arith.mulf %512, %511 : vector<8x8x128xf32>
    %cst_224 = arith.constant 5.000000e-01 : f32
    %514 = vector.broadcast %cst_224 : f32 to vector<8x8x128xf32>
    %515 = arith.addf %513, %514 : vector<8x8x128xf32>
    %516 = vector.shape_cast %496 : vector<8x128xf32> to vector<1x8x128xf32>
    %517 = vector.broadcast %516 : vector<1x8x128xf32> to vector<8x8x128xf32>
    %518 = arith.mulf %517, %515 : vector<8x8x128xf32>
    %cst_225 = arith.constant dense<0.000000e+00> : vector<8x128xf32>
    %519 = vector.multi_reduction <add>, %518, %cst_225 [1] : vector<8x8x128xf32> to vector<8x128xf32>
    %520 = arith.addf %490, %519 : vector<8x128xf32>
    %521 = vector.shape_cast %499 : vector<8x128xf32> to vector<1x8x128xf32>
    %522 = vector.broadcast %521 : vector<1x8x128xf32> to vector<8x8x128xf32>
    %523 = arith.mulf %522, %515 : vector<8x8x128xf32>
    %cst_226 = arith.constant dense<0.000000e+00> : vector<8x128xf32>
    %524 = vector.multi_reduction <add>, %523, %cst_226 [1] : vector<8x8x128xf32> to vector<8x128xf32>
    %525 = arith.addf %495, %524 : vector<8x128xf32>
    %c16_227 = arith.constant 16 : index
    %c0_228 = arith.constant 0 : index
    %526 = vector.load %arg11[%c16_227, %c0_228] : memref<32x128xf32, #tpu.memory_space<vmem>>, vector<8x128xf32>
    %c16_229 = arith.constant 16 : index
    %c0_230 = arith.constant 0 : index
    %527 = vector.load %arg10[%c16_229, %c0_230] : memref<32x128xf32, #tpu.memory_space<vmem>>, vector<8x128xf32>
    %c16_231 = arith.constant 16 : index
    %c0_232 = arith.constant 0 : index
    %528 = vector.load %arg9[%c16_231, %c0_232] : memref<32x128xf32, #tpu.memory_space<vmem>>, vector<8x128xf32>
    %c16_233 = arith.constant 16 : index
    %c0_234 = arith.constant 0 : index
    %529 = vector.load %arg12[%c16_233, %c0_234] : memref<32x128xf32, #tpu.memory_space<vmem>>, vector<8x128xf32>
    %530 = vector.extract_strided_slice %463 {offsets = [0, 16], sizes = [8, 8], strides = [1, 1]} : vector<8x128xf32> to vector<8x8xf32>
    %531 = vector.shape_cast %527 : vector<8x128xf32> to vector<1x8x128xf32>
    %532 = vector.shape_cast %530 : vector<8x8xf32> to vector<8x8x1xf32>
    %533 = vector.shape_cast %528 : vector<8x128xf32> to vector<1x8x128xf32>
    %534 = vector.broadcast %532 : vector<8x8x1xf32> to vector<8x8x128xf32>
    %535 = vector.broadcast %533 : vector<1x8x128xf32> to vector<8x8x128xf32>
    %536 = arith.subf %534, %535 : vector<8x8x128xf32>
    %537 = vector.broadcast %531 : vector<1x8x128xf32> to vector<8x8x128xf32>
    %538 = arith.mulf %537, %536 : vector<8x8x128xf32>
    %cst_235 = arith.constant 5.000000e-01 : f32
    %539 = vector.broadcast %cst_235 : f32 to vector<8x8x128xf32>
    %540 = arith.mulf %539, %538 : vector<8x8x128xf32>
    %541 = math.tanh %540 : vector<8x8x128xf32>
    %cst_236 = arith.constant 5.000000e-01 : f32
    %542 = vector.broadcast %cst_236 : f32 to vector<8x8x128xf32>
    %543 = arith.mulf %542, %541 : vector<8x8x128xf32>
    %cst_237 = arith.constant 5.000000e-01 : f32
    %544 = vector.broadcast %cst_237 : f32 to vector<8x8x128xf32>
    %545 = arith.addf %543, %544 : vector<8x8x128xf32>
    %546 = vector.shape_cast %526 : vector<8x128xf32> to vector<1x8x128xf32>
    %547 = vector.broadcast %546 : vector<1x8x128xf32> to vector<8x8x128xf32>
    %548 = arith.mulf %547, %545 : vector<8x8x128xf32>
    %cst_238 = arith.constant dense<0.000000e+00> : vector<8x128xf32>
    %549 = vector.multi_reduction <add>, %548, %cst_238 [1] : vector<8x8x128xf32> to vector<8x128xf32>
    %550 = arith.addf %520, %549 : vector<8x128xf32>
    %551 = vector.shape_cast %529 : vector<8x128xf32> to vector<1x8x128xf32>
    %552 = vector.broadcast %551 : vector<1x8x128xf32> to vector<8x8x128xf32>
    %553 = arith.mulf %552, %545 : vector<8x8x128xf32>
    %cst_239 = arith.constant dense<0.000000e+00> : vector<8x128xf32>
    %554 = vector.multi_reduction <add>, %553, %cst_239 [1] : vector<8x8x128xf32> to vector<8x128xf32>
    %555 = arith.addf %525, %554 : vector<8x128xf32>
    %c24_240 = arith.constant 24 : index
    %c0_241 = arith.constant 0 : index
    %556 = vector.load %arg11[%c24_240, %c0_241] : memref<32x128xf32, #tpu.memory_space<vmem>>, vector<8x128xf32>
    %c24_242 = arith.constant 24 : index
    %c0_243 = arith.constant 0 : index
    %557 = vector.load %arg10[%c24_242, %c0_243] : memref<32x128xf32, #tpu.memory_space<vmem>>, vector<8x128xf32>
    %c24_244 = arith.constant 24 : index
    %c0_245 = arith.constant 0 : index
    %558 = vector.load %arg9[%c24_244, %c0_245] : memref<32x128xf32, #tpu.memory_space<vmem>>, vector<8x128xf32>
    %c24_246 = arith.constant 24 : index
    %c0_247 = arith.constant 0 : index
    %559 = vector.load %arg12[%c24_246, %c0_247] : memref<32x128xf32, #tpu.memory_space<vmem>>, vector<8x128xf32>
    %560 = vector.extract_strided_slice %463 {offsets = [0, 24], sizes = [8, 8], strides = [1, 1]} : vector<8x128xf32> to vector<8x8xf32>
    %561 = vector.shape_cast %557 : vector<8x128xf32> to vector<1x8x128xf32>
    %562 = vector.shape_cast %560 : vector<8x8xf32> to vector<8x8x1xf32>
    %563 = vector.shape_cast %558 : vector<8x128xf32> to vector<1x8x128xf32>
    %564 = vector.broadcast %562 : vector<8x8x1xf32> to vector<8x8x128xf32>
    %565 = vector.broadcast %563 : vector<1x8x128xf32> to vector<8x8x128xf32>
    %566 = arith.subf %564, %565 : vector<8x8x128xf32>
    %567 = vector.broadcast %561 : vector<1x8x128xf32> to vector<8x8x128xf32>
    %568 = arith.mulf %567, %566 : vector<8x8x128xf32>
    %cst_248 = arith.constant 5.000000e-01 : f32
    %569 = vector.broadcast %cst_248 : f32 to vector<8x8x128xf32>
    %570 = arith.mulf %569, %568 : vector<8x8x128xf32>
    %571 = math.tanh %570 : vector<8x8x128xf32>
    %cst_249 = arith.constant 5.000000e-01 : f32
    %572 = vector.broadcast %cst_249 : f32 to vector<8x8x128xf32>
    %573 = arith.mulf %572, %571 : vector<8x8x128xf32>
    %cst_250 = arith.constant 5.000000e-01 : f32
    %574 = vector.broadcast %cst_250 : f32 to vector<8x8x128xf32>
    %575 = arith.addf %573, %574 : vector<8x8x128xf32>
    %576 = vector.shape_cast %556 : vector<8x128xf32> to vector<1x8x128xf32>
    %577 = vector.broadcast %576 : vector<1x8x128xf32> to vector<8x8x128xf32>
    %578 = arith.mulf %577, %575 : vector<8x8x128xf32>
    %cst_251 = arith.constant dense<0.000000e+00> : vector<8x128xf32>
    %579 = vector.multi_reduction <add>, %578, %cst_251 [1] : vector<8x8x128xf32> to vector<8x128xf32>
    %580 = arith.addf %550, %579 : vector<8x128xf32>
    %581 = vector.shape_cast %559 : vector<8x128xf32> to vector<1x8x128xf32>
    %582 = vector.broadcast %581 : vector<1x8x128xf32> to vector<8x8x128xf32>
    %583 = arith.mulf %582, %575 : vector<8x8x128xf32>
    %cst_252 = arith.constant dense<0.000000e+00> : vector<8x128xf32>
    %584 = vector.multi_reduction <add>, %583, %cst_252 [1] : vector<8x8x128xf32> to vector<8x128xf32>
    %585 = arith.addf %555, %584 : vector<8x128xf32>
    %586 = arith.mulf %14, %463 : vector<8x128xf32>
    %587 = arith.addf %586, %81 : vector<8x128xf32>
    %588 = arith.addf %587, %585 : vector<8x128xf32>
    %589 = arith.addf %82, %580 : vector<8x128xf32>
    %590 = arith.divf %588, %589 : vector<8x128xf32>
    %cst_253 = arith.constant 0.000000e+00 : f32
    %591 = vector.broadcast %cst_253 : f32 to vector<8x128xf32>
    %cst_254 = arith.constant 0.000000e+00 : f32
    %592 = vector.broadcast %cst_254 : f32 to vector<8x128xf32>
    %c0_255 = arith.constant 0 : index
    %c0_256 = arith.constant 0 : index
    %593 = vector.load %arg11[%c0_255, %c0_256] : memref<32x128xf32, #tpu.memory_space<vmem>>, vector<8x128xf32>
    %c0_257 = arith.constant 0 : index
    %c0_258 = arith.constant 0 : index
    %594 = vector.load %arg10[%c0_257, %c0_258] : memref<32x128xf32, #tpu.memory_space<vmem>>, vector<8x128xf32>
    %c0_259 = arith.constant 0 : index
    %c0_260 = arith.constant 0 : index
    %595 = vector.load %arg9[%c0_259, %c0_260] : memref<32x128xf32, #tpu.memory_space<vmem>>, vector<8x128xf32>
    %c0_261 = arith.constant 0 : index
    %c0_262 = arith.constant 0 : index
    %596 = vector.load %arg12[%c0_261, %c0_262] : memref<32x128xf32, #tpu.memory_space<vmem>>, vector<8x128xf32>
    %597 = vector.extract_strided_slice %590 {offsets = [0, 0], sizes = [8, 8], strides = [1, 1]} : vector<8x128xf32> to vector<8x8xf32>
    %598 = vector.shape_cast %594 : vector<8x128xf32> to vector<1x8x128xf32>
    %599 = vector.shape_cast %597 : vector<8x8xf32> to vector<8x8x1xf32>
    %600 = vector.shape_cast %595 : vector<8x128xf32> to vector<1x8x128xf32>
    %601 = vector.broadcast %599 : vector<8x8x1xf32> to vector<8x8x128xf32>
    %602 = vector.broadcast %600 : vector<1x8x128xf32> to vector<8x8x128xf32>
    %603 = arith.subf %601, %602 : vector<8x8x128xf32>
    %604 = vector.broadcast %598 : vector<1x8x128xf32> to vector<8x8x128xf32>
    %605 = arith.mulf %604, %603 : vector<8x8x128xf32>
    %cst_263 = arith.constant 5.000000e-01 : f32
    %606 = vector.broadcast %cst_263 : f32 to vector<8x8x128xf32>
    %607 = arith.mulf %606, %605 : vector<8x8x128xf32>
    %608 = math.tanh %607 : vector<8x8x128xf32>
    %cst_264 = arith.constant 5.000000e-01 : f32
    %609 = vector.broadcast %cst_264 : f32 to vector<8x8x128xf32>
    %610 = arith.mulf %609, %608 : vector<8x8x128xf32>
    %cst_265 = arith.constant 5.000000e-01 : f32
    %611 = vector.broadcast %cst_265 : f32 to vector<8x8x128xf32>
    %612 = arith.addf %610, %611 : vector<8x8x128xf32>
    %613 = vector.shape_cast %593 : vector<8x128xf32> to vector<1x8x128xf32>
    %614 = vector.broadcast %613 : vector<1x8x128xf32> to vector<8x8x128xf32>
    %615 = arith.mulf %614, %612 : vector<8x8x128xf32>
    %cst_266 = arith.constant dense<0.000000e+00> : vector<8x128xf32>
    %616 = vector.multi_reduction <add>, %615, %cst_266 [1] : vector<8x8x128xf32> to vector<8x128xf32>
    %617 = arith.addf %592, %616 : vector<8x128xf32>
    %618 = vector.shape_cast %596 : vector<8x128xf32> to vector<1x8x128xf32>
    %619 = vector.broadcast %618 : vector<1x8x128xf32> to vector<8x8x128xf32>
    %620 = arith.mulf %619, %612 : vector<8x8x128xf32>
    %cst_267 = arith.constant dense<0.000000e+00> : vector<8x128xf32>
    %621 = vector.multi_reduction <add>, %620, %cst_267 [1] : vector<8x8x128xf32> to vector<8x128xf32>
    %622 = arith.addf %591, %621 : vector<8x128xf32>
    %c8_268 = arith.constant 8 : index
    %c0_269 = arith.constant 0 : index
    %623 = vector.load %arg11[%c8_268, %c0_269] : memref<32x128xf32, #tpu.memory_space<vmem>>, vector<8x128xf32>
    %c8_270 = arith.constant 8 : index
    %c0_271 = arith.constant 0 : index
    %624 = vector.load %arg10[%c8_270, %c0_271] : memref<32x128xf32, #tpu.memory_space<vmem>>, vector<8x128xf32>
    %c8_272 = arith.constant 8 : index
    %c0_273 = arith.constant 0 : index
    %625 = vector.load %arg9[%c8_272, %c0_273] : memref<32x128xf32, #tpu.memory_space<vmem>>, vector<8x128xf32>
    %c8_274 = arith.constant 8 : index
    %c0_275 = arith.constant 0 : index
    %626 = vector.load %arg12[%c8_274, %c0_275] : memref<32x128xf32, #tpu.memory_space<vmem>>, vector<8x128xf32>
    %627 = vector.extract_strided_slice %590 {offsets = [0, 8], sizes = [8, 8], strides = [1, 1]} : vector<8x128xf32> to vector<8x8xf32>
    %628 = vector.shape_cast %624 : vector<8x128xf32> to vector<1x8x128xf32>
    %629 = vector.shape_cast %627 : vector<8x8xf32> to vector<8x8x1xf32>
    %630 = vector.shape_cast %625 : vector<8x128xf32> to vector<1x8x128xf32>
    %631 = vector.broadcast %629 : vector<8x8x1xf32> to vector<8x8x128xf32>
    %632 = vector.broadcast %630 : vector<1x8x128xf32> to vector<8x8x128xf32>
    %633 = arith.subf %631, %632 : vector<8x8x128xf32>
    %634 = vector.broadcast %628 : vector<1x8x128xf32> to vector<8x8x128xf32>
    %635 = arith.mulf %634, %633 : vector<8x8x128xf32>
    %cst_276 = arith.constant 5.000000e-01 : f32
    %636 = vector.broadcast %cst_276 : f32 to vector<8x8x128xf32>
    %637 = arith.mulf %636, %635 : vector<8x8x128xf32>
    %638 = math.tanh %637 : vector<8x8x128xf32>
    %cst_277 = arith.constant 5.000000e-01 : f32
    %639 = vector.broadcast %cst_277 : f32 to vector<8x8x128xf32>
    %640 = arith.mulf %639, %638 : vector<8x8x128xf32>
    %cst_278 = arith.constant 5.000000e-01 : f32
    %641 = vector.broadcast %cst_278 : f32 to vector<8x8x128xf32>
    %642 = arith.addf %640, %641 : vector<8x8x128xf32>
    %643 = vector.shape_cast %623 : vector<8x128xf32> to vector<1x8x128xf32>
    %644 = vector.broadcast %643 : vector<1x8x128xf32> to vector<8x8x128xf32>
    %645 = arith.mulf %644, %642 : vector<8x8x128xf32>
    %cst_279 = arith.constant dense<0.000000e+00> : vector<8x128xf32>
    %646 = vector.multi_reduction <add>, %645, %cst_279 [1] : vector<8x8x128xf32> to vector<8x128xf32>
    %647 = arith.addf %617, %646 : vector<8x128xf32>
    %648 = vector.shape_cast %626 : vector<8x128xf32> to vector<1x8x128xf32>
    %649 = vector.broadcast %648 : vector<1x8x128xf32> to vector<8x8x128xf32>
    %650 = arith.mulf %649, %642 : vector<8x8x128xf32>
    %cst_280 = arith.constant dense<0.000000e+00> : vector<8x128xf32>
    %651 = vector.multi_reduction <add>, %650, %cst_280 [1] : vector<8x8x128xf32> to vector<8x128xf32>
    %652 = arith.addf %622, %651 : vector<8x128xf32>
    %c16_281 = arith.constant 16 : index
    %c0_282 = arith.constant 0 : index
    %653 = vector.load %arg11[%c16_281, %c0_282] : memref<32x128xf32, #tpu.memory_space<vmem>>, vector<8x128xf32>
    %c16_283 = arith.constant 16 : index
    %c0_284 = arith.constant 0 : index
    %654 = vector.load %arg10[%c16_283, %c0_284] : memref<32x128xf32, #tpu.memory_space<vmem>>, vector<8x128xf32>
    %c16_285 = arith.constant 16 : index
    %c0_286 = arith.constant 0 : index
    %655 = vector.load %arg9[%c16_285, %c0_286] : memref<32x128xf32, #tpu.memory_space<vmem>>, vector<8x128xf32>
    %c16_287 = arith.constant 16 : index
    %c0_288 = arith.constant 0 : index
    %656 = vector.load %arg12[%c16_287, %c0_288] : memref<32x128xf32, #tpu.memory_space<vmem>>, vector<8x128xf32>
    %657 = vector.extract_strided_slice %590 {offsets = [0, 16], sizes = [8, 8], strides = [1, 1]} : vector<8x128xf32> to vector<8x8xf32>
    %658 = vector.shape_cast %654 : vector<8x128xf32> to vector<1x8x128xf32>
    %659 = vector.shape_cast %657 : vector<8x8xf32> to vector<8x8x1xf32>
    %660 = vector.shape_cast %655 : vector<8x128xf32> to vector<1x8x128xf32>
    %661 = vector.broadcast %659 : vector<8x8x1xf32> to vector<8x8x128xf32>
    %662 = vector.broadcast %660 : vector<1x8x128xf32> to vector<8x8x128xf32>
    %663 = arith.subf %661, %662 : vector<8x8x128xf32>
    %664 = vector.broadcast %658 : vector<1x8x128xf32> to vector<8x8x128xf32>
    %665 = arith.mulf %664, %663 : vector<8x8x128xf32>
    %cst_289 = arith.constant 5.000000e-01 : f32
    %666 = vector.broadcast %cst_289 : f32 to vector<8x8x128xf32>
    %667 = arith.mulf %666, %665 : vector<8x8x128xf32>
    %668 = math.tanh %667 : vector<8x8x128xf32>
    %cst_290 = arith.constant 5.000000e-01 : f32
    %669 = vector.broadcast %cst_290 : f32 to vector<8x8x128xf32>
    %670 = arith.mulf %669, %668 : vector<8x8x128xf32>
    %cst_291 = arith.constant 5.000000e-01 : f32
    %671 = vector.broadcast %cst_291 : f32 to vector<8x8x128xf32>
    %672 = arith.addf %670, %671 : vector<8x8x128xf32>
    %673 = vector.shape_cast %653 : vector<8x128xf32> to vector<1x8x128xf32>
    %674 = vector.broadcast %673 : vector<1x8x128xf32> to vector<8x8x128xf32>
    %675 = arith.mulf %674, %672 : vector<8x8x128xf32>
    %cst_292 = arith.constant dense<0.000000e+00> : vector<8x128xf32>
    %676 = vector.multi_reduction <add>, %675, %cst_292 [1] : vector<8x8x128xf32> to vector<8x128xf32>
    %677 = arith.addf %647, %676 : vector<8x128xf32>
    %678 = vector.shape_cast %656 : vector<8x128xf32> to vector<1x8x128xf32>
    %679 = vector.broadcast %678 : vector<1x8x128xf32> to vector<8x8x128xf32>
    %680 = arith.mulf %679, %672 : vector<8x8x128xf32>
    %cst_293 = arith.constant dense<0.000000e+00> : vector<8x128xf32>
    %681 = vector.multi_reduction <add>, %680, %cst_293 [1] : vector<8x8x128xf32> to vector<8x128xf32>
    %682 = arith.addf %652, %681 : vector<8x128xf32>
    %c24_294 = arith.constant 24 : index
    %c0_295 = arith.constant 0 : index
    %683 = vector.load %arg11[%c24_294, %c0_295] : memref<32x128xf32, #tpu.memory_space<vmem>>, vector<8x128xf32>
    %c24_296 = arith.constant 24 : index
    %c0_297 = arith.constant 0 : index
    %684 = vector.load %arg10[%c24_296, %c0_297] : memref<32x128xf32, #tpu.memory_space<vmem>>, vector<8x128xf32>
    %c24_298 = arith.constant 24 : index
    %c0_299 = arith.constant 0 : index
    %685 = vector.load %arg9[%c24_298, %c0_299] : memref<32x128xf32, #tpu.memory_space<vmem>>, vector<8x128xf32>
    %c24_300 = arith.constant 24 : index
    %c0_301 = arith.constant 0 : index
    %686 = vector.load %arg12[%c24_300, %c0_301] : memref<32x128xf32, #tpu.memory_space<vmem>>, vector<8x128xf32>
    %687 = vector.extract_strided_slice %590 {offsets = [0, 24], sizes = [8, 8], strides = [1, 1]} : vector<8x128xf32> to vector<8x8xf32>
    %688 = vector.shape_cast %684 : vector<8x128xf32> to vector<1x8x128xf32>
    %689 = vector.shape_cast %687 : vector<8x8xf32> to vector<8x8x1xf32>
    %690 = vector.shape_cast %685 : vector<8x128xf32> to vector<1x8x128xf32>
    %691 = vector.broadcast %689 : vector<8x8x1xf32> to vector<8x8x128xf32>
    %692 = vector.broadcast %690 : vector<1x8x128xf32> to vector<8x8x128xf32>
    %693 = arith.subf %691, %692 : vector<8x8x128xf32>
    %694 = vector.broadcast %688 : vector<1x8x128xf32> to vector<8x8x128xf32>
    %695 = arith.mulf %694, %693 : vector<8x8x128xf32>
    %cst_302 = arith.constant 5.000000e-01 : f32
    %696 = vector.broadcast %cst_302 : f32 to vector<8x8x128xf32>
    %697 = arith.mulf %696, %695 : vector<8x8x128xf32>
    %698 = math.tanh %697 : vector<8x8x128xf32>
    %cst_303 = arith.constant 5.000000e-01 : f32
    %699 = vector.broadcast %cst_303 : f32 to vector<8x8x128xf32>
    %700 = arith.mulf %699, %698 : vector<8x8x128xf32>
    %cst_304 = arith.constant 5.000000e-01 : f32
    %701 = vector.broadcast %cst_304 : f32 to vector<8x8x128xf32>
    %702 = arith.addf %700, %701 : vector<8x8x128xf32>
    %703 = vector.shape_cast %683 : vector<8x128xf32> to vector<1x8x128xf32>
    %704 = vector.broadcast %703 : vector<1x8x128xf32> to vector<8x8x128xf32>
    %705 = arith.mulf %704, %702 : vector<8x8x128xf32>
    %cst_305 = arith.constant dense<0.000000e+00> : vector<8x128xf32>
    %706 = vector.multi_reduction <add>, %705, %cst_305 [1] : vector<8x8x128xf32> to vector<8x128xf32>
    %707 = arith.addf %677, %706 : vector<8x128xf32>
    %708 = vector.shape_cast %686 : vector<8x128xf32> to vector<1x8x128xf32>
    %709 = vector.broadcast %708 : vector<1x8x128xf32> to vector<8x8x128xf32>
    %710 = arith.mulf %709, %702 : vector<8x8x128xf32>
    %cst_306 = arith.constant dense<0.000000e+00> : vector<8x128xf32>
    %711 = vector.multi_reduction <add>, %710, %cst_306 [1] : vector<8x8x128xf32> to vector<8x128xf32>
    %712 = arith.addf %682, %711 : vector<8x128xf32>
    %713 = arith.mulf %14, %590 : vector<8x128xf32>
    %714 = arith.addf %713, %81 : vector<8x128xf32>
    %715 = arith.addf %714, %712 : vector<8x128xf32>
    %716 = arith.addf %82, %707 : vector<8x128xf32>
    %717 = arith.divf %715, %716 : vector<8x128xf32>
    %cst_307 = arith.constant 0.000000e+00 : f32
    %718 = vector.broadcast %cst_307 : f32 to vector<8x128xf32>
    %cst_308 = arith.constant 0.000000e+00 : f32
    %719 = vector.broadcast %cst_308 : f32 to vector<8x128xf32>
    %c0_309 = arith.constant 0 : index
    %c0_310 = arith.constant 0 : index
    %720 = vector.load %arg11[%c0_309, %c0_310] : memref<32x128xf32, #tpu.memory_space<vmem>>, vector<8x128xf32>
    %c0_311 = arith.constant 0 : index
    %c0_312 = arith.constant 0 : index
    %721 = vector.load %arg10[%c0_311, %c0_312] : memref<32x128xf32, #tpu.memory_space<vmem>>, vector<8x128xf32>
    %c0_313 = arith.constant 0 : index
    %c0_314 = arith.constant 0 : index
    %722 = vector.load %arg9[%c0_313, %c0_314] : memref<32x128xf32, #tpu.memory_space<vmem>>, vector<8x128xf32>
    %c0_315 = arith.constant 0 : index
    %c0_316 = arith.constant 0 : index
    %723 = vector.load %arg12[%c0_315, %c0_316] : memref<32x128xf32, #tpu.memory_space<vmem>>, vector<8x128xf32>
    %724 = vector.extract_strided_slice %717 {offsets = [0, 0], sizes = [8, 8], strides = [1, 1]} : vector<8x128xf32> to vector<8x8xf32>
    %725 = vector.shape_cast %721 : vector<8x128xf32> to vector<1x8x128xf32>
    %726 = vector.shape_cast %724 : vector<8x8xf32> to vector<8x8x1xf32>
    %727 = vector.shape_cast %722 : vector<8x128xf32> to vector<1x8x128xf32>
    %728 = vector.broadcast %726 : vector<8x8x1xf32> to vector<8x8x128xf32>
    %729 = vector.broadcast %727 : vector<1x8x128xf32> to vector<8x8x128xf32>
    %730 = arith.subf %728, %729 : vector<8x8x128xf32>
    %731 = vector.broadcast %725 : vector<1x8x128xf32> to vector<8x8x128xf32>
    %732 = arith.mulf %731, %730 : vector<8x8x128xf32>
    %cst_317 = arith.constant 5.000000e-01 : f32
    %733 = vector.broadcast %cst_317 : f32 to vector<8x8x128xf32>
    %734 = arith.mulf %733, %732 : vector<8x8x128xf32>
    %735 = math.tanh %734 : vector<8x8x128xf32>
    %cst_318 = arith.constant 5.000000e-01 : f32
    %736 = vector.broadcast %cst_318 : f32 to vector<8x8x128xf32>
    %737 = arith.mulf %736, %735 : vector<8x8x128xf32>
    %cst_319 = arith.constant 5.000000e-01 : f32
    %738 = vector.broadcast %cst_319 : f32 to vector<8x8x128xf32>
    %739 = arith.addf %737, %738 : vector<8x8x128xf32>
    %740 = vector.shape_cast %720 : vector<8x128xf32> to vector<1x8x128xf32>
    %741 = vector.broadcast %740 : vector<1x8x128xf32> to vector<8x8x128xf32>
    %742 = arith.mulf %741, %739 : vector<8x8x128xf32>
    %cst_320 = arith.constant dense<0.000000e+00> : vector<8x128xf32>
    %743 = vector.multi_reduction <add>, %742, %cst_320 [1] : vector<8x8x128xf32> to vector<8x128xf32>
    %744 = arith.addf %719, %743 : vector<8x128xf32>
    %745 = vector.shape_cast %723 : vector<8x128xf32> to vector<1x8x128xf32>
    %746 = vector.broadcast %745 : vector<1x8x128xf32> to vector<8x8x128xf32>
    %747 = arith.mulf %746, %739 : vector<8x8x128xf32>
    %cst_321 = arith.constant dense<0.000000e+00> : vector<8x128xf32>
    %748 = vector.multi_reduction <add>, %747, %cst_321 [1] : vector<8x8x128xf32> to vector<8x128xf32>
    %749 = arith.addf %718, %748 : vector<8x128xf32>
    %c8_322 = arith.constant 8 : index
    %c0_323 = arith.constant 0 : index
    %750 = vector.load %arg11[%c8_322, %c0_323] : memref<32x128xf32, #tpu.memory_space<vmem>>, vector<8x128xf32>
    %c8_324 = arith.constant 8 : index
    %c0_325 = arith.constant 0 : index
    %751 = vector.load %arg10[%c8_324, %c0_325] : memref<32x128xf32, #tpu.memory_space<vmem>>, vector<8x128xf32>
    %c8_326 = arith.constant 8 : index
    %c0_327 = arith.constant 0 : index
    %752 = vector.load %arg9[%c8_326, %c0_327] : memref<32x128xf32, #tpu.memory_space<vmem>>, vector<8x128xf32>
    %c8_328 = arith.constant 8 : index
    %c0_329 = arith.constant 0 : index
    %753 = vector.load %arg12[%c8_328, %c0_329] : memref<32x128xf32, #tpu.memory_space<vmem>>, vector<8x128xf32>
    %754 = vector.extract_strided_slice %717 {offsets = [0, 8], sizes = [8, 8], strides = [1, 1]} : vector<8x128xf32> to vector<8x8xf32>
    %755 = vector.shape_cast %751 : vector<8x128xf32> to vector<1x8x128xf32>
    %756 = vector.shape_cast %754 : vector<8x8xf32> to vector<8x8x1xf32>
    %757 = vector.shape_cast %752 : vector<8x128xf32> to vector<1x8x128xf32>
    %758 = vector.broadcast %756 : vector<8x8x1xf32> to vector<8x8x128xf32>
    %759 = vector.broadcast %757 : vector<1x8x128xf32> to vector<8x8x128xf32>
    %760 = arith.subf %758, %759 : vector<8x8x128xf32>
    %761 = vector.broadcast %755 : vector<1x8x128xf32> to vector<8x8x128xf32>
    %762 = arith.mulf %761, %760 : vector<8x8x128xf32>
    %cst_330 = arith.constant 5.000000e-01 : f32
    %763 = vector.broadcast %cst_330 : f32 to vector<8x8x128xf32>
    %764 = arith.mulf %763, %762 : vector<8x8x128xf32>
    %765 = math.tanh %764 : vector<8x8x128xf32>
    %cst_331 = arith.constant 5.000000e-01 : f32
    %766 = vector.broadcast %cst_331 : f32 to vector<8x8x128xf32>
    %767 = arith.mulf %766, %765 : vector<8x8x128xf32>
    %cst_332 = arith.constant 5.000000e-01 : f32
    %768 = vector.broadcast %cst_332 : f32 to vector<8x8x128xf32>
    %769 = arith.addf %767, %768 : vector<8x8x128xf32>
    %770 = vector.shape_cast %750 : vector<8x128xf32> to vector<1x8x128xf32>
    %771 = vector.broadcast %770 : vector<1x8x128xf32> to vector<8x8x128xf32>
    %772 = arith.mulf %771, %769 : vector<8x8x128xf32>
    %cst_333 = arith.constant dense<0.000000e+00> : vector<8x128xf32>
    %773 = vector.multi_reduction <add>, %772, %cst_333 [1] : vector<8x8x128xf32> to vector<8x128xf32>
    %774 = arith.addf %744, %773 : vector<8x128xf32>
    %775 = vector.shape_cast %753 : vector<8x128xf32> to vector<1x8x128xf32>
    %776 = vector.broadcast %775 : vector<1x8x128xf32> to vector<8x8x128xf32>
    %777 = arith.mulf %776, %769 : vector<8x8x128xf32>
    %cst_334 = arith.constant dense<0.000000e+00> : vector<8x128xf32>
    %778 = vector.multi_reduction <add>, %777, %cst_334 [1] : vector<8x8x128xf32> to vector<8x128xf32>
    %779 = arith.addf %749, %778 : vector<8x128xf32>
    %c16_335 = arith.constant 16 : index
    %c0_336 = arith.constant 0 : index
    %780 = vector.load %arg11[%c16_335, %c0_336] : memref<32x128xf32, #tpu.memory_space<vmem>>, vector<8x128xf32>
    %c16_337 = arith.constant 16 : index
    %c0_338 = arith.constant 0 : index
    %781 = vector.load %arg10[%c16_337, %c0_338] : memref<32x128xf32, #tpu.memory_space<vmem>>, vector<8x128xf32>
    %c16_339 = arith.constant 16 : index
    %c0_340 = arith.constant 0 : index
    %782 = vector.load %arg9[%c16_339, %c0_340] : memref<32x128xf32, #tpu.memory_space<vmem>>, vector<8x128xf32>
    %c16_341 = arith.constant 16 : index
    %c0_342 = arith.constant 0 : index
    %783 = vector.load %arg12[%c16_341, %c0_342] : memref<32x128xf32, #tpu.memory_space<vmem>>, vector<8x128xf32>
    %784 = vector.extract_strided_slice %717 {offsets = [0, 16], sizes = [8, 8], strides = [1, 1]} : vector<8x128xf32> to vector<8x8xf32>
    %785 = vector.shape_cast %781 : vector<8x128xf32> to vector<1x8x128xf32>
    %786 = vector.shape_cast %784 : vector<8x8xf32> to vector<8x8x1xf32>
    %787 = vector.shape_cast %782 : vector<8x128xf32> to vector<1x8x128xf32>
    %788 = vector.broadcast %786 : vector<8x8x1xf32> to vector<8x8x128xf32>
    %789 = vector.broadcast %787 : vector<1x8x128xf32> to vector<8x8x128xf32>
    %790 = arith.subf %788, %789 : vector<8x8x128xf32>
    %791 = vector.broadcast %785 : vector<1x8x128xf32> to vector<8x8x128xf32>
    %792 = arith.mulf %791, %790 : vector<8x8x128xf32>
    %cst_343 = arith.constant 5.000000e-01 : f32
    %793 = vector.broadcast %cst_343 : f32 to vector<8x8x128xf32>
    %794 = arith.mulf %793, %792 : vector<8x8x128xf32>
    %795 = math.tanh %794 : vector<8x8x128xf32>
    %cst_344 = arith.constant 5.000000e-01 : f32
    %796 = vector.broadcast %cst_344 : f32 to vector<8x8x128xf32>
    %797 = arith.mulf %796, %795 : vector<8x8x128xf32>
    %cst_345 = arith.constant 5.000000e-01 : f32
    %798 = vector.broadcast %cst_345 : f32 to vector<8x8x128xf32>
    %799 = arith.addf %797, %798 : vector<8x8x128xf32>
    %800 = vector.shape_cast %780 : vector<8x128xf32> to vector<1x8x128xf32>
    %801 = vector.broadcast %800 : vector<1x8x128xf32> to vector<8x8x128xf32>
    %802 = arith.mulf %801, %799 : vector<8x8x128xf32>
    %cst_346 = arith.constant dense<0.000000e+00> : vector<8x128xf32>
    %803 = vector.multi_reduction <add>, %802, %cst_346 [1] : vector<8x8x128xf32> to vector<8x128xf32>
    %804 = arith.addf %774, %803 : vector<8x128xf32>
    %805 = vector.shape_cast %783 : vector<8x128xf32> to vector<1x8x128xf32>
    %806 = vector.broadcast %805 : vector<1x8x128xf32> to vector<8x8x128xf32>
    %807 = arith.mulf %806, %799 : vector<8x8x128xf32>
    %cst_347 = arith.constant dense<0.000000e+00> : vector<8x128xf32>
    %808 = vector.multi_reduction <add>, %807, %cst_347 [1] : vector<8x8x128xf32> to vector<8x128xf32>
    %809 = arith.addf %779, %808 : vector<8x128xf32>
    %c24_348 = arith.constant 24 : index
    %c0_349 = arith.constant 0 : index
    %810 = vector.load %arg11[%c24_348, %c0_349] : memref<32x128xf32, #tpu.memory_space<vmem>>, vector<8x128xf32>
    %c24_350 = arith.constant 24 : index
    %c0_351 = arith.constant 0 : index
    %811 = vector.load %arg10[%c24_350, %c0_351] : memref<32x128xf32, #tpu.memory_space<vmem>>, vector<8x128xf32>
    %c24_352 = arith.constant 24 : index
    %c0_353 = arith.constant 0 : index
    %812 = vector.load %arg9[%c24_352, %c0_353] : memref<32x128xf32, #tpu.memory_space<vmem>>, vector<8x128xf32>
    %c24_354 = arith.constant 24 : index
    %c0_355 = arith.constant 0 : index
    %813 = vector.load %arg12[%c24_354, %c0_355] : memref<32x128xf32, #tpu.memory_space<vmem>>, vector<8x128xf32>
    %814 = vector.extract_strided_slice %717 {offsets = [0, 24], sizes = [8, 8], strides = [1, 1]} : vector<8x128xf32> to vector<8x8xf32>
    %815 = vector.shape_cast %811 : vector<8x128xf32> to vector<1x8x128xf32>
    %816 = vector.shape_cast %814 : vector<8x8xf32> to vector<8x8x1xf32>
    %817 = vector.shape_cast %812 : vector<8x128xf32> to vector<1x8x128xf32>
    %818 = vector.broadcast %816 : vector<8x8x1xf32> to vector<8x8x128xf32>
    %819 = vector.broadcast %817 : vector<1x8x128xf32> to vector<8x8x128xf32>
    %820 = arith.subf %818, %819 : vector<8x8x128xf32>
    %821 = vector.broadcast %815 : vector<1x8x128xf32> to vector<8x8x128xf32>
    %822 = arith.mulf %821, %820 : vector<8x8x128xf32>
    %cst_356 = arith.constant 5.000000e-01 : f32
    %823 = vector.broadcast %cst_356 : f32 to vector<8x8x128xf32>
    %824 = arith.mulf %823, %822 : vector<8x8x128xf32>
    %825 = math.tanh %824 : vector<8x8x128xf32>
    %cst_357 = arith.constant 5.000000e-01 : f32
    %826 = vector.broadcast %cst_357 : f32 to vector<8x8x128xf32>
    %827 = arith.mulf %826, %825 : vector<8x8x128xf32>
    %cst_358 = arith.constant 5.000000e-01 : f32
    %828 = vector.broadcast %cst_358 : f32 to vector<8x8x128xf32>
    %829 = arith.addf %827, %828 : vector<8x8x128xf32>
    %830 = vector.shape_cast %810 : vector<8x128xf32> to vector<1x8x128xf32>
    %831 = vector.broadcast %830 : vector<1x8x128xf32> to vector<8x8x128xf32>
    %832 = arith.mulf %831, %829 : vector<8x8x128xf32>
    %cst_359 = arith.constant dense<0.000000e+00> : vector<8x128xf32>
    %833 = vector.multi_reduction <add>, %832, %cst_359 [1] : vector<8x8x128xf32> to vector<8x128xf32>
    %834 = arith.addf %804, %833 : vector<8x128xf32>
    %835 = vector.shape_cast %813 : vector<8x128xf32> to vector<1x8x128xf32>
    %836 = vector.broadcast %835 : vector<1x8x128xf32> to vector<8x8x128xf32>
    %837 = arith.mulf %836, %829 : vector<8x8x128xf32>
    %cst_360 = arith.constant dense<0.000000e+00> : vector<8x128xf32>
    %838 = vector.multi_reduction <add>, %837, %cst_360 [1] : vector<8x8x128xf32> to vector<8x128xf32>
    %839 = arith.addf %809, %838 : vector<8x128xf32>
    %840 = arith.mulf %14, %717 : vector<8x128xf32>
    %841 = arith.addf %840, %81 : vector<8x128xf32>
    %842 = arith.addf %841, %839 : vector<8x128xf32>
    %843 = arith.addf %82, %834 : vector<8x128xf32>
    %844 = arith.divf %842, %843 : vector<8x128xf32>
    %c0_361 = arith.constant 0 : index
    %c0_362 = arith.constant 0 : index
    %845 = vector.load %arg16[%c0_361, %c0_362] : memref<8x128xf32, #tpu.memory_space<vmem>>, vector<8x128xf32>
    tpu.vector_store %arg16[%c0_361, %c0_362], %844 {strides = array<i32>} : memref<8x128xf32, #tpu.memory_space<vmem>>, vector<8x128xf32>,
    return
  }
  func.func @transform_0(%arg0: i32) -> (i32, i32) {
    %c0_i32 = arith.constant 0 : i32
    %c0_i32_0 = arith.constant 0 : i32
    return %arg0, %c0_i32 : i32, i32
  }
  func.func @transform_1(%arg0: i32) -> (i32, i32) {
    %c0_i32 = arith.constant 0 : i32
    %c0_i32_0 = arith.constant 0 : i32
    return %arg0, %c0_i32 : i32, i32
  }
  func.func @transform_2(%arg0: i32) -> (i32, i32) {
    %c0_i32 = arith.constant 0 : i32
    %c0_i32_0 = arith.constant 0 : i32
    %c0_i32_1 = arith.constant 0 : i32
    return %c0_i32, %c0_i32_0 : i32, i32
  }
  func.func @transform_3(%arg0: i32) -> (i32, i32) {
    %c0_i32 = arith.constant 0 : i32
    %c0_i32_0 = arith.constant 0 : i32
    %c0_i32_1 = arith.constant 0 : i32
    return %c0_i32, %c0_i32_0 : i32, i32
  }
  func.func @transform_4(%arg0: i32) -> (i32, i32) {
    %c0_i32 = arith.constant 0 : i32
    %c0_i32_0 = arith.constant 0 : i32
    %c0_i32_1 = arith.constant 0 : i32
    return %c0_i32, %c0_i32_0 : i32, i32
  }
  func.func @transform_5(%arg0: i32) -> (i32, i32) {
    %c0_i32 = arith.constant 0 : i32
    %c0_i32_0 = arith.constant 0 : i32
    %c0_i32_1 = arith.constant 0 : i32
    return %c0_i32, %c0_i32_0 : i32, i32
  }
  func.func @transform_6(%arg0: i32) -> (i32, i32) {
    %c0_i32 = arith.constant 0 : i32
    %c0_i32_0 = arith.constant 0 : i32
    %c0_i32_1 = arith.constant 0 : i32
    return %c0_i32, %c0_i32_0 : i32, i32
  }
  func.func @transform_7(%arg0: i32) -> (i32, i32) {
    %c0_i32 = arith.constant 0 : i32
    %c0_i32_0 = arith.constant 0 : i32
    %c0_i32_1 = arith.constant 0 : i32
    return %c0_i32, %c0_i32_0 : i32, i32
  }
  func.func @transform_8(%arg0: i32) -> (i32, i32) {
    %c0_i32 = arith.constant 0 : i32
    %c0_i32_0 = arith.constant 0 : i32
    %c0_i32_1 = arith.constant 0 : i32
    return %c0_i32, %c0_i32_0 : i32, i32
  }
  func.func @transform_9(%arg0: i32) -> (i32, i32) {
    %c0_i32 = arith.constant 0 : i32
    %c0_i32_0 = arith.constant 0 : i32
    %c0_i32_1 = arith.constant 0 : i32
    return %c0_i32, %c0_i32_0 : i32, i32
  }
  func.func @transform_10(%arg0: i32) -> (i32, i32) {
    %c0_i32 = arith.constant 0 : i32
    %c0_i32_0 = arith.constant 0 : i32
    %c0_i32_1 = arith.constant 0 : i32
    return %c0_i32, %c0_i32_0 : i32, i32
  }
  func.func @transform_11(%arg0: i32) -> (i32, i32) {
    %c0_i32 = arith.constant 0 : i32
    %c0_i32_0 = arith.constant 0 : i32
    %c0_i32_1 = arith.constant 0 : i32
    return %c0_i32, %c0_i32_0 : i32, i32
  }
  func.func @transform_12(%arg0: i32) -> (i32, i32) {
    %c0_i32 = arith.constant 0 : i32
    %c0_i32_0 = arith.constant 0 : i32
    %c0_i32_1 = arith.constant 0 : i32
    return %c0_i32, %c0_i32_0 : i32, i32
  }
  func.func @transform_13(%arg0: i32) -> (i32, i32) {
    %c0_i32 = arith.constant 0 : i32
    %c0_i32_0 = arith.constant 0 : i32
    %c0_i32_1 = arith.constant 0 : i32
    return %c0_i32, %c0_i32_0 : i32, i32
  }
  func.func @transform_14(%arg0: i32) -> (i32, i32) {
    %c0_i32 = arith.constant 0 : i32
    %c0_i32_0 = arith.constant 0 : i32
    %c0_i32_1 = arith.constant 0 : i32
    return %c0_i32, %c0_i32_0 : i32, i32
  }
  func.func @transform_15(%arg0: i32) -> (i32, i32) {
    %c0_i32 = arith.constant 0 : i32
    %c0_i32_0 = arith.constant 0 : i32
    return %arg0, %c0_i32 : i32, i32
  }
}

</mosaic_0001>

<llo_original>
// kernel: mul.2
$region0: #{mul.2}
  #allocation0 [shape = 's32[1]{0}', space=sflag, size = 0x4, scoped, tag = 'scoped memory for mul.2']
  %s0 = inlined_call_operand.vmem [shape: f32[16,32], index: 0, kind: input, shape index: {}]
  %s1 = inlined_call_operand.vmem [shape: f32[16,32], index: 1, kind: input, shape index: {}]
  %s2 = inlined_call_operand.vmem [shape: f32[16,32], index: 2, kind: output, shape index: {}]
  %v3 = vld [vmem:[%s0] sm:$0xff]
  %v4 = vld [vmem:[%s1] sm:$0xff]
  %5 = xla_tuple %v3, %v4
  %6 = xla_tuple %5
  %v7 = vmul.f32 %v3, %v4
  %8 = xla_tuple %v7
  %9 = vst [vmem:[%s2] sm:$0xff] %v7
  %s10 = scalar_lea.vmem %s0, 8
  %v11 = vld [vmem:[%s10] sm:$0xff]
  %s12 = scalar_lea.vmem %s1, 8
  %v13 = vld [vmem:[%s12] sm:$0xff]
  %14 = xla_tuple %v11, %v13
  %15 = xla_tuple %14
  %v16 = vmul.f32 %v11, %v13
  %17 = xla_tuple %v16
  %s18 = scalar_lea.vmem %s2, 8
  %19 = vst [vmem:[%s18] sm:$0xff] %v16

// kernel: mul.3
$region0: #{mul.3}
  #allocation0 [shape = 's32[1]{0}', space=sflag, size = 0x4, scoped, tag = 'scoped memory for mul.3']
  %s0 = inlined_call_operand.vmem [shape: f32[32,32], index: 0, kind: input, shape index: {}]
  %s1 = inlined_call_operand.vmem [shape: f32[32,32], index: 1, kind: input, shape index: {}]
  %s2 = inlined_call_operand.vmem [shape: f32[32,32], index: 2, kind: output, shape index: {}]
  %v3 = vld [vmem:[%s0] sm:$0xff]
  %v4 = vld [vmem:[%s1] sm:$0xff]
  %5 = xla_tuple %v3, %v4
  %6 = xla_tuple %5
  %v7 = vmul.f32 %v3, %v4
  %8 = xla_tuple %v7
  %9 = vst [vmem:[%s2] sm:$0xff] %v7
  %s10 = scalar_lea.vmem %s0, 8
  %v11 = vld [vmem:[%s10] sm:$0xff]
  %s12 = scalar_lea.vmem %s1, 8
  %v13 = vld [vmem:[%s12] sm:$0xff]
  %14 = xla_tuple %v11, %v13
  %15 = xla_tuple %14
  %v16 = vmul.f32 %v11, %v13
  %17 = xla_tuple %v16
  %s18 = scalar_lea.vmem %s2, 8
  %19 = vst [vmem:[%s18] sm:$0xff] %v16
  %s20 = scalar_lea.vmem %s0, 16
  %v21 = vld [vmem:[%s20] sm:$0xff]
  %s22 = scalar_lea.vmem %s1, 16
  %v23 = vld [vmem:[%s22] sm:$0xff]
  %24 = xla_tuple %v21, %v23
  %25 = xla_tuple %24
  %v26 = vmul.f32 %v21, %v23
  %27 = xla_tuple %v26
  %s28 = scalar_lea.vmem %s2, 16
  %29 = vst [vmem:[%s28] sm:$0xff] %v26
  %s30 = scalar_lea.vmem %s0, 24
  %v31 = vld [vmem:[%s30] sm:$0xff]
  %s32 = scalar_lea.vmem %s1, 24
  %v33 = vld [vmem:[%s32] sm:$0xff]
  %34 = xla_tuple %v31, %v33
  %35 = xla_tuple %34
  %v36 = vmul.f32 %v31, %v33
  %37 = xla_tuple %v36
  %s38 = scalar_lea.vmem %s2, 24
  %39 = vst [vmem:[%s38] sm:$0xff] %v36

// kernel: ltc_cell_forward.1
$region0: #{ltc_cell_forward.1}
  #allocation0 [shape = 'u32[]', space=smem, size = 0x4, offset = 0x4, fixed_abs, tag = 'smem constant byte address 0x4 - core index']
  #allocation1 [shape = 'u32[144,128]{1,0:T(1,128)}', space=vmem, size = 0x12000, scoped, tag = 'internal scratch']
  %s0 = inlined_call_operand.vmem [shape: f32[16,16], index: 0, kind: input, shape index: {}]
  %s1 = inlined_call_operand.vmem [shape: f32[16,128], index: 1, kind: input, shape index: {}, may-alias: {1,15}]
  %s2 = inlined_call_operand.vmem [shape: f32[1,16], index: 2, kind: input, shape index: {}]
  %s3 = inlined_call_operand.vmem [shape: f32[1,16], index: 3, kind: input, shape index: {}]
  %s4 = inlined_call_operand.vmem [shape: f32[16,128], index: 4, kind: input, shape index: {}]
  %s5 = inlined_call_operand.vmem [shape: f32[16,128], index: 5, kind: input, shape index: {}]
  %s6 = inlined_call_operand.vmem [shape: f32[16,128], index: 6, kind: input, shape index: {}]
  %s7 = inlined_call_operand.vmem [shape: f32[16,128], index: 7, kind: input, shape index: {}]
  %s8 = inlined_call_operand.vmem [shape: f32[32,128], index: 8, kind: input, shape index: {}]
  %s9 = inlined_call_operand.vmem [shape: f32[32,128], index: 9, kind: input, shape index: {}]
  %s10 = inlined_call_operand.vmem [shape: f32[32,128], index: 10, kind: input, shape index: {}]
  %s11 = inlined_call_operand.vmem [shape: f32[32,128], index: 11, kind: input, shape index: {}]
  %s12 = inlined_call_operand.vmem [shape: f32[1,128], index: 12, kind: input, shape index: {}]
  %s13 = inlined_call_operand.vmem [shape: f32[1,128], index: 13, kind: input, shape index: {}]
  %s14 = inlined_call_operand.vmem [shape: f32[1,128], index: 14, kind: input, shape index: {}]
  %s15 = inlined_call_operand.vmem [shape: f32[16,128], index: 15, kind: output, shape index: {}, may-alias: {1,15}]
  %s16 = sld [smem:[#allocation0]]
  $region93: #{ltc_cell_forward.1} parent=0
    _
  %s18 = ssub.s32 1, %s16
  %s19 = scalar_select 0, %s18, %s16
  loop: start=0, step=1, limit=4
  $region2: #{ltc_cell_forward.1} parent=0 // loop_pre_header
    _
  $region3: #{ltc_cell_forward.1} parent=0 // loop_header
    %s21 = sphi 0, %s25
    %p22 = scmp.ge.s32.totalorder %s21, 4
    %s31 = sphi 0, %s33
    %s34 = sphi 0, %s31
    %s35 = sphi 0, %s34
    %s51 = sphi 0, %s35
    %s57 = sphi 0, %s59
    %s60 = sphi 0, %s57
    %s61 = sphi 0, %s60
    %s77 = sphi 0, %s61
    %s81 = sphi 0, %s81
    %s83 = sphi 0, %s81
    %s84 = sphi 0, %s83
    %s98 = sphi 0, %s84
    %s102 = sphi 0, %s102
    %s104 = sphi 0, %s102
    %s105 = sphi 0, %s104
    %s119 = sphi 0, %s105
    %s123 = sphi 0, %s123
    %s125 = sphi 0, %s123
    %s126 = sphi 0, %s125
    %s140 = sphi 0, %s126
    %s144 = sphi 0, %s144
    %s146 = sphi 0, %s144
    %s147 = sphi 0, %s146
    %s161 = sphi 0, %s147
    %s165 = sphi 0, %s165
    %s167 = sphi 0, %s165
    %s168 = sphi 0, %s167
    %s182 = sphi 0, %s168
    %s186 = sphi 0, %s186
    %s188 = sphi 0, %s186
    %s189 = sphi 0, %s188
    %s203 = sphi 0, %s189
    %s207 = sphi 0, %s207
    %s209 = sphi 0, %s207
    %s210 = sphi 0, %s209
    %s224 = sphi 0, %s210
    %s228 = sphi 0, %s228
    %s230 = sphi 0, %s228
    %s231 = sphi 0, %s230
    %s245 = sphi 0, %s231
    %s249 = sphi 0, %s249
    %s251 = sphi 0, %s249
    %s252 = sphi 0, %s251
    %s266 = sphi 0, %s252
    %s270 = sphi 0, %s270
    %s272 = sphi 0, %s270
    %s273 = sphi 0, %s272
    %s287 = sphi 0, %s273
    %s291 = sphi 0, %s291
    %s293 = sphi 0, %s291
    %s294 = sphi 0, %s293
    %s308 = sphi 0, %s294
    %s312 = sphi 0, %s312
    %s314 = sphi 0, %s312
    %s315 = sphi 0, %s314
    %s329 = sphi 0, %s315
    %s333 = sphi 0, %s333
    %s335 = sphi 0, %s333
    %s336 = sphi 0, %s335
    %s350 = sphi 0, %s336
    %s356 = sphi 0, %s358
    %s359 = sphi 0, %s356
    %s360 = sphi 0, %s359
    %s376 = sphi 0, %s360
  $region4: #{ltc_cell_forward.1} parent=0 // loop_header_branch
    %24 = sbr.rel (%p22) target = $region8
  $region5: #{ltc_cell_forward.1} parent=0 // loop_body
    %s26 = ssub.s32 %s21, 1
    %s27 = ssub.s32 %s21, 2
    %s28 = sadd.s32 %s21, 1
    %s29 = ssub.s32 %s21, %s28
    %p30 = scmp.eq.s32.totalorder %s29, 0
    %s32 = sadd.s32 %s31, 1
    %s33 = scalar_select %p30, %s31, %s32
    %p36 = pneg %p30
    %p37 = scmp.eq.s32.totalorder %s21, 1
    %p38 = por %p36, %p37
    %p39 = scmp.ne.s32.totalorder %s31, %s34
    %p40 = scmp.eq.s32.totalorder %s21, 0
    %p41 = por %p39, %p40
    %p42 = scmp.ne.s32.totalorder %s31, %s34
    %p43 = scmp.eq.s32.totalorder %s26, 1
    %p44 = por %p42, %p43
    %p45 = scmp.ne.s32.totalorder %s34, %s35
    %p46 = scmp.eq.s32.totalorder %s26, 0
    %p47 = por %p45, %p46
    %p48 = scmp.ne.s32.totalorder %s34, %s35
    %p49 = scmp.eq.s32.totalorder %s27, 1
    %p50 = por %p48, %p49
    %p52 = scmp.ne.s32.totalorder %s35, %s51
    %p53 = scmp.eq.s32.totalorder %s27, 0
    %p54 = por %p52, %p53
    %s55 = ssub.s32 %s21, %s28
    %p56 = scmp.eq.s32.totalorder %s55, 0
    %s58 = sadd.s32 %s57, 1
    %s59 = scalar_select %p56, %s57, %s58
    %p62 = pneg %p56
    %p63 = scmp.eq.s32.totalorder %s21, 1
    %p64 = por %p62, %p63
    %p65 = scmp.ne.s32.totalorder %s57, %s60
    %p66 = scmp.eq.s32.totalorder %s21, 0
    %p67 = por %p65, %p66
    %p68 = scmp.ne.s32.totalorder %s57, %s60
    %p69 = scmp.eq.s32.totalorder %s26, 1
    %p70 = por %p68, %p69
    %p71 = scmp.ne.s32.totalorder %s60, %s61
    %p72 = scmp.eq.s32.totalorder %s26, 0
    %p73 = por %p71, %p72
    %p74 = scmp.ne.s32.totalorder %s60, %s61
    %p75 = scmp.eq.s32.totalorder %s27, 1
    %p76 = por %p74, %p75
    %p78 = scmp.ne.s32.totalorder %s61, %s77
    %p79 = scmp.eq.s32.totalorder %s27, 0
    %p80 = por %p78, %p79
    %s82 = sadd.s32 %s81, 1
    %p85 = scmp.eq.s32.totalorder %s21, 1
    %p86 = scmp.ne.s32.totalorder %s81, %s83
    %p87 = scmp.eq.s32.totalorder %s21, 0
    %p88 = por %p86, %p87
    %p89 = scmp.ne.s32.totalorder %s81, %s83
    %p90 = scmp.eq.s32.totalorder %s26, 1
    %p91 = por %p89, %p90
    %p92 = scmp.ne.s32.totalorder %s83, %s84
    %p93 = scmp.eq.s32.totalorder %s26, 0
    %p94 = por %p92, %p93
    %p95 = scmp.ne.s32.totalorder %s83, %s84
    %p96 = scmp.eq.s32.totalorder %s27, 1
    %p97 = por %p95, %p96
    %p99 = scmp.ne.s32.totalorder %s84, %s98
    %p100 = scmp.eq.s32.totalorder %s27, 0
    %p101 = por %p99, %p100
    %s103 = sadd.s32 %s102, 1
    %p106 = scmp.eq.s32.totalorder %s21, 1
    %p107 = scmp.ne.s32.totalorder %s102, %s104
    %p108 = scmp.eq.s32.totalorder %s21, 0
    %p109 = por %p107, %p108
    %p110 = scmp.ne.s32.totalorder %s102, %s104
    %p111 = scmp.eq.s32.totalorder %s26, 1
    %p112 = por %p110, %p111
    %p113 = scmp.ne.s32.totalorder %s104, %s105
    %p114 = scmp.eq.s32.totalorder %s26, 0
    %p115 = por %p113, %p114
    %p116 = scmp.ne.s32.totalorder %s104, %s105
    %p117 = scmp.eq.s32.totalorder %s27, 1
    %p118 = por %p116, %p117
    %p120 = scmp.ne.s32.totalorder %s105, %s119
    %p121 = scmp.eq.s32.totalorder %s27, 0
    %p122 = por %p120, %p121
    %s124 = sadd.s32 %s123, 1
    %p127 = scmp.eq.s32.totalorder %s21, 1
    %p128 = scmp.ne.s32.totalorder %s123, %s125
    %p129 = scmp.eq.s32.totalorder %s21, 0
    %p130 = por %p128, %p129
    %p131 = scmp.ne.s32.totalorder %s123, %s125
    %p132 = scmp.eq.s32.totalorder %s26, 1
    %p133 = por %p131, %p132
    %p134 = scmp.ne.s32.totalorder %s125, %s126
    %p135 = scmp.eq.s32.totalorder %s26, 0
    %p136 = por %p134, %p135
    %p137 = scmp.ne.s32.totalorder %s125, %s126
    %p138 = scmp.eq.s32.totalorder %s27, 1
    %p139 = por %p137, %p138
    %p141 = scmp.ne.s32.totalorder %s126, %s140
    %p142 = scmp.eq.s32.totalorder %s27, 0
    %p143 = por %p141, %p142
    %s145 = sadd.s32 %s144, 1
    %p148 = scmp.eq.s32.totalorder %s21, 1
    %p149 = scmp.ne.s32.totalorder %s144, %s146
    %p150 = scmp.eq.s32.totalorder %s21, 0
    %p151 = por %p149, %p150
    %p152 = scmp.ne.s32.totalorder %s144, %s146
    %p153 = scmp.eq.s32.totalorder %s26, 1
    %p154 = por %p152, %p153
    %p155 = scmp.ne.s32.totalorder %s146, %s147
    %p156 = scmp.eq.s32.totalorder %s26, 0
    %p157 = por %p155, %p156
    %p158 = scmp.ne.s32.totalorder %s146, %s147
    %p159 = scmp.eq.s32.totalorder %s27, 1
    %p160 = por %p158, %p159
    %p162 = scmp.ne.s32.totalorder %s147, %s161
    %p163 = scmp.eq.s32.totalorder %s27, 0
    %p164 = por %p162, %p163
    %s166 = sadd.s32 %s165, 1
    %p169 = scmp.eq.s32.totalorder %s21, 1
    %p170 = scmp.ne.s32.totalorder %s165, %s167
    %p171 = scmp.eq.s32.totalorder %s21, 0
    %p172 = por %p170, %p171
    %p173 = scmp.ne.s32.totalorder %s165, %s167
    %p174 = scmp.eq.s32.totalorder %s26, 1
    %p175 = por %p173, %p174
    %p176 = scmp.ne.s32.totalorder %s167, %s168
    %p177 = scmp.eq.s32.totalorder %s26, 0
    %p178 = por %p176, %p177
    %p179 = scmp.ne.s32.totalorder %s167, %s168
    %p180 = scmp.eq.s32.totalorder %s27, 1
    %p181 = por %p179, %p180
    %p183 = scmp.ne.s32.totalorder %s168, %s182
    %p184 = scmp.eq.s32.totalorder %s27, 0
    %p185 = por %p183, %p184
    %s187 = sadd.s32 %s186, 1
    %p190 = scmp.eq.s32.totalorder %s21, 1
    %p191 = scmp.ne.s32.totalorder %s186, %s188
    %p192 = scmp.eq.s32.totalorder %s21, 0
    %p193 = por %p191, %p192
    %p194 = scmp.ne.s32.totalorder %s186, %s188
    %p195 = scmp.eq.s32.totalorder %s26, 1
    %p196 = por %p194, %p195
    %p197 = scmp.ne.s32.totalorder %s188, %s189
    %p198 = scmp.eq.s32.totalorder %s26, 0
    %p199 = por %p197, %p198
    %p200 = scmp.ne.s32.totalorder %s188, %s189
    %p201 = scmp.eq.s32.totalorder %s27, 1
    %p202 = por %p200, %p201
    %p204 = scmp.ne.s32.totalorder %s189, %s203
    %p205 = scmp.eq.s32.totalorder %s27, 0
    %p206 = por %p204, %p205
    %s208 = sadd.s32 %s207, 1
    %p211 = scmp.eq.s32.totalorder %s21, 1
    %p212 = scmp.ne.s32.totalorder %s207, %s209
    %p213 = scmp.eq.s32.totalorder %s21, 0
    %p214 = por %p212, %p213
    %p215 = scmp.ne.s32.totalorder %s207, %s209
    %p216 = scmp.eq.s32.totalorder %s26, 1
    %p217 = por %p215, %p216
    %p218 = scmp.ne.s32.totalorder %s209, %s210
    %p219 = scmp.eq.s32.totalorder %s26, 0
    %p220 = por %p218, %p219
    %p221 = scmp.ne.s32.totalorder %s209, %s210
    %p222 = scmp.eq.s32.totalorder %s27, 1
    %p223 = por %p221, %p222
    %p225 = scmp.ne.s32.totalorder %s210, %s224
    %p226 = scmp.eq.s32.totalorder %s27, 0
    %p227 = por %p225, %p226
    %s229 = sadd.s32 %s228, 1
    %p232 = scmp.eq.s32.totalorder %s21, 1
    %p233 = scmp.ne.s32.totalorder %s228, %s230
    %p234 = scmp.eq.s32.totalorder %s21, 0
    %p235 = por %p233, %p234
    %p236 = scmp.ne.s32.totalorder %s228, %s230
    %p237 = scmp.eq.s32.totalorder %s26, 1
    %p238 = por %p236, %p237
    %p239 = scmp.ne.s32.totalorder %s230, %s231
    %p240 = scmp.eq.s32.totalorder %s26, 0
    %p241 = por %p239, %p240
    %p242 = scmp.ne.s32.totalorder %s230, %s231
    %p243 = scmp.eq.s32.totalorder %s27, 1
    %p244 = por %p242, %p243
    %p246 = scmp.ne.s32.totalorder %s231, %s245
    %p247 = scmp.eq.s32.totalorder %s27, 0
    %p248 = por %p246, %p247
    %s250 = sadd.s32 %s249, 1
    %p253 = scmp.eq.s32.totalorder %s21, 1
    %p254 = scmp.ne.s32.totalorder %s249, %s251
    %p255 = scmp.eq.s32.totalorder %s21, 0
    %p256 = por %p254, %p255
    %p257 = scmp.ne.s32.totalorder %s249, %s251
    %p258 = scmp.eq.s32.totalorder %s26, 1
    %p259 = por %p257, %p258
    %p260 = scmp.ne.s32.totalorder %s251, %s252
    %p261 = scmp.eq.s32.totalorder %s26, 0
    %p262 = por %p260, %p261
    %p263 = scmp.ne.s32.totalorder %s251, %s252
    %p264 = scmp.eq.s32.totalorder %s27, 1
    %p265 = por %p263, %p264
    %p267 = scmp.ne.s32.totalorder %s252, %s266
    %p268 = scmp.eq.s32.totalorder %s27, 0
    %p269 = por %p267, %p268
    %s271 = sadd.s32 %s270, 1
    %p274 = scmp.eq.s32.totalorder %s21, 1
    %p275 = scmp.ne.s32.totalorder %s270, %s272
    %p276 = scmp.eq.s32.totalorder %s21, 0
    %p277 = por %p275, %p276
    %p278 = scmp.ne.s32.totalorder %s270, %s272
    %p279 = scmp.eq.s32.totalorder %s26, 1
    %p280 = por %p278, %p279
    %p281 = scmp.ne.s32.totalorder %s272, %s273
    %p282 = scmp.eq.s32.totalorder %s26, 0
    %p283 = por %p281, %p282
    %p284 = scmp.ne.s32.totalorder %s272, %s273
    %p285 = scmp.eq.s32.totalorder %s27, 1
    %p286 = por %p284, %p285
    %p288 = scmp.ne.s32.totalorder %s273, %s287
    %p289 = scmp.eq.s32.totalorder %s27, 0
    %p290 = por %p288, %p289
    %s292 = sadd.s32 %s291, 1
    %p295 = scmp.eq.s32.totalorder %s21, 1
    %p296 = scmp.ne.s32.totalorder %s291, %s293
    %p297 = scmp.eq.s32.totalorder %s21, 0
    %p298 = por %p296, %p297
    %p299 = scmp.ne.s32.totalorder %s291, %s293
    %p300 = scmp.eq.s32.totalorder %s26, 1
    %p301 = por %p299, %p300
    %p302 = scmp.ne.s32.totalorder %s293, %s294
    %p303 = scmp.eq.s32.totalorder %s26, 0
    %p304 = por %p302, %p303
    %p305 = scmp.ne.s32.totalorder %s293, %s294
    %p306 = scmp.eq.s32.totalorder %s27, 1
    %p307 = por %p305, %p306
    %p309 = scmp.ne.s32.totalorder %s294, %s308
    %p310 = scmp.eq.s32.totalorder %s27, 0
    %p311 = por %p309, %p310
    %s313 = sadd.s32 %s312, 1
    %p316 = scmp.eq.s32.totalorder %s21, 1
    %p317 = scmp.ne.s32.totalorder %s312, %s314
    %p318 = scmp.eq.s32.totalorder %s21, 0
    %p319 = por %p317, %p318
    %p320 = scmp.ne.s32.totalorder %s312, %s314
    %p321 = scmp.eq.s32.totalorder %s26, 1
    %p322 = por %p320, %p321
    %p323 = scmp.ne.s32.totalorder %s314, %s315
    %p324 = scmp.eq.s32.totalorder %s26, 0
    %p325 = por %p323, %p324
    %p326 = scmp.ne.s32.totalorder %s314, %s315
    %p327 = scmp.eq.s32.totalorder %s27, 1
    %p328 = por %p326, %p327
    %p330 = scmp.ne.s32.totalorder %s315, %s329
    %p331 = scmp.eq.s32.totalorder %s27, 0
    %p332 = por %p330, %p331
    %s334 = sadd.s32 %s333, 1
    %p337 = scmp.eq.s32.totalorder %s21, 1
    %p338 = scmp.ne.s32.totalorder %s333, %s335
    %p339 = scmp.eq.s32.totalorder %s21, 0
    %p340 = por %p338, %p339
    %p341 = scmp.ne.s32.totalorder %s333, %s335
    %p342 = scmp.eq.s32.totalorder %s26, 1
    %p343 = por %p341, %p342
    %p344 = scmp.ne.s32.totalorder %s335, %s336
    %p345 = scmp.eq.s32.totalorder %s26, 0
    %p346 = por %p344, %p345
    %p347 = scmp.ne.s32.totalorder %s335, %s336
    %p348 = scmp.eq.s32.totalorder %s27, 1
    %p349 = por %p347, %p348
    %p351 = scmp.ne.s32.totalorder %s336, %s350
    %p352 = scmp.eq.s32.totalorder %s27, 0
    %p353 = por %p351, %p352
    %s354 = ssub.s32 %s21, %s28
    %p355 = scmp.eq.s32.totalorder %s354, 0
    %s357 = sadd.s32 %s356, 1
    %s358 = scalar_select %p355, %s356, %s357
    %p361 = pneg %p355
    %p362 = scmp.eq.s32.totalorder %s21, 1
    %p363 = por %p361, %p362
    %p364 = scmp.ne.s32.totalorder %s356, %s359
    %p365 = scmp.eq.s32.totalorder %s21, 0
    %p366 = por %p364, %p365
    %p367 = scmp.ne.s32.totalorder %s356, %s359
    %p368 = scmp.eq.s32.totalorder %s26, 1
    %p369 = por %p367, %p368
    %p370 = scmp.ne.s32.totalorder %s359, %s360
    %p371 = scmp.eq.s32.totalorder %s26, 0
    %p372 = por %p370, %p371
    %p373 = scmp.ne.s32.totalorder %s359, %s360
    %p374 = scmp.eq.s32.totalorder %s27, 1
    %p375 = por %p373, %p374
    %p377 = scmp.ne.s32.totalorder %s360, %s376
    %p378 = scmp.eq.s32.totalorder %s27, 0
    %p379 = por %p377, %p378
    %p380 = scmp.le.s32.totalorder 1, %s21
    %p381 = scmp.lt.s32.totalorder %s21, 3
    %p382 = pnand %p380, %p381
    %p383 = pneg %p382
    // Predicated region
    $region9: #{ltc_cell_forward.1} parent=5 // pred_check
      _
    $region10: #{ltc_cell_forward.1} parent=5 // pred_check_branch
      %385 = sbr.rel (%p382) target = $region12
    $region11: #{ltc_cell_forward.1} parent=5 // pred_region
      %s386 = ssub.s32 %s21, 1
      // Predicated region
      $region13: #{ltc_cell_forward.1} parent=11 // pred_check
        %p387 = pneg %p94
      $region14: #{ltc_cell_forward.1} parent=11 // pred_check_branch
        %389 = sbr.rel (%p387) target = $region16
      $region15: #{ltc_cell_forward.1} parent=11 // pred_region
        _
      $region16: #{ltc_cell_forward.1} parent=11 // pred_fallthru
        _
      // Predicated region
      $region17: #{ltc_cell_forward.1} parent=11 // pred_check
        %p390 = pneg %p115
      $region18: #{ltc_cell_forward.1} parent=11 // pred_check_branch
        %392 = sbr.rel (%p390) target = $region20
      $region19: #{ltc_cell_forward.1} parent=11 // pred_region
        _
      $region20: #{ltc_cell_forward.1} parent=11 // pred_fallthru
        _
      // Predicated region
      $region21: #{ltc_cell_forward.1} parent=11 // pred_check
        %p393 = pneg %p136
      $region22: #{ltc_cell_forward.1} parent=11 // pred_check_branch
        %395 = sbr.rel (%p393) target = $region24
      $region23: #{ltc_cell_forward.1} parent=11 // pred_region
        _
      $region24: #{ltc_cell_forward.1} parent=11 // pred_fallthru
        _
      // Predicated region
      $region25: #{ltc_cell_forward.1} parent=11 // pred_check
        %p396 = pneg %p157
      $region26: #{ltc_cell_forward.1} parent=11 // pred_check_branch
        %398 = sbr.rel (%p396) target = $region28
      $region27: #{ltc_cell_forward.1} parent=11 // pred_region
        _
      $region28: #{ltc_cell_forward.1} parent=11 // pred_fallthru
        _
      // Predicated region
      $region29: #{ltc_cell_forward.1} parent=11 // pred_check
        %p399 = pneg %p178
      $region30: #{ltc_cell_forward.1} parent=11 // pred_check_branch
        %401 = sbr.rel (%p399) target = $region32
      $region31: #{ltc_cell_forward.1} parent=11 // pred_region
        _
      $region32: #{ltc_cell_forward.1} parent=11 // pred_fallthru
        _
      // Predicated region
      $region33: #{ltc_cell_forward.1} parent=11 // pred_check
        %p402 = pneg %p199
      $region34: #{ltc_cell_forward.1} parent=11 // pred_check_branch
        %404 = sbr.rel (%p402) target = $region36
      $region35: #{ltc_cell_forward.1} parent=11 // pred_region
        _
      $region36: #{ltc_cell_forward.1} parent=11 // pred_fallthru
        _
      // Predicated region
      $region37: #{ltc_cell_forward.1} parent=11 // pred_check
        %p405 = pneg %p220
      $region38: #{ltc_cell_forward.1} parent=11 // pred_check_branch
        %407 = sbr.rel (%p405) target = $region40
      $region39: #{ltc_cell_forward.1} parent=11 // pred_region
        _
      $region40: #{ltc_cell_forward.1} parent=11 // pred_fallthru
        _
      // Predicated region
      $region41: #{ltc_cell_forward.1} parent=11 // pred_check
        %p408 = pneg %p241
      $region42: #{ltc_cell_forward.1} parent=11 // pred_check_branch
        %410 = sbr.rel (%p408) target = $region44
      $region43: #{ltc_cell_forward.1} parent=11 // pred_region
        _
      $region44: #{ltc_cell_forward.1} parent=11 // pred_fallthru
        _
      // Predicated region
      $region45: #{ltc_cell_forward.1} parent=11 // pred_check
        %p411 = pneg %p262
      $region46: #{ltc_cell_forward.1} parent=11 // pred_check_branch
        %413 = sbr.rel (%p411) target = $region48
      $region47: #{ltc_cell_forward.1} parent=11 // pred_region
        _
      $region48: #{ltc_cell_forward.1} parent=11 // pred_fallthru
        _
      // Predicated region
      $region49: #{ltc_cell_forward.1} parent=11 // pred_check
        %p414 = pneg %p283
      $region50: #{ltc_cell_forward.1} parent=11 // pred_check_branch
        %416 = sbr.rel (%p414) target = $region52
      $region51: #{ltc_cell_forward.1} parent=11 // pred_region
        _
      $region52: #{ltc_cell_forward.1} parent=11 // pred_fallthru
        _
      // Predicated region
      $region53: #{ltc_cell_forward.1} parent=11 // pred_check
        %p417 = pneg %p304
      $region54: #{ltc_cell_forward.1} parent=11 // pred_check_branch
        %419 = sbr.rel (%p417) target = $region56
      $region55: #{ltc_cell_forward.1} parent=11 // pred_region
        _
      $region56: #{ltc_cell_forward.1} parent=11 // pred_fallthru
        _
      // Predicated region
      $region57: #{ltc_cell_forward.1} parent=11 // pred_check
        %p420 = pneg %p325
      $region58: #{ltc_cell_forward.1} parent=11 // pred_check_branch
        %422 = sbr.rel (%p420) target = $region60
      $region59: #{ltc_cell_forward.1} parent=11 // pred_region
        _
      $region60: #{ltc_cell_forward.1} parent=11 // pred_fallthru
        _
      // Predicated region
      $region61: #{ltc_cell_forward.1} parent=11 // pred_check
        %p423 = pneg %p346
      $region62: #{ltc_cell_forward.1} parent=11 // pred_check_branch
        %425 = sbr.rel (%p423) target = $region64
      $region63: #{ltc_cell_forward.1} parent=11 // pred_region
        _
      $region64: #{ltc_cell_forward.1} parent=11 // pred_fallthru
        _
    $region12: #{ltc_cell_forward.1} parent=5 // pred_fallthru
      _
    %p426 = scmp.lt.s32.totalorder %s21, 2
    // Predicated region
    $region65: #{ltc_cell_forward.1} parent=5 // pred_check
      %p427 = pneg %p426
    $region66: #{ltc_cell_forward.1} parent=5 // pred_check_branch
      %429 = sbr.rel (%p427) target = $region68
    $region67: #{ltc_cell_forward.1} parent=5 // pred_region
      // Predicated region
      $region69: #{ltc_cell_forward.1} parent=67 // pred_check
        %p430 = pneg %p41
      $region70: #{ltc_cell_forward.1} parent=67 // pred_check_branch
        %432 = sbr.rel (%p430) target = $region72
      $region71: #{ltc_cell_forward.1} parent=67 // pred_region
        %p433 = scmp.lt.s32.totalorder %s21, 1
        %s434 = scalar_select %p433, %s21, 1
        %s435 = smul.addr %s434, 8
        %s436 = scalar_lea.vmem %s0, %s435
      $region72: #{ltc_cell_forward.1} parent=67 // pred_fallthru
        _
      // Predicated region
      $region73: #{ltc_cell_forward.1} parent=67 // pred_check
        %p437 = pneg %p67
      $region74: #{ltc_cell_forward.1} parent=67 // pred_check_branch
        %439 = sbr.rel (%p437) target = $region76
      $region75: #{ltc_cell_forward.1} parent=67 // pred_region
        %p440 = scmp.lt.s32.totalorder %s21, 1
        %s441 = scalar_select %p440, %s21, 1
        %s442 = smul.addr %s441, 8
        %s443 = scalar_lea.vmem %s1, %s442
      $region76: #{ltc_cell_forward.1} parent=67 // pred_fallthru
        _
    $region68: #{ltc_cell_forward.1} parent=5 // pred_fallthru
      _
    %p444 = scmp.le.s32.totalorder 1, %s21
    %p445 = scmp.lt.s32.totalorder %s21, 3
    %p446 = pnand %p444, %p445
    %p447 = pneg %p446
    // Predicated region
    $region77: #{ltc_cell_forward.1} parent=5 // pred_check
      _
    $region78: #{ltc_cell_forward.1} parent=5 // pred_check_branch
      %449 = sbr.rel (%p446) target = $region80
    $region79: #{ltc_cell_forward.1} parent=5 // pred_region
      %s450 = ssub.s32 %s21, 1
      %p451 = scmp.lt.s32.totalorder %s26, 1
      %s452 = scalar_select %p451, %s26, 1
      %s453 = smul.addr %s452, 8
      %s454 = scalar_lea.vmem %s0, %s453
      %p455 = pneg %p47
      %p456 = pneg %p44
      %p457 = scmp.lt.s32.totalorder %s26, 1
      %s458 = scalar_select %p457, %s26, 1
      %s459 = smul.addr %s458, 8
      %s460 = scalar_lea.vmem %s1, %s459
      %p461 = pneg %p73
      %p462 = pneg %p70
      %p463 = pneg %p94
      %p464 = pneg %p91
      %p465 = pneg %p115
      %p466 = pneg %p112
      %p467 = pneg %p136
      %p468 = pneg %p133
      %p469 = pneg %p157
      %p470 = pneg %p154
      %p471 = pneg %p178
      %p472 = pneg %p175
      %p473 = pneg %p199
      %p474 = pneg %p196
      %p475 = pneg %p220
      %p476 = pneg %p217
      %p477 = pneg %p241
      %p478 = pneg %p238
      %p479 = pneg %p262
      %p480 = pneg %p259
      %p481 = pneg %p283
      %p482 = pneg %p280
      %p483 = pneg %p304
      %p484 = pneg %p301
      %p485 = pneg %p325
      %p486 = pneg %p322
      %p487 = pneg %p346
      %p488 = pneg %p343
      %p489 = pneg %p372
      %p490 = pneg %p369
      %p491 = scmp.lt.s32.totalorder %s26, 1
      %s492 = scalar_select %p491, %s26, 1
      %s493 = smul.addr %s492, 8
      %s494 = scalar_lea.vmem %s15, %s493
      %p495 = scmp.lt.s32.totalorder %s26, 1
      %s496 = scalar_select %p495, %s26, 1
      %s497 = smul.addr %s496, 8
      %s498 = scalar_lea.vmem %s0, %s497
      %p499 = scmp.lt.s32.totalorder %s26, 1
      %s500 = scalar_select %p499, %s26, 1
      %s501 = smul.addr %s500, 8
      %s502 = scalar_lea.vmem %s1, %s501
      %p503 = scmp.lt.s32.totalorder %s26, 1
      %s504 = scalar_select %p503, %s26, 1
      %s505 = smul.addr %s504, 8
      %s506 = scalar_lea.vmem %s15, %s505
      %v507 = vld [vmem:[%s14] sm:$0x1]
      %v508 = vld [vmem:[%s13] sm:$0x1]
      %v509 = vld [vmem:[%s12] sm:$0x1]
      %v510 = vmul.f32 %v508, %v509
      %v511 = vadd.f32 %v507, %v508
      %v512 = vld [vmem:[%s2] sm:$0x1]
      %v513 = vld [vmem:[%s3] sm:$0x1]
      %v514 = vld [vmem:[%s498] sm:$0xff]
      %v516 = vlaneseq
      %v517 = vshrl.u32 %v516, 7
      %v518 = vsub.s32 0, %v517
      %v519 = vrot.slane %v512, %v518
      %v521 = vmul.f32 %v514, %v519
      %v523 = vlaneseq
      %v524 = vshrl.u32 %v523, 7
      %v525 = vsub.s32 0, %v524
      %v526 = vrot.slane %v513, %v525
      %v528 = vadd.f32 %v521, %v526
      %v529 = vld [vmem:[%s502] sm:$0xff]
      %v531 = vlaneseq
      %v532 = vshrl.u32 %v531, 7
      %v533 = vsub.s32 0, %v532
      %v534 = vrot.slane %v507, %v533
      %v537 = vlaneseq
      %v538 = vshrl.u32 %v537, 7
      %v539 = vsub.s32 0, %v538
      %v540 = vrot.slane %v510, %v539
      %v543 = vlaneseq
      %v544 = vshrl.u32 %v543, 7
      %v545 = vsub.s32 0, %v544
      %v546 = vrot.slane %v511, %v545
      %v548 = vld [vmem:[%s6] sm:$0xff]
      %v549 = vld [vmem:[%s5] sm:$0xff]
      %v550 = vld [vmem:[%s4] sm:$0xff]
      %v551 = vld [vmem:[%s7] sm:$0xff]
      %v552 = vlaneseq
      %v553 = vshrl.u32 %v552, 7
      %v554 = vsub.s32 0, %v553
      %v555 = vrot.slane %v528, %v554
      %557 = vbcast.lane.b32.xlu0 %v555, 256
      %v558 = vpop.permute.xlu0 %557
      %v559 = vlaneseq
      %v560 = vshrl.u32 %v559, 7
      %v561 = vsub.s32 1, %v560
      %v562 = vrot.slane %v528, %v561
      %564 = vbcast.lane.b32.xlu0 %v562, 256
      %v565 = vpop.permute.xlu0 %564
      %v566 = vlaneseq
      %v567 = vshrl.u32 %v566, 7
      %v568 = vsub.s32 2, %v567
      %v569 = vrot.slane %v528, %v568
      %571 = vbcast.lane.b32.xlu0 %v569, 256
      %v572 = vpop.permute.xlu0 %571
      %v573 = vlaneseq
      %v574 = vshrl.u32 %v573, 7
      %v575 = vsub.s32 3, %v574
      %v576 = vrot.slane %v528, %v575
      %578 = vbcast.lane.b32.xlu0 %v576, 256
      %v579 = vpop.permute.xlu0 %578
      %v580 = vlaneseq
      %v581 = vshrl.u32 %v580, 7
      %v582 = vsub.s32 4, %v581
      %v583 = vrot.slane %v528, %v582
      %585 = vbcast.lane.b32.xlu0 %v583, 256
      %v586 = vpop.permute.xlu0 %585
      %v587 = vlaneseq
      %v588 = vshrl.u32 %v587, 7
      %v589 = vsub.s32 5, %v588
      %v590 = vrot.slane %v528, %v589
      %592 = vbcast.lane.b32.xlu0 %v590, 256
      %v593 = vpop.permute.xlu0 %592
      %v594 = vlaneseq
      %v595 = vshrl.u32 %v594, 7
      %v596 = vsub.s32 6, %v595
      %v597 = vrot.slane %v528, %v596
      %599 = vbcast.lane.b32.xlu0 %v597, 256
      %v600 = vpop.permute.xlu0 %599
      %v601 = vlaneseq
      %v602 = vshrl.u32 %v601, 7
      %v603 = vsub.s32 7, %v602
      %v604 = vrot.slane %v528, %v603
      %606 = vbcast.lane.b32.xlu0 %v604, 256
      %v607 = vpop.permute.xlu0 %606
      %v608 = vsub.f32 %v558, %v550
      %v609 = vsub.f32 %v565, %v550
      %v610 = vsub.f32 %v572, %v550
      %v611 = vsub.f32 %v579, %v550
      %v612 = vsub.f32 %v586, %v550
      %v613 = vsub.f32 %v593, %v550
      %v614 = vsub.f32 %v600, %v550
      %v615 = vsub.f32 %v607, %v550
      %v616 = vmul.f32 %v549, %v608
      %v617 = vmul.f32 %v549, %v609
      %v618 = vmul.f32 %v549, %v610
      %v619 = vmul.f32 %v549, %v611
      %v620 = vmul.f32 %v549, %v612
      %v621 = vmul.f32 %v549, %v613
      %v622 = vmul.f32 %v549, %v614
      %v623 = vmul.f32 %v549, %v615
      %v624 = vmul.f32 %v616, 0.5
      %v625 = vmul.f32 %v617, 0.5
      %v626 = vmul.f32 %v618, 0.5
      %v627 = vmul.f32 %v619, 0.5
      %v628 = vmul.f32 %v620, 0.5
      %v629 = vmul.f32 %v621, 0.5
      %v630 = vmul.f32 %v622, 0.5
      %v631 = vmul.f32 %v623, 0.5
      %v632 = vtanh.pop %v624
      %v633 = vtanh.pop %v625
      %v634 = vtanh.pop %v626
      %v635 = vtanh.pop %v627
      %v636 = vtanh.pop %v628
      %v637 = vtanh.pop %v629
      %v638 = vtanh.pop %v630
      %v639 = vtanh.pop %v631
      %v640 = vmul.f32 %v632, 0.5
      %v641 = vmul.f32 %v633, 0.5
      %v642 = vmul.f32 %v634, 0.5
      %v643 = vmul.f32 %v635, 0.5
      %v644 = vmul.f32 %v636, 0.5
      %v645 = vmul.f32 %v637, 0.5
      %v646 = vmul.f32 %v638, 0.5
      %v647 = vmul.f32 %v639, 0.5
      %v648 = vadd.f32 %v640, 0.5
      %v649 = vadd.f32 %v641, 0.5
      %v650 = vadd.f32 %v642, 0.5
      %v651 = vadd.f32 %v643, 0.5
      %v652 = vadd.f32 %v644, 0.5
      %v653 = vadd.f32 %v645, 0.5
      %v654 = vadd.f32 %v646, 0.5
      %v655 = vadd.f32 %v647, 0.5
      %v656 = vmul.f32 %v548, %v648
      %v657 = vmul.f32 %v548, %v649
      %v658 = vmul.f32 %v548, %v650
      %v659 = vmul.f32 %v548, %v651
      %v660 = vmul.f32 %v548, %v652
      %v661 = vmul.f32 %v548, %v653
      %v662 = vmul.f32 %v548, %v654
      %v663 = vmul.f32 %v548, %v655
      %v664 = vrot.slane %v656, 4
      %v665 = vadd.f32 %v656, %v664
      %v666 = vrot.slane %v665, 2
      %v667 = vadd.f32 %v665, %v666
      %v668 = vrot.slane %v667, 1
      %v669 = vadd.f32 %v667, %v668
      %v670 = vrot.slane %v657, 4
      %v671 = vadd.f32 %v657, %v670
      %v672 = vrot.slane %v671, 2
      %v673 = vadd.f32 %v671, %v672
      %v674 = vrot.slane %v673, 1
      %v675 = vadd.f32 %v673, %v674
      %v676 = vrot.slane %v658, 4
      %v677 = vadd.f32 %v658, %v676
      %v678 = vrot.slane %v677, 2
      %v679 = vadd.f32 %v677, %v678
      %v680 = vrot.slane %v679, 1
      %v681 = vadd.f32 %v679, %v680
      %v682 = vrot.slane %v659, 4
      %v683 = vadd.f32 %v659, %v682
      %v684 = vrot.slane %v683, 2
      %v685 = vadd.f32 %v683, %v684
      %v686 = vrot.slane %v685, 1
      %v687 = vadd.f32 %v685, %v686
      %v688 = vrot.slane %v660, 4
      %v689 = vadd.f32 %v660, %v688
      %v690 = vrot.slane %v689, 2
      %v691 = vadd.f32 %v689, %v690
      %v692 = vrot.slane %v691, 1
      %v693 = vadd.f32 %v691, %v692
      %v694 = vrot.slane %v661, 4
      %v695 = vadd.f32 %v661, %v694
      %v696 = vrot.slane %v695, 2
      %v697 = vadd.f32 %v695, %v696
      %v698 = vrot.slane %v697, 1
      %v699 = vadd.f32 %v697, %v698
      %v700 = vrot.slane %v662, 4
      %v701 = vadd.f32 %v662, %v700
      %v702 = vrot.slane %v701, 2
      %v703 = vadd.f32 %v701, %v702
      %v704 = vrot.slane %v703, 1
      %v705 = vadd.f32 %v703, %v704
      %v706 = vrot.slane %v663, 4
      %v707 = vadd.f32 %v663, %v706
      %v708 = vrot.slane %v707, 2
      %v709 = vadd.f32 %v707, %v708
      %v710 = vrot.slane %v709, 1
      %v711 = vadd.f32 %v709, %v710
      %v712 = vadd.f32 %v669, 0.0
      %v713 = vadd.f32 %v675, 0.0
      %v714 = vadd.f32 %v681, 0.0
      %v715 = vadd.f32 %v687, 0.0
      %v716 = vadd.f32 %v693, 0.0
      %v717 = vadd.f32 %v699, 0.0
      %v718 = vadd.f32 %v705, 0.0
      %v719 = vadd.f32 %v711, 0.0
      %v720 = vmul.f32 %v551, %v648
      %v721 = vmul.f32 %v551, %v649
      %v722 = vmul.f32 %v551, %v650
      %v723 = vmul.f32 %v551, %v651
      %v724 = vmul.f32 %v551, %v652
      %v725 = vmul.f32 %v551, %v653
      %v726 = vmul.f32 %v551, %v654
      %v727 = vmul.f32 %v551, %v655
      %v728 = vrot.slane %v720, 4
      %v729 = vadd.f32 %v720, %v728
      %v730 = vrot.slane %v729, 2
      %v731 = vadd.f32 %v729, %v730
      %v732 = vrot.slane %v731, 1
      %v733 = vadd.f32 %v731, %v732
      %v734 = vrot.slane %v721, 4
      %v735 = vadd.f32 %v721, %v734
      %v736 = vrot.slane %v735, 2
      %v737 = vadd.f32 %v735, %v736
      %v738 = vrot.slane %v737, 1
      %v739 = vadd.f32 %v737, %v738
      %v740 = vrot.slane %v722, 4
      %v741 = vadd.f32 %v722, %v740
      %v742 = vrot.slane %v741, 2
      %v743 = vadd.f32 %v741, %v742
      %v744 = vrot.slane %v743, 1
      %v745 = vadd.f32 %v743, %v744
      %v746 = vrot.slane %v723, 4
      %v747 = vadd.f32 %v723, %v746
      %v748 = vrot.slane %v747, 2
      %v749 = vadd.f32 %v747, %v748
      %v750 = vrot.slane %v749, 1
      %v751 = vadd.f32 %v749, %v750
      %v752 = vrot.slane %v724, 4
      %v753 = vadd.f32 %v724, %v752
      %v754 = vrot.slane %v753, 2
      %v755 = vadd.f32 %v753, %v754
      %v756 = vrot.slane %v755, 1
      %v757 = vadd.f32 %v755, %v756
      %v758 = vrot.slane %v725, 4
      %v759 = vadd.f32 %v725, %v758
      %v760 = vrot.slane %v759, 2
      %v761 = vadd.f32 %v759, %v760
      %v762 = vrot.slane %v761, 1
      %v763 = vadd.f32 %v761, %v762
      %v764 = vrot.slane %v726, 4
      %v765 = vadd.f32 %v726, %v764
      %v766 = vrot.slane %v765, 2
      %v767 = vadd.f32 %v765, %v766
      %v768 = vrot.slane %v767, 1
      %v769 = vadd.f32 %v767, %v768
      %v770 = vrot.slane %v727, 4
      %v771 = vadd.f32 %v727, %v770
      %v772 = vrot.slane %v771, 2
      %v773 = vadd.f32 %v771, %v772
      %v774 = vrot.slane %v773, 1
      %v775 = vadd.f32 %v773, %v774
      %v776 = vadd.f32 %v733, 0.0
      %v777 = vadd.f32 %v739, 0.0
      %v778 = vadd.f32 %v745, 0.0
      %v779 = vadd.f32 %v751, 0.0
      %v780 = vadd.f32 %v757, 0.0
      %v781 = vadd.f32 %v763, 0.0
      %v782 = vadd.f32 %v769, 0.0
      %v783 = vadd.f32 %v775, 0.0
      %v784 = vld [vmem:[%s6 + $0x8] sm:$0xff]
      %v785 = vld [vmem:[%s5 + $0x8] sm:$0xff]
      %v786 = vld [vmem:[%s4 + $0x8] sm:$0xff]
      %v787 = vld [vmem:[%s7 + $0x8] sm:$0xff]
      %s789 = sor.u32 256, 8
      %790 = vbcast.lane.b32.xlu0 %v555, %s789
      %v791 = vpop.permute.xlu0 %790
      %s793 = sor.u32 256, 8
      %794 = vbcast.lane.b32.xlu0 %v562, %s793
      %v795 = vpop.permute.xlu0 %794
      %s797 = sor.u32 256, 8
      %798 = vbcast.lane.b32.xlu0 %v569, %s797
      %v799 = vpop.permute.xlu0 %798
      %s801 = sor.u32 256, 8
      %802 = vbcast.lane.b32.xlu0 %v576, %s801
      %v803 = vpop.permute.xlu0 %802
      %s805 = sor.u32 256, 8
      %806 = vbcast.lane.b32.xlu0 %v583, %s805
      %v807 = vpop.permute.xlu0 %806
      %s809 = sor.u32 256, 8
      %810 = vbcast.lane.b32.xlu0 %v590, %s809
      %v811 = vpop.permute.xlu0 %810
      %s813 = sor.u32 256, 8
      %814 = vbcast.lane.b32.xlu0 %v597, %s813
      %v815 = vpop.permute.xlu0 %814
      %s817 = sor.u32 256, 8
      %818 = vbcast.lane.b32.xlu0 %v604, %s817
      %v819 = vpop.permute.xlu0 %818
      %v820 = vsub.f32 %v791, %v786
      %v821 = vsub.f32 %v795, %v786
      %v822 = vsub.f32 %v799, %v786
      %v823 = vsub.f32 %v803, %v786
      %v824 = vsub.f32 %v807, %v786
      %v825 = vsub.f32 %v811, %v786
      %v826 = vsub.f32 %v815, %v786
      %v827 = vsub.f32 %v819, %v786
      %v828 = vmul.f32 %v785, %v820
      %v829 = vmul.f32 %v785, %v821
      %v830 = vmul.f32 %v785, %v822
      %v831 = vmul.f32 %v785, %v823
      %v832 = vmul.f32 %v785, %v824
      %v833 = vmul.f32 %v785, %v825
      %v834 = vmul.f32 %v785, %v826
      %v835 = vmul.f32 %v785, %v827
      %v836 = vmul.f32 %v828, 0.5
      %v837 = vmul.f32 %v829, 0.5
      %v838 = vmul.f32 %v830, 0.5
      %v839 = vmul.f32 %v831, 0.5
      %v840 = vmul.f32 %v832, 0.5
      %v841 = vmul.f32 %v833, 0.5
      %v842 = vmul.f32 %v834, 0.5
      %v843 = vmul.f32 %v835, 0.5
      %v844 = vtanh.pop %v836
      %v845 = vtanh.pop %v837
      %v846 = vtanh.pop %v838
      %v847 = vtanh.pop %v839
      %v848 = vtanh.pop %v840
      %v849 = vtanh.pop %v841
      %v850 = vtanh.pop %v842
      %v851 = vtanh.pop %v843
      %v852 = vmul.f32 %v844, 0.5
      %v853 = vmul.f32 %v845, 0.5
      %v854 = vmul.f32 %v846, 0.5
      %v855 = vmul.f32 %v847, 0.5
      %v856 = vmul.f32 %v848, 0.5
      %v857 = vmul.f32 %v849, 0.5
      %v858 = vmul.f32 %v850, 0.5
      %v859 = vmul.f32 %v851, 0.5
      %v860 = vadd.f32 %v852, 0.5
      %v861 = vadd.f32 %v853, 0.5
      %v862 = vadd.f32 %v854, 0.5
      %v863 = vadd.f32 %v855, 0.5
      %v864 = vadd.f32 %v856, 0.5
      %v865 = vadd.f32 %v857, 0.5
      %v866 = vadd.f32 %v858, 0.5
      %v867 = vadd.f32 %v859, 0.5
      %v868 = vmul.f32 %v784, %v860
      %v869 = vmul.f32 %v784, %v861
      %v870 = vmul.f32 %v784, %v862
      %v871 = vmul.f32 %v784, %v863
      %v872 = vmul.f32 %v784, %v864
      %v873 = vmul.f32 %v784, %v865
      %v874 = vmul.f32 %v784, %v866
      %v875 = vmul.f32 %v784, %v867
      %v876 = vrot.slane %v868, 4
      %v877 = vadd.f32 %v868, %v876
      %v878 = vrot.slane %v877, 2
      %v879 = vadd.f32 %v877, %v878
      %v880 = vrot.slane %v879, 1
      %v881 = vadd.f32 %v879, %v880
      %v882 = vrot.slane %v869, 4
      %v883 = vadd.f32 %v869, %v882
      %v884 = vrot.slane %v883, 2
      %v885 = vadd.f32 %v883, %v884
      %v886 = vrot.slane %v885, 1
      %v887 = vadd.f32 %v885, %v886
      %v888 = vrot.slane %v870, 4
      %v889 = vadd.f32 %v870, %v888
      %v890 = vrot.slane %v889, 2
      %v891 = vadd.f32 %v889, %v890
      %v892 = vrot.slane %v891, 1
      %v893 = vadd.f32 %v891, %v892
      %v894 = vrot.slane %v871, 4
      %v895 = vadd.f32 %v871, %v894
      %v896 = vrot.slane %v895, 2
      %v897 = vadd.f32 %v895, %v896
      %v898 = vrot.slane %v897, 1
      %v899 = vadd.f32 %v897, %v898
      %v900 = vrot.slane %v872, 4
      %v901 = vadd.f32 %v872, %v900
      %v902 = vrot.slane %v901, 2
      %v903 = vadd.f32 %v901, %v902
      %v904 = vrot.slane %v903, 1
      %v905 = vadd.f32 %v903, %v904
      %v906 = vrot.slane %v873, 4
      %v907 = vadd.f32 %v873, %v906
      %v908 = vrot.slane %v907, 2
      %v909 = vadd.f32 %v907, %v908
      %v910 = vrot.slane %v909, 1
      %v911 = vadd.f32 %v909, %v910
      %v912 = vrot.slane %v874, 4
      %v913 = vadd.f32 %v874, %v912
      %v914 = vrot.slane %v913, 2
      %v915 = vadd.f32 %v913, %v914
      %v916 = vrot.slane %v915, 1
      %v917 = vadd.f32 %v915, %v916
      %v918 = vrot.slane %v875, 4
      %v919 = vadd.f32 %v875, %v918
      %v920 = vrot.slane %v919, 2
      %v921 = vadd.f32 %v919, %v920
      %v922 = vrot.slane %v921, 1
      %v923 = vadd.f32 %v921, %v922
      %v924 = vadd.f32 %v712, %v881
      %v925 = vadd.f32 %v713, %v887
      %v926 = vadd.f32 %v714, %v893
      %v927 = vadd.f32 %v715, %v899
      %v928 = vadd.f32 %v716, %v905
      %v929 = vadd.f32 %v717, %v911
      %v930 = vadd.f32 %v718, %v917
      %v931 = vadd.f32 %v719, %v923
      %v932 = vmul.f32 %v787, %v860
      %v933 = vmul.f32 %v787, %v861
      %v934 = vmul.f32 %v787, %v862
      %v935 = vmul.f32 %v787, %v863
      %v936 = vmul.f32 %v787, %v864
      %v937 = vmul.f32 %v787, %v865
      %v938 = vmul.f32 %v787, %v866
      %v939 = vmul.f32 %v787, %v867
      %v940 = vrot.slane %v932, 4
      %v941 = vadd.f32 %v932, %v940
      %v942 = vrot.slane %v941, 2
      %v943 = vadd.f32 %v941, %v942
      %v944 = vrot.slane %v943, 1
      %v945 = vadd.f32 %v943, %v944
      %v946 = vrot.slane %v933, 4
      %v947 = vadd.f32 %v933, %v946
      %v948 = vrot.slane %v947, 2
      %v949 = vadd.f32 %v947, %v948
      %v950 = vrot.slane %v949, 1
      %v951 = vadd.f32 %v949, %v950
      %v952 = vrot.slane %v934, 4
      %v953 = vadd.f32 %v934, %v952
      %v954 = vrot.slane %v953, 2
      %v955 = vadd.f32 %v953, %v954
      %v956 = vrot.slane %v955, 1
      %v957 = vadd.f32 %v955, %v956
      %v958 = vrot.slane %v935, 4
      %v959 = vadd.f32 %v935, %v958
      %v960 = vrot.slane %v959, 2
      %v961 = vadd.f32 %v959, %v960
      %v962 = vrot.slane %v961, 1
      %v963 = vadd.f32 %v961, %v962
      %v964 = vrot.slane %v936, 4
      %v965 = vadd.f32 %v936, %v964
      %v966 = vrot.slane %v965, 2
      %v967 = vadd.f32 %v965, %v966
      %v968 = vrot.slane %v967, 1
      %v969 = vadd.f32 %v967, %v968
      %v970 = vrot.slane %v937, 4
      %v971 = vadd.f32 %v937, %v970
      %v972 = vrot.slane %v971, 2
      %v973 = vadd.f32 %v971, %v972
      %v974 = vrot.slane %v973, 1
      %v975 = vadd.f32 %v973, %v974
      %v976 = vrot.slane %v938, 4
      %v977 = vadd.f32 %v938, %v976
      %v978 = vrot.slane %v977, 2
      %v979 = vadd.f32 %v977, %v978
      %v980 = vrot.slane %v979, 1
      %v981 = vadd.f32 %v979, %v980
      %v982 = vrot.slane %v939, 4
      %v983 = vadd.f32 %v939, %v982
      %v984 = vrot.slane %v983, 2
      %v985 = vadd.f32 %v983, %v984
      %v986 = vrot.slane %v985, 1
      %v987 = vadd.f32 %v985, %v986
      %v988 = vadd.f32 %v776, %v945
      %v989 = vadd.f32 %v777, %v951
      %v990 = vadd.f32 %v778, %v957
      %v991 = vadd.f32 %v779, %v963
      %v992 = vadd.f32 %v780, %v969
      %v993 = vadd.f32 %v781, %v975
      %v994 = vadd.f32 %v782, %v981
      %v995 = vadd.f32 %v783, %v987
      %vm1004 = vcmask 1041409
      %v1005 = vsel %vm1004, %v989, %v988
      %vm1006 = vcmask 1042434
      %v1007 = vsel %vm1006, %v990, %v1005
      %vm1008 = vcmask 1043459
      %v1009 = vsel %vm1008, %v991, %v1007
      %vm1010 = vcmask 1044484
      %v1011 = vsel %vm1010, %v992, %v1009
      %vm1012 = vcmask 1045509
      %v1013 = vsel %vm1012, %v993, %v1011
      %vm1014 = vcmask 1046534
      %v1015 = vsel %vm1014, %v994, %v1013
      %vm1016 = vcmask 1047559
      %v1017 = vsel %vm1016, %v995, %v1015
      %v1019 = vadd.f32 %v540, %v1017
      %v1028 = vsel %vm1004, %v925, %v924
      %v1029 = vsel %vm1006, %v926, %v1028
      %v1030 = vsel %vm1008, %v927, %v1029
      %v1031 = vsel %vm1010, %v928, %v1030
      %v1032 = vsel %vm1012, %v929, %v1031
      %v1033 = vsel %vm1014, %v930, %v1032
      %v1034 = vsel %vm1016, %v931, %v1033
      %v1036 = vadd.f32 %v546, %v1034
      %v1037 = vld [vmem:[%s10] sm:$0xff]
      %v1038 = vld [vmem:[%s9] sm:$0xff]
      %v1039 = vld [vmem:[%s8] sm:$0xff]
      %v1040 = vld [vmem:[%s11] sm:$0xff]
      %v1041 = vlaneseq
      %v1042 = vshrl.u32 %v1041, 7
      %v1043 = vsub.s32 0, %v1042
      %v1044 = vrot.slane %v529, %v1043
      %1046 = vbcast.lane.b32.xlu0 %v1044, 256
      %v1047 = vpop.permute.xlu0 %1046
      %v1048 = vlaneseq
      %v1049 = vshrl.u32 %v1048, 7
      %v1050 = vsub.s32 1, %v1049
      %v1051 = vrot.slane %v529, %v1050
      %1053 = vbcast.lane.b32.xlu0 %v1051, 256
      %v1054 = vpop.permute.xlu0 %1053
      %v1055 = vlaneseq
      %v1056 = vshrl.u32 %v1055, 7
      %v1057 = vsub.s32 2, %v1056
      %v1058 = vrot.slane %v529, %v1057
      %1060 = vbcast.lane.b32.xlu0 %v1058, 256
      %v1061 = vpop.permute.xlu0 %1060
      %v1062 = vlaneseq
      %v1063 = vshrl.u32 %v1062, 7
      %v1064 = vsub.s32 3, %v1063
      %v1065 = vrot.slane %v529, %v1064
      %1067 = vbcast.lane.b32.xlu0 %v1065, 256
      %v1068 = vpop.permute.xlu0 %1067
      %v1069 = vlaneseq
      %v1070 = vshrl.u32 %v1069, 7
      %v1071 = vsub.s32 4, %v1070
      %v1072 = vrot.slane %v529, %v1071
      %1074 = vbcast.lane.b32.xlu0 %v1072, 256
      %v1075 = vpop.permute.xlu0 %1074
      %v1076 = vlaneseq
      %v1077 = vshrl.u32 %v1076, 7
      %v1078 = vsub.s32 5, %v1077
      %v1079 = vrot.slane %v529, %v1078
      %1081 = vbcast.lane.b32.xlu0 %v1079, 256
      %v1082 = vpop.permute.xlu0 %1081
      %v1083 = vlaneseq
      %v1084 = vshrl.u32 %v1083, 7
      %v1085 = vsub.s32 6, %v1084
      %v1086 = vrot.slane %v529, %v1085
      %1088 = vbcast.lane.b32.xlu0 %v1086, 256
      %v1089 = vpop.permute.xlu0 %1088
      %v1090 = vlaneseq
      %v1091 = vshrl.u32 %v1090, 7
      %v1092 = vsub.s32 7, %v1091
      %v1093 = vrot.slane %v529, %v1092
      %1095 = vbcast.lane.b32.xlu0 %v1093, 256
      %v1096 = vpop.permute.xlu0 %1095
      %v1097 = vsub.f32 %v1047, %v1039
      %v1098 = vsub.f32 %v1054, %v1039
      %v1099 = vsub.f32 %v1061, %v1039
      %v1100 = vsub.f32 %v1068, %v1039
      %v1101 = vsub.f32 %v1075, %v1039
      %v1102 = vsub.f32 %v1082, %v1039
      %v1103 = vsub.f32 %v1089, %v1039
      %v1104 = vsub.f32 %v1096, %v1039
      %v1105 = vmul.f32 %v1038, %v1097
      %v1106 = vmul.f32 %v1038, %v1098
      %v1107 = vmul.f32 %v1038, %v1099
      %v1108 = vmul.f32 %v1038, %v1100
      %v1109 = vmul.f32 %v1038, %v1101
      %v1110 = vmul.f32 %v1038, %v1102
      %v1111 = vmul.f32 %v1038, %v1103
      %v1112 = vmul.f32 %v1038, %v1104
      %v1113 = vmul.f32 %v1105, 0.5
      %v1114 = vmul.f32 %v1106, 0.5
      %v1115 = vmul.f32 %v1107, 0.5
      %v1116 = vmul.f32 %v1108, 0.5
      %v1117 = vmul.f32 %v1109, 0.5
      %v1118 = vmul.f32 %v1110, 0.5
      %v1119 = vmul.f32 %v1111, 0.5
      %v1120 = vmul.f32 %v1112, 0.5
      %v1121 = vtanh.pop %v1113
      %v1122 = vtanh.pop %v1114
      %v1123 = vtanh.pop %v1115
      %v1124 = vtanh.pop %v1116
      %v1125 = vtanh.pop %v1117
      %v1126 = vtanh.pop %v1118
      %v1127 = vtanh.pop %v1119
      %v1128 = vtanh.pop %v1120
      %v1129 = vmul.f32 %v1121, 0.5
      %v1130 = vmul.f32 %v1122, 0.5
      %v1131 = vmul.f32 %v1123, 0.5
      %v1132 = vmul.f32 %v1124, 0.5
      %v1133 = vmul.f32 %v1125, 0.5
      %v1134 = vmul.f32 %v1126, 0.5
      %v1135 = vmul.f32 %v1127, 0.5
      %v1136 = vmul.f32 %v1128, 0.5
      %v1137 = vadd.f32 %v1129, 0.5
      %v1138 = vadd.f32 %v1130, 0.5
      %v1139 = vadd.f32 %v1131, 0.5
      %v1140 = vadd.f32 %v1132, 0.5
      %v1141 = vadd.f32 %v1133, 0.5
      %v1142 = vadd.f32 %v1134, 0.5
      %v1143 = vadd.f32 %v1135, 0.5
      %v1144 = vadd.f32 %v1136, 0.5
      %v1145 = vmul.f32 %v1037, %v1137
      %v1146 = vmul.f32 %v1037, %v1138
      %v1147 = vmul.f32 %v1037, %v1139
      %v1148 = vmul.f32 %v1037, %v1140
      %v1149 = vmul.f32 %v1037, %v1141
      %v1150 = vmul.f32 %v1037, %v1142
      %v1151 = vmul.f32 %v1037, %v1143
      %v1152 = vmul.f32 %v1037, %v1144
      %v1153 = vrot.slane %v1145, 4
      %v1154 = vadd.f32 %v1145, %v1153
      %v1155 = vrot.slane %v1154, 2
      %v1156 = vadd.f32 %v1154, %v1155
      %v1157 = vrot.slane %v1156, 1
      %v1158 = vadd.f32 %v1156, %v1157
      %v1159 = vrot.slane %v1146, 4
      %v1160 = vadd.f32 %v1146, %v1159
      %v1161 = vrot.slane %v1160, 2
      %v1162 = vadd.f32 %v1160, %v1161
      %v1163 = vrot.slane %v1162, 1
      %v1164 = vadd.f32 %v1162, %v1163
      %v1165 = vrot.slane %v1147, 4
      %v1166 = vadd.f32 %v1147, %v1165
      %v1167 = vrot.slane %v1166, 2
      %v1168 = vadd.f32 %v1166, %v1167
      %v1169 = vrot.slane %v1168, 1
      %v1170 = vadd.f32 %v1168, %v1169
      %v1171 = vrot.slane %v1148, 4
      %v1172 = vadd.f32 %v1148, %v1171
      %v1173 = vrot.slane %v1172, 2
      %v1174 = vadd.f32 %v1172, %v1173
      %v1175 = vrot.slane %v1174, 1
      %v1176 = vadd.f32 %v1174, %v1175
      %v1177 = vrot.slane %v1149, 4
      %v1178 = vadd.f32 %v1149, %v1177
      %v1179 = vrot.slane %v1178, 2
      %v1180 = vadd.f32 %v1178, %v1179
      %v1181 = vrot.slane %v1180, 1
      %v1182 = vadd.f32 %v1180, %v1181
      %v1183 = vrot.slane %v1150, 4
      %v1184 = vadd.f32 %v1150, %v1183
      %v1185 = vrot.slane %v1184, 2
      %v1186 = vadd.f32 %v1184, %v1185
      %v1187 = vrot.slane %v1186, 1
      %v1188 = vadd.f32 %v1186, %v1187
      %v1189 = vrot.slane %v1151, 4
      %v1190 = vadd.f32 %v1151, %v1189
      %v1191 = vrot.slane %v1190, 2
      %v1192 = vadd.f32 %v1190, %v1191
      %v1193 = vrot.slane %v1192, 1
      %v1194 = vadd.f32 %v1192, %v1193
      %v1195 = vrot.slane %v1152, 4
      %v1196 = vadd.f32 %v1152, %v1195
      %v1197 = vrot.slane %v1196, 2
      %v1198 = vadd.f32 %v1196, %v1197
      %v1199 = vrot.slane %v1198, 1
      %v1200 = vadd.f32 %v1198, %v1199
      %v1201 = vadd.f32 %v1158, 0.0
      %v1202 = vadd.f32 %v1164, 0.0
      %v1203 = vadd.f32 %v1170, 0.0
      %v1204 = vadd.f32 %v1176, 0.0
      %v1205 = vadd.f32 %v1182, 0.0
      %v1206 = vadd.f32 %v1188, 0.0
      %v1207 = vadd.f32 %v1194, 0.0
      %v1208 = vadd.f32 %v1200, 0.0
      %v1209 = vmul.f32 %v1040, %v1137
      %v1210 = vmul.f32 %v1040, %v1138
      %v1211 = vmul.f32 %v1040, %v1139
      %v1212 = vmul.f32 %v1040, %v1140
      %v1213 = vmul.f32 %v1040, %v1141
      %v1214 = vmul.f32 %v1040, %v1142
      %v1215 = vmul.f32 %v1040, %v1143
      %v1216 = vmul.f32 %v1040, %v1144
      %v1217 = vrot.slane %v1209, 4
      %v1218 = vadd.f32 %v1209, %v1217
      %v1219 = vrot.slane %v1218, 2
      %v1220 = vadd.f32 %v1218, %v1219
      %v1221 = vrot.slane %v1220, 1
      %v1222 = vadd.f32 %v1220, %v1221
      %v1223 = vrot.slane %v1210, 4
      %v1224 = vadd.f32 %v1210, %v1223
      %v1225 = vrot.slane %v1224, 2
      %v1226 = vadd.f32 %v1224, %v1225
      %v1227 = vrot.slane %v1226, 1
      %v1228 = vadd.f32 %v1226, %v1227
      %v1229 = vrot.slane %v1211, 4
      %v1230 = vadd.f32 %v1211, %v1229
      %v1231 = vrot.slane %v1230, 2
      %v1232 = vadd.f32 %v1230, %v1231
      %v1233 = vrot.slane %v1232, 1
      %v1234 = vadd.f32 %v1232, %v1233
      %v1235 = vrot.slane %v1212, 4
      %v1236 = vadd.f32 %v1212, %v1235
      %v1237 = vrot.slane %v1236, 2
      %v1238 = vadd.f32 %v1236, %v1237
      %v1239 = vrot.slane %v1238, 1
      %v1240 = vadd.f32 %v1238, %v1239
      %v1241 = vrot.slane %v1213, 4
      %v1242 = vadd.f32 %v1213, %v1241
      %v1243 = vrot.slane %v1242, 2
      %v1244 = vadd.f32 %v1242, %v1243
      %v1245 = vrot.slane %v1244, 1
      %v1246 = vadd.f32 %v1244, %v1245
      %v1247 = vrot.slane %v1214, 4
      %v1248 = vadd.f32 %v1214, %v1247
      %v1249 = vrot.slane %v1248, 2
      %v1250 = vadd.f32 %v1248, %v1249
      %v1251 = vrot.slane %v1250, 1
      %v1252 = vadd.f32 %v1250, %v1251
      %v1253 = vrot.slane %v1215, 4
      %v1254 = vadd.f32 %v1215, %v1253
      %v1255 = vrot.slane %v1254, 2
      %v1256 = vadd.f32 %v1254, %v1255
      %v1257 = vrot.slane %v1256, 1
      %v1258 = vadd.f32 %v1256, %v1257
      %v1259 = vrot.slane %v1216, 4
      %v1260 = vadd.f32 %v1216, %v1259
      %v1261 = vrot.slane %v1260, 2
      %v1262 = vadd.f32 %v1260, %v1261
      %v1263 = vrot.slane %v1262, 1
      %v1264 = vadd.f32 %v1262, %v1263
      %v1265 = vadd.f32 %v1222, 0.0
      %v1266 = vadd.f32 %v1228, 0.0
      %v1267 = vadd.f32 %v1234, 0.0
      %v1268 = vadd.f32 %v1240, 0.0
      %v1269 = vadd.f32 %v1246, 0.0
      %v1270 = vadd.f32 %v1252, 0.0
      %v1271 = vadd.f32 %v1258, 0.0
      %v1272 = vadd.f32 %v1264, 0.0
      %v1273 = vld [vmem:[%s10 + $0x8] sm:$0xff]
      %v1274 = vld [vmem:[%s9 + $0x8] sm:$0xff]
      %v1275 = vld [vmem:[%s8 + $0x8] sm:$0xff]
      %v1276 = vld [vmem:[%s11 + $0x8] sm:$0xff]
      %s1278 = sor.u32 256, 8
      %1279 = vbcast.lane.b32.xlu0 %v1044, %s1278
      %v1280 = vpop.permute.xlu0 %1279
      %s1282 = sor.u32 256, 8
      %1283 = vbcast.lane.b32.xlu0 %v1051, %s1282
      %v1284 = vpop.permute.xlu0 %1283
      %s1286 = sor.u32 256, 8
      %1287 = vbcast.lane.b32.xlu0 %v1058, %s1286
      %v1288 = vpop.permute.xlu0 %1287
      %s1290 = sor.u32 256, 8
      %1291 = vbcast.lane.b32.xlu0 %v1065, %s1290
      %v1292 = vpop.permute.xlu0 %1291
      %s1294 = sor.u32 256, 8
      %1295 = vbcast.lane.b32.xlu0 %v1072, %s1294
      %v1296 = vpop.permute.xlu0 %1295
      %s1298 = sor.u32 256, 8
      %1299 = vbcast.lane.b32.xlu0 %v1079, %s1298
      %v1300 = vpop.permute.xlu0 %1299
      %s1302 = sor.u32 256, 8
      %1303 = vbcast.lane.b32.xlu0 %v1086, %s1302
      %v1304 = vpop.permute.xlu0 %1303
      %s1306 = sor.u32 256, 8
      %1307 = vbcast.lane.b32.xlu0 %v1093, %s1306
      %v1308 = vpop.permute.xlu0 %1307
      %v1309 = vsub.f32 %v1280, %v1275
      %v1310 = vsub.f32 %v1284, %v1275
      %v1311 = vsub.f32 %v1288, %v1275
      %v1312 = vsub.f32 %v1292, %v1275
      %v1313 = vsub.f32 %v1296, %v1275
      %v1314 = vsub.f32 %v1300, %v1275
      %v1315 = vsub.f32 %v1304, %v1275
      %v1316 = vsub.f32 %v1308, %v1275
      %v1317 = vmul.f32 %v1274, %v1309
      %v1318 = vmul.f32 %v1274, %v1310
      %v1319 = vmul.f32 %v1274, %v1311
      %v1320 = vmul.f32 %v1274, %v1312
      %v1321 = vmul.f32 %v1274, %v1313
      %v1322 = vmul.f32 %v1274, %v1314
      %v1323 = vmul.f32 %v1274, %v1315
      %v1324 = vmul.f32 %v1274, %v1316
      %v1325 = vmul.f32 %v1317, 0.5
      %v1326 = vmul.f32 %v1318, 0.5
      %v1327 = vmul.f32 %v1319, 0.5
      %v1328 = vmul.f32 %v1320, 0.5
      %v1329 = vmul.f32 %v1321, 0.5
      %v1330 = vmul.f32 %v1322, 0.5
      %v1331 = vmul.f32 %v1323, 0.5
      %v1332 = vmul.f32 %v1324, 0.5
      %v1333 = vtanh.pop %v1325
      %v1334 = vtanh.pop %v1326
      %v1335 = vtanh.pop %v1327
      %v1336 = vtanh.pop %v1328
      %v1337 = vtanh.pop %v1329
      %v1338 = vtanh.pop %v1330
      %v1339 = vtanh.pop %v1331
      %v1340 = vtanh.pop %v1332
      %v1341 = vmul.f32 %v1333, 0.5
      %v1342 = vmul.f32 %v1334, 0.5
      %v1343 = vmul.f32 %v1335, 0.5
      %v1344 = vmul.f32 %v1336, 0.5
      %v1345 = vmul.f32 %v1337, 0.5
      %v1346 = vmul.f32 %v1338, 0.5
      %v1347 = vmul.f32 %v1339, 0.5
      %v1348 = vmul.f32 %v1340, 0.5
      %v1349 = vadd.f32 %v1341, 0.5
      %v1350 = vadd.f32 %v1342, 0.5
      %v1351 = vadd.f32 %v1343, 0.5
      %v1352 = vadd.f32 %v1344, 0.5
      %v1353 = vadd.f32 %v1345, 0.5
      %v1354 = vadd.f32 %v1346, 0.5
      %v1355 = vadd.f32 %v1347, 0.5
      %v1356 = vadd.f32 %v1348, 0.5
      %v1357 = vmul.f32 %v1273, %v1349
      %v1358 = vmul.f32 %v1273, %v1350
      %v1359 = vmul.f32 %v1273, %v1351
      %v1360 = vmul.f32 %v1273, %v1352
      %v1361 = vmul.f32 %v1273, %v1353
      %v1362 = vmul.f32 %v1273, %v1354
      %v1363 = vmul.f32 %v1273, %v1355
      %v1364 = vmul.f32 %v1273, %v1356
      %v1365 = vrot.slane %v1357, 4
      %v1366 = vadd.f32 %v1357, %v1365
      %v1367 = vrot.slane %v1366, 2
      %v1368 = vadd.f32 %v1366, %v1367
      %v1369 = vrot.slane %v1368, 1
      %v1370 = vadd.f32 %v1368, %v1369
      %v1371 = vrot.slane %v1358, 4
      %v1372 = vadd.f32 %v1358, %v1371
      %v1373 = vrot.slane %v1372, 2
      %v1374 = vadd.f32 %v1372, %v1373
      %v1375 = vrot.slane %v1374, 1
      %v1376 = vadd.f32 %v1374, %v1375
      %v1377 = vrot.slane %v1359, 4
      %v1378 = vadd.f32 %v1359, %v1377
      %v1379 = vrot.slane %v1378, 2
      %v1380 = vadd.f32 %v1378, %v1379
      %v1381 = vrot.slane %v1380, 1
      %v1382 = vadd.f32 %v1380, %v1381
      %v1383 = vrot.slane %v1360, 4
      %v1384 = vadd.f32 %v1360, %v1383
      %v1385 = vrot.slane %v1384, 2
      %v1386 = vadd.f32 %v1384, %v1385
      %v1387 = vrot.slane %v1386, 1
      %v1388 = vadd.f32 %v1386, %v1387
      %v1389 = vrot.slane %v1361, 4
      %v1390 = vadd.f32 %v1361, %v1389
      %v1391 = vrot.slane %v1390, 2
      %v1392 = vadd.f32 %v1390, %v1391
      %v1393 = vrot.slane %v1392, 1
      %v1394 = vadd.f32 %v1392, %v1393
      %v1395 = vrot.slane %v1362, 4
      %v1396 = vadd.f32 %v1362, %v1395
      %v1397 = vrot.slane %v1396, 2
      %v1398 = vadd.f32 %v1396, %v1397
      %v1399 = vrot.slane %v1398, 1
      %v1400 = vadd.f32 %v1398, %v1399
      %v1401 = vrot.slane %v1363, 4
      %v1402 = vadd.f32 %v1363, %v1401
      %v1403 = vrot.slane %v1402, 2
      %v1404 = vadd.f32 %v1402, %v1403
      %v1405 = vrot.slane %v1404, 1
      %v1406 = vadd.f32 %v1404, %v1405
      %v1407 = vrot.slane %v1364, 4
      %v1408 = vadd.f32 %v1364, %v1407
      %v1409 = vrot.slane %v1408, 2
      %v1410 = vadd.f32 %v1408, %v1409
      %v1411 = vrot.slane %v1410, 1
      %v1412 = vadd.f32 %v1410, %v1411
      %v1413 = vadd.f32 %v1201, %v1370
      %v1414 = vadd.f32 %v1202, %v1376
      %v1415 = vadd.f32 %v1203, %v1382
      %v1416 = vadd.f32 %v1204, %v1388
      %v1417 = vadd.f32 %v1205, %v1394
      %v1418 = vadd.f32 %v1206, %v1400
      %v1419 = vadd.f32 %v1207, %v1406
      %v1420 = vadd.f32 %v1208, %v1412
      %v1421 = vmul.f32 %v1276, %v1349
      %v1422 = vmul.f32 %v1276, %v1350
      %v1423 = vmul.f32 %v1276, %v1351
      %v1424 = vmul.f32 %v1276, %v1352
      %v1425 = vmul.f32 %v1276, %v1353
      %v1426 = vmul.f32 %v1276, %v1354
      %v1427 = vmul.f32 %v1276, %v1355
      %v1428 = vmul.f32 %v1276, %v1356
      %v1429 = vrot.slane %v1421, 4
      %v1430 = vadd.f32 %v1421, %v1429
      %v1431 = vrot.slane %v1430, 2
      %v1432 = vadd.f32 %v1430, %v1431
      %v1433 = vrot.slane %v1432, 1
      %v1434 = vadd.f32 %v1432, %v1433
      %v1435 = vrot.slane %v1422, 4
      %v1436 = vadd.f32 %v1422, %v1435
      %v1437 = vrot.slane %v1436, 2
      %v1438 = vadd.f32 %v1436, %v1437
      %v1439 = vrot.slane %v1438, 1
      %v1440 = vadd.f32 %v1438, %v1439
      %v1441 = vrot.slane %v1423, 4
      %v1442 = vadd.f32 %v1423, %v1441
      %v1443 = vrot.slane %v1442, 2
      %v1444 = vadd.f32 %v1442, %v1443
      %v1445 = vrot.slane %v1444, 1
      %v1446 = vadd.f32 %v1444, %v1445
      %v1447 = vrot.slane %v1424, 4
      %v1448 = vadd.f32 %v1424, %v1447
      %v1449 = vrot.slane %v1448, 2
      %v1450 = vadd.f32 %v1448, %v1449
      %v1451 = vrot.slane %v1450, 1
      %v1452 = vadd.f32 %v1450, %v1451
      %v1453 = vrot.slane %v1425, 4
      %v1454 = vadd.f32 %v1425, %v1453
      %v1455 = vrot.slane %v1454, 2
      %v1456 = vadd.f32 %v1454, %v1455
      %v1457 = vrot.slane %v1456, 1
      %v1458 = vadd.f32 %v1456, %v1457
      %v1459 = vrot.slane %v1426, 4
      %v1460 = vadd.f32 %v1426, %v1459
      %v1461 = vrot.slane %v1460, 2
      %v1462 = vadd.f32 %v1460, %v1461
      %v1463 = vrot.slane %v1462, 1
      %v1464 = vadd.f32 %v1462, %v1463
      %v1465 = vrot.slane %v1427, 4
      %v1466 = vadd.f32 %v1427, %v1465
      %v1467 = vrot.slane %v1466, 2
      %v1468 = vadd.f32 %v1466, %v1467
      %v1469 = vrot.slane %v1468, 1
      %v1470 = vadd.f32 %v1468, %v1469
      %v1471 = vrot.slane %v1428, 4
      %v1472 = vadd.f32 %v1428, %v1471
      %v1473 = vrot.slane %v1472, 2
      %v1474 = vadd.f32 %v1472, %v1473
      %v1475 = vrot.slane %v1474, 1
      %v1476 = vadd.f32 %v1474, %v1475
      %v1477 = vadd.f32 %v1265, %v1434
      %v1478 = vadd.f32 %v1266, %v1440
      %v1479 = vadd.f32 %v1267, %v1446
      %v1480 = vadd.f32 %v1268, %v1452
      %v1481 = vadd.f32 %v1269, %v1458
      %v1482 = vadd.f32 %v1270, %v1464
      %v1483 = vadd.f32 %v1271, %v1470
      %v1484 = vadd.f32 %v1272, %v1476
      %v1485 = vld [vmem:[%s10 + $0x10] sm:$0xff]
      %v1486 = vld [vmem:[%s9 + $0x10] sm:$0xff]
      %v1487 = vld [vmem:[%s8 + $0x10] sm:$0xff]
      %v1488 = vld [vmem:[%s11 + $0x10] sm:$0xff]
      %s1490 = sor.u32 256, 16
      %1491 = vbcast.lane.b32.xlu0 %v1044, %s1490
      %v1492 = vpop.permute.xlu0 %1491
      %s1494 = sor.u32 256, 16
      %1495 = vbcast.lane.b32.xlu0 %v1051, %s1494
      %v1496 = vpop.permute.xlu0 %1495
      %s1498 = sor.u32 256, 16
      %1499 = vbcast.lane.b32.xlu0 %v1058, %s1498
      %v1500 = vpop.permute.xlu0 %1499
      %s1502 = sor.u32 256, 16
      %1503 = vbcast.lane.b32.xlu0 %v1065, %s1502
      %v1504 = vpop.permute.xlu0 %1503
      %s1506 = sor.u32 256, 16
      %1507 = vbcast.lane.b32.xlu0 %v1072, %s1506
      %v1508 = vpop.permute.xlu0 %1507
      %s1510 = sor.u32 256, 16
      %1511 = vbcast.lane.b32.xlu0 %v1079, %s1510
      %v1512 = vpop.permute.xlu0 %1511
      %s1514 = sor.u32 256, 16
      %1515 = vbcast.lane.b32.xlu0 %v1086, %s1514
      %v1516 = vpop.permute.xlu0 %1515
      %s1518 = sor.u32 256, 16
      %1519 = vbcast.lane.b32.xlu0 %v1093, %s1518
      %v1520 = vpop.permute.xlu0 %1519
      %v1521 = vsub.f32 %v1492, %v1487
      %v1522 = vsub.f32 %v1496, %v1487
      %v1523 = vsub.f32 %v1500, %v1487
      %v1524 = vsub.f32 %v1504, %v1487
      %v1525 = vsub.f32 %v1508, %v1487
      %v1526 = vsub.f32 %v1512, %v1487
      %v1527 = vsub.f32 %v1516, %v1487
      %v1528 = vsub.f32 %v1520, %v1487
      %v1529 = vmul.f32 %v1486, %v1521
      %v1530 = vmul.f32 %v1486, %v1522
      %v1531 = vmul.f32 %v1486, %v1523
      %v1532 = vmul.f32 %v1486, %v1524
      %v1533 = vmul.f32 %v1486, %v1525
      %v1534 = vmul.f32 %v1486, %v1526
      %v1535 = vmul.f32 %v1486, %v1527
      %v1536 = vmul.f32 %v1486, %v1528
      %v1537 = vmul.f32 %v1529, 0.5
      %v1538 = vmul.f32 %v1530, 0.5
      %v1539 = vmul.f32 %v1531, 0.5
      %v1540 = vmul.f32 %v1532, 0.5
      %v1541 = vmul.f32 %v1533, 0.5
      %v1542 = vmul.f32 %v1534, 0.5
      %v1543 = vmul.f32 %v1535, 0.5
      %v1544 = vmul.f32 %v1536, 0.5
      %v1545 = vtanh.pop %v1537
      %v1546 = vtanh.pop %v1538
      %v1547 = vtanh.pop %v1539
      %v1548 = vtanh.pop %v1540
      %v1549 = vtanh.pop %v1541
      %v1550 = vtanh.pop %v1542
      %v1551 = vtanh.pop %v1543
      %v1552 = vtanh.pop %v1544
      %v1553 = vmul.f32 %v1545, 0.5
      %v1554 = vmul.f32 %v1546, 0.5
      %v1555 = vmul.f32 %v1547, 0.5
      %v1556 = vmul.f32 %v1548, 0.5
      %v1557 = vmul.f32 %v1549, 0.5
      %v1558 = vmul.f32 %v1550, 0.5
      %v1559 = vmul.f32 %v1551, 0.5
      %v1560 = vmul.f32 %v1552, 0.5
      %v1561 = vadd.f32 %v1553, 0.5
      %v1562 = vadd.f32 %v1554, 0.5
      %v1563 = vadd.f32 %v1555, 0.5
      %v1564 = vadd.f32 %v1556, 0.5
      %v1565 = vadd.f32 %v1557, 0.5
      %v1566 = vadd.f32 %v1558, 0.5
      %v1567 = vadd.f32 %v1559, 0.5
      %v1568 = vadd.f32 %v1560, 0.5
      %v1569 = vmul.f32 %v1485, %v1561
      %v1570 = vmul.f32 %v1485, %v1562
      %v1571 = vmul.f32 %v1485, %v1563
      %v1572 = vmul.f32 %v1485, %v1564
      %v1573 = vmul.f32 %v1485, %v1565
      %v1574 = vmul.f32 %v1485, %v1566
      %v1575 = vmul.f32 %v1485, %v1567
      %v1576 = vmul.f32 %v1485, %v1568
      %v1577 = vrot.slane %v1569, 4
      %v1578 = vadd.f32 %v1569, %v1577
      %v1579 = vrot.slane %v1578, 2
      %v1580 = vadd.f32 %v1578, %v1579
      %v1581 = vrot.slane %v1580, 1
      %v1582 = vadd.f32 %v1580, %v1581
      %v1583 = vrot.slane %v1570, 4
      %v1584 = vadd.f32 %v1570, %v1583
      %v1585 = vrot.slane %v1584, 2
      %v1586 = vadd.f32 %v1584, %v1585
      %v1587 = vrot.slane %v1586, 1
      %v1588 = vadd.f32 %v1586, %v1587
      %v1589 = vrot.slane %v1571, 4
      %v1590 = vadd.f32 %v1571, %v1589
      %v1591 = vrot.slane %v1590, 2
      %v1592 = vadd.f32 %v1590, %v1591
      %v1593 = vrot.slane %v1592, 1
      %v1594 = vadd.f32 %v1592, %v1593
      %v1595 = vrot.slane %v1572, 4
      %v1596 = vadd.f32 %v1572, %v1595
      %v1597 = vrot.slane %v1596, 2
      %v1598 = vadd.f32 %v1596, %v1597
      %v1599 = vrot.slane %v1598, 1
      %v1600 = vadd.f32 %v1598, %v1599
      %v1601 = vrot.slane %v1573, 4
      %v1602 = vadd.f32 %v1573, %v1601
      %v1603 = vrot.slane %v1602, 2
      %v1604 = vadd.f32 %v1602, %v1603
      %v1605 = vrot.slane %v1604, 1
      %v1606 = vadd.f32 %v1604, %v1605
      %v1607 = vrot.slane %v1574, 4
      %v1608 = vadd.f32 %v1574, %v1607
      %v1609 = vrot.slane %v1608, 2
      %v1610 = vadd.f32 %v1608, %v1609
      %v1611 = vrot.slane %v1610, 1
      %v1612 = vadd.f32 %v1610, %v1611
      %v1613 = vrot.slane %v1575, 4
      %v1614 = vadd.f32 %v1575, %v1613
      %v1615 = vrot.slane %v1614, 2
      %v1616 = vadd.f32 %v1614, %v1615
      %v1617 = vrot.slane %v1616, 1
      %v1618 = vadd.f32 %v1616, %v1617
      %v1619 = vrot.slane %v1576, 4
      %v1620 = vadd.f32 %v1576, %v1619
      %v1621 = vrot.slane %v1620, 2
      %v1622 = vadd.f32 %v1620, %v1621
      %v1623 = vrot.slane %v1622, 1
      %v1624 = vadd.f32 %v1622, %v1623
      %v1625 = vadd.f32 %v1413, %v1582
      %v1626 = vadd.f32 %v1414, %v1588
      %v1627 = vadd.f32 %v1415, %v1594
      %v1628 = vadd.f32 %v1416, %v1600
      %v1629 = vadd.f32 %v1417, %v1606
      %v1630 = vadd.f32 %v1418, %v1612
      %v1631 = vadd.f32 %v1419, %v1618
      %v1632 = vadd.f32 %v1420, %v1624
      %v1633 = vmul.f32 %v1488, %v1561
      %v1634 = vmul.f32 %v1488, %v1562
      %v1635 = vmul.f32 %v1488, %v1563
      %v1636 = vmul.f32 %v1488, %v1564
      %v1637 = vmul.f32 %v1488, %v1565
      %v1638 = vmul.f32 %v1488, %v1566
      %v1639 = vmul.f32 %v1488, %v1567
      %v1640 = vmul.f32 %v1488, %v1568
      %v1641 = vrot.slane %v1633, 4
      %v1642 = vadd.f32 %v1633, %v1641
      %v1643 = vrot.slane %v1642, 2
      %v1644 = vadd.f32 %v1642, %v1643
      %v1645 = vrot.slane %v1644, 1
      %v1646 = vadd.f32 %v1644, %v1645
      %v1647 = vrot.slane %v1634, 4
      %v1648 = vadd.f32 %v1634, %v1647
      %v1649 = vrot.slane %v1648, 2
      %v1650 = vadd.f32 %v1648, %v1649
      %v1651 = vrot.slane %v1650, 1
      %v1652 = vadd.f32 %v1650, %v1651
      %v1653 = vrot.slane %v1635, 4
      %v1654 = vadd.f32 %v1635, %v1653
      %v1655 = vrot.slane %v1654, 2
      %v1656 = vadd.f32 %v1654, %v1655
      %v1657 = vrot.slane %v1656, 1
      %v1658 = vadd.f32 %v1656, %v1657
      %v1659 = vrot.slane %v1636, 4
      %v1660 = vadd.f32 %v1636, %v1659
      %v1661 = vrot.slane %v1660, 2
      %v1662 = vadd.f32 %v1660, %v1661
      %v1663 = vrot.slane %v1662, 1
      %v1664 = vadd.f32 %v1662, %v1663
      %v1665 = vrot.slane %v1637, 4
      %v1666 = vadd.f32 %v1637, %v1665
      %v1667 = vrot.slane %v1666, 2
      %v1668 = vadd.f32 %v1666, %v1667
      %v1669 = vrot.slane %v1668, 1
      %v1670 = vadd.f32 %v1668, %v1669
      %v1671 = vrot.slane %v1638, 4
      %v1672 = vadd.f32 %v1638, %v1671
      %v1673 = vrot.slane %v1672, 2
      %v1674 = vadd.f32 %v1672, %v1673
      %v1675 = vrot.slane %v1674, 1
      %v1676 = vadd.f32 %v1674, %v1675
      %v1677 = vrot.slane %v1639, 4
      %v1678 = vadd.f32 %v1639, %v1677
      %v1679 = vrot.slane %v1678, 2
      %v1680 = vadd.f32 %v1678, %v1679
      %v1681 = vrot.slane %v1680, 1
      %v1682 = vadd.f32 %v1680, %v1681
      %v1683 = vrot.slane %v1640, 4
      %v1684 = vadd.f32 %v1640, %v1683
      %v1685 = vrot.slane %v1684, 2
      %v1686 = vadd.f32 %v1684, %v1685
      %v1687 = vrot.slane %v1686, 1
      %v1688 = vadd.f32 %v1686, %v1687
      %v1689 = vadd.f32 %v1477, %v1646
      %v1690 = vadd.f32 %v1478, %v1652
      %v1691 = vadd.f32 %v1479, %v1658
      %v1692 = vadd.f32 %v1480, %v1664
      %v1693 = vadd.f32 %v1481, %v1670
      %v1694 = vadd.f32 %v1482, %v1676
      %v1695 = vadd.f32 %v1483, %v1682
      %v1696 = vadd.f32 %v1484, %v1688
      %v1697 = vld [vmem:[%s10 + $0x18] sm:$0xff]
      %v1698 = vld [vmem:[%s9 + $0x18] sm:$0xff]
      %v1699 = vld [vmem:[%s8 + $0x18] sm:$0xff]
      %v1700 = vld [vmem:[%s11 + $0x18] sm:$0xff]
      %s1702 = sor.u32 256, 24
      %1703 = vbcast.lane.b32.xlu0 %v1044, %s1702
      %v1704 = vpop.permute.xlu0 %1703
      %s1706 = sor.u32 256, 24
      %1707 = vbcast.lane.b32.xlu0 %v1051, %s1706
      %v1708 = vpop.permute.xlu0 %1707
      %s1710 = sor.u32 256, 24
      %1711 = vbcast.lane.b32.xlu0 %v1058, %s1710
      %v1712 = vpop.permute.xlu0 %1711
      %s1714 = sor.u32 256, 24
      %1715 = vbcast.lane.b32.xlu0 %v1065, %s1714
      %v1716 = vpop.permute.xlu0 %1715
      %s1718 = sor.u32 256, 24
      %1719 = vbcast.lane.b32.xlu0 %v1072, %s1718
      %v1720 = vpop.permute.xlu0 %1719
      %s1722 = sor.u32 256, 24
      %1723 = vbcast.lane.b32.xlu0 %v1079, %s1722
      %v1724 = vpop.permute.xlu0 %1723
      %s1726 = sor.u32 256, 24
      %1727 = vbcast.lane.b32.xlu0 %v1086, %s1726
      %v1728 = vpop.permute.xlu0 %1727
      %s1730 = sor.u32 256, 24
      %1731 = vbcast.lane.b32.xlu0 %v1093, %s1730
      %v1732 = vpop.permute.xlu0 %1731
      %v1733 = vsub.f32 %v1704, %v1699
      %v1734 = vsub.f32 %v1708, %v1699
      %v1735 = vsub.f32 %v1712, %v1699
      %v1736 = vsub.f32 %v1716, %v1699
      %v1737 = vsub.f32 %v1720, %v1699
      %v1738 = vsub.f32 %v1724, %v1699
      %v1739 = vsub.f32 %v1728, %v1699
      %v1740 = vsub.f32 %v1732, %v1699
      %v1741 = vmul.f32 %v1698, %v1733
      %v1742 = vmul.f32 %v1698, %v1734
      %v1743 = vmul.f32 %v1698, %v1735
      %v1744 = vmul.f32 %v1698, %v1736
      %v1745 = vmul.f32 %v1698, %v1737
      %v1746 = vmul.f32 %v1698, %v1738
      %v1747 = vmul.f32 %v1698, %v1739
      %v1748 = vmul.f32 %v1698, %v1740
      %v1749 = vmul.f32 %v1741, 0.5
      %v1750 = vmul.f32 %v1742, 0.5
      %v1751 = vmul.f32 %v1743, 0.5
      %v1752 = vmul.f32 %v1744, 0.5
      %v1753 = vmul.f32 %v1745, 0.5
      %v1754 = vmul.f32 %v1746, 0.5
      %v1755 = vmul.f32 %v1747, 0.5
      %v1756 = vmul.f32 %v1748, 0.5
      %v1757 = vtanh.pop %v1749
      %v1758 = vtanh.pop %v1750
      %v1759 = vtanh.pop %v1751
      %v1760 = vtanh.pop %v1752
      %v1761 = vtanh.pop %v1753
      %v1762 = vtanh.pop %v1754
      %v1763 = vtanh.pop %v1755
      %v1764 = vtanh.pop %v1756
      %v1765 = vmul.f32 %v1757, 0.5
      %v1766 = vmul.f32 %v1758, 0.5
      %v1767 = vmul.f32 %v1759, 0.5
      %v1768 = vmul.f32 %v1760, 0.5
      %v1769 = vmul.f32 %v1761, 0.5
      %v1770 = vmul.f32 %v1762, 0.5
      %v1771 = vmul.f32 %v1763, 0.5
      %v1772 = vmul.f32 %v1764, 0.5
      %v1773 = vadd.f32 %v1765, 0.5
      %v1774 = vadd.f32 %v1766, 0.5
      %v1775 = vadd.f32 %v1767, 0.5
      %v1776 = vadd.f32 %v1768, 0.5
      %v1777 = vadd.f32 %v1769, 0.5
      %v1778 = vadd.f32 %v1770, 0.5
      %v1779 = vadd.f32 %v1771, 0.5
      %v1780 = vadd.f32 %v1772, 0.5
      %v1781 = vmul.f32 %v1697, %v1773
      %v1782 = vmul.f32 %v1697, %v1774
      %v1783 = vmul.f32 %v1697, %v1775
      %v1784 = vmul.f32 %v1697, %v1776
      %v1785 = vmul.f32 %v1697, %v1777
      %v1786 = vmul.f32 %v1697, %v1778
      %v1787 = vmul.f32 %v1697, %v1779
      %v1788 = vmul.f32 %v1697, %v1780
      %v1789 = vrot.slane %v1781, 4
      %v1790 = vadd.f32 %v1781, %v1789
      %v1791 = vrot.slane %v1790, 2
      %v1792 = vadd.f32 %v1790, %v1791
      %v1793 = vrot.slane %v1792, 1
      %v1794 = vadd.f32 %v1792, %v1793
      %v1795 = vrot.slane %v1782, 4
      %v1796 = vadd.f32 %v1782, %v1795
      %v1797 = vrot.slane %v1796, 2
      %v1798 = vadd.f32 %v1796, %v1797
      %v1799 = vrot.slane %v1798, 1
      %v1800 = vadd.f32 %v1798, %v1799
      %v1801 = vrot.slane %v1783, 4
      %v1802 = vadd.f32 %v1783, %v1801
      %v1803 = vrot.slane %v1802, 2
      %v1804 = vadd.f32 %v1802, %v1803
      %v1805 = vrot.slane %v1804, 1
      %v1806 = vadd.f32 %v1804, %v1805
      %v1807 = vrot.slane %v1784, 4
      %v1808 = vadd.f32 %v1784, %v1807
      %v1809 = vrot.slane %v1808, 2
      %v1810 = vadd.f32 %v1808, %v1809
      %v1811 = vrot.slane %v1810, 1
      %v1812 = vadd.f32 %v1810, %v1811
      %v1813 = vrot.slane %v1785, 4
      %v1814 = vadd.f32 %v1785, %v1813
      %v1815 = vrot.slane %v1814, 2
      %v1816 = vadd.f32 %v1814, %v1815
      %v1817 = vrot.slane %v1816, 1
      %v1818 = vadd.f32 %v1816, %v1817
      %v1819 = vrot.slane %v1786, 4
      %v1820 = vadd.f32 %v1786, %v1819
      %v1821 = vrot.slane %v1820, 2
      %v1822 = vadd.f32 %v1820, %v1821
      %v1823 = vrot.slane %v1822, 1
      %v1824 = vadd.f32 %v1822, %v1823
      %v1825 = vrot.slane %v1787, 4
      %v1826 = vadd.f32 %v1787, %v1825
      %v1827 = vrot.slane %v1826, 2
      %v1828 = vadd.f32 %v1826, %v1827
      %v1829 = vrot.slane %v1828, 1
      %v1830 = vadd.f32 %v1828, %v1829
      %v1831 = vrot.slane %v1788, 4
      %v1832 = vadd.f32 %v1788, %v1831
      %v1833 = vrot.slane %v1832, 2
      %v1834 = vadd.f32 %v1832, %v1833
      %v1835 = vrot.slane %v1834, 1
      %v1836 = vadd.f32 %v1834, %v1835
      %v1837 = vadd.f32 %v1625, %v1794
      %v1838 = vadd.f32 %v1626, %v1800
      %v1839 = vadd.f32 %v1627, %v1806
      %v1840 = vadd.f32 %v1628, %v1812
      %v1841 = vadd.f32 %v1629, %v1818
      %v1842 = vadd.f32 %v1630, %v1824
      %v1843 = vadd.f32 %v1631, %v1830
      %v1844 = vadd.f32 %v1632, %v1836
      %v1845 = vmul.f32 %v1700, %v1773
      %v1846 = vmul.f32 %v1700, %v1774
      %v1847 = vmul.f32 %v1700, %v1775
      %v1848 = vmul.f32 %v1700, %v1776
      %v1849 = vmul.f32 %v1700, %v1777
      %v1850 = vmul.f32 %v1700, %v1778
      %v1851 = vmul.f32 %v1700, %v1779
      %v1852 = vmul.f32 %v1700, %v1780
      %v1853 = vrot.slane %v1845, 4
      %v1854 = vadd.f32 %v1845, %v1853
      %v1855 = vrot.slane %v1854, 2
      %v1856 = vadd.f32 %v1854, %v1855
      %v1857 = vrot.slane %v1856, 1
      %v1858 = vadd.f32 %v1856, %v1857
      %v1859 = vrot.slane %v1846, 4
      %v1860 = vadd.f32 %v1846, %v1859
      %v1861 = vrot.slane %v1860, 2
      %v1862 = vadd.f32 %v1860, %v1861
      %v1863 = vrot.slane %v1862, 1
      %v1864 = vadd.f32 %v1862, %v1863
      %v1865 = vrot.slane %v1847, 4
      %v1866 = vadd.f32 %v1847, %v1865
      %v1867 = vrot.slane %v1866, 2
      %v1868 = vadd.f32 %v1866, %v1867
      %v1869 = vrot.slane %v1868, 1
      %v1870 = vadd.f32 %v1868, %v1869
      %v1871 = vrot.slane %v1848, 4
      %v1872 = vadd.f32 %v1848, %v1871
      %v1873 = vrot.slane %v1872, 2
      %v1874 = vadd.f32 %v1872, %v1873
      %v1875 = vrot.slane %v1874, 1
      %v1876 = vadd.f32 %v1874, %v1875
      %v1877 = vrot.slane %v1849, 4
      %v1878 = vadd.f32 %v1849, %v1877
      %v1879 = vrot.slane %v1878, 2
      %v1880 = vadd.f32 %v1878, %v1879
      %v1881 = vrot.slane %v1880, 1
      %v1882 = vadd.f32 %v1880, %v1881
      %v1883 = vrot.slane %v1850, 4
      %v1884 = vadd.f32 %v1850, %v1883
      %v1885 = vrot.slane %v1884, 2
      %v1886 = vadd.f32 %v1884, %v1885
      %v1887 = vrot.slane %v1886, 1
      %v1888 = vadd.f32 %v1886, %v1887
      %v1889 = vrot.slane %v1851, 4
      %v1890 = vadd.f32 %v1851, %v1889
      %v1891 = vrot.slane %v1890, 2
      %v1892 = vadd.f32 %v1890, %v1891
      %v1893 = vrot.slane %v1892, 1
      %v1894 = vadd.f32 %v1892, %v1893
      %v1895 = vrot.slane %v1852, 4
      %v1896 = vadd.f32 %v1852, %v1895
      %v1897 = vrot.slane %v1896, 2
      %v1898 = vadd.f32 %v1896, %v1897
      %v1899 = vrot.slane %v1898, 1
      %v1900 = vadd.f32 %v1898, %v1899
      %v1901 = vadd.f32 %v1689, %v1858
      %v1902 = vadd.f32 %v1690, %v1864
      %v1903 = vadd.f32 %v1691, %v1870
      %v1904 = vadd.f32 %v1692, %v1876
      %v1905 = vadd.f32 %v1693, %v1882
      %v1906 = vadd.f32 %v1694, %v1888
      %v1907 = vadd.f32 %v1695, %v1894
      %v1908 = vadd.f32 %v1696, %v1900
      %v1909 = vmul.f32 %v534, %v529
      %v1910 = vadd.f32 %v1909, %v1019
      %v1919 = vsel %vm1004, %v1902, %v1901
      %v1920 = vsel %vm1006, %v1903, %v1919
      %v1921 = vsel %vm1008, %v1904, %v1920
      %v1922 = vsel %vm1010, %v1905, %v1921
      %v1923 = vsel %vm1012, %v1906, %v1922
      %v1924 = vsel %vm1014, %v1907, %v1923
      %v1925 = vsel %vm1016, %v1908, %v1924
      %v1927 = vadd.f32 %v1910, %v1925
      %v1936 = vsel %vm1004, %v1838, %v1837
      %v1937 = vsel %vm1006, %v1839, %v1936
      %v1938 = vsel %vm1008, %v1840, %v1937
      %v1939 = vsel %vm1010, %v1841, %v1938
      %v1940 = vsel %vm1012, %v1842, %v1939
      %v1941 = vsel %vm1014, %v1843, %v1940
      %v1942 = vsel %vm1016, %v1844, %v1941
      %v1944 = vadd.f32 %v1036, %v1942
      %v1945 = vrcp.pop %v1944
      %v1946 = vmul.f32 %v1927, %v1945
      %v1947 = vlaneseq
      %v1948 = vshrl.u32 %v1947, 7
      %v1949 = vsub.s32 0, %v1948
      %v1950 = vrot.slane %v1946, %v1949
      %1952 = vbcast.lane.b32.xlu0 %v1950, 256
      %v1953 = vpop.permute.xlu0 %1952
      %v1954 = vlaneseq
      %v1955 = vshrl.u32 %v1954, 7
      %v1956 = vsub.s32 1, %v1955
      %v1957 = vrot.slane %v1946, %v1956
      %1959 = vbcast.lane.b32.xlu0 %v1957, 256
      %v1960 = vpop.permute.xlu0 %1959
      %v1961 = vlaneseq
      %v1962 = vshrl.u32 %v1961, 7
      %v1963 = vsub.s32 2, %v1962
      %v1964 = vrot.slane %v1946, %v1963
      %1966 = vbcast.lane.b32.xlu0 %v1964, 256
      %v1967 = vpop.permute.xlu0 %1966
      %v1968 = vlaneseq
      %v1969 = vshrl.u32 %v1968, 7
      %v1970 = vsub.s32 3, %v1969
      %v1971 = vrot.slane %v1946, %v1970
      %1973 = vbcast.lane.b32.xlu0 %v1971, 256
      %v1974 = vpop.permute.xlu0 %1973
      %v1975 = vlaneseq
      %v1976 = vshrl.u32 %v1975, 7
      %v1977 = vsub.s32 4, %v1976
      %v1978 = vrot.slane %v1946, %v1977
      %1980 = vbcast.lane.b32.xlu0 %v1978, 256
      %v1981 = vpop.permute.xlu0 %1980
      %v1982 = vlaneseq
      %v1983 = vshrl.u32 %v1982, 7
      %v1984 = vsub.s32 5, %v1983
      %v1985 = vrot.slane %v1946, %v1984
      %1987 = vbcast.lane.b32.xlu0 %v1985, 256
      %v1988 = vpop.permute.xlu0 %1987
      %v1989 = vlaneseq
      %v1990 = vshrl.u32 %v1989, 7
      %v1991 = vsub.s32 6, %v1990
      %v1992 = vrot.slane %v1946, %v1991
      %1994 = vbcast.lane.b32.xlu0 %v1992, 256
      %v1995 = vpop.permute.xlu0 %1994
      %v1996 = vlaneseq
      %v1997 = vshrl.u32 %v1996, 7
      %v1998 = vsub.s32 7, %v1997
      %v1999 = vrot.slane %v1946, %v1998
      %2001 = vbcast.lane.b32.xlu0 %v1999, 256
      %v2002 = vpop.permute.xlu0 %2001
      %v2003 = vsub.f32 %v1953, %v1039
      %v2004 = vsub.f32 %v1960, %v1039
      %v2005 = vsub.f32 %v1967, %v1039
      %v2006 = vsub.f32 %v1974, %v1039
      %v2007 = vsub.f32 %v1981, %v1039
      %v2008 = vsub.f32 %v1988, %v1039
      %v2009 = vsub.f32 %v1995, %v1039
      %v2010 = vsub.f32 %v2002, %v1039
      %v2011 = vmul.f32 %v1038, %v2003
      %v2012 = vmul.f32 %v1038, %v2004
      %v2013 = vmul.f32 %v1038, %v2005
      %v2014 = vmul.f32 %v1038, %v2006
      %v2015 = vmul.f32 %v1038, %v2007
      %v2016 = vmul.f32 %v1038, %v2008
      %v2017 = vmul.f32 %v1038, %v2009
      %v2018 = vmul.f32 %v1038, %v2010
      %v2019 = vmul.f32 %v2011, 0.5
      %v2020 = vmul.f32 %v2012, 0.5
      %v2021 = vmul.f32 %v2013, 0.5
      %v2022 = vmul.f32 %v2014, 0.5
      %v2023 = vmul.f32 %v2015, 0.5
      %v2024 = vmul.f32 %v2016, 0.5
      %v2025 = vmul.f32 %v2017, 0.5
      %v2026 = vmul.f32 %v2018, 0.5
      %v2027 = vtanh.pop %v2019
      %v2028 = vtanh.pop %v2020
      %v2029 = vtanh.pop %v2021
      %v2030 = vtanh.pop %v2022
      %v2031 = vtanh.pop %v2023
      %v2032 = vtanh.pop %v2024
      %v2033 = vtanh.pop %v2025
      %v2034 = vtanh.pop %v2026
      %v2035 = vmul.f32 %v2027, 0.5
      %v2036 = vmul.f32 %v2028, 0.5
      %v2037 = vmul.f32 %v2029, 0.5
      %v2038 = vmul.f32 %v2030, 0.5
      %v2039 = vmul.f32 %v2031, 0.5
      %v2040 = vmul.f32 %v2032, 0.5
      %v2041 = vmul.f32 %v2033, 0.5
      %v2042 = vmul.f32 %v2034, 0.5
      %v2043 = vadd.f32 %v2035, 0.5
      %v2044 = vadd.f32 %v2036, 0.5
      %v2045 = vadd.f32 %v2037, 0.5
      %v2046 = vadd.f32 %v2038, 0.5
      %v2047 = vadd.f32 %v2039, 0.5
      %v2048 = vadd.f32 %v2040, 0.5
      %v2049 = vadd.f32 %v2041, 0.5
      %v2050 = vadd.f32 %v2042, 0.5
      %v2051 = vmul.f32 %v1037, %v2043
      %v2052 = vmul.f32 %v1037, %v2044
      %v2053 = vmul.f32 %v1037, %v2045
      %v2054 = vmul.f32 %v1037, %v2046
      %v2055 = vmul.f32 %v1037, %v2047
      %v2056 = vmul.f32 %v1037, %v2048
      %v2057 = vmul.f32 %v1037, %v2049
      %v2058 = vmul.f32 %v1037, %v2050
      %v2059 = vrot.slane %v2051, 4
      %v2060 = vadd.f32 %v2051, %v2059
      %v2061 = vrot.slane %v2060, 2
      %v2062 = vadd.f32 %v2060, %v2061
      %v2063 = vrot.slane %v2062, 1
      %v2064 = vadd.f32 %v2062, %v2063
      %v2065 = vrot.slane %v2052, 4
      %v2066 = vadd.f32 %v2052, %v2065
      %v2067 = vrot.slane %v2066, 2
      %v2068 = vadd.f32 %v2066, %v2067
      %v2069 = vrot.slane %v2068, 1
      %v2070 = vadd.f32 %v2068, %v2069
      %v2071 = vrot.slane %v2053, 4
      %v2072 = vadd.f32 %v2053, %v2071
      %v2073 = vrot.slane %v2072, 2
      %v2074 = vadd.f32 %v2072, %v2073
      %v2075 = vrot.slane %v2074, 1
      %v2076 = vadd.f32 %v2074, %v2075
      %v2077 = vrot.slane %v2054, 4
      %v2078 = vadd.f32 %v2054, %v2077
      %v2079 = vrot.slane %v2078, 2
      %v2080 = vadd.f32 %v2078, %v2079
      %v2081 = vrot.slane %v2080, 1
      %v2082 = vadd.f32 %v2080, %v2081
      %v2083 = vrot.slane %v2055, 4
      %v2084 = vadd.f32 %v2055, %v2083
      %v2085 = vrot.slane %v2084, 2
      %v2086 = vadd.f32 %v2084, %v2085
      %v2087 = vrot.slane %v2086, 1
      %v2088 = vadd.f32 %v2086, %v2087
      %v2089 = vrot.slane %v2056, 4
      %v2090 = vadd.f32 %v2056, %v2089
      %v2091 = vrot.slane %v2090, 2
      %v2092 = vadd.f32 %v2090, %v2091
      %v2093 = vrot.slane %v2092, 1
      %v2094 = vadd.f32 %v2092, %v2093
      %v2095 = vrot.slane %v2057, 4
      %v2096 = vadd.f32 %v2057, %v2095
      %v2097 = vrot.slane %v2096, 2
      %v2098 = vadd.f32 %v2096, %v2097
      %v2099 = vrot.slane %v2098, 1
      %v2100 = vadd.f32 %v2098, %v2099
      %v2101 = vrot.slane %v2058, 4
      %v2102 = vadd.f32 %v2058, %v2101
      %v2103 = vrot.slane %v2102, 2
      %v2104 = vadd.f32 %v2102, %v2103
      %v2105 = vrot.slane %v2104, 1
      %v2106 = vadd.f32 %v2104, %v2105
      %v2107 = vadd.f32 %v2064, 0.0
      %v2108 = vadd.f32 %v2070, 0.0
      %v2109 = vadd.f32 %v2076, 0.0
      %v2110 = vadd.f32 %v2082, 0.0
      %v2111 = vadd.f32 %v2088, 0.0
      %v2112 = vadd.f32 %v2094, 0.0
      %v2113 = vadd.f32 %v2100, 0.0
      %v2114 = vadd.f32 %v2106, 0.0
      %v2115 = vmul.f32 %v1040, %v2043
      %v2116 = vmul.f32 %v1040, %v2044
      %v2117 = vmul.f32 %v1040, %v2045
      %v2118 = vmul.f32 %v1040, %v2046
      %v2119 = vmul.f32 %v1040, %v2047
      %v2120 = vmul.f32 %v1040, %v2048
      %v2121 = vmul.f32 %v1040, %v2049
      %v2122 = vmul.f32 %v1040, %v2050
      %v2123 = vrot.slane %v2115, 4
      %v2124 = vadd.f32 %v2115, %v2123
      %v2125 = vrot.slane %v2124, 2
      %v2126 = vadd.f32 %v2124, %v2125
      %v2127 = vrot.slane %v2126, 1
      %v2128 = vadd.f32 %v2126, %v2127
      %v2129 = vrot.slane %v2116, 4
      %v2130 = vadd.f32 %v2116, %v2129
      %v2131 = vrot.slane %v2130, 2
      %v2132 = vadd.f32 %v2130, %v2131
      %v2133 = vrot.slane %v2132, 1
      %v2134 = vadd.f32 %v2132, %v2133
      %v2135 = vrot.slane %v2117, 4
      %v2136 = vadd.f32 %v2117, %v2135
      %v2137 = vrot.slane %v2136, 2
      %v2138 = vadd.f32 %v2136, %v2137
      %v2139 = vrot.slane %v2138, 1
      %v2140 = vadd.f32 %v2138, %v2139
      %v2141 = vrot.slane %v2118, 4
      %v2142 = vadd.f32 %v2118, %v2141
      %v2143 = vrot.slane %v2142, 2
      %v2144 = vadd.f32 %v2142, %v2143
      %v2145 = vrot.slane %v2144, 1
      %v2146 = vadd.f32 %v2144, %v2145
      %v2147 = vrot.slane %v2119, 4
      %v2148 = vadd.f32 %v2119, %v2147
      %v2149 = vrot.slane %v2148, 2
      %v2150 = vadd.f32 %v2148, %v2149
      %v2151 = vrot.slane %v2150, 1
      %v2152 = vadd.f32 %v2150, %v2151
      %v2153 = vrot.slane %v2120, 4
      %v2154 = vadd.f32 %v2120, %v2153
      %v2155 = vrot.slane %v2154, 2
      %v2156 = vadd.f32 %v2154, %v2155
      %v2157 = vrot.slane %v2156, 1
      %v2158 = vadd.f32 %v2156, %v2157
      %v2159 = vrot.slane %v2121, 4
      %v2160 = vadd.f32 %v2121, %v2159
      %v2161 = vrot.slane %v2160, 2
      %v2162 = vadd.f32 %v2160, %v2161
      %v2163 = vrot.slane %v2162, 1
      %v2164 = vadd.f32 %v2162, %v2163
      %v2165 = vrot.slane %v2122, 4
      %v2166 = vadd.f32 %v2122, %v2165
      %v2167 = vrot.slane %v2166, 2
      %v2168 = vadd.f32 %v2166, %v2167
      %v2169 = vrot.slane %v2168, 1
      %v2170 = vadd.f32 %v2168, %v2169
      %v2171 = vadd.f32 %v2128, 0.0
      %v2172 = vadd.f32 %v2134, 0.0
      %v2173 = vadd.f32 %v2140, 0.0
      %v2174 = vadd.f32 %v2146, 0.0
      %v2175 = vadd.f32 %v2152, 0.0
      %v2176 = vadd.f32 %v2158, 0.0
      %v2177 = vadd.f32 %v2164, 0.0
      %v2178 = vadd.f32 %v2170, 0.0
      %s2180 = sor.u32 256, 8
      %2181 = vbcast.lane.b32.xlu0 %v1950, %s2180
      %v2182 = vpop.permute.xlu0 %2181
      %s2184 = sor.u32 256, 8
      %2185 = vbcast.lane.b32.xlu0 %v1957, %s2184
      %v2186 = vpop.permute.xlu0 %2185
      %s2188 = sor.u32 256, 8
      %2189 = vbcast.lane.b32.xlu0 %v1964, %s2188
      %v2190 = vpop.permute.xlu0 %2189
      %s2192 = sor.u32 256, 8
      %2193 = vbcast.lane.b32.xlu0 %v1971, %s2192
      %v2194 = vpop.permute.xlu0 %2193
      %s2196 = sor.u32 256, 8
      %2197 = vbcast.lane.b32.xlu0 %v1978, %s2196
      %v2198 = vpop.permute.xlu0 %2197
      %s2200 = sor.u32 256, 8
      %2201 = vbcast.lane.b32.xlu0 %v1985, %s2200
      %v2202 = vpop.permute.xlu0 %2201
      %s2204 = sor.u32 256, 8
      %2205 = vbcast.lane.b32.xlu0 %v1992, %s2204
      %v2206 = vpop.permute.xlu0 %2205
      %s2208 = sor.u32 256, 8
      %2209 = vbcast.lane.b32.xlu0 %v1999, %s2208
      %v2210 = vpop.permute.xlu0 %2209
      %v2211 = vsub.f32 %v2182, %v1275
      %v2212 = vsub.f32 %v2186, %v1275
      %v2213 = vsub.f32 %v2190, %v1275
      %v2214 = vsub.f32 %v2194, %v1275
      %v2215 = vsub.f32 %v2198, %v1275
      %v2216 = vsub.f32 %v2202, %v1275
      %v2217 = vsub.f32 %v2206, %v1275
      %v2218 = vsub.f32 %v2210, %v1275
      %v2219 = vmul.f32 %v1274, %v2211
      %v2220 = vmul.f32 %v1274, %v2212
      %v2221 = vmul.f32 %v1274, %v2213
      %v2222 = vmul.f32 %v1274, %v2214
      %v2223 = vmul.f32 %v1274, %v2215
      %v2224 = vmul.f32 %v1274, %v2216
      %v2225 = vmul.f32 %v1274, %v2217
      %v2226 = vmul.f32 %v1274, %v2218
      %v2227 = vmul.f32 %v2219, 0.5
      %v2228 = vmul.f32 %v2220, 0.5
      %v2229 = vmul.f32 %v2221, 0.5
      %v2230 = vmul.f32 %v2222, 0.5
      %v2231 = vmul.f32 %v2223, 0.5
      %v2232 = vmul.f32 %v2224, 0.5
      %v2233 = vmul.f32 %v2225, 0.5
      %v2234 = vmul.f32 %v2226, 0.5
      %v2235 = vtanh.pop %v2227
      %v2236 = vtanh.pop %v2228
      %v2237 = vtanh.pop %v2229
      %v2238 = vtanh.pop %v2230
      %v2239 = vtanh.pop %v2231
      %v2240 = vtanh.pop %v2232
      %v2241 = vtanh.pop %v2233
      %v2242 = vtanh.pop %v2234
      %v2243 = vmul.f32 %v2235, 0.5
      %v2244 = vmul.f32 %v2236, 0.5
      %v2245 = vmul.f32 %v2237, 0.5
      %v2246 = vmul.f32 %v2238, 0.5
      %v2247 = vmul.f32 %v2239, 0.5
      %v2248 = vmul.f32 %v2240, 0.5
      %v2249 = vmul.f32 %v2241, 0.5
      %v2250 = vmul.f32 %v2242, 0.5
      %v2251 = vadd.f32 %v2243, 0.5
      %v2252 = vadd.f32 %v2244, 0.5
      %v2253 = vadd.f32 %v2245, 0.5
      %v2254 = vadd.f32 %v2246, 0.5
      %v2255 = vadd.f32 %v2247, 0.5
      %v2256 = vadd.f32 %v2248, 0.5
      %v2257 = vadd.f32 %v2249, 0.5
      %v2258 = vadd.f32 %v2250, 0.5
      %v2259 = vmul.f32 %v1273, %v2251
      %v2260 = vmul.f32 %v1273, %v2252
      %v2261 = vmul.f32 %v1273, %v2253
      %v2262 = vmul.f32 %v1273, %v2254
      %v2263 = vmul.f32 %v1273, %v2255
      %v2264 = vmul.f32 %v1273, %v2256
      %v2265 = vmul.f32 %v1273, %v2257
      %v2266 = vmul.f32 %v1273, %v2258
      %v2267 = vrot.slane %v2259, 4
      %v2268 = vadd.f32 %v2259, %v2267
      %v2269 = vrot.slane %v2268, 2
      %v2270 = vadd.f32 %v2268, %v2269
      %v2271 = vrot.slane %v2270, 1
      %v2272 = vadd.f32 %v2270, %v2271
      %v2273 = vrot.slane %v2260, 4
      %v2274 = vadd.f32 %v2260, %v2273
      %v2275 = vrot.slane %v2274, 2
      %v2276 = vadd.f32 %v2274, %v2275
      %v2277 = vrot.slane %v2276, 1
      %v2278 = vadd.f32 %v2276, %v2277
      %v2279 = vrot.slane %v2261, 4
      %v2280 = vadd.f32 %v2261, %v2279
      %v2281 = vrot.slane %v2280, 2
      %v2282 = vadd.f32 %v2280, %v2281
      %v2283 = vrot.slane %v2282, 1
      %v2284 = vadd.f32 %v2282, %v2283
      %v2285 = vrot.slane %v2262, 4
      %v2286 = vadd.f32 %v2262, %v2285
      %v2287 = vrot.slane %v2286, 2
      %v2288 = vadd.f32 %v2286, %v2287
      %v2289 = vrot.slane %v2288, 1
      %v2290 = vadd.f32 %v2288, %v2289
      %v2291 = vrot.slane %v2263, 4
      %v2292 = vadd.f32 %v2263, %v2291
      %v2293 = vrot.slane %v2292, 2
      %v2294 = vadd.f32 %v2292, %v2293
      %v2295 = vrot.slane %v2294, 1
      %v2296 = vadd.f32 %v2294, %v2295
      %v2297 = vrot.slane %v2264, 4
      %v2298 = vadd.f32 %v2264, %v2297
      %v2299 = vrot.slane %v2298, 2
      %v2300 = vadd.f32 %v2298, %v2299
      %v2301 = vrot.slane %v2300, 1
      %v2302 = vadd.f32 %v2300, %v2301
      %v2303 = vrot.slane %v2265, 4
      %v2304 = vadd.f32 %v2265, %v2303
      %v2305 = vrot.slane %v2304, 2
      %v2306 = vadd.f32 %v2304, %v2305
      %v2307 = vrot.slane %v2306, 1
      %v2308 = vadd.f32 %v2306, %v2307
      %v2309 = vrot.slane %v2266, 4
      %v2310 = vadd.f32 %v2266, %v2309
      %v2311 = vrot.slane %v2310, 2
      %v2312 = vadd.f32 %v2310, %v2311
      %v2313 = vrot.slane %v2312, 1
      %v2314 = vadd.f32 %v2312, %v2313
      %v2315 = vadd.f32 %v2107, %v2272
      %v2316 = vadd.f32 %v2108, %v2278
      %v2317 = vadd.f32 %v2109, %v2284
      %v2318 = vadd.f32 %v2110, %v2290
      %v2319 = vadd.f32 %v2111, %v2296
      %v2320 = vadd.f32 %v2112, %v2302
      %v2321 = vadd.f32 %v2113, %v2308
      %v2322 = vadd.f32 %v2114, %v2314
      %v2323 = vmul.f32 %v1276, %v2251
      %v2324 = vmul.f32 %v1276, %v2252
      %v2325 = vmul.f32 %v1276, %v2253
      %v2326 = vmul.f32 %v1276, %v2254
      %v2327 = vmul.f32 %v1276, %v2255
      %v2328 = vmul.f32 %v1276, %v2256
      %v2329 = vmul.f32 %v1276, %v2257
      %v2330 = vmul.f32 %v1276, %v2258
      %v2331 = vrot.slane %v2323, 4
      %v2332 = vadd.f32 %v2323, %v2331
      %v2333 = vrot.slane %v2332, 2
      %v2334 = vadd.f32 %v2332, %v2333
      %v2335 = vrot.slane %v2334, 1
      %v2336 = vadd.f32 %v2334, %v2335
      %v2337 = vrot.slane %v2324, 4
      %v2338 = vadd.f32 %v2324, %v2337
      %v2339 = vrot.slane %v2338, 2
      %v2340 = vadd.f32 %v2338, %v2339
      %v2341 = vrot.slane %v2340, 1
      %v2342 = vadd.f32 %v2340, %v2341
      %v2343 = vrot.slane %v2325, 4
      %v2344 = vadd.f32 %v2325, %v2343
      %v2345 = vrot.slane %v2344, 2
      %v2346 = vadd.f32 %v2344, %v2345
      %v2347 = vrot.slane %v2346, 1
      %v2348 = vadd.f32 %v2346, %v2347
      %v2349 = vrot.slane %v2326, 4
      %v2350 = vadd.f32 %v2326, %v2349
      %v2351 = vrot.slane %v2350, 2
      %v2352 = vadd.f32 %v2350, %v2351
      %v2353 = vrot.slane %v2352, 1
      %v2354 = vadd.f32 %v2352, %v2353
      %v2355 = vrot.slane %v2327, 4
      %v2356 = vadd.f32 %v2327, %v2355
      %v2357 = vrot.slane %v2356, 2
      %v2358 = vadd.f32 %v2356, %v2357
      %v2359 = vrot.slane %v2358, 1
      %v2360 = vadd.f32 %v2358, %v2359
      %v2361 = vrot.slane %v2328, 4
      %v2362 = vadd.f32 %v2328, %v2361
      %v2363 = vrot.slane %v2362, 2
      %v2364 = vadd.f32 %v2362, %v2363
      %v2365 = vrot.slane %v2364, 1
      %v2366 = vadd.f32 %v2364, %v2365
      %v2367 = vrot.slane %v2329, 4
      %v2368 = vadd.f32 %v2329, %v2367
      %v2369 = vrot.slane %v2368, 2
      %v2370 = vadd.f32 %v2368, %v2369
      %v2371 = vrot.slane %v2370, 1
      %v2372 = vadd.f32 %v2370, %v2371
      %v2373 = vrot.slane %v2330, 4
      %v2374 = vadd.f32 %v2330, %v2373
      %v2375 = vrot.slane %v2374, 2
      %v2376 = vadd.f32 %v2374, %v2375
      %v2377 = vrot.slane %v2376, 1
      %v2378 = vadd.f32 %v2376, %v2377
      %v2379 = vadd.f32 %v2171, %v2336
      %v2380 = vadd.f32 %v2172, %v2342
      %v2381 = vadd.f32 %v2173, %v2348
      %v2382 = vadd.f32 %v2174, %v2354
      %v2383 = vadd.f32 %v2175, %v2360
      %v2384 = vadd.f32 %v2176, %v2366
      %v2385 = vadd.f32 %v2177, %v2372
      %v2386 = vadd.f32 %v2178, %v2378
      %s2388 = sor.u32 256, 16
      %2389 = vbcast.lane.b32.xlu0 %v1950, %s2388
      %v2390 = vpop.permute.xlu0 %2389
      %s2392 = sor.u32 256, 16
      %2393 = vbcast.lane.b32.xlu0 %v1957, %s2392
      %v2394 = vpop.permute.xlu0 %2393
      %s2396 = sor.u32 256, 16
      %2397 = vbcast.lane.b32.xlu0 %v1964, %s2396
      %v2398 = vpop.permute.xlu0 %2397
      %s2400 = sor.u32 256, 16
      %2401 = vbcast.lane.b32.xlu0 %v1971, %s2400
      %v2402 = vpop.permute.xlu0 %2401
      %s2404 = sor.u32 256, 16
      %2405 = vbcast.lane.b32.xlu0 %v1978, %s2404
      %v2406 = vpop.permute.xlu0 %2405
      %s2408 = sor.u32 256, 16
      %2409 = vbcast.lane.b32.xlu0 %v1985, %s2408
      %v2410 = vpop.permute.xlu0 %2409
      %s2412 = sor.u32 256, 16
      %2413 = vbcast.lane.b32.xlu0 %v1992, %s2412
      %v2414 = vpop.permute.xlu0 %2413
      %s2416 = sor.u32 256, 16
      %2417 = vbcast.lane.b32.xlu0 %v1999, %s2416
      %v2418 = vpop.permute.xlu0 %2417
      %v2419 = vsub.f32 %v2390, %v1487
      %v2420 = vsub.f32 %v2394, %v1487
      %v2421 = vsub.f32 %v2398, %v1487
      %v2422 = vsub.f32 %v2402, %v1487
      %v2423 = vsub.f32 %v2406, %v1487
      %v2424 = vsub.f32 %v2410, %v1487
      %v2425 = vsub.f32 %v2414, %v1487
      %v2426 = vsub.f32 %v2418, %v1487
      %v2427 = vmul.f32 %v1486, %v2419
      %v2428 = vmul.f32 %v1486, %v2420
      %v2429 = vmul.f32 %v1486, %v2421
      %v2430 = vmul.f32 %v1486, %v2422
      %v2431 = vmul.f32 %v1486, %v2423
      %v2432 = vmul.f32 %v1486, %v2424
      %v2433 = vmul.f32 %v1486, %v2425
      %v2434 = vmul.f32 %v1486, %v2426
      %v2435 = vmul.f32 %v2427, 0.5
      %v2436 = vmul.f32 %v2428, 0.5
      %v2437 = vmul.f32 %v2429, 0.5
      %v2438 = vmul.f32 %v2430, 0.5
      %v2439 = vmul.f32 %v2431, 0.5
      %v2440 = vmul.f32 %v2432, 0.5
      %v2441 = vmul.f32 %v2433, 0.5
      %v2442 = vmul.f32 %v2434, 0.5
      %v2443 = vtanh.pop %v2435
      %v2444 = vtanh.pop %v2436
      %v2445 = vtanh.pop %v2437
      %v2446 = vtanh.pop %v2438
      %v2447 = vtanh.pop %v2439
      %v2448 = vtanh.pop %v2440
      %v2449 = vtanh.pop %v2441
      %v2450 = vtanh.pop %v2442
      %v2451 = vmul.f32 %v2443, 0.5
      %v2452 = vmul.f32 %v2444, 0.5
      %v2453 = vmul.f32 %v2445, 0.5
      %v2454 = vmul.f32 %v2446, 0.5
      %v2455 = vmul.f32 %v2447, 0.5
      %v2456 = vmul.f32 %v2448, 0.5
      %v2457 = vmul.f32 %v2449, 0.5
      %v2458 = vmul.f32 %v2450, 0.5
      %v2459 = vadd.f32 %v2451, 0.5
      %v2460 = vadd.f32 %v2452, 0.5
      %v2461 = vadd.f32 %v2453, 0.5
      %v2462 = vadd.f32 %v2454, 0.5
      %v2463 = vadd.f32 %v2455, 0.5
      %v2464 = vadd.f32 %v2456, 0.5
      %v2465 = vadd.f32 %v2457, 0.5
      %v2466 = vadd.f32 %v2458, 0.5
      %v2467 = vmul.f32 %v1485, %v2459
      %v2468 = vmul.f32 %v1485, %v2460
      %v2469 = vmul.f32 %v1485, %v2461
      %v2470 = vmul.f32 %v1485, %v2462
      %v2471 = vmul.f32 %v1485, %v2463
      %v2472 = vmul.f32 %v1485, %v2464
      %v2473 = vmul.f32 %v1485, %v2465
      %v2474 = vmul.f32 %v1485, %v2466
      %v2475 = vrot.slane %v2467, 4
      %v2476 = vadd.f32 %v2467, %v2475
      %v2477 = vrot.slane %v2476, 2
      %v2478 = vadd.f32 %v2476, %v2477
      %v2479 = vrot.slane %v2478, 1
      %v2480 = vadd.f32 %v2478, %v2479
      %v2481 = vrot.slane %v2468, 4
      %v2482 = vadd.f32 %v2468, %v2481
      %v2483 = vrot.slane %v2482, 2
      %v2484 = vadd.f32 %v2482, %v2483
      %v2485 = vrot.slane %v2484, 1
      %v2486 = vadd.f32 %v2484, %v2485
      %v2487 = vrot.slane %v2469, 4
      %v2488 = vadd.f32 %v2469, %v2487
      %v2489 = vrot.slane %v2488, 2
      %v2490 = vadd.f32 %v2488, %v2489
      %v2491 = vrot.slane %v2490, 1
      %v2492 = vadd.f32 %v2490, %v2491
      %v2493 = vrot.slane %v2470, 4
      %v2494 = vadd.f32 %v2470, %v2493
      %v2495 = vrot.slane %v2494, 2
      %v2496 = vadd.f32 %v2494, %v2495
      %v2497 = vrot.slane %v2496, 1
      %v2498 = vadd.f32 %v2496, %v2497
      %v2499 = vrot.slane %v2471, 4
      %v2500 = vadd.f32 %v2471, %v2499
      %v2501 = vrot.slane %v2500, 2
      %v2502 = vadd.f32 %v2500, %v2501
      %v2503 = vrot.slane %v2502, 1
      %v2504 = vadd.f32 %v2502, %v2503
      %v2505 = vrot.slane %v2472, 4
      %v2506 = vadd.f32 %v2472, %v2505
      %v2507 = vrot.slane %v2506, 2
      %v2508 = vadd.f32 %v2506, %v2507
      %v2509 = vrot.slane %v2508, 1
      %v2510 = vadd.f32 %v2508, %v2509
      %v2511 = vrot.slane %v2473, 4
      %v2512 = vadd.f32 %v2473, %v2511
      %v2513 = vrot.slane %v2512, 2
      %v2514 = vadd.f32 %v2512, %v2513
      %v2515 = vrot.slane %v2514, 1
      %v2516 = vadd.f32 %v2514, %v2515
      %v2517 = vrot.slane %v2474, 4
      %v2518 = vadd.f32 %v2474, %v2517
      %v2519 = vrot.slane %v2518, 2
      %v2520 = vadd.f32 %v2518, %v2519
      %v2521 = vrot.slane %v2520, 1
      %v2522 = vadd.f32 %v2520, %v2521
      %v2523 = vadd.f32 %v2315, %v2480
      %v2524 = vadd.f32 %v2316, %v2486
      %v2525 = vadd.f32 %v2317, %v2492
      %v2526 = vadd.f32 %v2318, %v2498
      %v2527 = vadd.f32 %v2319, %v2504
      %v2528 = vadd.f32 %v2320, %v2510
      %v2529 = vadd.f32 %v2321, %v2516
      %v2530 = vadd.f32 %v2322, %v2522
      %v2531 = vmul.f32 %v1488, %v2459
      %v2532 = vmul.f32 %v1488, %v2460
      %v2533 = vmul.f32 %v1488, %v2461
      %v2534 = vmul.f32 %v1488, %v2462
      %v2535 = vmul.f32 %v1488, %v2463
      %v2536 = vmul.f32 %v1488, %v2464
      %v2537 = vmul.f32 %v1488, %v2465
      %v2538 = vmul.f32 %v1488, %v2466
      %v2539 = vrot.slane %v2531, 4
      %v2540 = vadd.f32 %v2531, %v2539
      %v2541 = vrot.slane %v2540, 2
      %v2542 = vadd.f32 %v2540, %v2541
      %v2543 = vrot.slane %v2542, 1
      %v2544 = vadd.f32 %v2542, %v2543
      %v2545 = vrot.slane %v2532, 4
      %v2546 = vadd.f32 %v2532, %v2545
      %v2547 = vrot.slane %v2546, 2
      %v2548 = vadd.f32 %v2546, %v2547
      %v2549 = vrot.slane %v2548, 1
      %v2550 = vadd.f32 %v2548, %v2549
      %v2551 = vrot.slane %v2533, 4
      %v2552 = vadd.f32 %v2533, %v2551
      %v2553 = vrot.slane %v2552, 2
      %v2554 = vadd.f32 %v2552, %v2553
      %v2555 = vrot.slane %v2554, 1
      %v2556 = vadd.f32 %v2554, %v2555
      %v2557 = vrot.slane %v2534, 4
      %v2558 = vadd.f32 %v2534, %v2557
      %v2559 = vrot.slane %v2558, 2
      %v2560 = vadd.f32 %v2558, %v2559
      %v2561 = vrot.slane %v2560, 1
      %v2562 = vadd.f32 %v2560, %v2561
      %v2563 = vrot.slane %v2535, 4
      %v2564 = vadd.f32 %v2535, %v2563
      %v2565 = vrot.slane %v2564, 2
      %v2566 = vadd.f32 %v2564, %v2565
      %v2567 = vrot.slane %v2566, 1
      %v2568 = vadd.f32 %v2566, %v2567
      %v2569 = vrot.slane %v2536, 4
      %v2570 = vadd.f32 %v2536, %v2569
      %v2571 = vrot.slane %v2570, 2
      %v2572 = vadd.f32 %v2570, %v2571
      %v2573 = vrot.slane %v2572, 1
      %v2574 = vadd.f32 %v2572, %v2573
      %v2575 = vrot.slane %v2537, 4
      %v2576 = vadd.f32 %v2537, %v2575
      %v2577 = vrot.slane %v2576, 2
      %v2578 = vadd.f32 %v2576, %v2577
      %v2579 = vrot.slane %v2578, 1
      %v2580 = vadd.f32 %v2578, %v2579
      %v2581 = vrot.slane %v2538, 4
      %v2582 = vadd.f32 %v2538, %v2581
      %v2583 = vrot.slane %v2582, 2
      %v2584 = vadd.f32 %v2582, %v2583
      %v2585 = vrot.slane %v2584, 1
      %v2586 = vadd.f32 %v2584, %v2585
      %v2587 = vadd.f32 %v2379, %v2544
      %v2588 = vadd.f32 %v2380, %v2550
      %v2589 = vadd.f32 %v2381, %v2556
      %v2590 = vadd.f32 %v2382, %v2562
      %v2591 = vadd.f32 %v2383, %v2568
      %v2592 = vadd.f32 %v2384, %v2574
      %v2593 = vadd.f32 %v2385, %v2580
      %v2594 = vadd.f32 %v2386, %v2586
      %s2596 = sor.u32 256, 24
      %2597 = vbcast.lane.b32.xlu0 %v1950, %s2596
      %v2598 = vpop.permute.xlu0 %2597
      %s2600 = sor.u32 256, 24
      %2601 = vbcast.lane.b32.xlu0 %v1957, %s2600
      %v2602 = vpop.permute.xlu0 %2601
      %s2604 = sor.u32 256, 24
      %2605 = vbcast.lane.b32.xlu0 %v1964, %s2604
      %v2606 = vpop.permute.xlu0 %2605
      %s2608 = sor.u32 256, 24
      %2609 = vbcast.lane.b32.xlu0 %v1971, %s2608
      %v2610 = vpop.permute.xlu0 %2609
      %s2612 = sor.u32 256, 24
      %2613 = vbcast.lane.b32.xlu0 %v1978, %s2612
      %v2614 = vpop.permute.xlu0 %2613
      %s2616 = sor.u32 256, 24
      %2617 = vbcast.lane.b32.xlu0 %v1985, %s2616
      %v2618 = vpop.permute.xlu0 %2617
      %s2620 = sor.u32 256, 24
      %2621 = vbcast.lane.b32.xlu0 %v1992, %s2620
      %v2622 = vpop.permute.xlu0 %2621
      %s2624 = sor.u32 256, 24
      %2625 = vbcast.lane.b32.xlu0 %v1999, %s2624
      %v2626 = vpop.permute.xlu0 %2625
      %v2627 = vsub.f32 %v2598, %v1699
      %v2628 = vsub.f32 %v2602, %v1699
      %v2629 = vsub.f32 %v2606, %v1699
      %v2630 = vsub.f32 %v2610, %v1699
      %v2631 = vsub.f32 %v2614, %v1699
      %v2632 = vsub.f32 %v2618, %v1699
      %v2633 = vsub.f32 %v2622, %v1699
      %v2634 = vsub.f32 %v2626, %v1699
      %v2635 = vmul.f32 %v1698, %v2627
      %v2636 = vmul.f32 %v1698, %v2628
      %v2637 = vmul.f32 %v1698, %v2629
      %v2638 = vmul.f32 %v1698, %v2630
      %v2639 = vmul.f32 %v1698, %v2631
      %v2640 = vmul.f32 %v1698, %v2632
      %v2641 = vmul.f32 %v1698, %v2633
      %v2642 = vmul.f32 %v1698, %v2634
      %v2643 = vmul.f32 %v2635, 0.5
      %v2644 = vmul.f32 %v2636, 0.5
      %v2645 = vmul.f32 %v2637, 0.5
      %v2646 = vmul.f32 %v2638, 0.5
      %v2647 = vmul.f32 %v2639, 0.5
      %v2648 = vmul.f32 %v2640, 0.5
      %v2649 = vmul.f32 %v2641, 0.5
      %v2650 = vmul.f32 %v2642, 0.5
      %v2651 = vtanh.pop %v2643
      %v2652 = vtanh.pop %v2644
      %v2653 = vtanh.pop %v2645
      %v2654 = vtanh.pop %v2646
      %v2655 = vtanh.pop %v2647
      %v2656 = vtanh.pop %v2648
      %v2657 = vtanh.pop %v2649
      %v2658 = vtanh.pop %v2650
      %v2659 = vmul.f32 %v2651, 0.5
      %v2660 = vmul.f32 %v2652, 0.5
      %v2661 = vmul.f32 %v2653, 0.5
      %v2662 = vmul.f32 %v2654, 0.5
      %v2663 = vmul.f32 %v2655, 0.5
      %v2664 = vmul.f32 %v2656, 0.5
      %v2665 = vmul.f32 %v2657, 0.5
      %v2666 = vmul.f32 %v2658, 0.5
      %v2667 = vadd.f32 %v2659, 0.5
      %v2668 = vadd.f32 %v2660, 0.5
      %v2669 = vadd.f32 %v2661, 0.5
      %v2670 = vadd.f32 %v2662, 0.5
      %v2671 = vadd.f32 %v2663, 0.5
      %v2672 = vadd.f32 %v2664, 0.5
      %v2673 = vadd.f32 %v2665, 0.5
      %v2674 = vadd.f32 %v2666, 0.5
      %v2675 = vmul.f32 %v1697, %v2667
      %v2676 = vmul.f32 %v1697, %v2668
      %v2677 = vmul.f32 %v1697, %v2669
      %v2678 = vmul.f32 %v1697, %v2670
      %v2679 = vmul.f32 %v1697, %v2671
      %v2680 = vmul.f32 %v1697, %v2672
      %v2681 = vmul.f32 %v1697, %v2673
      %v2682 = vmul.f32 %v1697, %v2674
      %v2683 = vrot.slane %v2675, 4
      %v2684 = vadd.f32 %v2675, %v2683
      %v2685 = vrot.slane %v2684, 2
      %v2686 = vadd.f32 %v2684, %v2685
      %v2687 = vrot.slane %v2686, 1
      %v2688 = vadd.f32 %v2686, %v2687
      %v2689 = vrot.slane %v2676, 4
      %v2690 = vadd.f32 %v2676, %v2689
      %v2691 = vrot.slane %v2690, 2
      %v2692 = vadd.f32 %v2690, %v2691
      %v2693 = vrot.slane %v2692, 1
      %v2694 = vadd.f32 %v2692, %v2693
      %v2695 = vrot.slane %v2677, 4
      %v2696 = vadd.f32 %v2677, %v2695
      %v2697 = vrot.slane %v2696, 2
      %v2698 = vadd.f32 %v2696, %v2697
      %v2699 = vrot.slane %v2698, 1
      %v2700 = vadd.f32 %v2698, %v2699
      %v2701 = vrot.slane %v2678, 4
      %v2702 = vadd.f32 %v2678, %v2701
      %v2703 = vrot.slane %v2702, 2
      %v2704 = vadd.f32 %v2702, %v2703
      %v2705 = vrot.slane %v2704, 1
      %v2706 = vadd.f32 %v2704, %v2705
      %v2707 = vrot.slane %v2679, 4
      %v2708 = vadd.f32 %v2679, %v2707
      %v2709 = vrot.slane %v2708, 2
      %v2710 = vadd.f32 %v2708, %v2709
      %v2711 = vrot.slane %v2710, 1
      %v2712 = vadd.f32 %v2710, %v2711
      %v2713 = vrot.slane %v2680, 4
      %v2714 = vadd.f32 %v2680, %v2713
      %v2715 = vrot.slane %v2714, 2
      %v2716 = vadd.f32 %v2714, %v2715
      %v2717 = vrot.slane %v2716, 1
      %v2718 = vadd.f32 %v2716, %v2717
      %v2719 = vrot.slane %v2681, 4
      %v2720 = vadd.f32 %v2681, %v2719
      %v2721 = vrot.slane %v2720, 2
      %v2722 = vadd.f32 %v2720, %v2721
      %v2723 = vrot.slane %v2722, 1
      %v2724 = vadd.f32 %v2722, %v2723
      %v2725 = vrot.slane %v2682, 4
      %v2726 = vadd.f32 %v2682, %v2725
      %v2727 = vrot.slane %v2726, 2
      %v2728 = vadd.f32 %v2726, %v2727
      %v2729 = vrot.slane %v2728, 1
      %v2730 = vadd.f32 %v2728, %v2729
      %v2731 = vadd.f32 %v2523, %v2688
      %v2732 = vadd.f32 %v2524, %v2694
      %v2733 = vadd.f32 %v2525, %v2700
      %v2734 = vadd.f32 %v2526, %v2706
      %v2735 = vadd.f32 %v2527, %v2712
      %v2736 = vadd.f32 %v2528, %v2718
      %v2737 = vadd.f32 %v2529, %v2724
      %v2738 = vadd.f32 %v2530, %v2730
      %v2739 = vmul.f32 %v1700, %v2667
      %v2740 = vmul.f32 %v1700, %v2668
      %v2741 = vmul.f32 %v1700, %v2669
      %v2742 = vmul.f32 %v1700, %v2670
      %v2743 = vmul.f32 %v1700, %v2671
      %v2744 = vmul.f32 %v1700, %v2672
      %v2745 = vmul.f32 %v1700, %v2673
      %v2746 = vmul.f32 %v1700, %v2674
      %v2747 = vrot.slane %v2739, 4
      %v2748 = vadd.f32 %v2739, %v2747
      %v2749 = vrot.slane %v2748, 2
      %v2750 = vadd.f32 %v2748, %v2749
      %v2751 = vrot.slane %v2750, 1
      %v2752 = vadd.f32 %v2750, %v2751
      %v2753 = vrot.slane %v2740, 4
      %v2754 = vadd.f32 %v2740, %v2753
      %v2755 = vrot.slane %v2754, 2
      %v2756 = vadd.f32 %v2754, %v2755
      %v2757 = vrot.slane %v2756, 1
      %v2758 = vadd.f32 %v2756, %v2757
      %v2759 = vrot.slane %v2741, 4
      %v2760 = vadd.f32 %v2741, %v2759
      %v2761 = vrot.slane %v2760, 2
      %v2762 = vadd.f32 %v2760, %v2761
      %v2763 = vrot.slane %v2762, 1
      %v2764 = vadd.f32 %v2762, %v2763
      %v2765 = vrot.slane %v2742, 4
      %v2766 = vadd.f32 %v2742, %v2765
      %v2767 = vrot.slane %v2766, 2
      %v2768 = vadd.f32 %v2766, %v2767
      %v2769 = vrot.slane %v2768, 1
      %v2770 = vadd.f32 %v2768, %v2769
      %v2771 = vrot.slane %v2743, 4
      %v2772 = vadd.f32 %v2743, %v2771
      %v2773 = vrot.slane %v2772, 2
      %v2774 = vadd.f32 %v2772, %v2773
      %v2775 = vrot.slane %v2774, 1
      %v2776 = vadd.f32 %v2774, %v2775
      %v2777 = vrot.slane %v2744, 4
      %v2778 = vadd.f32 %v2744, %v2777
      %v2779 = vrot.slane %v2778, 2
      %v2780 = vadd.f32 %v2778, %v2779
      %v2781 = vrot.slane %v2780, 1
      %v2782 = vadd.f32 %v2780, %v2781
      %v2783 = vrot.slane %v2745, 4
      %v2784 = vadd.f32 %v2745, %v2783
      %v2785 = vrot.slane %v2784, 2
      %v2786 = vadd.f32 %v2784, %v2785
      %v2787 = vrot.slane %v2786, 1
      %v2788 = vadd.f32 %v2786, %v2787
      %v2789 = vrot.slane %v2746, 4
      %v2790 = vadd.f32 %v2746, %v2789
      %v2791 = vrot.slane %v2790, 2
      %v2792 = vadd.f32 %v2790, %v2791
      %v2793 = vrot.slane %v2792, 1
      %v2794 = vadd.f32 %v2792, %v2793
      %v2795 = vadd.f32 %v2587, %v2752
      %v2796 = vadd.f32 %v2588, %v2758
      %v2797 = vadd.f32 %v2589, %v2764
      %v2798 = vadd.f32 %v2590, %v2770
      %v2799 = vadd.f32 %v2591, %v2776
      %v2800 = vadd.f32 %v2592, %v2782
      %v2801 = vadd.f32 %v2593, %v2788
      %v2802 = vadd.f32 %v2594, %v2794
      %v2803 = vmul.f32 %v534, %v1946
      %v2804 = vadd.f32 %v2803, %v1019
      %v2813 = vsel %vm1004, %v2796, %v2795
      %v2814 = vsel %vm1006, %v2797, %v2813
      %v2815 = vsel %vm1008, %v2798, %v2814
      %v2816 = vsel %vm1010, %v2799, %v2815
      %v2817 = vsel %vm1012, %v2800, %v2816
      %v2818 = vsel %vm1014, %v2801, %v2817
      %v2819 = vsel %vm1016, %v2802, %v2818
      %v2821 = vadd.f32 %v2804, %v2819
      %v2830 = vsel %vm1004, %v2732, %v2731
      %v2831 = vsel %vm1006, %v2733, %v2830
      %v2832 = vsel %vm1008, %v2734, %v2831
      %v2833 = vsel %vm1010, %v2735, %v2832
      %v2834 = vsel %vm1012, %v2736, %v2833
      %v2835 = vsel %vm1014, %v2737, %v2834
      %v2836 = vsel %vm1016, %v2738, %v2835
      %v2838 = vadd.f32 %v1036, %v2836
      %v2839 = vrcp.pop %v2838
      %v2840 = vmul.f32 %v2821, %v2839
      %v2841 = vlaneseq
      %v2842 = vshrl.u32 %v2841, 7
      %v2843 = vsub.s32 0, %v2842
      %v2844 = vrot.slane %v2840, %v2843
      %2846 = vbcast.lane.b32.xlu0 %v2844, 256
      %v2847 = vpop.permute.xlu0 %2846
      %v2848 = vlaneseq
      %v2849 = vshrl.u32 %v2848, 7
      %v2850 = vsub.s32 1, %v2849
      %v2851 = vrot.slane %v2840, %v2850
      %2853 = vbcast.lane.b32.xlu0 %v2851, 256
      %v2854 = vpop.permute.xlu0 %2853
      %v2855 = vlaneseq
      %v2856 = vshrl.u32 %v2855, 7
      %v2857 = vsub.s32 2, %v2856
      %v2858 = vrot.slane %v2840, %v2857
      %2860 = vbcast.lane.b32.xlu0 %v2858, 256
      %v2861 = vpop.permute.xlu0 %2860
      %v2862 = vlaneseq
      %v2863 = vshrl.u32 %v2862, 7
      %v2864 = vsub.s32 3, %v2863
      %v2865 = vrot.slane %v2840, %v2864
      %2867 = vbcast.lane.b32.xlu0 %v2865, 256
      %v2868 = vpop.permute.xlu0 %2867
      %v2869 = vlaneseq
      %v2870 = vshrl.u32 %v2869, 7
      %v2871 = vsub.s32 4, %v2870
      %v2872 = vrot.slane %v2840, %v2871
      %2874 = vbcast.lane.b32.xlu0 %v2872, 256
      %v2875 = vpop.permute.xlu0 %2874
      %v2876 = vlaneseq
      %v2877 = vshrl.u32 %v2876, 7
      %v2878 = vsub.s32 5, %v2877
      %v2879 = vrot.slane %v2840, %v2878
      %2881 = vbcast.lane.b32.xlu0 %v2879, 256
      %v2882 = vpop.permute.xlu0 %2881
      %v2883 = vlaneseq
      %v2884 = vshrl.u32 %v2883, 7
      %v2885 = vsub.s32 6, %v2884
      %v2886 = vrot.slane %v2840, %v2885
      %2888 = vbcast.lane.b32.xlu0 %v2886, 256
      %v2889 = vpop.permute.xlu0 %2888
      %v2890 = vlaneseq
      %v2891 = vshrl.u32 %v2890, 7
      %v2892 = vsub.s32 7, %v2891
      %v2893 = vrot.slane %v2840, %v2892
      %2895 = vbcast.lane.b32.xlu0 %v2893, 256
      %v2896 = vpop.permute.xlu0 %2895
      %v2897 = vsub.f32 %v2847, %v1039
      %v2898 = vsub.f32 %v2854, %v1039
      %v2899 = vsub.f32 %v2861, %v1039
      %v2900 = vsub.f32 %v2868, %v1039
      %v2901 = vsub.f32 %v2875, %v1039
      %v2902 = vsub.f32 %v2882, %v1039
      %v2903 = vsub.f32 %v2889, %v1039
      %v2904 = vsub.f32 %v2896, %v1039
      %v2905 = vmul.f32 %v1038, %v2897
      %v2906 = vmul.f32 %v1038, %v2898
      %v2907 = vmul.f32 %v1038, %v2899
      %v2908 = vmul.f32 %v1038, %v2900
      %v2909 = vmul.f32 %v1038, %v2901
      %v2910 = vmul.f32 %v1038, %v2902
      %v2911 = vmul.f32 %v1038, %v2903
      %v2912 = vmul.f32 %v1038, %v2904
      %v2913 = vmul.f32 %v2905, 0.5
      %v2914 = vmul.f32 %v2906, 0.5
      %v2915 = vmul.f32 %v2907, 0.5
      %v2916 = vmul.f32 %v2908, 0.5
      %v2917 = vmul.f32 %v2909, 0.5
      %v2918 = vmul.f32 %v2910, 0.5
      %v2919 = vmul.f32 %v2911, 0.5
      %v2920 = vmul.f32 %v2912, 0.5
      %v2921 = vtanh.pop %v2913
      %v2922 = vtanh.pop %v2914
      %v2923 = vtanh.pop %v2915
      %v2924 = vtanh.pop %v2916
      %v2925 = vtanh.pop %v2917
      %v2926 = vtanh.pop %v2918
      %v2927 = vtanh.pop %v2919
      %v2928 = vtanh.pop %v2920
      %v2929 = vmul.f32 %v2921, 0.5
      %v2930 = vmul.f32 %v2922, 0.5
      %v2931 = vmul.f32 %v2923, 0.5
      %v2932 = vmul.f32 %v2924, 0.5
      %v2933 = vmul.f32 %v2925, 0.5
      %v2934 = vmul.f32 %v2926, 0.5
      %v2935 = vmul.f32 %v2927, 0.5
      %v2936 = vmul.f32 %v2928, 0.5
      %v2937 = vadd.f32 %v2929, 0.5
      %v2938 = vadd.f32 %v2930, 0.5
      %v2939 = vadd.f32 %v2931, 0.5
      %v2940 = vadd.f32 %v2932, 0.5
      %v2941 = vadd.f32 %v2933, 0.5
      %v2942 = vadd.f32 %v2934, 0.5
      %v2943 = vadd.f32 %v2935, 0.5
      %v2944 = vadd.f32 %v2936, 0.5
      %v2945 = vmul.f32 %v1037, %v2937
      %v2946 = vmul.f32 %v1037, %v2938
      %v2947 = vmul.f32 %v1037, %v2939
      %v2948 = vmul.f32 %v1037, %v2940
      %v2949 = vmul.f32 %v1037, %v2941
      %v2950 = vmul.f32 %v1037, %v2942
      %v2951 = vmul.f32 %v1037, %v2943
      %v2952 = vmul.f32 %v1037, %v2944
      %v2953 = vrot.slane %v2945, 4
      %v2954 = vadd.f32 %v2945, %v2953
      %v2955 = vrot.slane %v2954, 2
      %v2956 = vadd.f32 %v2954, %v2955
      %v2957 = vrot.slane %v2956, 1
      %v2958 = vadd.f32 %v2956, %v2957
      %v2959 = vrot.slane %v2946, 4
      %v2960 = vadd.f32 %v2946, %v2959
      %v2961 = vrot.slane %v2960, 2
      %v2962 = vadd.f32 %v2960, %v2961
      %v2963 = vrot.slane %v2962, 1
      %v2964 = vadd.f32 %v2962, %v2963
      %v2965 = vrot.slane %v2947, 4
      %v2966 = vadd.f32 %v2947, %v2965
      %v2967 = vrot.slane %v2966, 2
      %v2968 = vadd.f32 %v2966, %v2967
      %v2969 = vrot.slane %v2968, 1
      %v2970 = vadd.f32 %v2968, %v2969
      %v2971 = vrot.slane %v2948, 4
      %v2972 = vadd.f32 %v2948, %v2971
      %v2973 = vrot.slane %v2972, 2
      %v2974 = vadd.f32 %v2972, %v2973
      %v2975 = vrot.slane %v2974, 1
      %v2976 = vadd.f32 %v2974, %v2975
      %v2977 = vrot.slane %v2949, 4
      %v2978 = vadd.f32 %v2949, %v2977
      %v2979 = vrot.slane %v2978, 2
      %v2980 = vadd.f32 %v2978, %v2979
      %v2981 = vrot.slane %v2980, 1
      %v2982 = vadd.f32 %v2980, %v2981
      %v2983 = vrot.slane %v2950, 4
      %v2984 = vadd.f32 %v2950, %v2983
      %v2985 = vrot.slane %v2984, 2
      %v2986 = vadd.f32 %v2984, %v2985
      %v2987 = vrot.slane %v2986, 1
      %v2988 = vadd.f32 %v2986, %v2987
      %v2989 = vrot.slane %v2951, 4
      %v2990 = vadd.f32 %v2951, %v2989
      %v2991 = vrot.slane %v2990, 2
      %v2992 = vadd.f32 %v2990, %v2991
      %v2993 = vrot.slane %v2992, 1
      %v2994 = vadd.f32 %v2992, %v2993
      %v2995 = vrot.slane %v2952, 4
      %v2996 = vadd.f32 %v2952, %v2995
      %v2997 = vrot.slane %v2996, 2
      %v2998 = vadd.f32 %v2996, %v2997
      %v2999 = vrot.slane %v2998, 1
      %v3000 = vadd.f32 %v2998, %v2999
      %v3001 = vadd.f32 %v2958, 0.0
      %v3002 = vadd.f32 %v2964, 0.0
      %v3003 = vadd.f32 %v2970, 0.0
      %v3004 = vadd.f32 %v2976, 0.0
      %v3005 = vadd.f32 %v2982, 0.0
      %v3006 = vadd.f32 %v2988, 0.0
      %v3007 = vadd.f32 %v2994, 0.0
      %v3008 = vadd.f32 %v3000, 0.0
      %v3009 = vmul.f32 %v1040, %v2937
      %v3010 = vmul.f32 %v1040, %v2938
      %v3011 = vmul.f32 %v1040, %v2939
      %v3012 = vmul.f32 %v1040, %v2940
      %v3013 = vmul.f32 %v1040, %v2941
      %v3014 = vmul.f32 %v1040, %v2942
      %v3015 = vmul.f32 %v1040, %v2943
      %v3016 = vmul.f32 %v1040, %v2944
      %v3017 = vrot.slane %v3009, 4
      %v3018 = vadd.f32 %v3009, %v3017
      %v3019 = vrot.slane %v3018, 2
      %v3020 = vadd.f32 %v3018, %v3019
      %v3021 = vrot.slane %v3020, 1
      %v3022 = vadd.f32 %v3020, %v3021
      %v3023 = vrot.slane %v3010, 4
      %v3024 = vadd.f32 %v3010, %v3023
      %v3025 = vrot.slane %v3024, 2
      %v3026 = vadd.f32 %v3024, %v3025
      %v3027 = vrot.slane %v3026, 1
      %v3028 = vadd.f32 %v3026, %v3027
      %v3029 = vrot.slane %v3011, 4
      %v3030 = vadd.f32 %v3011, %v3029
      %v3031 = vrot.slane %v3030, 2
      %v3032 = vadd.f32 %v3030, %v3031
      %v3033 = vrot.slane %v3032, 1
      %v3034 = vadd.f32 %v3032, %v3033
      %v3035 = vrot.slane %v3012, 4
      %v3036 = vadd.f32 %v3012, %v3035
      %v3037 = vrot.slane %v3036, 2
      %v3038 = vadd.f32 %v3036, %v3037
      %v3039 = vrot.slane %v3038, 1
      %v3040 = vadd.f32 %v3038, %v3039
      %v3041 = vrot.slane %v3013, 4
      %v3042 = vadd.f32 %v3013, %v3041
      %v3043 = vrot.slane %v3042, 2
      %v3044 = vadd.f32 %v3042, %v3043
      %v3045 = vrot.slane %v3044, 1
      %v3046 = vadd.f32 %v3044, %v3045
      %v3047 = vrot.slane %v3014, 4
      %v3048 = vadd.f32 %v3014, %v3047
      %v3049 = vrot.slane %v3048, 2
      %v3050 = vadd.f32 %v3048, %v3049
      %v3051 = vrot.slane %v3050, 1
      %v3052 = vadd.f32 %v3050, %v3051
      %v3053 = vrot.slane %v3015, 4
      %v3054 = vadd.f32 %v3015, %v3053
      %v3055 = vrot.slane %v3054, 2
      %v3056 = vadd.f32 %v3054, %v3055
      %v3057 = vrot.slane %v3056, 1
      %v3058 = vadd.f32 %v3056, %v3057
      %v3059 = vrot.slane %v3016, 4
      %v3060 = vadd.f32 %v3016, %v3059
      %v3061 = vrot.slane %v3060, 2
      %v3062 = vadd.f32 %v3060, %v3061
      %v3063 = vrot.slane %v3062, 1
      %v3064 = vadd.f32 %v3062, %v3063
      %v3065 = vadd.f32 %v3022, 0.0
      %v3066 = vadd.f32 %v3028, 0.0
      %v3067 = vadd.f32 %v3034, 0.0
      %v3068 = vadd.f32 %v3040, 0.0
      %v3069 = vadd.f32 %v3046, 0.0
      %v3070 = vadd.f32 %v3052, 0.0
      %v3071 = vadd.f32 %v3058, 0.0
      %v3072 = vadd.f32 %v3064, 0.0
      %s3074 = sor.u32 256, 8
      %3075 = vbcast.lane.b32.xlu0 %v2844, %s3074
      %v3076 = vpop.permute.xlu0 %3075
      %s3078 = sor.u32 256, 8
      %3079 = vbcast.lane.b32.xlu0 %v2851, %s3078
      %v3080 = vpop.permute.xlu0 %3079
      %s3082 = sor.u32 256, 8
      %3083 = vbcast.lane.b32.xlu0 %v2858, %s3082
      %v3084 = vpop.permute.xlu0 %3083
      %s3086 = sor.u32 256, 8
      %3087 = vbcast.lane.b32.xlu0 %v2865, %s3086
      %v3088 = vpop.permute.xlu0 %3087
      %s3090 = sor.u32 256, 8
      %3091 = vbcast.lane.b32.xlu0 %v2872, %s3090
      %v3092 = vpop.permute.xlu0 %3091
      %s3094 = sor.u32 256, 8
      %3095 = vbcast.lane.b32.xlu0 %v2879, %s3094
      %v3096 = vpop.permute.xlu0 %3095
      %s3098 = sor.u32 256, 8
      %3099 = vbcast.lane.b32.xlu0 %v2886, %s3098
      %v3100 = vpop.permute.xlu0 %3099
      %s3102 = sor.u32 256, 8
      %3103 = vbcast.lane.b32.xlu0 %v2893, %s3102
      %v3104 = vpop.permute.xlu0 %3103
      %v3105 = vsub.f32 %v3076, %v1275
      %v3106 = vsub.f32 %v3080, %v1275
      %v3107 = vsub.f32 %v3084, %v1275
      %v3108 = vsub.f32 %v3088, %v1275
      %v3109 = vsub.f32 %v3092, %v1275
      %v3110 = vsub.f32 %v3096, %v1275
      %v3111 = vsub.f32 %v3100, %v1275
      %v3112 = vsub.f32 %v3104, %v1275
      %v3113 = vmul.f32 %v1274, %v3105
      %v3114 = vmul.f32 %v1274, %v3106
      %v3115 = vmul.f32 %v1274, %v3107
      %v3116 = vmul.f32 %v1274, %v3108
      %v3117 = vmul.f32 %v1274, %v3109
      %v3118 = vmul.f32 %v1274, %v3110
      %v3119 = vmul.f32 %v1274, %v3111
      %v3120 = vmul.f32 %v1274, %v3112
      %v3121 = vmul.f32 %v3113, 0.5
      %v3122 = vmul.f32 %v3114, 0.5
      %v3123 = vmul.f32 %v3115, 0.5
      %v3124 = vmul.f32 %v3116, 0.5
      %v3125 = vmul.f32 %v3117, 0.5
      %v3126 = vmul.f32 %v3118, 0.5
      %v3127 = vmul.f32 %v3119, 0.5
      %v3128 = vmul.f32 %v3120, 0.5
      %v3129 = vtanh.pop %v3121
      %v3130 = vtanh.pop %v3122
      %v3131 = vtanh.pop %v3123
      %v3132 = vtanh.pop %v3124
      %v3133 = vtanh.pop %v3125
      %v3134 = vtanh.pop %v3126
      %v3135 = vtanh.pop %v3127
      %v3136 = vtanh.pop %v3128
      %v3137 = vmul.f32 %v3129, 0.5
      %v3138 = vmul.f32 %v3130, 0.5
      %v3139 = vmul.f32 %v3131, 0.5
      %v3140 = vmul.f32 %v3132, 0.5
      %v3141 = vmul.f32 %v3133, 0.5
      %v3142 = vmul.f32 %v3134, 0.5
      %v3143 = vmul.f32 %v3135, 0.5
      %v3144 = vmul.f32 %v3136, 0.5
      %v3145 = vadd.f32 %v3137, 0.5
      %v3146 = vadd.f32 %v3138, 0.5
      %v3147 = vadd.f32 %v3139, 0.5
      %v3148 = vadd.f32 %v3140, 0.5
      %v3149 = vadd.f32 %v3141, 0.5
      %v3150 = vadd.f32 %v3142, 0.5
      %v3151 = vadd.f32 %v3143, 0.5
      %v3152 = vadd.f32 %v3144, 0.5
      %v3153 = vmul.f32 %v1273, %v3145
      %v3154 = vmul.f32 %v1273, %v3146
      %v3155 = vmul.f32 %v1273, %v3147
      %v3156 = vmul.f32 %v1273, %v3148
      %v3157 = vmul.f32 %v1273, %v3149
      %v3158 = vmul.f32 %v1273, %v3150
      %v3159 = vmul.f32 %v1273, %v3151
      %v3160 = vmul.f32 %v1273, %v3152
      %v3161 = vrot.slane %v3153, 4
      %v3162 = vadd.f32 %v3153, %v3161
      %v3163 = vrot.slane %v3162, 2
      %v3164 = vadd.f32 %v3162, %v3163
      %v3165 = vrot.slane %v3164, 1
      %v3166 = vadd.f32 %v3164, %v3165
      %v3167 = vrot.slane %v3154, 4
      %v3168 = vadd.f32 %v3154, %v3167
      %v3169 = vrot.slane %v3168, 2
      %v3170 = vadd.f32 %v3168, %v3169
      %v3171 = vrot.slane %v3170, 1
      %v3172 = vadd.f32 %v3170, %v3171
      %v3173 = vrot.slane %v3155, 4
      %v3174 = vadd.f32 %v3155, %v3173
      %v3175 = vrot.slane %v3174, 2
      %v3176 = vadd.f32 %v3174, %v3175
      %v3177 = vrot.slane %v3176, 1
      %v3178 = vadd.f32 %v3176, %v3177
      %v3179 = vrot.slane %v3156, 4
      %v3180 = vadd.f32 %v3156, %v3179
      %v3181 = vrot.slane %v3180, 2
      %v3182 = vadd.f32 %v3180, %v3181
      %v3183 = vrot.slane %v3182, 1
      %v3184 = vadd.f32 %v3182, %v3183
      %v3185 = vrot.slane %v3157, 4
      %v3186 = vadd.f32 %v3157, %v3185
      %v3187 = vrot.slane %v3186, 2
      %v3188 = vadd.f32 %v3186, %v3187
      %v3189 = vrot.slane %v3188, 1
      %v3190 = vadd.f32 %v3188, %v3189
      %v3191 = vrot.slane %v3158, 4
      %v3192 = vadd.f32 %v3158, %v3191
      %v3193 = vrot.slane %v3192, 2
      %v3194 = vadd.f32 %v3192, %v3193
      %v3195 = vrot.slane %v3194, 1
      %v3196 = vadd.f32 %v3194, %v3195
      %v3197 = vrot.slane %v3159, 4
      %v3198 = vadd.f32 %v3159, %v3197
      %v3199 = vrot.slane %v3198, 2
      %v3200 = vadd.f32 %v3198, %v3199
      %v3201 = vrot.slane %v3200, 1
      %v3202 = vadd.f32 %v3200, %v3201
      %v3203 = vrot.slane %v3160, 4
      %v3204 = vadd.f32 %v3160, %v3203
      %v3205 = vrot.slane %v3204, 2
      %v3206 = vadd.f32 %v3204, %v3205
      %v3207 = vrot.slane %v3206, 1
      %v3208 = vadd.f32 %v3206, %v3207
      %v3209 = vadd.f32 %v3001, %v3166
      %v3210 = vadd.f32 %v3002, %v3172
      %v3211 = vadd.f32 %v3003, %v3178
      %v3212 = vadd.f32 %v3004, %v3184
      %v3213 = vadd.f32 %v3005, %v3190
      %v3214 = vadd.f32 %v3006, %v3196
      %v3215 = vadd.f32 %v3007, %v3202
      %v3216 = vadd.f32 %v3008, %v3208
      %v3217 = vmul.f32 %v1276, %v3145
      %v3218 = vmul.f32 %v1276, %v3146
      %v3219 = vmul.f32 %v1276, %v3147
      %v3220 = vmul.f32 %v1276, %v3148
      %v3221 = vmul.f32 %v1276, %v3149
      %v3222 = vmul.f32 %v1276, %v3150
      %v3223 = vmul.f32 %v1276, %v3151
      %v3224 = vmul.f32 %v1276, %v3152
      %v3225 = vrot.slane %v3217, 4
      %v3226 = vadd.f32 %v3217, %v3225
      %v3227 = vrot.slane %v3226, 2
      %v3228 = vadd.f32 %v3226, %v3227
      %v3229 = vrot.slane %v3228, 1
      %v3230 = vadd.f32 %v3228, %v3229
      %v3231 = vrot.slane %v3218, 4
      %v3232 = vadd.f32 %v3218, %v3231
      %v3233 = vrot.slane %v3232, 2
      %v3234 = vadd.f32 %v3232, %v3233
      %v3235 = vrot.slane %v3234, 1
      %v3236 = vadd.f32 %v3234, %v3235
      %v3237 = vrot.slane %v3219, 4
      %v3238 = vadd.f32 %v3219, %v3237
      %v3239 = vrot.slane %v3238, 2
      %v3240 = vadd.f32 %v3238, %v3239
      %v3241 = vrot.slane %v3240, 1
      %v3242 = vadd.f32 %v3240, %v3241
      %v3243 = vrot.slane %v3220, 4
      %v3244 = vadd.f32 %v3220, %v3243
      %v3245 = vrot.slane %v3244, 2
      %v3246 = vadd.f32 %v3244, %v3245
      %v3247 = vrot.slane %v3246, 1
      %v3248 = vadd.f32 %v3246, %v3247
      %v3249 = vrot.slane %v3221, 4
      %v3250 = vadd.f32 %v3221, %v3249
      %v3251 = vrot.slane %v3250, 2
      %v3252 = vadd.f32 %v3250, %v3251
      %v3253 = vrot.slane %v3252, 1
      %v3254 = vadd.f32 %v3252, %v3253
      %v3255 = vrot.slane %v3222, 4
      %v3256 = vadd.f32 %v3222, %v3255
      %v3257 = vrot.slane %v3256, 2
      %v3258 = vadd.f32 %v3256, %v3257
      %v3259 = vrot.slane %v3258, 1
      %v3260 = vadd.f32 %v3258, %v3259
      %v3261 = vrot.slane %v3223, 4
      %v3262 = vadd.f32 %v3223, %v3261
      %v3263 = vrot.slane %v3262, 2
      %v3264 = vadd.f32 %v3262, %v3263
      %v3265 = vrot.slane %v3264, 1
      %v3266 = vadd.f32 %v3264, %v3265
      %v3267 = vrot.slane %v3224, 4
      %v3268 = vadd.f32 %v3224, %v3267
      %v3269 = vrot.slane %v3268, 2
      %v3270 = vadd.f32 %v3268, %v3269
      %v3271 = vrot.slane %v3270, 1
      %v3272 = vadd.f32 %v3270, %v3271
      %v3273 = vadd.f32 %v3065, %v3230
      %v3274 = vadd.f32 %v3066, %v3236
      %v3275 = vadd.f32 %v3067, %v3242
      %v3276 = vadd.f32 %v3068, %v3248
      %v3277 = vadd.f32 %v3069, %v3254
      %v3278 = vadd.f32 %v3070, %v3260
      %v3279 = vadd.f32 %v3071, %v3266
      %v3280 = vadd.f32 %v3072, %v3272
      %s3282 = sor.u32 256, 16
      %3283 = vbcast.lane.b32.xlu0 %v2844, %s3282
      %v3284 = vpop.permute.xlu0 %3283
      %s3286 = sor.u32 256, 16
      %3287 = vbcast.lane.b32.xlu0 %v2851, %s3286
      %v3288 = vpop.permute.xlu0 %3287
      %s3290 = sor.u32 256, 16
      %3291 = vbcast.lane.b32.xlu0 %v2858, %s3290
      %v3292 = vpop.permute.xlu0 %3291
      %s3294 = sor.u32 256, 16
      %3295 = vbcast.lane.b32.xlu0 %v2865, %s3294
      %v3296 = vpop.permute.xlu0 %3295
      %s3298 = sor.u32 256, 16
      %3299 = vbcast.lane.b32.xlu0 %v2872, %s3298
      %v3300 = vpop.permute.xlu0 %3299
      %s3302 = sor.u32 256, 16
      %3303 = vbcast.lane.b32.xlu0 %v2879, %s3302
      %v3304 = vpop.permute.xlu0 %3303
      %s3306 = sor.u32 256, 16
      %3307 = vbcast.lane.b32.xlu0 %v2886, %s3306
      %v3308 = vpop.permute.xlu0 %3307
      %s3310 = sor.u32 256, 16
      %3311 = vbcast.lane.b32.xlu0 %v2893, %s3310
      %v3312 = vpop.permute.xlu0 %3311
      %v3313 = vsub.f32 %v3284, %v1487
      %v3314 = vsub.f32 %v3288, %v1487
      %v3315 = vsub.f32 %v3292, %v1487
      %v3316 = vsub.f32 %v3296, %v1487
      %v3317 = vsub.f32 %v3300, %v1487
      %v3318 = vsub.f32 %v3304, %v1487
      %v3319 = vsub.f32 %v3308, %v1487
      %v3320 = vsub.f32 %v3312, %v1487
      %v3321 = vmul.f32 %v1486, %v3313
      %v3322 = vmul.f32 %v1486, %v3314
      %v3323 = vmul.f32 %v1486, %v3315
      %v3324 = vmul.f32 %v1486, %v3316
      %v3325 = vmul.f32 %v1486, %v3317
      %v3326 = vmul.f32 %v1486, %v3318
      %v3327 = vmul.f32 %v1486, %v3319
      %v3328 = vmul.f32 %v1486, %v3320
      %v3329 = vmul.f32 %v3321, 0.5
      %v3330 = vmul.f32 %v3322, 0.5
      %v3331 = vmul.f32 %v3323, 0.5
      %v3332 = vmul.f32 %v3324, 0.5
      %v3333 = vmul.f32 %v3325, 0.5
      %v3334 = vmul.f32 %v3326, 0.5
      %v3335 = vmul.f32 %v3327, 0.5
      %v3336 = vmul.f32 %v3328, 0.5
      %v3337 = vtanh.pop %v3329
      %v3338 = vtanh.pop %v3330
      %v3339 = vtanh.pop %v3331
      %v3340 = vtanh.pop %v3332
      %v3341 = vtanh.pop %v3333
      %v3342 = vtanh.pop %v3334
      %v3343 = vtanh.pop %v3335
      %v3344 = vtanh.pop %v3336
      %v3345 = vmul.f32 %v3337, 0.5
      %v3346 = vmul.f32 %v3338, 0.5
      %v3347 = vmul.f32 %v3339, 0.5
      %v3348 = vmul.f32 %v3340, 0.5
      %v3349 = vmul.f32 %v3341, 0.5
      %v3350 = vmul.f32 %v3342, 0.5
      %v3351 = vmul.f32 %v3343, 0.5
      %v3352 = vmul.f32 %v3344, 0.5
      %v3353 = vadd.f32 %v3345, 0.5
      %v3354 = vadd.f32 %v3346, 0.5
      %v3355 = vadd.f32 %v3347, 0.5
      %v3356 = vadd.f32 %v3348, 0.5
      %v3357 = vadd.f32 %v3349, 0.5
      %v3358 = vadd.f32 %v3350, 0.5
      %v3359 = vadd.f32 %v3351, 0.5
      %v3360 = vadd.f32 %v3352, 0.5
      %v3361 = vmul.f32 %v1485, %v3353
      %v3362 = vmul.f32 %v1485, %v3354
      %v3363 = vmul.f32 %v1485, %v3355
      %v3364 = vmul.f32 %v1485, %v3356
      %v3365 = vmul.f32 %v1485, %v3357
      %v3366 = vmul.f32 %v1485, %v3358
      %v3367 = vmul.f32 %v1485, %v3359
      %v3368 = vmul.f32 %v1485, %v3360
      %v3369 = vrot.slane %v3361, 4
      %v3370 = vadd.f32 %v3361, %v3369
      %v3371 = vrot.slane %v3370, 2
      %v3372 = vadd.f32 %v3370, %v3371
      %v3373 = vrot.slane %v3372, 1
      %v3374 = vadd.f32 %v3372, %v3373
      %v3375 = vrot.slane %v3362, 4
      %v3376 = vadd.f32 %v3362, %v3375
      %v3377 = vrot.slane %v3376, 2
      %v3378 = vadd.f32 %v3376, %v3377
      %v3379 = vrot.slane %v3378, 1
      %v3380 = vadd.f32 %v3378, %v3379
      %v3381 = vrot.slane %v3363, 4
      %v3382 = vadd.f32 %v3363, %v3381
      %v3383 = vrot.slane %v3382, 2
      %v3384 = vadd.f32 %v3382, %v3383
      %v3385 = vrot.slane %v3384, 1
      %v3386 = vadd.f32 %v3384, %v3385
      %v3387 = vrot.slane %v3364, 4
      %v3388 = vadd.f32 %v3364, %v3387
      %v3389 = vrot.slane %v3388, 2
      %v3390 = vadd.f32 %v3388, %v3389
      %v3391 = vrot.slane %v3390, 1
      %v3392 = vadd.f32 %v3390, %v3391
      %v3393 = vrot.slane %v3365, 4
      %v3394 = vadd.f32 %v3365, %v3393
      %v3395 = vrot.slane %v3394, 2
      %v3396 = vadd.f32 %v3394, %v3395
      %v3397 = vrot.slane %v3396, 1
      %v3398 = vadd.f32 %v3396, %v3397
      %v3399 = vrot.slane %v3366, 4
      %v3400 = vadd.f32 %v3366, %v3399
      %v3401 = vrot.slane %v3400, 2
      %v3402 = vadd.f32 %v3400, %v3401
      %v3403 = vrot.slane %v3402, 1
      %v3404 = vadd.f32 %v3402, %v3403
      %v3405 = vrot.slane %v3367, 4
      %v3406 = vadd.f32 %v3367, %v3405
      %v3407 = vrot.slane %v3406, 2
      %v3408 = vadd.f32 %v3406, %v3407
      %v3409 = vrot.slane %v3408, 1
      %v3410 = vadd.f32 %v3408, %v3409
      %v3411 = vrot.slane %v3368, 4
      %v3412 = vadd.f32 %v3368, %v3411
      %v3413 = vrot.slane %v3412, 2
      %v3414 = vadd.f32 %v3412, %v3413
      %v3415 = vrot.slane %v3414, 1
      %v3416 = vadd.f32 %v3414, %v3415
      %v3417 = vadd.f32 %v3209, %v3374
      %v3418 = vadd.f32 %v3210, %v3380
      %v3419 = vadd.f32 %v3211, %v3386
      %v3420 = vadd.f32 %v3212, %v3392
      %v3421 = vadd.f32 %v3213, %v3398
      %v3422 = vadd.f32 %v3214, %v3404
      %v3423 = vadd.f32 %v3215, %v3410
      %v3424 = vadd.f32 %v3216, %v3416
      %v3425 = vmul.f32 %v1488, %v3353
      %v3426 = vmul.f32 %v1488, %v3354
      %v3427 = vmul.f32 %v1488, %v3355
      %v3428 = vmul.f32 %v1488, %v3356
      %v3429 = vmul.f32 %v1488, %v3357
      %v3430 = vmul.f32 %v1488, %v3358
      %v3431 = vmul.f32 %v1488, %v3359
      %v3432 = vmul.f32 %v1488, %v3360
      %v3433 = vrot.slane %v3425, 4
      %v3434 = vadd.f32 %v3425, %v3433
      %v3435 = vrot.slane %v3434, 2
      %v3436 = vadd.f32 %v3434, %v3435
      %v3437 = vrot.slane %v3436, 1
      %v3438 = vadd.f32 %v3436, %v3437
      %v3439 = vrot.slane %v3426, 4
      %v3440 = vadd.f32 %v3426, %v3439
      %v3441 = vrot.slane %v3440, 2
      %v3442 = vadd.f32 %v3440, %v3441
      %v3443 = vrot.slane %v3442, 1
      %v3444 = vadd.f32 %v3442, %v3443
      %v3445 = vrot.slane %v3427, 4
      %v3446 = vadd.f32 %v3427, %v3445
      %v3447 = vrot.slane %v3446, 2
      %v3448 = vadd.f32 %v3446, %v3447
      %v3449 = vrot.slane %v3448, 1
      %v3450 = vadd.f32 %v3448, %v3449
      %v3451 = vrot.slane %v3428, 4
      %v3452 = vadd.f32 %v3428, %v3451
      %v3453 = vrot.slane %v3452, 2
      %v3454 = vadd.f32 %v3452, %v3453
      %v3455 = vrot.slane %v3454, 1
      %v3456 = vadd.f32 %v3454, %v3455
      %v3457 = vrot.slane %v3429, 4
      %v3458 = vadd.f32 %v3429, %v3457
      %v3459 = vrot.slane %v3458, 2
      %v3460 = vadd.f32 %v3458, %v3459
      %v3461 = vrot.slane %v3460, 1
      %v3462 = vadd.f32 %v3460, %v3461
      %v3463 = vrot.slane %v3430, 4
      %v3464 = vadd.f32 %v3430, %v3463
      %v3465 = vrot.slane %v3464, 2
      %v3466 = vadd.f32 %v3464, %v3465
      %v3467 = vrot.slane %v3466, 1
      %v3468 = vadd.f32 %v3466, %v3467
      %v3469 = vrot.slane %v3431, 4
      %v3470 = vadd.f32 %v3431, %v3469
      %v3471 = vrot.slane %v3470, 2
      %v3472 = vadd.f32 %v3470, %v3471
      %v3473 = vrot.slane %v3472, 1
      %v3474 = vadd.f32 %v3472, %v3473
      %v3475 = vrot.slane %v3432, 4
      %v3476 = vadd.f32 %v3432, %v3475
      %v3477 = vrot.slane %v3476, 2
      %v3478 = vadd.f32 %v3476, %v3477
      %v3479 = vrot.slane %v3478, 1
      %v3480 = vadd.f32 %v3478, %v3479
      %v3481 = vadd.f32 %v3273, %v3438
      %v3482 = vadd.f32 %v3274, %v3444
      %v3483 = vadd.f32 %v3275, %v3450
      %v3484 = vadd.f32 %v3276, %v3456
      %v3485 = vadd.f32 %v3277, %v3462
      %v3486 = vadd.f32 %v3278, %v3468
      %v3487 = vadd.f32 %v3279, %v3474
      %v3488 = vadd.f32 %v3280, %v3480
      %s3490 = sor.u32 256, 24
      %3491 = vbcast.lane.b32.xlu0 %v2844, %s3490
      %v3492 = vpop.permute.xlu0 %3491
      %s3494 = sor.u32 256, 24
      %3495 = vbcast.lane.b32.xlu0 %v2851, %s3494
      %v3496 = vpop.permute.xlu0 %3495
      %s3498 = sor.u32 256, 24
      %3499 = vbcast.lane.b32.xlu0 %v2858, %s3498
      %v3500 = vpop.permute.xlu0 %3499
      %s3502 = sor.u32 256, 24
      %3503 = vbcast.lane.b32.xlu0 %v2865, %s3502
      %v3504 = vpop.permute.xlu0 %3503
      %s3506 = sor.u32 256, 24
      %3507 = vbcast.lane.b32.xlu0 %v2872, %s3506
      %v3508 = vpop.permute.xlu0 %3507
      %s3510 = sor.u32 256, 24
      %3511 = vbcast.lane.b32.xlu0 %v2879, %s3510
      %v3512 = vpop.permute.xlu0 %3511
      %s3514 = sor.u32 256, 24
      %3515 = vbcast.lane.b32.xlu0 %v2886, %s3514
      %v3516 = vpop.permute.xlu0 %3515
      %s3518 = sor.u32 256, 24
      %3519 = vbcast.lane.b32.xlu0 %v2893, %s3518
      %v3520 = vpop.permute.xlu0 %3519
      %v3521 = vsub.f32 %v3492, %v1699
      %v3522 = vsub.f32 %v3496, %v1699
      %v3523 = vsub.f32 %v3500, %v1699
      %v3524 = vsub.f32 %v3504, %v1699
      %v3525 = vsub.f32 %v3508, %v1699
      %v3526 = vsub.f32 %v3512, %v1699
      %v3527 = vsub.f32 %v3516, %v1699
      %v3528 = vsub.f32 %v3520, %v1699
      %v3529 = vmul.f32 %v1698, %v3521
      %v3530 = vmul.f32 %v1698, %v3522
      %v3531 = vmul.f32 %v1698, %v3523
      %v3532 = vmul.f32 %v1698, %v3524
      %v3533 = vmul.f32 %v1698, %v3525
      %v3534 = vmul.f32 %v1698, %v3526
      %v3535 = vmul.f32 %v1698, %v3527
      %v3536 = vmul.f32 %v1698, %v3528
      %v3537 = vmul.f32 %v3529, 0.5
      %v3538 = vmul.f32 %v3530, 0.5
      %v3539 = vmul.f32 %v3531, 0.5
      %v3540 = vmul.f32 %v3532, 0.5
      %v3541 = vmul.f32 %v3533, 0.5
      %v3542 = vmul.f32 %v3534, 0.5
      %v3543 = vmul.f32 %v3535, 0.5
      %v3544 = vmul.f32 %v3536, 0.5
      %v3545 = vtanh.pop %v3537
      %v3546 = vtanh.pop %v3538
      %v3547 = vtanh.pop %v3539
      %v3548 = vtanh.pop %v3540
      %v3549 = vtanh.pop %v3541
      %v3550 = vtanh.pop %v3542
      %v3551 = vtanh.pop %v3543
      %v3552 = vtanh.pop %v3544
      %v3553 = vmul.f32 %v3545, 0.5
      %v3554 = vmul.f32 %v3546, 0.5
      %v3555 = vmul.f32 %v3547, 0.5
      %v3556 = vmul.f32 %v3548, 0.5
      %v3557 = vmul.f32 %v3549, 0.5
      %v3558 = vmul.f32 %v3550, 0.5
      %v3559 = vmul.f32 %v3551, 0.5
      %v3560 = vmul.f32 %v3552, 0.5
      %v3561 = vadd.f32 %v3553, 0.5
      %v3562 = vadd.f32 %v3554, 0.5
      %v3563 = vadd.f32 %v3555, 0.5
      %v3564 = vadd.f32 %v3556, 0.5
      %v3565 = vadd.f32 %v3557, 0.5
      %v3566 = vadd.f32 %v3558, 0.5
      %v3567 = vadd.f32 %v3559, 0.5
      %v3568 = vadd.f32 %v3560, 0.5
      %v3569 = vmul.f32 %v1697, %v3561
      %v3570 = vmul.f32 %v1697, %v3562
      %v3571 = vmul.f32 %v1697, %v3563
      %v3572 = vmul.f32 %v1697, %v3564
      %v3573 = vmul.f32 %v1697, %v3565
      %v3574 = vmul.f32 %v1697, %v3566
      %v3575 = vmul.f32 %v1697, %v3567
      %v3576 = vmul.f32 %v1697, %v3568
      %v3577 = vrot.slane %v3569, 4
      %v3578 = vadd.f32 %v3569, %v3577
      %v3579 = vrot.slane %v3578, 2
      %v3580 = vadd.f32 %v3578, %v3579
      %v3581 = vrot.slane %v3580, 1
      %v3582 = vadd.f32 %v3580, %v3581
      %v3583 = vrot.slane %v3570, 4
      %v3584 = vadd.f32 %v3570, %v3583
      %v3585 = vrot.slane %v3584, 2
      %v3586 = vadd.f32 %v3584, %v3585
      %v3587 = vrot.slane %v3586, 1
      %v3588 = vadd.f32 %v3586, %v3587
      %v3589 = vrot.slane %v3571, 4
      %v3590 = vadd.f32 %v3571, %v3589
      %v3591 = vrot.slane %v3590, 2
      %v3592 = vadd.f32 %v3590, %v3591
      %v3593 = vrot.slane %v3592, 1
      %v3594 = vadd.f32 %v3592, %v3593
      %v3595 = vrot.slane %v3572, 4
      %v3596 = vadd.f32 %v3572, %v3595
      %v3597 = vrot.slane %v3596, 2
      %v3598 = vadd.f32 %v3596, %v3597
      %v3599 = vrot.slane %v3598, 1
      %v3600 = vadd.f32 %v3598, %v3599
      %v3601 = vrot.slane %v3573, 4
      %v3602 = vadd.f32 %v3573, %v3601
      %v3603 = vrot.slane %v3602, 2
      %v3604 = vadd.f32 %v3602, %v3603
      %v3605 = vrot.slane %v3604, 1
      %v3606 = vadd.f32 %v3604, %v3605
      %v3607 = vrot.slane %v3574, 4
      %v3608 = vadd.f32 %v3574, %v3607
      %v3609 = vrot.slane %v3608, 2
      %v3610 = vadd.f32 %v3608, %v3609
      %v3611 = vrot.slane %v3610, 1
      %v3612 = vadd.f32 %v3610, %v3611
      %v3613 = vrot.slane %v3575, 4
      %v3614 = vadd.f32 %v3575, %v3613
      %v3615 = vrot.slane %v3614, 2
      %v3616 = vadd.f32 %v3614, %v3615
      %v3617 = vrot.slane %v3616, 1
      %v3618 = vadd.f32 %v3616, %v3617
      %v3619 = vrot.slane %v3576, 4
      %v3620 = vadd.f32 %v3576, %v3619
      %v3621 = vrot.slane %v3620, 2
      %v3622 = vadd.f32 %v3620, %v3621
      %v3623 = vrot.slane %v3622, 1
      %v3624 = vadd.f32 %v3622, %v3623
      %v3625 = vadd.f32 %v3417, %v3582
      %v3626 = vadd.f32 %v3418, %v3588
      %v3627 = vadd.f32 %v3419, %v3594
      %v3628 = vadd.f32 %v3420, %v3600
      %v3629 = vadd.f32 %v3421, %v3606
      %v3630 = vadd.f32 %v3422, %v3612
      %v3631 = vadd.f32 %v3423, %v3618
      %v3632 = vadd.f32 %v3424, %v3624
      %v3633 = vmul.f32 %v1700, %v3561
      %v3634 = vmul.f32 %v1700, %v3562
      %v3635 = vmul.f32 %v1700, %v3563
      %v3636 = vmul.f32 %v1700, %v3564
      %v3637 = vmul.f32 %v1700, %v3565
      %v3638 = vmul.f32 %v1700, %v3566
      %v3639 = vmul.f32 %v1700, %v3567
      %v3640 = vmul.f32 %v1700, %v3568
      %v3641 = vrot.slane %v3633, 4
      %v3642 = vadd.f32 %v3633, %v3641
      %v3643 = vrot.slane %v3642, 2
      %v3644 = vadd.f32 %v3642, %v3643
      %v3645 = vrot.slane %v3644, 1
      %v3646 = vadd.f32 %v3644, %v3645
      %v3647 = vrot.slane %v3634, 4
      %v3648 = vadd.f32 %v3634, %v3647
      %v3649 = vrot.slane %v3648, 2
      %v3650 = vadd.f32 %v3648, %v3649
      %v3651 = vrot.slane %v3650, 1
      %v3652 = vadd.f32 %v3650, %v3651
      %v3653 = vrot.slane %v3635, 4
      %v3654 = vadd.f32 %v3635, %v3653
      %v3655 = vrot.slane %v3654, 2
      %v3656 = vadd.f32 %v3654, %v3655
      %v3657 = vrot.slane %v3656, 1
      %v3658 = vadd.f32 %v3656, %v3657
      %v3659 = vrot.slane %v3636, 4
      %v3660 = vadd.f32 %v3636, %v3659
      %v3661 = vrot.slane %v3660, 2
      %v3662 = vadd.f32 %v3660, %v3661
      %v3663 = vrot.slane %v3662, 1
      %v3664 = vadd.f32 %v3662, %v3663
      %v3665 = vrot.slane %v3637, 4
      %v3666 = vadd.f32 %v3637, %v3665
      %v3667 = vrot.slane %v3666, 2
      %v3668 = vadd.f32 %v3666, %v3667
      %v3669 = vrot.slane %v3668, 1
      %v3670 = vadd.f32 %v3668, %v3669
      %v3671 = vrot.slane %v3638, 4
      %v3672 = vadd.f32 %v3638, %v3671
      %v3673 = vrot.slane %v3672, 2
      %v3674 = vadd.f32 %v3672, %v3673
      %v3675 = vrot.slane %v3674, 1
      %v3676 = vadd.f32 %v3674, %v3675
      %v3677 = vrot.slane %v3639, 4
      %v3678 = vadd.f32 %v3639, %v3677
      %v3679 = vrot.slane %v3678, 2
      %v3680 = vadd.f32 %v3678, %v3679
      %v3681 = vrot.slane %v3680, 1
      %v3682 = vadd.f32 %v3680, %v3681
      %v3683 = vrot.slane %v3640, 4
      %v3684 = vadd.f32 %v3640, %v3683
      %v3685 = vrot.slane %v3684, 2
      %v3686 = vadd.f32 %v3684, %v3685
      %v3687 = vrot.slane %v3686, 1
      %v3688 = vadd.f32 %v3686, %v3687
      %v3689 = vadd.f32 %v3481, %v3646
      %v3690 = vadd.f32 %v3482, %v3652
      %v3691 = vadd.f32 %v3483, %v3658
      %v3692 = vadd.f32 %v3484, %v3664
      %v3693 = vadd.f32 %v3485, %v3670
      %v3694 = vadd.f32 %v3486, %v3676
      %v3695 = vadd.f32 %v3487, %v3682
      %v3696 = vadd.f32 %v3488, %v3688
      %v3697 = vmul.f32 %v534, %v2840
      %v3698 = vadd.f32 %v3697, %v1019
      %v3707 = vsel %vm1004, %v3690, %v3689
      %v3708 = vsel %vm1006, %v3691, %v3707
      %v3709 = vsel %vm1008, %v3692, %v3708
      %v3710 = vsel %vm1010, %v3693, %v3709
      %v3711 = vsel %vm1012, %v3694, %v3710
      %v3712 = vsel %vm1014, %v3695, %v3711
      %v3713 = vsel %vm1016, %v3696, %v3712
      %v3715 = vadd.f32 %v3698, %v3713
      %v3724 = vsel %vm1004, %v3626, %v3625
      %v3725 = vsel %vm1006, %v3627, %v3724
      %v3726 = vsel %vm1008, %v3628, %v3725
      %v3727 = vsel %vm1010, %v3629, %v3726
      %v3728 = vsel %vm1012, %v3630, %v3727
      %v3729 = vsel %vm1014, %v3631, %v3728
      %v3730 = vsel %vm1016, %v3632, %v3729
      %v3732 = vadd.f32 %v1036, %v3730
      %v3733 = vrcp.pop %v3732
      %v3734 = vmul.f32 %v3715, %v3733
      %v3735 = vlaneseq
      %v3736 = vshrl.u32 %v3735, 7
      %v3737 = vsub.s32 0, %v3736
      %v3738 = vrot.slane %v3734, %v3737
      %3740 = vbcast.lane.b32.xlu0 %v3738, 256
      %v3741 = vpop.permute.xlu0 %3740
      %v3742 = vlaneseq
      %v3743 = vshrl.u32 %v3742, 7
      %v3744 = vsub.s32 1, %v3743
      %v3745 = vrot.slane %v3734, %v3744
      %3747 = vbcast.lane.b32.xlu0 %v3745, 256
      %v3748 = vpop.permute.xlu0 %3747
      %v3749 = vlaneseq
      %v3750 = vshrl.u32 %v3749, 7
      %v3751 = vsub.s32 2, %v3750
      %v3752 = vrot.slane %v3734, %v3751
      %3754 = vbcast.lane.b32.xlu0 %v3752, 256
      %v3755 = vpop.permute.xlu0 %3754
      %v3756 = vlaneseq
      %v3757 = vshrl.u32 %v3756, 7
      %v3758 = vsub.s32 3, %v3757
      %v3759 = vrot.slane %v3734, %v3758
      %3761 = vbcast.lane.b32.xlu0 %v3759, 256
      %v3762 = vpop.permute.xlu0 %3761
      %v3763 = vlaneseq
      %v3764 = vshrl.u32 %v3763, 7
      %v3765 = vsub.s32 4, %v3764
      %v3766 = vrot.slane %v3734, %v3765
      %3768 = vbcast.lane.b32.xlu0 %v3766, 256
      %v3769 = vpop.permute.xlu0 %3768
      %v3770 = vlaneseq
      %v3771 = vshrl.u32 %v3770, 7
      %v3772 = vsub.s32 5, %v3771
      %v3773 = vrot.slane %v3734, %v3772
      %3775 = vbcast.lane.b32.xlu0 %v3773, 256
      %v3776 = vpop.permute.xlu0 %3775
      %v3777 = vlaneseq
      %v3778 = vshrl.u32 %v3777, 7
      %v3779 = vsub.s32 6, %v3778
      %v3780 = vrot.slane %v3734, %v3779
      %3782 = vbcast.lane.b32.xlu0 %v3780, 256
      %v3783 = vpop.permute.xlu0 %3782
      %v3784 = vlaneseq
      %v3785 = vshrl.u32 %v3784, 7
      %v3786 = vsub.s32 7, %v3785
      %v3787 = vrot.slane %v3734, %v3786
      %3789 = vbcast.lane.b32.xlu0 %v3787, 256
      %v3790 = vpop.permute.xlu0 %3789
      %v3791 = vsub.f32 %v3741, %v1039
      %v3792 = vsub.f32 %v3748, %v1039
      %v3793 = vsub.f32 %v3755, %v1039
      %v3794 = vsub.f32 %v3762, %v1039
      %v3795 = vsub.f32 %v3769, %v1039
      %v3796 = vsub.f32 %v3776, %v1039
      %v3797 = vsub.f32 %v3783, %v1039
      %v3798 = vsub.f32 %v3790, %v1039
      %v3799 = vmul.f32 %v1038, %v3791
      %v3800 = vmul.f32 %v1038, %v3792
      %v3801 = vmul.f32 %v1038, %v3793
      %v3802 = vmul.f32 %v1038, %v3794
      %v3803 = vmul.f32 %v1038, %v3795
      %v3804 = vmul.f32 %v1038, %v3796
      %v3805 = vmul.f32 %v1038, %v3797
      %v3806 = vmul.f32 %v1038, %v3798
      %v3807 = vmul.f32 %v3799, 0.5
      %v3808 = vmul.f32 %v3800, 0.5
      %v3809 = vmul.f32 %v3801, 0.5
      %v3810 = vmul.f32 %v3802, 0.5
      %v3811 = vmul.f32 %v3803, 0.5
      %v3812 = vmul.f32 %v3804, 0.5
      %v3813 = vmul.f32 %v3805, 0.5
      %v3814 = vmul.f32 %v3806, 0.5
      %v3815 = vtanh.pop %v3807
      %v3816 = vtanh.pop %v3808
      %v3817 = vtanh.pop %v3809
      %v3818 = vtanh.pop %v3810
      %v3819 = vtanh.pop %v3811
      %v3820 = vtanh.pop %v3812
      %v3821 = vtanh.pop %v3813
      %v3822 = vtanh.pop %v3814
      %v3823 = vmul.f32 %v3815, 0.5
      %v3824 = vmul.f32 %v3816, 0.5
      %v3825 = vmul.f32 %v3817, 0.5
      %v3826 = vmul.f32 %v3818, 0.5
      %v3827 = vmul.f32 %v3819, 0.5
      %v3828 = vmul.f32 %v3820, 0.5
      %v3829 = vmul.f32 %v3821, 0.5
      %v3830 = vmul.f32 %v3822, 0.5
      %v3831 = vadd.f32 %v3823, 0.5
      %v3832 = vadd.f32 %v3824, 0.5
      %v3833 = vadd.f32 %v3825, 0.5
      %v3834 = vadd.f32 %v3826, 0.5
      %v3835 = vadd.f32 %v3827, 0.5
      %v3836 = vadd.f32 %v3828, 0.5
      %v3837 = vadd.f32 %v3829, 0.5
      %v3838 = vadd.f32 %v3830, 0.5
      %v3839 = vmul.f32 %v1037, %v3831
      %v3840 = vmul.f32 %v1037, %v3832
      %v3841 = vmul.f32 %v1037, %v3833
      %v3842 = vmul.f32 %v1037, %v3834
      %v3843 = vmul.f32 %v1037, %v3835
      %v3844 = vmul.f32 %v1037, %v3836
      %v3845 = vmul.f32 %v1037, %v3837
      %v3846 = vmul.f32 %v1037, %v3838
      %v3847 = vrot.slane %v3839, 4
      %v3848 = vadd.f32 %v3839, %v3847
      %v3849 = vrot.slane %v3848, 2
      %v3850 = vadd.f32 %v3848, %v3849
      %v3851 = vrot.slane %v3850, 1
      %v3852 = vadd.f32 %v3850, %v3851
      %v3853 = vrot.slane %v3840, 4
      %v3854 = vadd.f32 %v3840, %v3853
      %v3855 = vrot.slane %v3854, 2
      %v3856 = vadd.f32 %v3854, %v3855
      %v3857 = vrot.slane %v3856, 1
      %v3858 = vadd.f32 %v3856, %v3857
      %v3859 = vrot.slane %v3841, 4
      %v3860 = vadd.f32 %v3841, %v3859
      %v3861 = vrot.slane %v3860, 2
      %v3862 = vadd.f32 %v3860, %v3861
      %v3863 = vrot.slane %v3862, 1
      %v3864 = vadd.f32 %v3862, %v3863
      %v3865 = vrot.slane %v3842, 4
      %v3866 = vadd.f32 %v3842, %v3865
      %v3867 = vrot.slane %v3866, 2
      %v3868 = vadd.f32 %v3866, %v3867
      %v3869 = vrot.slane %v3868, 1
      %v3870 = vadd.f32 %v3868, %v3869
      %v3871 = vrot.slane %v3843, 4
      %v3872 = vadd.f32 %v3843, %v3871
      %v3873 = vrot.slane %v3872, 2
      %v3874 = vadd.f32 %v3872, %v3873
      %v3875 = vrot.slane %v3874, 1
      %v3876 = vadd.f32 %v3874, %v3875
      %v3877 = vrot.slane %v3844, 4
      %v3878 = vadd.f32 %v3844, %v3877
      %v3879 = vrot.slane %v3878, 2
      %v3880 = vadd.f32 %v3878, %v3879
      %v3881 = vrot.slane %v3880, 1
      %v3882 = vadd.f32 %v3880, %v3881
      %v3883 = vrot.slane %v3845, 4
      %v3884 = vadd.f32 %v3845, %v3883
      %v3885 = vrot.slane %v3884, 2
      %v3886 = vadd.f32 %v3884, %v3885
      %v3887 = vrot.slane %v3886, 1
      %v3888 = vadd.f32 %v3886, %v3887
      %v3889 = vrot.slane %v3846, 4
      %v3890 = vadd.f32 %v3846, %v3889
      %v3891 = vrot.slane %v3890, 2
      %v3892 = vadd.f32 %v3890, %v3891
      %v3893 = vrot.slane %v3892, 1
      %v3894 = vadd.f32 %v3892, %v3893
      %v3895 = vadd.f32 %v3852, 0.0
      %v3896 = vadd.f32 %v3858, 0.0
      %v3897 = vadd.f32 %v3864, 0.0
      %v3898 = vadd.f32 %v3870, 0.0
      %v3899 = vadd.f32 %v3876, 0.0
      %v3900 = vadd.f32 %v3882, 0.0
      %v3901 = vadd.f32 %v3888, 0.0
      %v3902 = vadd.f32 %v3894, 0.0
      %v3903 = vmul.f32 %v1040, %v3831
      %v3904 = vmul.f32 %v1040, %v3832
      %v3905 = vmul.f32 %v1040, %v3833
      %v3906 = vmul.f32 %v1040, %v3834
      %v3907 = vmul.f32 %v1040, %v3835
      %v3908 = vmul.f32 %v1040, %v3836
      %v3909 = vmul.f32 %v1040, %v3837
      %v3910 = vmul.f32 %v1040, %v3838
      %v3911 = vrot.slane %v3903, 4
      %v3912 = vadd.f32 %v3903, %v3911
      %v3913 = vrot.slane %v3912, 2
      %v3914 = vadd.f32 %v3912, %v3913
      %v3915 = vrot.slane %v3914, 1
      %v3916 = vadd.f32 %v3914, %v3915
      %v3917 = vrot.slane %v3904, 4
      %v3918 = vadd.f32 %v3904, %v3917
      %v3919 = vrot.slane %v3918, 2
      %v3920 = vadd.f32 %v3918, %v3919
      %v3921 = vrot.slane %v3920, 1
      %v3922 = vadd.f32 %v3920, %v3921
      %v3923 = vrot.slane %v3905, 4
      %v3924 = vadd.f32 %v3905, %v3923
      %v3925 = vrot.slane %v3924, 2
      %v3926 = vadd.f32 %v3924, %v3925
      %v3927 = vrot.slane %v3926, 1
      %v3928 = vadd.f32 %v3926, %v3927
      %v3929 = vrot.slane %v3906, 4
      %v3930 = vadd.f32 %v3906, %v3929
      %v3931 = vrot.slane %v3930, 2
      %v3932 = vadd.f32 %v3930, %v3931
      %v3933 = vrot.slane %v3932, 1
      %v3934 = vadd.f32 %v3932, %v3933
      %v3935 = vrot.slane %v3907, 4
      %v3936 = vadd.f32 %v3907, %v3935
      %v3937 = vrot.slane %v3936, 2
      %v3938 = vadd.f32 %v3936, %v3937
      %v3939 = vrot.slane %v3938, 1
      %v3940 = vadd.f32 %v3938, %v3939
      %v3941 = vrot.slane %v3908, 4
      %v3942 = vadd.f32 %v3908, %v3941
      %v3943 = vrot.slane %v3942, 2
      %v3944 = vadd.f32 %v3942, %v3943
      %v3945 = vrot.slane %v3944, 1
      %v3946 = vadd.f32 %v3944, %v3945
      %v3947 = vrot.slane %v3909, 4
      %v3948 = vadd.f32 %v3909, %v3947
      %v3949 = vrot.slane %v3948, 2
      %v3950 = vadd.f32 %v3948, %v3949
      %v3951 = vrot.slane %v3950, 1
      %v3952 = vadd.f32 %v3950, %v3951
      %v3953 = vrot.slane %v3910, 4
      %v3954 = vadd.f32 %v3910, %v3953
      %v3955 = vrot.slane %v3954, 2
      %v3956 = vadd.f32 %v3954, %v3955
      %v3957 = vrot.slane %v3956, 1
      %v3958 = vadd.f32 %v3956, %v3957
      %v3959 = vadd.f32 %v3916, 0.0
      %v3960 = vadd.f32 %v3922, 0.0
      %v3961 = vadd.f32 %v3928, 0.0
      %v3962 = vadd.f32 %v3934, 0.0
      %v3963 = vadd.f32 %v3940, 0.0
      %v3964 = vadd.f32 %v3946, 0.0
      %v3965 = vadd.f32 %v3952, 0.0
      %v3966 = vadd.f32 %v3958, 0.0
      %s3968 = sor.u32 256, 8
      %3969 = vbcast.lane.b32.xlu0 %v3738, %s3968
      %v3970 = vpop.permute.xlu0 %3969
      %s3972 = sor.u32 256, 8
      %3973 = vbcast.lane.b32.xlu0 %v3745, %s3972
      %v3974 = vpop.permute.xlu0 %3973
      %s3976 = sor.u32 256, 8
      %3977 = vbcast.lane.b32.xlu0 %v3752, %s3976
      %v3978 = vpop.permute.xlu0 %3977
      %s3980 = sor.u32 256, 8
      %3981 = vbcast.lane.b32.xlu0 %v3759, %s3980
      %v3982 = vpop.permute.xlu0 %3981
      %s3984 = sor.u32 256, 8
      %3985 = vbcast.lane.b32.xlu0 %v3766, %s3984
      %v3986 = vpop.permute.xlu0 %3985
      %s3988 = sor.u32 256, 8
      %3989 = vbcast.lane.b32.xlu0 %v3773, %s3988
      %v3990 = vpop.permute.xlu0 %3989
      %s3992 = sor.u32 256, 8
      %3993 = vbcast.lane.b32.xlu0 %v3780, %s3992
      %v3994 = vpop.permute.xlu0 %3993
      %s3996 = sor.u32 256, 8
      %3997 = vbcast.lane.b32.xlu0 %v3787, %s3996
      %v3998 = vpop.permute.xlu0 %3997
      %v3999 = vsub.f32 %v3970, %v1275
      %v4000 = vsub.f32 %v3974, %v1275
      %v4001 = vsub.f32 %v3978, %v1275
      %v4002 = vsub.f32 %v3982, %v1275
      %v4003 = vsub.f32 %v3986, %v1275
      %v4004 = vsub.f32 %v3990, %v1275
      %v4005 = vsub.f32 %v3994, %v1275
      %v4006 = vsub.f32 %v3998, %v1275
      %v4007 = vmul.f32 %v1274, %v3999
      %v4008 = vmul.f32 %v1274, %v4000
      %v4009 = vmul.f32 %v1274, %v4001
      %v4010 = vmul.f32 %v1274, %v4002
      %v4011 = vmul.f32 %v1274, %v4003
      %v4012 = vmul.f32 %v1274, %v4004
      %v4013 = vmul.f32 %v1274, %v4005
      %v4014 = vmul.f32 %v1274, %v4006
      %v4015 = vmul.f32 %v4007, 0.5
      %v4016 = vmul.f32 %v4008, 0.5
      %v4017 = vmul.f32 %v4009, 0.5
      %v4018 = vmul.f32 %v4010, 0.5
      %v4019 = vmul.f32 %v4011, 0.5
      %v4020 = vmul.f32 %v4012, 0.5
      %v4021 = vmul.f32 %v4013, 0.5
      %v4022 = vmul.f32 %v4014, 0.5
      %v4023 = vtanh.pop %v4015
      %v4024 = vtanh.pop %v4016
      %v4025 = vtanh.pop %v4017
      %v4026 = vtanh.pop %v4018
      %v4027 = vtanh.pop %v4019
      %v4028 = vtanh.pop %v4020
      %v4029 = vtanh.pop %v4021
      %v4030 = vtanh.pop %v4022
      %v4031 = vmul.f32 %v4023, 0.5
      %v4032 = vmul.f32 %v4024, 0.5
      %v4033 = vmul.f32 %v4025, 0.5
      %v4034 = vmul.f32 %v4026, 0.5
      %v4035 = vmul.f32 %v4027, 0.5
      %v4036 = vmul.f32 %v4028, 0.5
      %v4037 = vmul.f32 %v4029, 0.5
      %v4038 = vmul.f32 %v4030, 0.5
      %v4039 = vadd.f32 %v4031, 0.5
      %v4040 = vadd.f32 %v4032, 0.5
      %v4041 = vadd.f32 %v4033, 0.5
      %v4042 = vadd.f32 %v4034, 0.5
      %v4043 = vadd.f32 %v4035, 0.5
      %v4044 = vadd.f32 %v4036, 0.5
      %v4045 = vadd.f32 %v4037, 0.5
      %v4046 = vadd.f32 %v4038, 0.5
      %v4047 = vmul.f32 %v1273, %v4039
      %v4048 = vmul.f32 %v1273, %v4040
      %v4049 = vmul.f32 %v1273, %v4041
      %v4050 = vmul.f32 %v1273, %v4042
      %v4051 = vmul.f32 %v1273, %v4043
      %v4052 = vmul.f32 %v1273, %v4044
      %v4053 = vmul.f32 %v1273, %v4045
      %v4054 = vmul.f32 %v1273, %v4046
      %v4055 = vrot.slane %v4047, 4
      %v4056 = vadd.f32 %v4047, %v4055
      %v4057 = vrot.slane %v4056, 2
      %v4058 = vadd.f32 %v4056, %v4057
      %v4059 = vrot.slane %v4058, 1
      %v4060 = vadd.f32 %v4058, %v4059
      %v4061 = vrot.slane %v4048, 4
      %v4062 = vadd.f32 %v4048, %v4061
      %v4063 = vrot.slane %v4062, 2
      %v4064 = vadd.f32 %v4062, %v4063
      %v4065 = vrot.slane %v4064, 1
      %v4066 = vadd.f32 %v4064, %v4065
      %v4067 = vrot.slane %v4049, 4
      %v4068 = vadd.f32 %v4049, %v4067
      %v4069 = vrot.slane %v4068, 2
      %v4070 = vadd.f32 %v4068, %v4069
      %v4071 = vrot.slane %v4070, 1
      %v4072 = vadd.f32 %v4070, %v4071
      %v4073 = vrot.slane %v4050, 4
      %v4074 = vadd.f32 %v4050, %v4073
      %v4075 = vrot.slane %v4074, 2
      %v4076 = vadd.f32 %v4074, %v4075
      %v4077 = vrot.slane %v4076, 1
      %v4078 = vadd.f32 %v4076, %v4077
      %v4079 = vrot.slane %v4051, 4
      %v4080 = vadd.f32 %v4051, %v4079
      %v4081 = vrot.slane %v4080, 2
      %v4082 = vadd.f32 %v4080, %v4081
      %v4083 = vrot.slane %v4082, 1
      %v4084 = vadd.f32 %v4082, %v4083
      %v4085 = vrot.slane %v4052, 4
      %v4086 = vadd.f32 %v4052, %v4085
      %v4087 = vrot.slane %v4086, 2
      %v4088 = vadd.f32 %v4086, %v4087
      %v4089 = vrot.slane %v4088, 1
      %v4090 = vadd.f32 %v4088, %v4089
      %v4091 = vrot.slane %v4053, 4
      %v4092 = vadd.f32 %v4053, %v4091
      %v4093 = vrot.slane %v4092, 2
      %v4094 = vadd.f32 %v4092, %v4093
      %v4095 = vrot.slane %v4094, 1
      %v4096 = vadd.f32 %v4094, %v4095
      %v4097 = vrot.slane %v4054, 4
      %v4098 = vadd.f32 %v4054, %v4097
      %v4099 = vrot.slane %v4098, 2
      %v4100 = vadd.f32 %v4098, %v4099
      %v4101 = vrot.slane %v4100, 1
      %v4102 = vadd.f32 %v4100, %v4101
      %v4103 = vadd.f32 %v3895, %v4060
      %v4104 = vadd.f32 %v3896, %v4066
      %v4105 = vadd.f32 %v3897, %v4072
      %v4106 = vadd.f32 %v3898, %v4078
      %v4107 = vadd.f32 %v3899, %v4084
      %v4108 = vadd.f32 %v3900, %v4090
      %v4109 = vadd.f32 %v3901, %v4096
      %v4110 = vadd.f32 %v3902, %v4102
      %v4111 = vmul.f32 %v1276, %v4039
      %v4112 = vmul.f32 %v1276, %v4040
      %v4113 = vmul.f32 %v1276, %v4041
      %v4114 = vmul.f32 %v1276, %v4042
      %v4115 = vmul.f32 %v1276, %v4043
      %v4116 = vmul.f32 %v1276, %v4044
      %v4117 = vmul.f32 %v1276, %v4045
      %v4118 = vmul.f32 %v1276, %v4046
      %v4119 = vrot.slane %v4111, 4
      %v4120 = vadd.f32 %v4111, %v4119
      %v4121 = vrot.slane %v4120, 2
      %v4122 = vadd.f32 %v4120, %v4121
      %v4123 = vrot.slane %v4122, 1
      %v4124 = vadd.f32 %v4122, %v4123
      %v4125 = vrot.slane %v4112, 4
      %v4126 = vadd.f32 %v4112, %v4125
      %v4127 = vrot.slane %v4126, 2
      %v4128 = vadd.f32 %v4126, %v4127
      %v4129 = vrot.slane %v4128, 1
      %v4130 = vadd.f32 %v4128, %v4129
      %v4131 = vrot.slane %v4113, 4
      %v4132 = vadd.f32 %v4113, %v4131
      %v4133 = vrot.slane %v4132, 2
      %v4134 = vadd.f32 %v4132, %v4133
      %v4135 = vrot.slane %v4134, 1
      %v4136 = vadd.f32 %v4134, %v4135
      %v4137 = vrot.slane %v4114, 4
      %v4138 = vadd.f32 %v4114, %v4137
      %v4139 = vrot.slane %v4138, 2
      %v4140 = vadd.f32 %v4138, %v4139
      %v4141 = vrot.slane %v4140, 1
      %v4142 = vadd.f32 %v4140, %v4141
      %v4143 = vrot.slane %v4115, 4
      %v4144 = vadd.f32 %v4115, %v4143
      %v4145 = vrot.slane %v4144, 2
      %v4146 = vadd.f32 %v4144, %v4145
      %v4147 = vrot.slane %v4146, 1
      %v4148 = vadd.f32 %v4146, %v4147
      %v4149 = vrot.slane %v4116, 4
      %v4150 = vadd.f32 %v4116, %v4149
      %v4151 = vrot.slane %v4150, 2
      %v4152 = vadd.f32 %v4150, %v4151
      %v4153 = vrot.slane %v4152, 1
      %v4154 = vadd.f32 %v4152, %v4153
      %v4155 = vrot.slane %v4117, 4
      %v4156 = vadd.f32 %v4117, %v4155
      %v4157 = vrot.slane %v4156, 2
      %v4158 = vadd.f32 %v4156, %v4157
      %v4159 = vrot.slane %v4158, 1
      %v4160 = vadd.f32 %v4158, %v4159
      %v4161 = vrot.slane %v4118, 4
      %v4162 = vadd.f32 %v4118, %v4161
      %v4163 = vrot.slane %v4162, 2
      %v4164 = vadd.f32 %v4162, %v4163
      %v4165 = vrot.slane %v4164, 1
      %v4166 = vadd.f32 %v4164, %v4165
      %v4167 = vadd.f32 %v3959, %v4124
      %v4168 = vadd.f32 %v3960, %v4130
      %v4169 = vadd.f32 %v3961, %v4136
      %v4170 = vadd.f32 %v3962, %v4142
      %v4171 = vadd.f32 %v3963, %v4148
      %v4172 = vadd.f32 %v3964, %v4154
      %v4173 = vadd.f32 %v3965, %v4160
      %v4174 = vadd.f32 %v3966, %v4166
      %s4176 = sor.u32 256, 16
      %4177 = vbcast.lane.b32.xlu0 %v3738, %s4176
      %v4178 = vpop.permute.xlu0 %4177
      %s4180 = sor.u32 256, 16
      %4181 = vbcast.lane.b32.xlu0 %v3745, %s4180
      %v4182 = vpop.permute.xlu0 %4181
      %s4184 = sor.u32 256, 16
      %4185 = vbcast.lane.b32.xlu0 %v3752, %s4184
      %v4186 = vpop.permute.xlu0 %4185
      %s4188 = sor.u32 256, 16
      %4189 = vbcast.lane.b32.xlu0 %v3759, %s4188
      %v4190 = vpop.permute.xlu0 %4189
      %s4192 = sor.u32 256, 16
      %4193 = vbcast.lane.b32.xlu0 %v3766, %s4192
      %v4194 = vpop.permute.xlu0 %4193
      %s4196 = sor.u32 256, 16
      %4197 = vbcast.lane.b32.xlu0 %v3773, %s4196
      %v4198 = vpop.permute.xlu0 %4197
      %s4200 = sor.u32 256, 16
      %4201 = vbcast.lane.b32.xlu0 %v3780, %s4200
      %v4202 = vpop.permute.xlu0 %4201
      %s4204 = sor.u32 256, 16
      %4205 = vbcast.lane.b32.xlu0 %v3787, %s4204
      %v4206 = vpop.permute.xlu0 %4205
      %v4207 = vsub.f32 %v4178, %v1487
      %v4208 = vsub.f32 %v4182, %v1487
      %v4209 = vsub.f32 %v4186, %v1487
      %v4210 = vsub.f32 %v4190, %v1487
      %v4211 = vsub.f32 %v4194, %v1487
      %v4212 = vsub.f32 %v4198, %v1487
      %v4213 = vsub.f32 %v4202, %v1487
      %v4214 = vsub.f32 %v4206, %v1487
      %v4215 = vmul.f32 %v1486, %v4207
      %v4216 = vmul.f32 %v1486, %v4208
      %v4217 = vmul.f32 %v1486, %v4209
      %v4218 = vmul.f32 %v1486, %v4210
      %v4219 = vmul.f32 %v1486, %v4211
      %v4220 = vmul.f32 %v1486, %v4212
      %v4221 = vmul.f32 %v1486, %v4213
      %v4222 = vmul.f32 %v1486, %v4214
      %v4223 = vmul.f32 %v4215, 0.5
      %v4224 = vmul.f32 %v4216, 0.5
      %v4225 = vmul.f32 %v4217, 0.5
      %v4226 = vmul.f32 %v4218, 0.5
      %v4227 = vmul.f32 %v4219, 0.5
      %v4228 = vmul.f32 %v4220, 0.5
      %v4229 = vmul.f32 %v4221, 0.5
      %v4230 = vmul.f32 %v4222, 0.5
      %v4231 = vtanh.pop %v4223
      %v4232 = vtanh.pop %v4224
      %v4233 = vtanh.pop %v4225
      %v4234 = vtanh.pop %v4226
      %v4235 = vtanh.pop %v4227
      %v4236 = vtanh.pop %v4228
      %v4237 = vtanh.pop %v4229
      %v4238 = vtanh.pop %v4230
      %v4239 = vmul.f32 %v4231, 0.5
      %v4240 = vmul.f32 %v4232, 0.5
      %v4241 = vmul.f32 %v4233, 0.5
      %v4242 = vmul.f32 %v4234, 0.5
      %v4243 = vmul.f32 %v4235, 0.5
      %v4244 = vmul.f32 %v4236, 0.5
      %v4245 = vmul.f32 %v4237, 0.5
      %v4246 = vmul.f32 %v4238, 0.5
      %v4247 = vadd.f32 %v4239, 0.5
      %v4248 = vadd.f32 %v4240, 0.5
      %v4249 = vadd.f32 %v4241, 0.5
      %v4250 = vadd.f32 %v4242, 0.5
      %v4251 = vadd.f32 %v4243, 0.5
      %v4252 = vadd.f32 %v4244, 0.5
      %v4253 = vadd.f32 %v4245, 0.5
      %v4254 = vadd.f32 %v4246, 0.5
      %v4255 = vmul.f32 %v1485, %v4247
      %v4256 = vmul.f32 %v1485, %v4248
      %v4257 = vmul.f32 %v1485, %v4249
      %v4258 = vmul.f32 %v1485, %v4250
      %v4259 = vmul.f32 %v1485, %v4251
      %v4260 = vmul.f32 %v1485, %v4252
      %v4261 = vmul.f32 %v1485, %v4253
      %v4262 = vmul.f32 %v1485, %v4254
      %v4263 = vrot.slane %v4255, 4
      %v4264 = vadd.f32 %v4255, %v4263
      %v4265 = vrot.slane %v4264, 2
      %v4266 = vadd.f32 %v4264, %v4265
      %v4267 = vrot.slane %v4266, 1
      %v4268 = vadd.f32 %v4266, %v4267
      %v4269 = vrot.slane %v4256, 4
      %v4270 = vadd.f32 %v4256, %v4269
      %v4271 = vrot.slane %v4270, 2
      %v4272 = vadd.f32 %v4270, %v4271
      %v4273 = vrot.slane %v4272, 1
      %v4274 = vadd.f32 %v4272, %v4273
      %v4275 = vrot.slane %v4257, 4
      %v4276 = vadd.f32 %v4257, %v4275
      %v4277 = vrot.slane %v4276, 2
      %v4278 = vadd.f32 %v4276, %v4277
      %v4279 = vrot.slane %v4278, 1
      %v4280 = vadd.f32 %v4278, %v4279
      %v4281 = vrot.slane %v4258, 4
      %v4282 = vadd.f32 %v4258, %v4281
      %v4283 = vrot.slane %v4282, 2
      %v4284 = vadd.f32 %v4282, %v4283
      %v4285 = vrot.slane %v4284, 1
      %v4286 = vadd.f32 %v4284, %v4285
      %v4287 = vrot.slane %v4259, 4
      %v4288 = vadd.f32 %v4259, %v4287
      %v4289 = vrot.slane %v4288, 2
      %v4290 = vadd.f32 %v4288, %v4289
      %v4291 = vrot.slane %v4290, 1
      %v4292 = vadd.f32 %v4290, %v4291
      %v4293 = vrot.slane %v4260, 4
      %v4294 = vadd.f32 %v4260, %v4293
      %v4295 = vrot.slane %v4294, 2
      %v4296 = vadd.f32 %v4294, %v4295
      %v4297 = vrot.slane %v4296, 1
      %v4298 = vadd.f32 %v4296, %v4297
      %v4299 = vrot.slane %v4261, 4
      %v4300 = vadd.f32 %v4261, %v4299
      %v4301 = vrot.slane %v4300, 2
      %v4302 = vadd.f32 %v4300, %v4301
      %v4303 = vrot.slane %v4302, 1
      %v4304 = vadd.f32 %v4302, %v4303
      %v4305 = vrot.slane %v4262, 4
      %v4306 = vadd.f32 %v4262, %v4305
      %v4307 = vrot.slane %v4306, 2
      %v4308 = vadd.f32 %v4306, %v4307
      %v4309 = vrot.slane %v4308, 1
      %v4310 = vadd.f32 %v4308, %v4309
      %v4311 = vadd.f32 %v4103, %v4268
      %v4312 = vadd.f32 %v4104, %v4274
      %v4313 = vadd.f32 %v4105, %v4280
      %v4314 = vadd.f32 %v4106, %v4286
      %v4315 = vadd.f32 %v4107, %v4292
      %v4316 = vadd.f32 %v4108, %v4298
      %v4317 = vadd.f32 %v4109, %v4304
      %v4318 = vadd.f32 %v4110, %v4310
      %v4319 = vmul.f32 %v1488, %v4247
      %v4320 = vmul.f32 %v1488, %v4248
      %v4321 = vmul.f32 %v1488, %v4249
      %v4322 = vmul.f32 %v1488, %v4250
      %v4323 = vmul.f32 %v1488, %v4251
      %v4324 = vmul.f32 %v1488, %v4252
      %v4325 = vmul.f32 %v1488, %v4253
      %v4326 = vmul.f32 %v1488, %v4254
      %v4327 = vrot.slane %v4319, 4
      %v4328 = vadd.f32 %v4319, %v4327
      %v4329 = vrot.slane %v4328, 2
      %v4330 = vadd.f32 %v4328, %v4329
      %v4331 = vrot.slane %v4330, 1
      %v4332 = vadd.f32 %v4330, %v4331
      %v4333 = vrot.slane %v4320, 4
      %v4334 = vadd.f32 %v4320, %v4333
      %v4335 = vrot.slane %v4334, 2
      %v4336 = vadd.f32 %v4334, %v4335
      %v4337 = vrot.slane %v4336, 1
      %v4338 = vadd.f32 %v4336, %v4337
      %v4339 = vrot.slane %v4321, 4
      %v4340 = vadd.f32 %v4321, %v4339
      %v4341 = vrot.slane %v4340, 2
      %v4342 = vadd.f32 %v4340, %v4341
      %v4343 = vrot.slane %v4342, 1
      %v4344 = vadd.f32 %v4342, %v4343
      %v4345 = vrot.slane %v4322, 4
      %v4346 = vadd.f32 %v4322, %v4345
      %v4347 = vrot.slane %v4346, 2
      %v4348 = vadd.f32 %v4346, %v4347
      %v4349 = vrot.slane %v4348, 1
      %v4350 = vadd.f32 %v4348, %v4349
      %v4351 = vrot.slane %v4323, 4
      %v4352 = vadd.f32 %v4323, %v4351
      %v4353 = vrot.slane %v4352, 2
      %v4354 = vadd.f32 %v4352, %v4353
      %v4355 = vrot.slane %v4354, 1
      %v4356 = vadd.f32 %v4354, %v4355
      %v4357 = vrot.slane %v4324, 4
      %v4358 = vadd.f32 %v4324, %v4357
      %v4359 = vrot.slane %v4358, 2
      %v4360 = vadd.f32 %v4358, %v4359
      %v4361 = vrot.slane %v4360, 1
      %v4362 = vadd.f32 %v4360, %v4361
      %v4363 = vrot.slane %v4325, 4
      %v4364 = vadd.f32 %v4325, %v4363
      %v4365 = vrot.slane %v4364, 2
      %v4366 = vadd.f32 %v4364, %v4365
      %v4367 = vrot.slane %v4366, 1
      %v4368 = vadd.f32 %v4366, %v4367
      %v4369 = vrot.slane %v4326, 4
      %v4370 = vadd.f32 %v4326, %v4369
      %v4371 = vrot.slane %v4370, 2
      %v4372 = vadd.f32 %v4370, %v4371
      %v4373 = vrot.slane %v4372, 1
      %v4374 = vadd.f32 %v4372, %v4373
      %v4375 = vadd.f32 %v4167, %v4332
      %v4376 = vadd.f32 %v4168, %v4338
      %v4377 = vadd.f32 %v4169, %v4344
      %v4378 = vadd.f32 %v4170, %v4350
      %v4379 = vadd.f32 %v4171, %v4356
      %v4380 = vadd.f32 %v4172, %v4362
      %v4381 = vadd.f32 %v4173, %v4368
      %v4382 = vadd.f32 %v4174, %v4374
      %s4384 = sor.u32 256, 24
      %4385 = vbcast.lane.b32.xlu0 %v3738, %s4384
      %v4386 = vpop.permute.xlu0 %4385
      %s4388 = sor.u32 256, 24
      %4389 = vbcast.lane.b32.xlu0 %v3745, %s4388
      %v4390 = vpop.permute.xlu0 %4389
      %s4392 = sor.u32 256, 24
      %4393 = vbcast.lane.b32.xlu0 %v3752, %s4392
      %v4394 = vpop.permute.xlu0 %4393
      %s4396 = sor.u32 256, 24
      %4397 = vbcast.lane.b32.xlu0 %v3759, %s4396
      %v4398 = vpop.permute.xlu0 %4397
      %s4400 = sor.u32 256, 24
      %4401 = vbcast.lane.b32.xlu0 %v3766, %s4400
      %v4402 = vpop.permute.xlu0 %4401
      %s4404 = sor.u32 256, 24
      %4405 = vbcast.lane.b32.xlu0 %v3773, %s4404
      %v4406 = vpop.permute.xlu0 %4405
      %s4408 = sor.u32 256, 24
      %4409 = vbcast.lane.b32.xlu0 %v3780, %s4408
      %v4410 = vpop.permute.xlu0 %4409
      %s4412 = sor.u32 256, 24
      %4413 = vbcast.lane.b32.xlu0 %v3787, %s4412
      %v4414 = vpop.permute.xlu0 %4413
      %v4415 = vsub.f32 %v4386, %v1699
      %v4416 = vsub.f32 %v4390, %v1699
      %v4417 = vsub.f32 %v4394, %v1699
      %v4418 = vsub.f32 %v4398, %v1699
      %v4419 = vsub.f32 %v4402, %v1699
      %v4420 = vsub.f32 %v4406, %v1699
      %v4421 = vsub.f32 %v4410, %v1699
      %v4422 = vsub.f32 %v4414, %v1699
      %v4423 = vmul.f32 %v1698, %v4415
      %v4424 = vmul.f32 %v1698, %v4416
      %v4425 = vmul.f32 %v1698, %v4417
      %v4426 = vmul.f32 %v1698, %v4418
      %v4427 = vmul.f32 %v1698, %v4419
      %v4428 = vmul.f32 %v1698, %v4420
      %v4429 = vmul.f32 %v1698, %v4421
      %v4430 = vmul.f32 %v1698, %v4422
      %v4431 = vmul.f32 %v4423, 0.5
      %v4432 = vmul.f32 %v4424, 0.5
      %v4433 = vmul.f32 %v4425, 0.5
      %v4434 = vmul.f32 %v4426, 0.5
      %v4435 = vmul.f32 %v4427, 0.5
      %v4436 = vmul.f32 %v4428, 0.5
      %v4437 = vmul.f32 %v4429, 0.5
      %v4438 = vmul.f32 %v4430, 0.5
      %v4439 = vtanh.pop %v4431
      %v4440 = vtanh.pop %v4432
      %v4441 = vtanh.pop %v4433
      %v4442 = vtanh.pop %v4434
      %v4443 = vtanh.pop %v4435
      %v4444 = vtanh.pop %v4436
      %v4445 = vtanh.pop %v4437
      %v4446 = vtanh.pop %v4438
      %v4447 = vmul.f32 %v4439, 0.5
      %v4448 = vmul.f32 %v4440, 0.5
      %v4449 = vmul.f32 %v4441, 0.5
      %v4450 = vmul.f32 %v4442, 0.5
      %v4451 = vmul.f32 %v4443, 0.5
      %v4452 = vmul.f32 %v4444, 0.5
      %v4453 = vmul.f32 %v4445, 0.5
      %v4454 = vmul.f32 %v4446, 0.5
      %v4455 = vadd.f32 %v4447, 0.5
      %v4456 = vadd.f32 %v4448, 0.5
      %v4457 = vadd.f32 %v4449, 0.5
      %v4458 = vadd.f32 %v4450, 0.5
      %v4459 = vadd.f32 %v4451, 0.5
      %v4460 = vadd.f32 %v4452, 0.5
      %v4461 = vadd.f32 %v4453, 0.5
      %v4462 = vadd.f32 %v4454, 0.5
      %v4463 = vmul.f32 %v1697, %v4455
      %v4464 = vmul.f32 %v1697, %v4456
      %v4465 = vmul.f32 %v1697, %v4457
      %v4466 = vmul.f32 %v1697, %v4458
      %v4467 = vmul.f32 %v1697, %v4459
      %v4468 = vmul.f32 %v1697, %v4460
      %v4469 = vmul.f32 %v1697, %v4461
      %v4470 = vmul.f32 %v1697, %v4462
      %v4471 = vrot.slane %v4463, 4
      %v4472 = vadd.f32 %v4463, %v4471
      %v4473 = vrot.slane %v4472, 2
      %v4474 = vadd.f32 %v4472, %v4473
      %v4475 = vrot.slane %v4474, 1
      %v4476 = vadd.f32 %v4474, %v4475
      %v4477 = vrot.slane %v4464, 4
      %v4478 = vadd.f32 %v4464, %v4477
      %v4479 = vrot.slane %v4478, 2
      %v4480 = vadd.f32 %v4478, %v4479
      %v4481 = vrot.slane %v4480, 1
      %v4482 = vadd.f32 %v4480, %v4481
      %v4483 = vrot.slane %v4465, 4
      %v4484 = vadd.f32 %v4465, %v4483
      %v4485 = vrot.slane %v4484, 2
      %v4486 = vadd.f32 %v4484, %v4485
      %v4487 = vrot.slane %v4486, 1
      %v4488 = vadd.f32 %v4486, %v4487
      %v4489 = vrot.slane %v4466, 4
      %v4490 = vadd.f32 %v4466, %v4489
      %v4491 = vrot.slane %v4490, 2
      %v4492 = vadd.f32 %v4490, %v4491
      %v4493 = vrot.slane %v4492, 1
      %v4494 = vadd.f32 %v4492, %v4493
      %v4495 = vrot.slane %v4467, 4
      %v4496 = vadd.f32 %v4467, %v4495
      %v4497 = vrot.slane %v4496, 2
      %v4498 = vadd.f32 %v4496, %v4497
      %v4499 = vrot.slane %v4498, 1
      %v4500 = vadd.f32 %v4498, %v4499
      %v4501 = vrot.slane %v4468, 4
      %v4502 = vadd.f32 %v4468, %v4501
      %v4503 = vrot.slane %v4502, 2
      %v4504 = vadd.f32 %v4502, %v4503
      %v4505 = vrot.slane %v4504, 1
      %v4506 = vadd.f32 %v4504, %v4505
      %v4507 = vrot.slane %v4469, 4
      %v4508 = vadd.f32 %v4469, %v4507
      %v4509 = vrot.slane %v4508, 2
      %v4510 = vadd.f32 %v4508, %v4509
      %v4511 = vrot.slane %v4510, 1
      %v4512 = vadd.f32 %v4510, %v4511
      %v4513 = vrot.slane %v4470, 4
      %v4514 = vadd.f32 %v4470, %v4513
      %v4515 = vrot.slane %v4514, 2
      %v4516 = vadd.f32 %v4514, %v4515
      %v4517 = vrot.slane %v4516, 1
      %v4518 = vadd.f32 %v4516, %v4517
      %v4519 = vadd.f32 %v4311, %v4476
      %v4520 = vadd.f32 %v4312, %v4482
      %v4521 = vadd.f32 %v4313, %v4488
      %v4522 = vadd.f32 %v4314, %v4494
      %v4523 = vadd.f32 %v4315, %v4500
      %v4524 = vadd.f32 %v4316, %v4506
      %v4525 = vadd.f32 %v4317, %v4512
      %v4526 = vadd.f32 %v4318, %v4518
      %v4527 = vmul.f32 %v1700, %v4455
      %v4528 = vmul.f32 %v1700, %v4456
      %v4529 = vmul.f32 %v1700, %v4457
      %v4530 = vmul.f32 %v1700, %v4458
      %v4531 = vmul.f32 %v1700, %v4459
      %v4532 = vmul.f32 %v1700, %v4460
      %v4533 = vmul.f32 %v1700, %v4461
      %v4534 = vmul.f32 %v1700, %v4462
      %v4535 = vrot.slane %v4527, 4
      %v4536 = vadd.f32 %v4527, %v4535
      %v4537 = vrot.slane %v4536, 2
      %v4538 = vadd.f32 %v4536, %v4537
      %v4539 = vrot.slane %v4538, 1
      %v4540 = vadd.f32 %v4538, %v4539
      %v4541 = vrot.slane %v4528, 4
      %v4542 = vadd.f32 %v4528, %v4541
      %v4543 = vrot.slane %v4542, 2
      %v4544 = vadd.f32 %v4542, %v4543
      %v4545 = vrot.slane %v4544, 1
      %v4546 = vadd.f32 %v4544, %v4545
      %v4547 = vrot.slane %v4529, 4
      %v4548 = vadd.f32 %v4529, %v4547
      %v4549 = vrot.slane %v4548, 2
      %v4550 = vadd.f32 %v4548, %v4549
      %v4551 = vrot.slane %v4550, 1
      %v4552 = vadd.f32 %v4550, %v4551
      %v4553 = vrot.slane %v4530, 4
      %v4554 = vadd.f32 %v4530, %v4553
      %v4555 = vrot.slane %v4554, 2
      %v4556 = vadd.f32 %v4554, %v4555
      %v4557 = vrot.slane %v4556, 1
      %v4558 = vadd.f32 %v4556, %v4557
      %v4559 = vrot.slane %v4531, 4
      %v4560 = vadd.f32 %v4531, %v4559
      %v4561 = vrot.slane %v4560, 2
      %v4562 = vadd.f32 %v4560, %v4561
      %v4563 = vrot.slane %v4562, 1
      %v4564 = vadd.f32 %v4562, %v4563
      %v4565 = vrot.slane %v4532, 4
      %v4566 = vadd.f32 %v4532, %v4565
      %v4567 = vrot.slane %v4566, 2
      %v4568 = vadd.f32 %v4566, %v4567
      %v4569 = vrot.slane %v4568, 1
      %v4570 = vadd.f32 %v4568, %v4569
      %v4571 = vrot.slane %v4533, 4
      %v4572 = vadd.f32 %v4533, %v4571
      %v4573 = vrot.slane %v4572, 2
      %v4574 = vadd.f32 %v4572, %v4573
      %v4575 = vrot.slane %v4574, 1
      %v4576 = vadd.f32 %v4574, %v4575
      %v4577 = vrot.slane %v4534, 4
      %v4578 = vadd.f32 %v4534, %v4577
      %v4579 = vrot.slane %v4578, 2
      %v4580 = vadd.f32 %v4578, %v4579
      %v4581 = vrot.slane %v4580, 1
      %v4582 = vadd.f32 %v4580, %v4581
      %v4583 = vadd.f32 %v4375, %v4540
      %v4584 = vadd.f32 %v4376, %v4546
      %v4585 = vadd.f32 %v4377, %v4552
      %v4586 = vadd.f32 %v4378, %v4558
      %v4587 = vadd.f32 %v4379, %v4564
      %v4588 = vadd.f32 %v4380, %v4570
      %v4589 = vadd.f32 %v4381, %v4576
      %v4590 = vadd.f32 %v4382, %v4582
      %v4591 = vmul.f32 %v534, %v3734
      %v4592 = vadd.f32 %v4591, %v1019
      %v4601 = vsel %vm1004, %v4584, %v4583
      %v4602 = vsel %vm1006, %v4585, %v4601
      %v4603 = vsel %vm1008, %v4586, %v4602
      %v4604 = vsel %vm1010, %v4587, %v4603
      %v4605 = vsel %vm1012, %v4588, %v4604
      %v4606 = vsel %vm1014, %v4589, %v4605
      %v4607 = vsel %vm1016, %v4590, %v4606
      %v4609 = vadd.f32 %v4592, %v4607
      %v4618 = vsel %vm1004, %v4520, %v4519
      %v4619 = vsel %vm1006, %v4521, %v4618
      %v4620 = vsel %vm1008, %v4522, %v4619
      %v4621 = vsel %vm1010, %v4523, %v4620
      %v4622 = vsel %vm1012, %v4524, %v4621
      %v4623 = vsel %vm1014, %v4525, %v4622
      %v4624 = vsel %vm1016, %v4526, %v4623
      %v4626 = vadd.f32 %v1036, %v4624
      %v4627 = vrcp.pop %v4626
      %v4628 = vmul.f32 %v4609, %v4627
      %v4629 = vlaneseq
      %v4630 = vshrl.u32 %v4629, 7
      %v4631 = vsub.s32 0, %v4630
      %v4632 = vrot.slane %v4628, %v4631
      %4634 = vbcast.lane.b32.xlu0 %v4632, 256
      %v4635 = vpop.permute.xlu0 %4634
      %v4636 = vlaneseq
      %v4637 = vshrl.u32 %v4636, 7
      %v4638 = vsub.s32 1, %v4637
      %v4639 = vrot.slane %v4628, %v4638
      %4641 = vbcast.lane.b32.xlu0 %v4639, 256
      %v4642 = vpop.permute.xlu0 %4641
      %v4643 = vlaneseq
      %v4644 = vshrl.u32 %v4643, 7
      %v4645 = vsub.s32 2, %v4644
      %v4646 = vrot.slane %v4628, %v4645
      %4648 = vbcast.lane.b32.xlu0 %v4646, 256
      %v4649 = vpop.permute.xlu0 %4648
      %v4650 = vlaneseq
      %v4651 = vshrl.u32 %v4650, 7
      %v4652 = vsub.s32 3, %v4651
      %v4653 = vrot.slane %v4628, %v4652
      %4655 = vbcast.lane.b32.xlu0 %v4653, 256
      %v4656 = vpop.permute.xlu0 %4655
      %v4657 = vlaneseq
      %v4658 = vshrl.u32 %v4657, 7
      %v4659 = vsub.s32 4, %v4658
      %v4660 = vrot.slane %v4628, %v4659
      %4662 = vbcast.lane.b32.xlu0 %v4660, 256
      %v4663 = vpop.permute.xlu0 %4662
      %v4664 = vlaneseq
      %v4665 = vshrl.u32 %v4664, 7
      %v4666 = vsub.s32 5, %v4665
      %v4667 = vrot.slane %v4628, %v4666
      %4669 = vbcast.lane.b32.xlu0 %v4667, 256
      %v4670 = vpop.permute.xlu0 %4669
      %v4671 = vlaneseq
      %v4672 = vshrl.u32 %v4671, 7
      %v4673 = vsub.s32 6, %v4672
      %v4674 = vrot.slane %v4628, %v4673
      %4676 = vbcast.lane.b32.xlu0 %v4674, 256
      %v4677 = vpop.permute.xlu0 %4676
      %v4678 = vlaneseq
      %v4679 = vshrl.u32 %v4678, 7
      %v4680 = vsub.s32 7, %v4679
      %v4681 = vrot.slane %v4628, %v4680
      %4683 = vbcast.lane.b32.xlu0 %v4681, 256
      %v4684 = vpop.permute.xlu0 %4683
      %v4685 = vsub.f32 %v4635, %v1039
      %v4686 = vsub.f32 %v4642, %v1039
      %v4687 = vsub.f32 %v4649, %v1039
      %v4688 = vsub.f32 %v4656, %v1039
      %v4689 = vsub.f32 %v4663, %v1039
      %v4690 = vsub.f32 %v4670, %v1039
      %v4691 = vsub.f32 %v4677, %v1039
      %v4692 = vsub.f32 %v4684, %v1039
      %v4693 = vmul.f32 %v1038, %v4685
      %v4694 = vmul.f32 %v1038, %v4686
      %v4695 = vmul.f32 %v1038, %v4687
      %v4696 = vmul.f32 %v1038, %v4688
      %v4697 = vmul.f32 %v1038, %v4689
      %v4698 = vmul.f32 %v1038, %v4690
      %v4699 = vmul.f32 %v1038, %v4691
      %v4700 = vmul.f32 %v1038, %v4692
      %v4701 = vmul.f32 %v4693, 0.5
      %v4702 = vmul.f32 %v4694, 0.5
      %v4703 = vmul.f32 %v4695, 0.5
      %v4704 = vmul.f32 %v4696, 0.5
      %v4705 = vmul.f32 %v4697, 0.5
      %v4706 = vmul.f32 %v4698, 0.5
      %v4707 = vmul.f32 %v4699, 0.5
      %v4708 = vmul.f32 %v4700, 0.5
      %v4709 = vtanh.pop %v4701
      %v4710 = vtanh.pop %v4702
      %v4711 = vtanh.pop %v4703
      %v4712 = vtanh.pop %v4704
      %v4713 = vtanh.pop %v4705
      %v4714 = vtanh.pop %v4706
      %v4715 = vtanh.pop %v4707
      %v4716 = vtanh.pop %v4708
      %v4717 = vmul.f32 %v4709, 0.5
      %v4718 = vmul.f32 %v4710, 0.5
      %v4719 = vmul.f32 %v4711, 0.5
      %v4720 = vmul.f32 %v4712, 0.5
      %v4721 = vmul.f32 %v4713, 0.5
      %v4722 = vmul.f32 %v4714, 0.5
      %v4723 = vmul.f32 %v4715, 0.5
      %v4724 = vmul.f32 %v4716, 0.5
      %v4725 = vadd.f32 %v4717, 0.5
      %v4726 = vadd.f32 %v4718, 0.5
      %v4727 = vadd.f32 %v4719, 0.5
      %v4728 = vadd.f32 %v4720, 0.5
      %v4729 = vadd.f32 %v4721, 0.5
      %v4730 = vadd.f32 %v4722, 0.5
      %v4731 = vadd.f32 %v4723, 0.5
      %v4732 = vadd.f32 %v4724, 0.5
      %v4733 = vmul.f32 %v1037, %v4725
      %v4734 = vmul.f32 %v1037, %v4726
      %v4735 = vmul.f32 %v1037, %v4727
      %v4736 = vmul.f32 %v1037, %v4728
      %v4737 = vmul.f32 %v1037, %v4729
      %v4738 = vmul.f32 %v1037, %v4730
      %v4739 = vmul.f32 %v1037, %v4731
      %v4740 = vmul.f32 %v1037, %v4732
      %v4741 = vrot.slane %v4733, 4
      %v4742 = vadd.f32 %v4733, %v4741
      %v4743 = vrot.slane %v4742, 2
      %v4744 = vadd.f32 %v4742, %v4743
      %v4745 = vrot.slane %v4744, 1
      %v4746 = vadd.f32 %v4744, %v4745
      %v4747 = vrot.slane %v4734, 4
      %v4748 = vadd.f32 %v4734, %v4747
      %v4749 = vrot.slane %v4748, 2
      %v4750 = vadd.f32 %v4748, %v4749
      %v4751 = vrot.slane %v4750, 1
      %v4752 = vadd.f32 %v4750, %v4751
      %v4753 = vrot.slane %v4735, 4
      %v4754 = vadd.f32 %v4735, %v4753
      %v4755 = vrot.slane %v4754, 2
      %v4756 = vadd.f32 %v4754, %v4755
      %v4757 = vrot.slane %v4756, 1
      %v4758 = vadd.f32 %v4756, %v4757
      %v4759 = vrot.slane %v4736, 4
      %v4760 = vadd.f32 %v4736, %v4759
      %v4761 = vrot.slane %v4760, 2
      %v4762 = vadd.f32 %v4760, %v4761
      %v4763 = vrot.slane %v4762, 1
      %v4764 = vadd.f32 %v4762, %v4763
      %v4765 = vrot.slane %v4737, 4
      %v4766 = vadd.f32 %v4737, %v4765
      %v4767 = vrot.slane %v4766, 2
      %v4768 = vadd.f32 %v4766, %v4767
      %v4769 = vrot.slane %v4768, 1
      %v4770 = vadd.f32 %v4768, %v4769
      %v4771 = vrot.slane %v4738, 4
      %v4772 = vadd.f32 %v4738, %v4771
      %v4773 = vrot.slane %v4772, 2
      %v4774 = vadd.f32 %v4772, %v4773
      %v4775 = vrot.slane %v4774, 1
      %v4776 = vadd.f32 %v4774, %v4775
      %v4777 = vrot.slane %v4739, 4
      %v4778 = vadd.f32 %v4739, %v4777
      %v4779 = vrot.slane %v4778, 2
      %v4780 = vadd.f32 %v4778, %v4779
      %v4781 = vrot.slane %v4780, 1
      %v4782 = vadd.f32 %v4780, %v4781
      %v4783 = vrot.slane %v4740, 4
      %v4784 = vadd.f32 %v4740, %v4783
      %v4785 = vrot.slane %v4784, 2
      %v4786 = vadd.f32 %v4784, %v4785
      %v4787 = vrot.slane %v4786, 1
      %v4788 = vadd.f32 %v4786, %v4787
      %v4789 = vadd.f32 %v4746, 0.0
      %v4790 = vadd.f32 %v4752, 0.0
      %v4791 = vadd.f32 %v4758, 0.0
      %v4792 = vadd.f32 %v4764, 0.0
      %v4793 = vadd.f32 %v4770, 0.0
      %v4794 = vadd.f32 %v4776, 0.0
      %v4795 = vadd.f32 %v4782, 0.0
      %v4796 = vadd.f32 %v4788, 0.0
      %v4797 = vmul.f32 %v1040, %v4725
      %v4798 = vmul.f32 %v1040, %v4726
      %v4799 = vmul.f32 %v1040, %v4727
      %v4800 = vmul.f32 %v1040, %v4728
      %v4801 = vmul.f32 %v1040, %v4729
      %v4802 = vmul.f32 %v1040, %v4730
      %v4803 = vmul.f32 %v1040, %v4731
      %v4804 = vmul.f32 %v1040, %v4732
      %v4805 = vrot.slane %v4797, 4
      %v4806 = vadd.f32 %v4797, %v4805
      %v4807 = vrot.slane %v4806, 2
      %v4808 = vadd.f32 %v4806, %v4807
      %v4809 = vrot.slane %v4808, 1
      %v4810 = vadd.f32 %v4808, %v4809
      %v4811 = vrot.slane %v4798, 4
      %v4812 = vadd.f32 %v4798, %v4811
      %v4813 = vrot.slane %v4812, 2
      %v4814 = vadd.f32 %v4812, %v4813
      %v4815 = vrot.slane %v4814, 1
      %v4816 = vadd.f32 %v4814, %v4815
      %v4817 = vrot.slane %v4799, 4
      %v4818 = vadd.f32 %v4799, %v4817
      %v4819 = vrot.slane %v4818, 2
      %v4820 = vadd.f32 %v4818, %v4819
      %v4821 = vrot.slane %v4820, 1
      %v4822 = vadd.f32 %v4820, %v4821
      %v4823 = vrot.slane %v4800, 4
      %v4824 = vadd.f32 %v4800, %v4823
      %v4825 = vrot.slane %v4824, 2
      %v4826 = vadd.f32 %v4824, %v4825
      %v4827 = vrot.slane %v4826, 1
      %v4828 = vadd.f32 %v4826, %v4827
      %v4829 = vrot.slane %v4801, 4
      %v4830 = vadd.f32 %v4801, %v4829
      %v4831 = vrot.slane %v4830, 2
      %v4832 = vadd.f32 %v4830, %v4831
      %v4833 = vrot.slane %v4832, 1
      %v4834 = vadd.f32 %v4832, %v4833
      %v4835 = vrot.slane %v4802, 4
      %v4836 = vadd.f32 %v4802, %v4835
      %v4837 = vrot.slane %v4836, 2
      %v4838 = vadd.f32 %v4836, %v4837
      %v4839 = vrot.slane %v4838, 1
      %v4840 = vadd.f32 %v4838, %v4839
      %v4841 = vrot.slane %v4803, 4
      %v4842 = vadd.f32 %v4803, %v4841
      %v4843 = vrot.slane %v4842, 2
      %v4844 = vadd.f32 %v4842, %v4843
      %v4845 = vrot.slane %v4844, 1
      %v4846 = vadd.f32 %v4844, %v4845
      %v4847 = vrot.slane %v4804, 4
      %v4848 = vadd.f32 %v4804, %v4847
      %v4849 = vrot.slane %v4848, 2
      %v4850 = vadd.f32 %v4848, %v4849
      %v4851 = vrot.slane %v4850, 1
      %v4852 = vadd.f32 %v4850, %v4851
      %v4853 = vadd.f32 %v4810, 0.0
      %v4854 = vadd.f32 %v4816, 0.0
      %v4855 = vadd.f32 %v4822, 0.0
      %v4856 = vadd.f32 %v4828, 0.0
      %v4857 = vadd.f32 %v4834, 0.0
      %v4858 = vadd.f32 %v4840, 0.0
      %v4859 = vadd.f32 %v4846, 0.0
      %v4860 = vadd.f32 %v4852, 0.0
      %s4862 = sor.u32 256, 8
      %4863 = vbcast.lane.b32.xlu0 %v4632, %s4862
      %v4864 = vpop.permute.xlu0 %4863
      %s4866 = sor.u32 256, 8
      %4867 = vbcast.lane.b32.xlu0 %v4639, %s4866
      %v4868 = vpop.permute.xlu0 %4867
      %s4870 = sor.u32 256, 8
      %4871 = vbcast.lane.b32.xlu0 %v4646, %s4870
      %v4872 = vpop.permute.xlu0 %4871
      %s4874 = sor.u32 256, 8
      %4875 = vbcast.lane.b32.xlu0 %v4653, %s4874
      %v4876 = vpop.permute.xlu0 %4875
      %s4878 = sor.u32 256, 8
      %4879 = vbcast.lane.b32.xlu0 %v4660, %s4878
      %v4880 = vpop.permute.xlu0 %4879
      %s4882 = sor.u32 256, 8
      %4883 = vbcast.lane.b32.xlu0 %v4667, %s4882
      %v4884 = vpop.permute.xlu0 %4883
      %s4886 = sor.u32 256, 8
      %4887 = vbcast.lane.b32.xlu0 %v4674, %s4886
      %v4888 = vpop.permute.xlu0 %4887
      %s4890 = sor.u32 256, 8
      %4891 = vbcast.lane.b32.xlu0 %v4681, %s4890
      %v4892 = vpop.permute.xlu0 %4891
      %v4893 = vsub.f32 %v4864, %v1275
      %v4894 = vsub.f32 %v4868, %v1275
      %v4895 = vsub.f32 %v4872, %v1275
      %v4896 = vsub.f32 %v4876, %v1275
      %v4897 = vsub.f32 %v4880, %v1275
      %v4898 = vsub.f32 %v4884, %v1275
      %v4899 = vsub.f32 %v4888, %v1275
      %v4900 = vsub.f32 %v4892, %v1275
      %v4901 = vmul.f32 %v1274, %v4893
      %v4902 = vmul.f32 %v1274, %v4894
      %v4903 = vmul.f32 %v1274, %v4895
      %v4904 = vmul.f32 %v1274, %v4896
      %v4905 = vmul.f32 %v1274, %v4897
      %v4906 = vmul.f32 %v1274, %v4898
      %v4907 = vmul.f32 %v1274, %v4899
      %v4908 = vmul.f32 %v1274, %v4900
      %v4909 = vmul.f32 %v4901, 0.5
      %v4910 = vmul.f32 %v4902, 0.5
      %v4911 = vmul.f32 %v4903, 0.5
      %v4912 = vmul.f32 %v4904, 0.5
      %v4913 = vmul.f32 %v4905, 0.5
      %v4914 = vmul.f32 %v4906, 0.5
      %v4915 = vmul.f32 %v4907, 0.5
      %v4916 = vmul.f32 %v4908, 0.5
      %v4917 = vtanh.pop %v4909
      %v4918 = vtanh.pop %v4910
      %v4919 = vtanh.pop %v4911
      %v4920 = vtanh.pop %v4912
      %v4921 = vtanh.pop %v4913
      %v4922 = vtanh.pop %v4914
      %v4923 = vtanh.pop %v4915
      %v4924 = vtanh.pop %v4916
      %v4925 = vmul.f32 %v4917, 0.5
      %v4926 = vmul.f32 %v4918, 0.5
      %v4927 = vmul.f32 %v4919, 0.5
      %v4928 = vmul.f32 %v4920, 0.5
      %v4929 = vmul.f32 %v4921, 0.5
      %v4930 = vmul.f32 %v4922, 0.5
      %v4931 = vmul.f32 %v4923, 0.5
      %v4932 = vmul.f32 %v4924, 0.5
      %v4933 = vadd.f32 %v4925, 0.5
      %v4934 = vadd.f32 %v4926, 0.5
      %v4935 = vadd.f32 %v4927, 0.5
      %v4936 = vadd.f32 %v4928, 0.5
      %v4937 = vadd.f32 %v4929, 0.5
      %v4938 = vadd.f32 %v4930, 0.5
      %v4939 = vadd.f32 %v4931, 0.5
      %v4940 = vadd.f32 %v4932, 0.5
      %v4941 = vmul.f32 %v1273, %v4933
      %v4942 = vmul.f32 %v1273, %v4934
      %v4943 = vmul.f32 %v1273, %v4935
      %v4944 = vmul.f32 %v1273, %v4936
      %v4945 = vmul.f32 %v1273, %v4937
      %v4946 = vmul.f32 %v1273, %v4938
      %v4947 = vmul.f32 %v1273, %v4939
      %v4948 = vmul.f32 %v1273, %v4940
      %v4949 = vrot.slane %v4941, 4
      %v4950 = vadd.f32 %v4941, %v4949
      %v4951 = vrot.slane %v4950, 2
      %v4952 = vadd.f32 %v4950, %v4951
      %v4953 = vrot.slane %v4952, 1
      %v4954 = vadd.f32 %v4952, %v4953
      %v4955 = vrot.slane %v4942, 4
      %v4956 = vadd.f32 %v4942, %v4955
      %v4957 = vrot.slane %v4956, 2
      %v4958 = vadd.f32 %v4956, %v4957
      %v4959 = vrot.slane %v4958, 1
      %v4960 = vadd.f32 %v4958, %v4959
      %v4961 = vrot.slane %v4943, 4
      %v4962 = vadd.f32 %v4943, %v4961
      %v4963 = vrot.slane %v4962, 2
      %v4964 = vadd.f32 %v4962, %v4963
      %v4965 = vrot.slane %v4964, 1
      %v4966 = vadd.f32 %v4964, %v4965
      %v4967 = vrot.slane %v4944, 4
      %v4968 = vadd.f32 %v4944, %v4967
      %v4969 = vrot.slane %v4968, 2
      %v4970 = vadd.f32 %v4968, %v4969
      %v4971 = vrot.slane %v4970, 1
      %v4972 = vadd.f32 %v4970, %v4971
      %v4973 = vrot.slane %v4945, 4
      %v4974 = vadd.f32 %v4945, %v4973
      %v4975 = vrot.slane %v4974, 2
      %v4976 = vadd.f32 %v4974, %v4975
      %v4977 = vrot.slane %v4976, 1
      %v4978 = vadd.f32 %v4976, %v4977
      %v4979 = vrot.slane %v4946, 4
      %v4980 = vadd.f32 %v4946, %v4979
      %v4981 = vrot.slane %v4980, 2
      %v4982 = vadd.f32 %v4980, %v4981
      %v4983 = vrot.slane %v4982, 1
      %v4984 = vadd.f32 %v4982, %v4983
      %v4985 = vrot.slane %v4947, 4
      %v4986 = vadd.f32 %v4947, %v4985
      %v4987 = vrot.slane %v4986, 2
      %v4988 = vadd.f32 %v4986, %v4987
      %v4989 = vrot.slane %v4988, 1
      %v4990 = vadd.f32 %v4988, %v4989
      %v4991 = vrot.slane %v4948, 4
      %v4992 = vadd.f32 %v4948, %v4991
      %v4993 = vrot.slane %v4992, 2
      %v4994 = vadd.f32 %v4992, %v4993
      %v4995 = vrot.slane %v4994, 1
      %v4996 = vadd.f32 %v4994, %v4995
      %v4997 = vadd.f32 %v4789, %v4954
      %v4998 = vadd.f32 %v4790, %v4960
      %v4999 = vadd.f32 %v4791, %v4966
      %v5000 = vadd.f32 %v4792, %v4972
      %v5001 = vadd.f32 %v4793, %v4978
      %v5002 = vadd.f32 %v4794, %v4984
      %v5003 = vadd.f32 %v4795, %v4990
      %v5004 = vadd.f32 %v4796, %v4996
      %v5005 = vmul.f32 %v1276, %v4933
      %v5006 = vmul.f32 %v1276, %v4934
      %v5007 = vmul.f32 %v1276, %v4935
      %v5008 = vmul.f32 %v1276, %v4936
      %v5009 = vmul.f32 %v1276, %v4937
      %v5010 = vmul.f32 %v1276, %v4938
      %v5011 = vmul.f32 %v1276, %v4939
      %v5012 = vmul.f32 %v1276, %v4940
      %v5013 = vrot.slane %v5005, 4
      %v5014 = vadd.f32 %v5005, %v5013
      %v5015 = vrot.slane %v5014, 2
      %v5016 = vadd.f32 %v5014, %v5015
      %v5017 = vrot.slane %v5016, 1
      %v5018 = vadd.f32 %v5016, %v5017
      %v5019 = vrot.slane %v5006, 4
      %v5020 = vadd.f32 %v5006, %v5019
      %v5021 = vrot.slane %v5020, 2
      %v5022 = vadd.f32 %v5020, %v5021
      %v5023 = vrot.slane %v5022, 1
      %v5024 = vadd.f32 %v5022, %v5023
      %v5025 = vrot.slane %v5007, 4
      %v5026 = vadd.f32 %v5007, %v5025
      %v5027 = vrot.slane %v5026, 2
      %v5028 = vadd.f32 %v5026, %v5027
      %v5029 = vrot.slane %v5028, 1
      %v5030 = vadd.f32 %v5028, %v5029
      %v5031 = vrot.slane %v5008, 4
      %v5032 = vadd.f32 %v5008, %v5031
      %v5033 = vrot.slane %v5032, 2
      %v5034 = vadd.f32 %v5032, %v5033
      %v5035 = vrot.slane %v5034, 1
      %v5036 = vadd.f32 %v5034, %v5035
      %v5037 = vrot.slane %v5009, 4
      %v5038 = vadd.f32 %v5009, %v5037
      %v5039 = vrot.slane %v5038, 2
      %v5040 = vadd.f32 %v5038, %v5039
      %v5041 = vrot.slane %v5040, 1
      %v5042 = vadd.f32 %v5040, %v5041
      %v5043 = vrot.slane %v5010, 4
      %v5044 = vadd.f32 %v5010, %v5043
      %v5045 = vrot.slane %v5044, 2
      %v5046 = vadd.f32 %v5044, %v5045
      %v5047 = vrot.slane %v5046, 1
      %v5048 = vadd.f32 %v5046, %v5047
      %v5049 = vrot.slane %v5011, 4
      %v5050 = vadd.f32 %v5011, %v5049
      %v5051 = vrot.slane %v5050, 2
      %v5052 = vadd.f32 %v5050, %v5051
      %v5053 = vrot.slane %v5052, 1
      %v5054 = vadd.f32 %v5052, %v5053
      %v5055 = vrot.slane %v5012, 4
      %v5056 = vadd.f32 %v5012, %v5055
      %v5057 = vrot.slane %v5056, 2
      %v5058 = vadd.f32 %v5056, %v5057
      %v5059 = vrot.slane %v5058, 1
      %v5060 = vadd.f32 %v5058, %v5059
      %v5061 = vadd.f32 %v4853, %v5018
      %v5062 = vadd.f32 %v4854, %v5024
      %v5063 = vadd.f32 %v4855, %v5030
      %v5064 = vadd.f32 %v4856, %v5036
      %v5065 = vadd.f32 %v4857, %v5042
      %v5066 = vadd.f32 %v4858, %v5048
      %v5067 = vadd.f32 %v4859, %v5054
      %v5068 = vadd.f32 %v4860, %v5060
      %s5070 = sor.u32 256, 16
      %5071 = vbcast.lane.b32.xlu0 %v4632, %s5070
      %v5072 = vpop.permute.xlu0 %5071
      %s5074 = sor.u32 256, 16
      %5075 = vbcast.lane.b32.xlu0 %v4639, %s5074
      %v5076 = vpop.permute.xlu0 %5075
      %s5078 = sor.u32 256, 16
      %5079 = vbcast.lane.b32.xlu0 %v4646, %s5078
      %v5080 = vpop.permute.xlu0 %5079
      %s5082 = sor.u32 256, 16
      %5083 = vbcast.lane.b32.xlu0 %v4653, %s5082
      %v5084 = vpop.permute.xlu0 %5083
      %s5086 = sor.u32 256, 16
      %5087 = vbcast.lane.b32.xlu0 %v4660, %s5086
      %v5088 = vpop.permute.xlu0 %5087
      %s5090 = sor.u32 256, 16
      %5091 = vbcast.lane.b32.xlu0 %v4667, %s5090
      %v5092 = vpop.permute.xlu0 %5091
      %s5094 = sor.u32 256, 16
      %5095 = vbcast.lane.b32.xlu0 %v4674, %s5094
      %v5096 = vpop.permute.xlu0 %5095
      %s5098 = sor.u32 256, 16
      %5099 = vbcast.lane.b32.xlu0 %v4681, %s5098
      %v5100 = vpop.permute.xlu0 %5099
      %v5101 = vsub.f32 %v5072, %v1487
      %v5102 = vsub.f32 %v5076, %v1487
      %v5103 = vsub.f32 %v5080, %v1487
      %v5104 = vsub.f32 %v5084, %v1487
      %v5105 = vsub.f32 %v5088, %v1487
      %v5106 = vsub.f32 %v5092, %v1487
      %v5107 = vsub.f32 %v5096, %v1487
      %v5108 = vsub.f32 %v5100, %v1487
      %v5109 = vmul.f32 %v1486, %v5101
      %v5110 = vmul.f32 %v1486, %v5102
      %v5111 = vmul.f32 %v1486, %v5103
      %v5112 = vmul.f32 %v1486, %v5104
      %v5113 = vmul.f32 %v1486, %v5105
      %v5114 = vmul.f32 %v1486, %v5106
      %v5115 = vmul.f32 %v1486, %v5107
      %v5116 = vmul.f32 %v1486, %v5108
      %v5117 = vmul.f32 %v5109, 0.5
      %v5118 = vmul.f32 %v5110, 0.5
      %v5119 = vmul.f32 %v5111, 0.5
      %v5120 = vmul.f32 %v5112, 0.5
      %v5121 = vmul.f32 %v5113, 0.5
      %v5122 = vmul.f32 %v5114, 0.5
      %v5123 = vmul.f32 %v5115, 0.5
      %v5124 = vmul.f32 %v5116, 0.5
      %v5125 = vtanh.pop %v5117
      %v5126 = vtanh.pop %v5118
      %v5127 = vtanh.pop %v5119
      %v5128 = vtanh.pop %v5120
      %v5129 = vtanh.pop %v5121
      %v5130 = vtanh.pop %v5122
      %v5131 = vtanh.pop %v5123
      %v5132 = vtanh.pop %v5124
      %v5133 = vmul.f32 %v5125, 0.5
      %v5134 = vmul.f32 %v5126, 0.5
      %v5135 = vmul.f32 %v5127, 0.5
      %v5136 = vmul.f32 %v5128, 0.5
      %v5137 = vmul.f32 %v5129, 0.5
      %v5138 = vmul.f32 %v5130, 0.5
      %v5139 = vmul.f32 %v5131, 0.5
      %v5140 = vmul.f32 %v5132, 0.5
      %v5141 = vadd.f32 %v5133, 0.5
      %v5142 = vadd.f32 %v5134, 0.5
      %v5143 = vadd.f32 %v5135, 0.5
      %v5144 = vadd.f32 %v5136, 0.5
      %v5145 = vadd.f32 %v5137, 0.5
      %v5146 = vadd.f32 %v5138, 0.5
      %v5147 = vadd.f32 %v5139, 0.5
      %v5148 = vadd.f32 %v5140, 0.5
      %v5149 = vmul.f32 %v1485, %v5141
      %v5150 = vmul.f32 %v1485, %v5142
      %v5151 = vmul.f32 %v1485, %v5143
      %v5152 = vmul.f32 %v1485, %v5144
      %v5153 = vmul.f32 %v1485, %v5145
      %v5154 = vmul.f32 %v1485, %v5146
      %v5155 = vmul.f32 %v1485, %v5147
      %v5156 = vmul.f32 %v1485, %v5148
      %v5157 = vrot.slane %v5149, 4
      %v5158 = vadd.f32 %v5149, %v5157
      %v5159 = vrot.slane %v5158, 2
      %v5160 = vadd.f32 %v5158, %v5159
      %v5161 = vrot.slane %v5160, 1
      %v5162 = vadd.f32 %v5160, %v5161
      %v5163 = vrot.slane %v5150, 4
      %v5164 = vadd.f32 %v5150, %v5163
      %v5165 = vrot.slane %v5164, 2
      %v5166 = vadd.f32 %v5164, %v5165
      %v5167 = vrot.slane %v5166, 1
      %v5168 = vadd.f32 %v5166, %v5167
      %v5169 = vrot.slane %v5151, 4
      %v5170 = vadd.f32 %v5151, %v5169
      %v5171 = vrot.slane %v5170, 2
      %v5172 = vadd.f32 %v5170, %v5171
      %v5173 = vrot.slane %v5172, 1
      %v5174 = vadd.f32 %v5172, %v5173
      %v5175 = vrot.slane %v5152, 4
      %v5176 = vadd.f32 %v5152, %v5175
      %v5177 = vrot.slane %v5176, 2
      %v5178 = vadd.f32 %v5176, %v5177
      %v5179 = vrot.slane %v5178, 1
      %v5180 = vadd.f32 %v5178, %v5179
      %v5181 = vrot.slane %v5153, 4
      %v5182 = vadd.f32 %v5153, %v5181
      %v5183 = vrot.slane %v5182, 2
      %v5184 = vadd.f32 %v5182, %v5183
      %v5185 = vrot.slane %v5184, 1
      %v5186 = vadd.f32 %v5184, %v5185
      %v5187 = vrot.slane %v5154, 4
      %v5188 = vadd.f32 %v5154, %v5187
      %v5189 = vrot.slane %v5188, 2
      %v5190 = vadd.f32 %v5188, %v5189
      %v5191 = vrot.slane %v5190, 1
      %v5192 = vadd.f32 %v5190, %v5191
      %v5193 = vrot.slane %v5155, 4
      %v5194 = vadd.f32 %v5155, %v5193
      %v5195 = vrot.slane %v5194, 2
      %v5196 = vadd.f32 %v5194, %v5195
      %v5197 = vrot.slane %v5196, 1
      %v5198 = vadd.f32 %v5196, %v5197
      %v5199 = vrot.slane %v5156, 4
      %v5200 = vadd.f32 %v5156, %v5199
      %v5201 = vrot.slane %v5200, 2
      %v5202 = vadd.f32 %v5200, %v5201
      %v5203 = vrot.slane %v5202, 1
      %v5204 = vadd.f32 %v5202, %v5203
      %v5205 = vadd.f32 %v4997, %v5162
      %v5206 = vadd.f32 %v4998, %v5168
      %v5207 = vadd.f32 %v4999, %v5174
      %v5208 = vadd.f32 %v5000, %v5180
      %v5209 = vadd.f32 %v5001, %v5186
      %v5210 = vadd.f32 %v5002, %v5192
      %v5211 = vadd.f32 %v5003, %v5198
      %v5212 = vadd.f32 %v5004, %v5204
      %v5213 = vmul.f32 %v1488, %v5141
      %v5214 = vmul.f32 %v1488, %v5142
      %v5215 = vmul.f32 %v1488, %v5143
      %v5216 = vmul.f32 %v1488, %v5144
      %v5217 = vmul.f32 %v1488, %v5145
      %v5218 = vmul.f32 %v1488, %v5146
      %v5219 = vmul.f32 %v1488, %v5147
      %v5220 = vmul.f32 %v1488, %v5148
      %v5221 = vrot.slane %v5213, 4
      %v5222 = vadd.f32 %v5213, %v5221
      %v5223 = vrot.slane %v5222, 2
      %v5224 = vadd.f32 %v5222, %v5223
      %v5225 = vrot.slane %v5224, 1
      %v5226 = vadd.f32 %v5224, %v5225
      %v5227 = vrot.slane %v5214, 4
      %v5228 = vadd.f32 %v5214, %v5227
      %v5229 = vrot.slane %v5228, 2
      %v5230 = vadd.f32 %v5228, %v5229
      %v5231 = vrot.slane %v5230, 1
      %v5232 = vadd.f32 %v5230, %v5231
      %v5233 = vrot.slane %v5215, 4
      %v5234 = vadd.f32 %v5215, %v5233
      %v5235 = vrot.slane %v5234, 2
      %v5236 = vadd.f32 %v5234, %v5235
      %v5237 = vrot.slane %v5236, 1
      %v5238 = vadd.f32 %v5236, %v5237
      %v5239 = vrot.slane %v5216, 4
      %v5240 = vadd.f32 %v5216, %v5239
      %v5241 = vrot.slane %v5240, 2
      %v5242 = vadd.f32 %v5240, %v5241
      %v5243 = vrot.slane %v5242, 1
      %v5244 = vadd.f32 %v5242, %v5243
      %v5245 = vrot.slane %v5217, 4
      %v5246 = vadd.f32 %v5217, %v5245
      %v5247 = vrot.slane %v5246, 2
      %v5248 = vadd.f32 %v5246, %v5247
      %v5249 = vrot.slane %v5248, 1
      %v5250 = vadd.f32 %v5248, %v5249
      %v5251 = vrot.slane %v5218, 4
      %v5252 = vadd.f32 %v5218, %v5251
      %v5253 = vrot.slane %v5252, 2
      %v5254 = vadd.f32 %v5252, %v5253
      %v5255 = vrot.slane %v5254, 1
      %v5256 = vadd.f32 %v5254, %v5255
      %v5257 = vrot.slane %v5219, 4
      %v5258 = vadd.f32 %v5219, %v5257
      %v5259 = vrot.slane %v5258, 2
      %v5260 = vadd.f32 %v5258, %v5259
      %v5261 = vrot.slane %v5260, 1
      %v5262 = vadd.f32 %v5260, %v5261
      %v5263 = vrot.slane %v5220, 4
      %v5264 = vadd.f32 %v5220, %v5263
      %v5265 = vrot.slane %v5264, 2
      %v5266 = vadd.f32 %v5264, %v5265
      %v5267 = vrot.slane %v5266, 1
      %v5268 = vadd.f32 %v5266, %v5267
      %v5269 = vadd.f32 %v5061, %v5226
      %v5270 = vadd.f32 %v5062, %v5232
      %v5271 = vadd.f32 %v5063, %v5238
      %v5272 = vadd.f32 %v5064, %v5244
      %v5273 = vadd.f32 %v5065, %v5250
      %v5274 = vadd.f32 %v5066, %v5256
      %v5275 = vadd.f32 %v5067, %v5262
      %v5276 = vadd.f32 %v5068, %v5268
      %s5278 = sor.u32 256, 24
      %5279 = vbcast.lane.b32.xlu0 %v4632, %s5278
      %v5280 = vpop.permute.xlu0 %5279
      %s5282 = sor.u32 256, 24
      %5283 = vbcast.lane.b32.xlu0 %v4639, %s5282
      %v5284 = vpop.permute.xlu0 %5283
      %s5286 = sor.u32 256, 24
      %5287 = vbcast.lane.b32.xlu0 %v4646, %s5286
      %v5288 = vpop.permute.xlu0 %5287
      %s5290 = sor.u32 256, 24
      %5291 = vbcast.lane.b32.xlu0 %v4653, %s5290
      %v5292 = vpop.permute.xlu0 %5291
      %s5294 = sor.u32 256, 24
      %5295 = vbcast.lane.b32.xlu0 %v4660, %s5294
      %v5296 = vpop.permute.xlu0 %5295
      %s5298 = sor.u32 256, 24
      %5299 = vbcast.lane.b32.xlu0 %v4667, %s5298
      %v5300 = vpop.permute.xlu0 %5299
      %s5302 = sor.u32 256, 24
      %5303 = vbcast.lane.b32.xlu0 %v4674, %s5302
      %v5304 = vpop.permute.xlu0 %5303
      %s5306 = sor.u32 256, 24
      %5307 = vbcast.lane.b32.xlu0 %v4681, %s5306
      %v5308 = vpop.permute.xlu0 %5307
      %v5309 = vsub.f32 %v5280, %v1699
      %v5310 = vsub.f32 %v5284, %v1699
      %v5311 = vsub.f32 %v5288, %v1699
      %v5312 = vsub.f32 %v5292, %v1699
      %v5313 = vsub.f32 %v5296, %v1699
      %v5314 = vsub.f32 %v5300, %v1699
      %v5315 = vsub.f32 %v5304, %v1699
      %v5316 = vsub.f32 %v5308, %v1699
      %v5317 = vmul.f32 %v1698, %v5309
      %v5318 = vmul.f32 %v1698, %v5310
      %v5319 = vmul.f32 %v1698, %v5311
      %v5320 = vmul.f32 %v1698, %v5312
      %v5321 = vmul.f32 %v1698, %v5313
      %v5322 = vmul.f32 %v1698, %v5314
      %v5323 = vmul.f32 %v1698, %v5315
      %v5324 = vmul.f32 %v1698, %v5316
      %v5325 = vmul.f32 %v5317, 0.5
      %v5326 = vmul.f32 %v5318, 0.5
      %v5327 = vmul.f32 %v5319, 0.5
      %v5328 = vmul.f32 %v5320, 0.5
      %v5329 = vmul.f32 %v5321, 0.5
      %v5330 = vmul.f32 %v5322, 0.5
      %v5331 = vmul.f32 %v5323, 0.5
      %v5332 = vmul.f32 %v5324, 0.5
      %v5333 = vtanh.pop %v5325
      %v5334 = vtanh.pop %v5326
      %v5335 = vtanh.pop %v5327
      %v5336 = vtanh.pop %v5328
      %v5337 = vtanh.pop %v5329
      %v5338 = vtanh.pop %v5330
      %v5339 = vtanh.pop %v5331
      %v5340 = vtanh.pop %v5332
      %v5341 = vmul.f32 %v5333, 0.5
      %v5342 = vmul.f32 %v5334, 0.5
      %v5343 = vmul.f32 %v5335, 0.5
      %v5344 = vmul.f32 %v5336, 0.5
      %v5345 = vmul.f32 %v5337, 0.5
      %v5346 = vmul.f32 %v5338, 0.5
      %v5347 = vmul.f32 %v5339, 0.5
      %v5348 = vmul.f32 %v5340, 0.5
      %v5349 = vadd.f32 %v5341, 0.5
      %v5350 = vadd.f32 %v5342, 0.5
      %v5351 = vadd.f32 %v5343, 0.5
      %v5352 = vadd.f32 %v5344, 0.5
      %v5353 = vadd.f32 %v5345, 0.5
      %v5354 = vadd.f32 %v5346, 0.5
      %v5355 = vadd.f32 %v5347, 0.5
      %v5356 = vadd.f32 %v5348, 0.5
      %v5357 = vmul.f32 %v1697, %v5349
      %v5358 = vmul.f32 %v1697, %v5350
      %v5359 = vmul.f32 %v1697, %v5351
      %v5360 = vmul.f32 %v1697, %v5352
      %v5361 = vmul.f32 %v1697, %v5353
      %v5362 = vmul.f32 %v1697, %v5354
      %v5363 = vmul.f32 %v1697, %v5355
      %v5364 = vmul.f32 %v1697, %v5356
      %v5365 = vrot.slane %v5357, 4
      %v5366 = vadd.f32 %v5357, %v5365
      %v5367 = vrot.slane %v5366, 2
      %v5368 = vadd.f32 %v5366, %v5367
      %v5369 = vrot.slane %v5368, 1
      %v5370 = vadd.f32 %v5368, %v5369
      %v5371 = vrot.slane %v5358, 4
      %v5372 = vadd.f32 %v5358, %v5371
      %v5373 = vrot.slane %v5372, 2
      %v5374 = vadd.f32 %v5372, %v5373
      %v5375 = vrot.slane %v5374, 1
      %v5376 = vadd.f32 %v5374, %v5375
      %v5377 = vrot.slane %v5359, 4
      %v5378 = vadd.f32 %v5359, %v5377
      %v5379 = vrot.slane %v5378, 2
      %v5380 = vadd.f32 %v5378, %v5379
      %v5381 = vrot.slane %v5380, 1
      %v5382 = vadd.f32 %v5380, %v5381
      %v5383 = vrot.slane %v5360, 4
      %v5384 = vadd.f32 %v5360, %v5383
      %v5385 = vrot.slane %v5384, 2
      %v5386 = vadd.f32 %v5384, %v5385
      %v5387 = vrot.slane %v5386, 1
      %v5388 = vadd.f32 %v5386, %v5387
      %v5389 = vrot.slane %v5361, 4
      %v5390 = vadd.f32 %v5361, %v5389
      %v5391 = vrot.slane %v5390, 2
      %v5392 = vadd.f32 %v5390, %v5391
      %v5393 = vrot.slane %v5392, 1
      %v5394 = vadd.f32 %v5392, %v5393
      %v5395 = vrot.slane %v5362, 4
      %v5396 = vadd.f32 %v5362, %v5395
      %v5397 = vrot.slane %v5396, 2
      %v5398 = vadd.f32 %v5396, %v5397
      %v5399 = vrot.slane %v5398, 1
      %v5400 = vadd.f32 %v5398, %v5399
      %v5401 = vrot.slane %v5363, 4
      %v5402 = vadd.f32 %v5363, %v5401
      %v5403 = vrot.slane %v5402, 2
      %v5404 = vadd.f32 %v5402, %v5403
      %v5405 = vrot.slane %v5404, 1
      %v5406 = vadd.f32 %v5404, %v5405
      %v5407 = vrot.slane %v5364, 4
      %v5408 = vadd.f32 %v5364, %v5407
      %v5409 = vrot.slane %v5408, 2
      %v5410 = vadd.f32 %v5408, %v5409
      %v5411 = vrot.slane %v5410, 1
      %v5412 = vadd.f32 %v5410, %v5411
      %v5413 = vadd.f32 %v5205, %v5370
      %v5414 = vadd.f32 %v5206, %v5376
      %v5415 = vadd.f32 %v5207, %v5382
      %v5416 = vadd.f32 %v5208, %v5388
      %v5417 = vadd.f32 %v5209, %v5394
      %v5418 = vadd.f32 %v5210, %v5400
      %v5419 = vadd.f32 %v5211, %v5406
      %v5420 = vadd.f32 %v5212, %v5412
      %v5421 = vmul.f32 %v1700, %v5349
      %v5422 = vmul.f32 %v1700, %v5350
      %v5423 = vmul.f32 %v1700, %v5351
      %v5424 = vmul.f32 %v1700, %v5352
      %v5425 = vmul.f32 %v1700, %v5353
      %v5426 = vmul.f32 %v1700, %v5354
      %v5427 = vmul.f32 %v1700, %v5355
      %v5428 = vmul.f32 %v1700, %v5356
      %v5429 = vrot.slane %v5421, 4
      %v5430 = vadd.f32 %v5421, %v5429
      %v5431 = vrot.slane %v5430, 2
      %v5432 = vadd.f32 %v5430, %v5431
      %v5433 = vrot.slane %v5432, 1
      %v5434 = vadd.f32 %v5432, %v5433
      %v5435 = vrot.slane %v5422, 4
      %v5436 = vadd.f32 %v5422, %v5435
      %v5437 = vrot.slane %v5436, 2
      %v5438 = vadd.f32 %v5436, %v5437
      %v5439 = vrot.slane %v5438, 1
      %v5440 = vadd.f32 %v5438, %v5439
      %v5441 = vrot.slane %v5423, 4
      %v5442 = vadd.f32 %v5423, %v5441
      %v5443 = vrot.slane %v5442, 2
      %v5444 = vadd.f32 %v5442, %v5443
      %v5445 = vrot.slane %v5444, 1
      %v5446 = vadd.f32 %v5444, %v5445
      %v5447 = vrot.slane %v5424, 4
      %v5448 = vadd.f32 %v5424, %v5447
      %v5449 = vrot.slane %v5448, 2
      %v5450 = vadd.f32 %v5448, %v5449
      %v5451 = vrot.slane %v5450, 1
      %v5452 = vadd.f32 %v5450, %v5451
      %v5453 = vrot.slane %v5425, 4
      %v5454 = vadd.f32 %v5425, %v5453
      %v5455 = vrot.slane %v5454, 2
      %v5456 = vadd.f32 %v5454, %v5455
      %v5457 = vrot.slane %v5456, 1
      %v5458 = vadd.f32 %v5456, %v5457
      %v5459 = vrot.slane %v5426, 4
      %v5460 = vadd.f32 %v5426, %v5459
      %v5461 = vrot.slane %v5460, 2
      %v5462 = vadd.f32 %v5460, %v5461
      %v5463 = vrot.slane %v5462, 1
      %v5464 = vadd.f32 %v5462, %v5463
      %v5465 = vrot.slane %v5427, 4
      %v5466 = vadd.f32 %v5427, %v5465
      %v5467 = vrot.slane %v5466, 2
      %v5468 = vadd.f32 %v5466, %v5467
      %v5469 = vrot.slane %v5468, 1
      %v5470 = vadd.f32 %v5468, %v5469
      %v5471 = vrot.slane %v5428, 4
      %v5472 = vadd.f32 %v5428, %v5471
      %v5473 = vrot.slane %v5472, 2
      %v5474 = vadd.f32 %v5472, %v5473
      %v5475 = vrot.slane %v5474, 1
      %v5476 = vadd.f32 %v5474, %v5475
      %v5477 = vadd.f32 %v5269, %v5434
      %v5478 = vadd.f32 %v5270, %v5440
      %v5479 = vadd.f32 %v5271, %v5446
      %v5480 = vadd.f32 %v5272, %v5452
      %v5481 = vadd.f32 %v5273, %v5458
      %v5482 = vadd.f32 %v5274, %v5464
      %v5483 = vadd.f32 %v5275, %v5470
      %v5484 = vadd.f32 %v5276, %v5476
      %v5485 = vmul.f32 %v534, %v4628
      %v5486 = vadd.f32 %v5485, %v1019
      %v5495 = vsel %vm1004, %v5478, %v5477
      %v5496 = vsel %vm1006, %v5479, %v5495
      %v5497 = vsel %vm1008, %v5480, %v5496
      %v5498 = vsel %vm1010, %v5481, %v5497
      %v5499 = vsel %vm1012, %v5482, %v5498
      %v5500 = vsel %vm1014, %v5483, %v5499
      %v5501 = vsel %vm1016, %v5484, %v5500
      %v5503 = vadd.f32 %v5486, %v5501
      %v5512 = vsel %vm1004, %v5414, %v5413
      %v5513 = vsel %vm1006, %v5415, %v5512
      %v5514 = vsel %vm1008, %v5416, %v5513
      %v5515 = vsel %vm1010, %v5417, %v5514
      %v5516 = vsel %vm1012, %v5418, %v5515
      %v5517 = vsel %vm1014, %v5419, %v5516
      %v5518 = vsel %vm1016, %v5420, %v5517
      %v5520 = vadd.f32 %v1036, %v5518
      %v5521 = vrcp.pop %v5520
      %v5522 = vmul.f32 %v5503, %v5521
      %v5523 = vlaneseq
      %v5524 = vshrl.u32 %v5523, 7
      %v5525 = vsub.s32 0, %v5524
      %v5526 = vrot.slane %v5522, %v5525
      %5528 = vbcast.lane.b32.xlu0 %v5526, 256
      %v5529 = vpop.permute.xlu0 %5528
      %v5530 = vlaneseq
      %v5531 = vshrl.u32 %v5530, 7
      %v5532 = vsub.s32 1, %v5531
      %v5533 = vrot.slane %v5522, %v5532
      %5535 = vbcast.lane.b32.xlu0 %v5533, 256
      %v5536 = vpop.permute.xlu0 %5535
      %v5537 = vlaneseq
      %v5538 = vshrl.u32 %v5537, 7
      %v5539 = vsub.s32 2, %v5538
      %v5540 = vrot.slane %v5522, %v5539
      %5542 = vbcast.lane.b32.xlu0 %v5540, 256
      %v5543 = vpop.permute.xlu0 %5542
      %v5544 = vlaneseq
      %v5545 = vshrl.u32 %v5544, 7
      %v5546 = vsub.s32 3, %v5545
      %v5547 = vrot.slane %v5522, %v5546
      %5549 = vbcast.lane.b32.xlu0 %v5547, 256
      %v5550 = vpop.permute.xlu0 %5549
      %v5551 = vlaneseq
      %v5552 = vshrl.u32 %v5551, 7
      %v5553 = vsub.s32 4, %v5552
      %v5554 = vrot.slane %v5522, %v5553
      %5556 = vbcast.lane.b32.xlu0 %v5554, 256
      %v5557 = vpop.permute.xlu0 %5556
      %v5558 = vlaneseq
      %v5559 = vshrl.u32 %v5558, 7
      %v5560 = vsub.s32 5, %v5559
      %v5561 = vrot.slane %v5522, %v5560
      %5563 = vbcast.lane.b32.xlu0 %v5561, 256
      %v5564 = vpop.permute.xlu0 %5563
      %v5565 = vlaneseq
      %v5566 = vshrl.u32 %v5565, 7
      %v5567 = vsub.s32 6, %v5566
      %v5568 = vrot.slane %v5522, %v5567
      %5570 = vbcast.lane.b32.xlu0 %v5568, 256
      %v5571 = vpop.permute.xlu0 %5570
      %v5572 = vlaneseq
      %v5573 = vshrl.u32 %v5572, 7
      %v5574 = vsub.s32 7, %v5573
      %v5575 = vrot.slane %v5522, %v5574
      %5577 = vbcast.lane.b32.xlu0 %v5575, 256
      %v5578 = vpop.permute.xlu0 %5577
      %v5579 = vsub.f32 %v5529, %v1039
      %v5580 = vsub.f32 %v5536, %v1039
      %v5581 = vsub.f32 %v5543, %v1039
      %v5582 = vsub.f32 %v5550, %v1039
      %v5583 = vsub.f32 %v5557, %v1039
      %v5584 = vsub.f32 %v5564, %v1039
      %v5585 = vsub.f32 %v5571, %v1039
      %v5586 = vsub.f32 %v5578, %v1039
      %v5587 = vmul.f32 %v1038, %v5579
      %v5588 = vmul.f32 %v1038, %v5580
      %v5589 = vmul.f32 %v1038, %v5581
      %v5590 = vmul.f32 %v1038, %v5582
      %v5591 = vmul.f32 %v1038, %v5583
      %v5592 = vmul.f32 %v1038, %v5584
      %v5593 = vmul.f32 %v1038, %v5585
      %v5594 = vmul.f32 %v1038, %v5586
      %v5595 = vmul.f32 %v5587, 0.5
      %v5596 = vmul.f32 %v5588, 0.5
      %v5597 = vmul.f32 %v5589, 0.5
      %v5598 = vmul.f32 %v5590, 0.5
      %v5599 = vmul.f32 %v5591, 0.5
      %v5600 = vmul.f32 %v5592, 0.5
      %v5601 = vmul.f32 %v5593, 0.5
      %v5602 = vmul.f32 %v5594, 0.5
      %v5603 = vtanh.pop %v5595
      %v5604 = vtanh.pop %v5596
      %v5605 = vtanh.pop %v5597
      %v5606 = vtanh.pop %v5598
      %v5607 = vtanh.pop %v5599
      %v5608 = vtanh.pop %v5600
      %v5609 = vtanh.pop %v5601
      %v5610 = vtanh.pop %v5602
      %v5611 = vmul.f32 %v5603, 0.5
      %v5612 = vmul.f32 %v5604, 0.5
      %v5613 = vmul.f32 %v5605, 0.5
      %v5614 = vmul.f32 %v5606, 0.5
      %v5615 = vmul.f32 %v5607, 0.5
      %v5616 = vmul.f32 %v5608, 0.5
      %v5617 = vmul.f32 %v5609, 0.5
      %v5618 = vmul.f32 %v5610, 0.5
      %v5619 = vadd.f32 %v5611, 0.5
      %v5620 = vadd.f32 %v5612, 0.5
      %v5621 = vadd.f32 %v5613, 0.5
      %v5622 = vadd.f32 %v5614, 0.5
      %v5623 = vadd.f32 %v5615, 0.5
      %v5624 = vadd.f32 %v5616, 0.5
      %v5625 = vadd.f32 %v5617, 0.5
      %v5626 = vadd.f32 %v5618, 0.5
      %v5627 = vmul.f32 %v1037, %v5619
      %v5628 = vmul.f32 %v1037, %v5620
      %v5629 = vmul.f32 %v1037, %v5621
      %v5630 = vmul.f32 %v1037, %v5622
      %v5631 = vmul.f32 %v1037, %v5623
      %v5632 = vmul.f32 %v1037, %v5624
      %v5633 = vmul.f32 %v1037, %v5625
      %v5634 = vmul.f32 %v1037, %v5626
      %v5635 = vrot.slane %v5627, 4
      %v5636 = vadd.f32 %v5627, %v5635
      %v5637 = vrot.slane %v5636, 2
      %v5638 = vadd.f32 %v5636, %v5637
      %v5639 = vrot.slane %v5638, 1
      %v5640 = vadd.f32 %v5638, %v5639
      %v5641 = vrot.slane %v5628, 4
      %v5642 = vadd.f32 %v5628, %v5641
      %v5643 = vrot.slane %v5642, 2
      %v5644 = vadd.f32 %v5642, %v5643
      %v5645 = vrot.slane %v5644, 1
      %v5646 = vadd.f32 %v5644, %v5645
      %v5647 = vrot.slane %v5629, 4
      %v5648 = vadd.f32 %v5629, %v5647
      %v5649 = vrot.slane %v5648, 2
      %v5650 = vadd.f32 %v5648, %v5649
      %v5651 = vrot.slane %v5650, 1
      %v5652 = vadd.f32 %v5650, %v5651
      %v5653 = vrot.slane %v5630, 4
      %v5654 = vadd.f32 %v5630, %v5653
      %v5655 = vrot.slane %v5654, 2
      %v5656 = vadd.f32 %v5654, %v5655
      %v5657 = vrot.slane %v5656, 1
      %v5658 = vadd.f32 %v5656, %v5657
      %v5659 = vrot.slane %v5631, 4
      %v5660 = vadd.f32 %v5631, %v5659
      %v5661 = vrot.slane %v5660, 2
      %v5662 = vadd.f32 %v5660, %v5661
      %v5663 = vrot.slane %v5662, 1
      %v5664 = vadd.f32 %v5662, %v5663
      %v5665 = vrot.slane %v5632, 4
      %v5666 = vadd.f32 %v5632, %v5665
      %v5667 = vrot.slane %v5666, 2
      %v5668 = vadd.f32 %v5666, %v5667
      %v5669 = vrot.slane %v5668, 1
      %v5670 = vadd.f32 %v5668, %v5669
      %v5671 = vrot.slane %v5633, 4
      %v5672 = vadd.f32 %v5633, %v5671
      %v5673 = vrot.slane %v5672, 2
      %v5674 = vadd.f32 %v5672, %v5673
      %v5675 = vrot.slane %v5674, 1
      %v5676 = vadd.f32 %v5674, %v5675
      %v5677 = vrot.slane %v5634, 4
      %v5678 = vadd.f32 %v5634, %v5677
      %v5679 = vrot.slane %v5678, 2
      %v5680 = vadd.f32 %v5678, %v5679
      %v5681 = vrot.slane %v5680, 1
      %v5682 = vadd.f32 %v5680, %v5681
      %v5683 = vadd.f32 %v5640, 0.0
      %v5684 = vadd.f32 %v5646, 0.0
      %v5685 = vadd.f32 %v5652, 0.0
      %v5686 = vadd.f32 %v5658, 0.0
      %v5687 = vadd.f32 %v5664, 0.0
      %v5688 = vadd.f32 %v5670, 0.0
      %v5689 = vadd.f32 %v5676, 0.0
      %v5690 = vadd.f32 %v5682, 0.0
      %v5691 = vmul.f32 %v1040, %v5619
      %v5692 = vmul.f32 %v1040, %v5620
      %v5693 = vmul.f32 %v1040, %v5621
      %v5694 = vmul.f32 %v1040, %v5622
      %v5695 = vmul.f32 %v1040, %v5623
      %v5696 = vmul.f32 %v1040, %v5624
      %v5697 = vmul.f32 %v1040, %v5625
      %v5698 = vmul.f32 %v1040, %v5626
      %v5699 = vrot.slane %v5691, 4
      %v5700 = vadd.f32 %v5691, %v5699
      %v5701 = vrot.slane %v5700, 2
      %v5702 = vadd.f32 %v5700, %v5701
      %v5703 = vrot.slane %v5702, 1
      %v5704 = vadd.f32 %v5702, %v5703
      %v5705 = vrot.slane %v5692, 4
      %v5706 = vadd.f32 %v5692, %v5705
      %v5707 = vrot.slane %v5706, 2
      %v5708 = vadd.f32 %v5706, %v5707
      %v5709 = vrot.slane %v5708, 1
      %v5710 = vadd.f32 %v5708, %v5709
      %v5711 = vrot.slane %v5693, 4
      %v5712 = vadd.f32 %v5693, %v5711
      %v5713 = vrot.slane %v5712, 2
      %v5714 = vadd.f32 %v5712, %v5713
      %v5715 = vrot.slane %v5714, 1
      %v5716 = vadd.f32 %v5714, %v5715
      %v5717 = vrot.slane %v5694, 4
      %v5718 = vadd.f32 %v5694, %v5717
      %v5719 = vrot.slane %v5718, 2
      %v5720 = vadd.f32 %v5718, %v5719
      %v5721 = vrot.slane %v5720, 1
      %v5722 = vadd.f32 %v5720, %v5721
      %v5723 = vrot.slane %v5695, 4
      %v5724 = vadd.f32 %v5695, %v5723
      %v5725 = vrot.slane %v5724, 2
      %v5726 = vadd.f32 %v5724, %v5725
      %v5727 = vrot.slane %v5726, 1
      %v5728 = vadd.f32 %v5726, %v5727
      %v5729 = vrot.slane %v5696, 4
      %v5730 = vadd.f32 %v5696, %v5729
      %v5731 = vrot.slane %v5730, 2
      %v5732 = vadd.f32 %v5730, %v5731
      %v5733 = vrot.slane %v5732, 1
      %v5734 = vadd.f32 %v5732, %v5733
      %v5735 = vrot.slane %v5697, 4
      %v5736 = vadd.f32 %v5697, %v5735
      %v5737 = vrot.slane %v5736, 2
      %v5738 = vadd.f32 %v5736, %v5737
      %v5739 = vrot.slane %v5738, 1
      %v5740 = vadd.f32 %v5738, %v5739
      %v5741 = vrot.slane %v5698, 4
      %v5742 = vadd.f32 %v5698, %v5741
      %v5743 = vrot.slane %v5742, 2
      %v5744 = vadd.f32 %v5742, %v5743
      %v5745 = vrot.slane %v5744, 1
      %v5746 = vadd.f32 %v5744, %v5745
      %v5747 = vadd.f32 %v5704, 0.0
      %v5748 = vadd.f32 %v5710, 0.0
      %v5749 = vadd.f32 %v5716, 0.0
      %v5750 = vadd.f32 %v5722, 0.0
      %v5751 = vadd.f32 %v5728, 0.0
      %v5752 = vadd.f32 %v5734, 0.0
      %v5753 = vadd.f32 %v5740, 0.0
      %v5754 = vadd.f32 %v5746, 0.0
      %s5756 = sor.u32 256, 8
      %5757 = vbcast.lane.b32.xlu0 %v5526, %s5756
      %v5758 = vpop.permute.xlu0 %5757
      %s5760 = sor.u32 256, 8
      %5761 = vbcast.lane.b32.xlu0 %v5533, %s5760
      %v5762 = vpop.permute.xlu0 %5761
      %s5764 = sor.u32 256, 8
      %5765 = vbcast.lane.b32.xlu0 %v5540, %s5764
      %v5766 = vpop.permute.xlu0 %5765
      %s5768 = sor.u32 256, 8
      %5769 = vbcast.lane.b32.xlu0 %v5547, %s5768
      %v5770 = vpop.permute.xlu0 %5769
      %s5772 = sor.u32 256, 8
      %5773 = vbcast.lane.b32.xlu0 %v5554, %s5772
      %v5774 = vpop.permute.xlu0 %5773
      %s5776 = sor.u32 256, 8
      %5777 = vbcast.lane.b32.xlu0 %v5561, %s5776
      %v5778 = vpop.permute.xlu0 %5777
      %s5780 = sor.u32 256, 8
      %5781 = vbcast.lane.b32.xlu0 %v5568, %s5780
      %v5782 = vpop.permute.xlu0 %5781
      %s5784 = sor.u32 256, 8
      %5785 = vbcast.lane.b32.xlu0 %v5575, %s5784
      %v5786 = vpop.permute.xlu0 %5785
      %v5787 = vsub.f32 %v5758, %v1275
      %v5788 = vsub.f32 %v5762, %v1275
      %v5789 = vsub.f32 %v5766, %v1275
      %v5790 = vsub.f32 %v5770, %v1275
      %v5791 = vsub.f32 %v5774, %v1275
      %v5792 = vsub.f32 %v5778, %v1275
      %v5793 = vsub.f32 %v5782, %v1275
      %v5794 = vsub.f32 %v5786, %v1275
      %v5795 = vmul.f32 %v1274, %v5787
      %v5796 = vmul.f32 %v1274, %v5788
      %v5797 = vmul.f32 %v1274, %v5789
      %v5798 = vmul.f32 %v1274, %v5790
      %v5799 = vmul.f32 %v1274, %v5791
      %v5800 = vmul.f32 %v1274, %v5792
      %v5801 = vmul.f32 %v1274, %v5793
      %v5802 = vmul.f32 %v1274, %v5794
      %v5803 = vmul.f32 %v5795, 0.5
      %v5804 = vmul.f32 %v5796, 0.5
      %v5805 = vmul.f32 %v5797, 0.5
      %v5806 = vmul.f32 %v5798, 0.5
      %v5807 = vmul.f32 %v5799, 0.5
      %v5808 = vmul.f32 %v5800, 0.5
      %v5809 = vmul.f32 %v5801, 0.5
      %v5810 = vmul.f32 %v5802, 0.5
      %v5811 = vtanh.pop %v5803
      %v5812 = vtanh.pop %v5804
      %v5813 = vtanh.pop %v5805
      %v5814 = vtanh.pop %v5806
      %v5815 = vtanh.pop %v5807
      %v5816 = vtanh.pop %v5808
      %v5817 = vtanh.pop %v5809
      %v5818 = vtanh.pop %v5810
      %v5819 = vmul.f32 %v5811, 0.5
      %v5820 = vmul.f32 %v5812, 0.5
      %v5821 = vmul.f32 %v5813, 0.5
      %v5822 = vmul.f32 %v5814, 0.5
      %v5823 = vmul.f32 %v5815, 0.5
      %v5824 = vmul.f32 %v5816, 0.5
      %v5825 = vmul.f32 %v5817, 0.5
      %v5826 = vmul.f32 %v5818, 0.5
      %v5827 = vadd.f32 %v5819, 0.5
      %v5828 = vadd.f32 %v5820, 0.5
      %v5829 = vadd.f32 %v5821, 0.5
      %v5830 = vadd.f32 %v5822, 0.5
      %v5831 = vadd.f32 %v5823, 0.5
      %v5832 = vadd.f32 %v5824, 0.5
      %v5833 = vadd.f32 %v5825, 0.5
      %v5834 = vadd.f32 %v5826, 0.5
      %v5835 = vmul.f32 %v1273, %v5827
      %v5836 = vmul.f32 %v1273, %v5828
      %v5837 = vmul.f32 %v1273, %v5829
      %v5838 = vmul.f32 %v1273, %v5830
      %v5839 = vmul.f32 %v1273, %v5831
      %v5840 = vmul.f32 %v1273, %v5832
      %v5841 = vmul.f32 %v1273, %v5833
      %v5842 = vmul.f32 %v1273, %v5834
      %v5843 = vrot.slane %v5835, 4
      %v5844 = vadd.f32 %v5835, %v5843
      %v5845 = vrot.slane %v5844, 2
      %v5846 = vadd.f32 %v5844, %v5845
      %v5847 = vrot.slane %v5846, 1
      %v5848 = vadd.f32 %v5846, %v5847
      %v5849 = vrot.slane %v5836, 4
      %v5850 = vadd.f32 %v5836, %v5849
      %v5851 = vrot.slane %v5850, 2
      %v5852 = vadd.f32 %v5850, %v5851
      %v5853 = vrot.slane %v5852, 1
      %v5854 = vadd.f32 %v5852, %v5853
      %v5855 = vrot.slane %v5837, 4
      %v5856 = vadd.f32 %v5837, %v5855
      %v5857 = vrot.slane %v5856, 2
      %v5858 = vadd.f32 %v5856, %v5857
      %v5859 = vrot.slane %v5858, 1
      %v5860 = vadd.f32 %v5858, %v5859
      %v5861 = vrot.slane %v5838, 4
      %v5862 = vadd.f32 %v5838, %v5861
      %v5863 = vrot.slane %v5862, 2
      %v5864 = vadd.f32 %v5862, %v5863
      %v5865 = vrot.slane %v5864, 1
      %v5866 = vadd.f32 %v5864, %v5865
      %v5867 = vrot.slane %v5839, 4
      %v5868 = vadd.f32 %v5839, %v5867
      %v5869 = vrot.slane %v5868, 2
      %v5870 = vadd.f32 %v5868, %v5869
      %v5871 = vrot.slane %v5870, 1
      %v5872 = vadd.f32 %v5870, %v5871
      %v5873 = vrot.slane %v5840, 4
      %v5874 = vadd.f32 %v5840, %v5873
      %v5875 = vrot.slane %v5874, 2
      %v5876 = vadd.f32 %v5874, %v5875
      %v5877 = vrot.slane %v5876, 1
      %v5878 = vadd.f32 %v5876, %v5877
      %v5879 = vrot.slane %v5841, 4
      %v5880 = vadd.f32 %v5841, %v5879
      %v5881 = vrot.slane %v5880, 2
      %v5882 = vadd.f32 %v5880, %v5881
      %v5883 = vrot.slane %v5882, 1
      %v5884 = vadd.f32 %v5882, %v5883
      %v5885 = vrot.slane %v5842, 4
      %v5886 = vadd.f32 %v5842, %v5885
      %v5887 = vrot.slane %v5886, 2
      %v5888 = vadd.f32 %v5886, %v5887
      %v5889 = vrot.slane %v5888, 1
      %v5890 = vadd.f32 %v5888, %v5889
      %v5891 = vadd.f32 %v5683, %v5848
      %v5892 = vadd.f32 %v5684, %v5854
      %v5893 = vadd.f32 %v5685, %v5860
      %v5894 = vadd.f32 %v5686, %v5866
      %v5895 = vadd.f32 %v5687, %v5872
      %v5896 = vadd.f32 %v5688, %v5878
      %v5897 = vadd.f32 %v5689, %v5884
      %v5898 = vadd.f32 %v5690, %v5890
      %v5899 = vmul.f32 %v1276, %v5827
      %v5900 = vmul.f32 %v1276, %v5828
      %v5901 = vmul.f32 %v1276, %v5829
      %v5902 = vmul.f32 %v1276, %v5830
      %v5903 = vmul.f32 %v1276, %v5831
      %v5904 = vmul.f32 %v1276, %v5832
      %v5905 = vmul.f32 %v1276, %v5833
      %v5906 = vmul.f32 %v1276, %v5834
      %v5907 = vrot.slane %v5899, 4
      %v5908 = vadd.f32 %v5899, %v5907
      %v5909 = vrot.slane %v5908, 2
      %v5910 = vadd.f32 %v5908, %v5909
      %v5911 = vrot.slane %v5910, 1
      %v5912 = vadd.f32 %v5910, %v5911
      %v5913 = vrot.slane %v5900, 4
      %v5914 = vadd.f32 %v5900, %v5913
      %v5915 = vrot.slane %v5914, 2
      %v5916 = vadd.f32 %v5914, %v5915
      %v5917 = vrot.slane %v5916, 1
      %v5918 = vadd.f32 %v5916, %v5917
      %v5919 = vrot.slane %v5901, 4
      %v5920 = vadd.f32 %v5901, %v5919
      %v5921 = vrot.slane %v5920, 2
      %v5922 = vadd.f32 %v5920, %v5921
      %v5923 = vrot.slane %v5922, 1
      %v5924 = vadd.f32 %v5922, %v5923
      %v5925 = vrot.slane %v5902, 4
      %v5926 = vadd.f32 %v5902, %v5925
      %v5927 = vrot.slane %v5926, 2
      %v5928 = vadd.f32 %v5926, %v5927
      %v5929 = vrot.slane %v5928, 1
      %v5930 = vadd.f32 %v5928, %v5929
      %v5931 = vrot.slane %v5903, 4
      %v5932 = vadd.f32 %v5903, %v5931
      %v5933 = vrot.slane %v5932, 2
      %v5934 = vadd.f32 %v5932, %v5933
      %v5935 = vrot.slane %v5934, 1
      %v5936 = vadd.f32 %v5934, %v5935
      %v5937 = vrot.slane %v5904, 4
      %v5938 = vadd.f32 %v5904, %v5937
      %v5939 = vrot.slane %v5938, 2
      %v5940 = vadd.f32 %v5938, %v5939
      %v5941 = vrot.slane %v5940, 1
      %v5942 = vadd.f32 %v5940, %v5941
      %v5943 = vrot.slane %v5905, 4
      %v5944 = vadd.f32 %v5905, %v5943
      %v5945 = vrot.slane %v5944, 2
      %v5946 = vadd.f32 %v5944, %v5945
      %v5947 = vrot.slane %v5946, 1
      %v5948 = vadd.f32 %v5946, %v5947
      %v5949 = vrot.slane %v5906, 4
      %v5950 = vadd.f32 %v5906, %v5949
      %v5951 = vrot.slane %v5950, 2
      %v5952 = vadd.f32 %v5950, %v5951
      %v5953 = vrot.slane %v5952, 1
      %v5954 = vadd.f32 %v5952, %v5953
      %v5955 = vadd.f32 %v5747, %v5912
      %v5956 = vadd.f32 %v5748, %v5918
      %v5957 = vadd.f32 %v5749, %v5924
      %v5958 = vadd.f32 %v5750, %v5930
      %v5959 = vadd.f32 %v5751, %v5936
      %v5960 = vadd.f32 %v5752, %v5942
      %v5961 = vadd.f32 %v5753, %v5948
      %v5962 = vadd.f32 %v5754, %v5954
      %s5964 = sor.u32 256, 16
      %5965 = vbcast.lane.b32.xlu0 %v5526, %s5964
      %v5966 = vpop.permute.xlu0 %5965
      %s5968 = sor.u32 256, 16
      %5969 = vbcast.lane.b32.xlu0 %v5533, %s5968
      %v5970 = vpop.permute.xlu0 %5969
      %s5972 = sor.u32 256, 16
      %5973 = vbcast.lane.b32.xlu0 %v5540, %s5972
      %v5974 = vpop.permute.xlu0 %5973
      %s5976 = sor.u32 256, 16
      %5977 = vbcast.lane.b32.xlu0 %v5547, %s5976
      %v5978 = vpop.permute.xlu0 %5977
      %s5980 = sor.u32 256, 16
      %5981 = vbcast.lane.b32.xlu0 %v5554, %s5980
      %v5982 = vpop.permute.xlu0 %5981
      %s5984 = sor.u32 256, 16
      %5985 = vbcast.lane.b32.xlu0 %v5561, %s5984
      %v5986 = vpop.permute.xlu0 %5985
      %s5988 = sor.u32 256, 16
      %5989 = vbcast.lane.b32.xlu0 %v5568, %s5988
      %v5990 = vpop.permute.xlu0 %5989
      %s5992 = sor.u32 256, 16
      %5993 = vbcast.lane.b32.xlu0 %v5575, %s5992
      %v5994 = vpop.permute.xlu0 %5993
      %v5995 = vsub.f32 %v5966, %v1487
      %v5996 = vsub.f32 %v5970, %v1487
      %v5997 = vsub.f32 %v5974, %v1487
      %v5998 = vsub.f32 %v5978, %v1487
      %v5999 = vsub.f32 %v5982, %v1487
      %v6000 = vsub.f32 %v5986, %v1487
      %v6001 = vsub.f32 %v5990, %v1487
      %v6002 = vsub.f32 %v5994, %v1487
      %v6003 = vmul.f32 %v1486, %v5995
      %v6004 = vmul.f32 %v1486, %v5996
      %v6005 = vmul.f32 %v1486, %v5997
      %v6006 = vmul.f32 %v1486, %v5998
      %v6007 = vmul.f32 %v1486, %v5999
      %v6008 = vmul.f32 %v1486, %v6000
      %v6009 = vmul.f32 %v1486, %v6001
      %v6010 = vmul.f32 %v1486, %v6002
      %v6011 = vmul.f32 %v6003, 0.5
      %v6012 = vmul.f32 %v6004, 0.5
      %v6013 = vmul.f32 %v6005, 0.5
      %v6014 = vmul.f32 %v6006, 0.5
      %v6015 = vmul.f32 %v6007, 0.5
      %v6016 = vmul.f32 %v6008, 0.5
      %v6017 = vmul.f32 %v6009, 0.5
      %v6018 = vmul.f32 %v6010, 0.5
      %v6019 = vtanh.pop %v6011
      %v6020 = vtanh.pop %v6012
      %v6021 = vtanh.pop %v6013
      %v6022 = vtanh.pop %v6014
      %v6023 = vtanh.pop %v6015
      %v6024 = vtanh.pop %v6016
      %v6025 = vtanh.pop %v6017
      %v6026 = vtanh.pop %v6018
      %v6027 = vmul.f32 %v6019, 0.5
      %v6028 = vmul.f32 %v6020, 0.5
      %v6029 = vmul.f32 %v6021, 0.5
      %v6030 = vmul.f32 %v6022, 0.5
      %v6031 = vmul.f32 %v6023, 0.5
      %v6032 = vmul.f32 %v6024, 0.5
      %v6033 = vmul.f32 %v6025, 0.5
      %v6034 = vmul.f32 %v6026, 0.5
      %v6035 = vadd.f32 %v6027, 0.5
      %v6036 = vadd.f32 %v6028, 0.5
      %v6037 = vadd.f32 %v6029, 0.5
      %v6038 = vadd.f32 %v6030, 0.5
      %v6039 = vadd.f32 %v6031, 0.5
      %v6040 = vadd.f32 %v6032, 0.5
      %v6041 = vadd.f32 %v6033, 0.5
      %v6042 = vadd.f32 %v6034, 0.5
      %v6043 = vmul.f32 %v1485, %v6035
      %v6044 = vmul.f32 %v1485, %v6036
      %v6045 = vmul.f32 %v1485, %v6037
      %v6046 = vmul.f32 %v1485, %v6038
      %v6047 = vmul.f32 %v1485, %v6039
      %v6048 = vmul.f32 %v1485, %v6040
      %v6049 = vmul.f32 %v1485, %v6041
      %v6050 = vmul.f32 %v1485, %v6042
      %v6051 = vrot.slane %v6043, 4
      %v6052 = vadd.f32 %v6043, %v6051
      %v6053 = vrot.slane %v6052, 2
      %v6054 = vadd.f32 %v6052, %v6053
      %v6055 = vrot.slane %v6054, 1
      %v6056 = vadd.f32 %v6054, %v6055
      %v6057 = vrot.slane %v6044, 4
      %v6058 = vadd.f32 %v6044, %v6057
      %v6059 = vrot.slane %v6058, 2
      %v6060 = vadd.f32 %v6058, %v6059
      %v6061 = vrot.slane %v6060, 1
      %v6062 = vadd.f32 %v6060, %v6061
      %v6063 = vrot.slane %v6045, 4
      %v6064 = vadd.f32 %v6045, %v6063
      %v6065 = vrot.slane %v6064, 2
      %v6066 = vadd.f32 %v6064, %v6065
      %v6067 = vrot.slane %v6066, 1
      %v6068 = vadd.f32 %v6066, %v6067
      %v6069 = vrot.slane %v6046, 4
      %v6070 = vadd.f32 %v6046, %v6069
      %v6071 = vrot.slane %v6070, 2
      %v6072 = vadd.f32 %v6070, %v6071
      %v6073 = vrot.slane %v6072, 1
      %v6074 = vadd.f32 %v6072, %v6073
      %v6075 = vrot.slane %v6047, 4
      %v6076 = vadd.f32 %v6047, %v6075
      %v6077 = vrot.slane %v6076, 2
      %v6078 = vadd.f32 %v6076, %v6077
      %v6079 = vrot.slane %v6078, 1
      %v6080 = vadd.f32 %v6078, %v6079
      %v6081 = vrot.slane %v6048, 4
      %v6082 = vadd.f32 %v6048, %v6081
      %v6083 = vrot.slane %v6082, 2
      %v6084 = vadd.f32 %v6082, %v6083
      %v6085 = vrot.slane %v6084, 1
      %v6086 = vadd.f32 %v6084, %v6085
      %v6087 = vrot.slane %v6049, 4
      %v6088 = vadd.f32 %v6049, %v6087
      %v6089 = vrot.slane %v6088, 2
      %v6090 = vadd.f32 %v6088, %v6089
      %v6091 = vrot.slane %v6090, 1
      %v6092 = vadd.f32 %v6090, %v6091
      %v6093 = vrot.slane %v6050, 4
      %v6094 = vadd.f32 %v6050, %v6093
      %v6095 = vrot.slane %v6094, 2
      %v6096 = vadd.f32 %v6094, %v6095
      %v6097 = vrot.slane %v6096, 1
      %v6098 = vadd.f32 %v6096, %v6097
      %v6099 = vadd.f32 %v5891, %v6056
      %v6100 = vadd.f32 %v5892, %v6062
      %v6101 = vadd.f32 %v5893, %v6068
      %v6102 = vadd.f32 %v5894, %v6074
      %v6103 = vadd.f32 %v5895, %v6080
      %v6104 = vadd.f32 %v5896, %v6086
      %v6105 = vadd.f32 %v5897, %v6092
      %v6106 = vadd.f32 %v5898, %v6098
      %v6107 = vmul.f32 %v1488, %v6035
      %v6108 = vmul.f32 %v1488, %v6036
      %v6109 = vmul.f32 %v1488, %v6037
      %v6110 = vmul.f32 %v1488, %v6038
      %v6111 = vmul.f32 %v1488, %v6039
      %v6112 = vmul.f32 %v1488, %v6040
      %v6113 = vmul.f32 %v1488, %v6041
      %v6114 = vmul.f32 %v1488, %v6042
      %v6115 = vrot.slane %v6107, 4
      %v6116 = vadd.f32 %v6107, %v6115
      %v6117 = vrot.slane %v6116, 2
      %v6118 = vadd.f32 %v6116, %v6117
      %v6119 = vrot.slane %v6118, 1
      %v6120 = vadd.f32 %v6118, %v6119
      %v6121 = vrot.slane %v6108, 4
      %v6122 = vadd.f32 %v6108, %v6121
      %v6123 = vrot.slane %v6122, 2
      %v6124 = vadd.f32 %v6122, %v6123
      %v6125 = vrot.slane %v6124, 1
      %v6126 = vadd.f32 %v6124, %v6125
      %v6127 = vrot.slane %v6109, 4
      %v6128 = vadd.f32 %v6109, %v6127
      %v6129 = vrot.slane %v6128, 2
      %v6130 = vadd.f32 %v6128, %v6129
      %v6131 = vrot.slane %v6130, 1
      %v6132 = vadd.f32 %v6130, %v6131
      %v6133 = vrot.slane %v6110, 4
      %v6134 = vadd.f32 %v6110, %v6133
      %v6135 = vrot.slane %v6134, 2
      %v6136 = vadd.f32 %v6134, %v6135
      %v6137 = vrot.slane %v6136, 1
      %v6138 = vadd.f32 %v6136, %v6137
      %v6139 = vrot.slane %v6111, 4
      %v6140 = vadd.f32 %v6111, %v6139
      %v6141 = vrot.slane %v6140, 2
      %v6142 = vadd.f32 %v6140, %v6141
      %v6143 = vrot.slane %v6142, 1
      %v6144 = vadd.f32 %v6142, %v6143
      %v6145 = vrot.slane %v6112, 4
      %v6146 = vadd.f32 %v6112, %v6145
      %v6147 = vrot.slane %v6146, 2
      %v6148 = vadd.f32 %v6146, %v6147
      %v6149 = vrot.slane %v6148, 1
      %v6150 = vadd.f32 %v6148, %v6149
      %v6151 = vrot.slane %v6113, 4
      %v6152 = vadd.f32 %v6113, %v6151
      %v6153 = vrot.slane %v6152, 2
      %v6154 = vadd.f32 %v6152, %v6153
      %v6155 = vrot.slane %v6154, 1
      %v6156 = vadd.f32 %v6154, %v6155
      %v6157 = vrot.slane %v6114, 4
      %v6158 = vadd.f32 %v6114, %v6157
      %v6159 = vrot.slane %v6158, 2
      %v6160 = vadd.f32 %v6158, %v6159
      %v6161 = vrot.slane %v6160, 1
      %v6162 = vadd.f32 %v6160, %v6161
      %v6163 = vadd.f32 %v5955, %v6120
      %v6164 = vadd.f32 %v5956, %v6126
      %v6165 = vadd.f32 %v5957, %v6132
      %v6166 = vadd.f32 %v5958, %v6138
      %v6167 = vadd.f32 %v5959, %v6144
      %v6168 = vadd.f32 %v5960, %v6150
      %v6169 = vadd.f32 %v5961, %v6156
      %v6170 = vadd.f32 %v5962, %v6162
      %s6172 = sor.u32 256, 24
      %6173 = vbcast.lane.b32.xlu0 %v5526, %s6172
      %v6174 = vpop.permute.xlu0 %6173
      %s6176 = sor.u32 256, 24
      %6177 = vbcast.lane.b32.xlu0 %v5533, %s6176
      %v6178 = vpop.permute.xlu0 %6177
      %s6180 = sor.u32 256, 24
      %6181 = vbcast.lane.b32.xlu0 %v5540, %s6180
      %v6182 = vpop.permute.xlu0 %6181
      %s6184 = sor.u32 256, 24
      %6185 = vbcast.lane.b32.xlu0 %v5547, %s6184
      %v6186 = vpop.permute.xlu0 %6185
      %s6188 = sor.u32 256, 24
      %6189 = vbcast.lane.b32.xlu0 %v5554, %s6188
      %v6190 = vpop.permute.xlu0 %6189
      %s6192 = sor.u32 256, 24
      %6193 = vbcast.lane.b32.xlu0 %v5561, %s6192
      %v6194 = vpop.permute.xlu0 %6193
      %s6196 = sor.u32 256, 24
      %6197 = vbcast.lane.b32.xlu0 %v5568, %s6196
      %v6198 = vpop.permute.xlu0 %6197
      %s6200 = sor.u32 256, 24
      %6201 = vbcast.lane.b32.xlu0 %v5575, %s6200
      %v6202 = vpop.permute.xlu0 %6201
      %v6203 = vsub.f32 %v6174, %v1699
      %v6204 = vsub.f32 %v6178, %v1699
      %v6205 = vsub.f32 %v6182, %v1699
      %v6206 = vsub.f32 %v6186, %v1699
      %v6207 = vsub.f32 %v6190, %v1699
      %v6208 = vsub.f32 %v6194, %v1699
      %v6209 = vsub.f32 %v6198, %v1699
      %v6210 = vsub.f32 %v6202, %v1699
      %v6211 = vmul.f32 %v1698, %v6203
      %v6212 = vmul.f32 %v1698, %v6204
      %v6213 = vmul.f32 %v1698, %v6205
      %v6214 = vmul.f32 %v1698, %v6206
      %v6215 = vmul.f32 %v1698, %v6207
      %v6216 = vmul.f32 %v1698, %v6208
      %v6217 = vmul.f32 %v1698, %v6209
      %v6218 = vmul.f32 %v1698, %v6210
      %v6219 = vmul.f32 %v6211, 0.5
      %v6220 = vmul.f32 %v6212, 0.5
      %v6221 = vmul.f32 %v6213, 0.5
      %v6222 = vmul.f32 %v6214, 0.5
      %v6223 = vmul.f32 %v6215, 0.5
      %v6224 = vmul.f32 %v6216, 0.5
      %v6225 = vmul.f32 %v6217, 0.5
      %v6226 = vmul.f32 %v6218, 0.5
      %v6227 = vtanh.pop %v6219
      %v6228 = vtanh.pop %v6220
      %v6229 = vtanh.pop %v6221
      %v6230 = vtanh.pop %v6222
      %v6231 = vtanh.pop %v6223
      %v6232 = vtanh.pop %v6224
      %v6233 = vtanh.pop %v6225
      %v6234 = vtanh.pop %v6226
      %v6235 = vmul.f32 %v6227, 0.5
      %v6236 = vmul.f32 %v6228, 0.5
      %v6237 = vmul.f32 %v6229, 0.5
      %v6238 = vmul.f32 %v6230, 0.5
      %v6239 = vmul.f32 %v6231, 0.5
      %v6240 = vmul.f32 %v6232, 0.5
      %v6241 = vmul.f32 %v6233, 0.5
      %v6242 = vmul.f32 %v6234, 0.5
      %v6243 = vadd.f32 %v6235, 0.5
      %v6244 = vadd.f32 %v6236, 0.5
      %v6245 = vadd.f32 %v6237, 0.5
      %v6246 = vadd.f32 %v6238, 0.5
      %v6247 = vadd.f32 %v6239, 0.5
      %v6248 = vadd.f32 %v6240, 0.5
      %v6249 = vadd.f32 %v6241, 0.5
      %v6250 = vadd.f32 %v6242, 0.5
      %v6251 = vmul.f32 %v1697, %v6243
      %v6252 = vmul.f32 %v1697, %v6244
      %v6253 = vmul.f32 %v1697, %v6245
      %v6254 = vmul.f32 %v1697, %v6246
      %v6255 = vmul.f32 %v1697, %v6247
      %v6256 = vmul.f32 %v1697, %v6248
      %v6257 = vmul.f32 %v1697, %v6249
      %v6258 = vmul.f32 %v1697, %v6250
      %v6259 = vrot.slane %v6251, 4
      %v6260 = vadd.f32 %v6251, %v6259
      %v6261 = vrot.slane %v6260, 2
      %v6262 = vadd.f32 %v6260, %v6261
      %v6263 = vrot.slane %v6262, 1
      %v6264 = vadd.f32 %v6262, %v6263
      %v6265 = vrot.slane %v6252, 4
      %v6266 = vadd.f32 %v6252, %v6265
      %v6267 = vrot.slane %v6266, 2
      %v6268 = vadd.f32 %v6266, %v6267
      %v6269 = vrot.slane %v6268, 1
      %v6270 = vadd.f32 %v6268, %v6269
      %v6271 = vrot.slane %v6253, 4
      %v6272 = vadd.f32 %v6253, %v6271
      %v6273 = vrot.slane %v6272, 2
      %v6274 = vadd.f32 %v6272, %v6273
      %v6275 = vrot.slane %v6274, 1
      %v6276 = vadd.f32 %v6274, %v6275
      %v6277 = vrot.slane %v6254, 4
      %v6278 = vadd.f32 %v6254, %v6277
      %v6279 = vrot.slane %v6278, 2
      %v6280 = vadd.f32 %v6278, %v6279
      %v6281 = vrot.slane %v6280, 1
      %v6282 = vadd.f32 %v6280, %v6281
      %v6283 = vrot.slane %v6255, 4
      %v6284 = vadd.f32 %v6255, %v6283
      %v6285 = vrot.slane %v6284, 2
      %v6286 = vadd.f32 %v6284, %v6285
      %v6287 = vrot.slane %v6286, 1
      %v6288 = vadd.f32 %v6286, %v6287
      %v6289 = vrot.slane %v6256, 4
      %v6290 = vadd.f32 %v6256, %v6289
      %v6291 = vrot.slane %v6290, 2
      %v6292 = vadd.f32 %v6290, %v6291
      %v6293 = vrot.slane %v6292, 1
      %v6294 = vadd.f32 %v6292, %v6293
      %v6295 = vrot.slane %v6257, 4
      %v6296 = vadd.f32 %v6257, %v6295
      %v6297 = vrot.slane %v6296, 2
      %v6298 = vadd.f32 %v6296, %v6297
      %v6299 = vrot.slane %v6298, 1
      %v6300 = vadd.f32 %v6298, %v6299
      %v6301 = vrot.slane %v6258, 4
      %v6302 = vadd.f32 %v6258, %v6301
      %v6303 = vrot.slane %v6302, 2
      %v6304 = vadd.f32 %v6302, %v6303
      %v6305 = vrot.slane %v6304, 1
      %v6306 = vadd.f32 %v6304, %v6305
      %v6307 = vadd.f32 %v6099, %v6264
      %v6308 = vadd.f32 %v6100, %v6270
      %v6309 = vadd.f32 %v6101, %v6276
      %v6310 = vadd.f32 %v6102, %v6282
      %v6311 = vadd.f32 %v6103, %v6288
      %v6312 = vadd.f32 %v6104, %v6294
      %v6313 = vadd.f32 %v6105, %v6300
      %v6314 = vadd.f32 %v6106, %v6306
      %v6315 = vmul.f32 %v1700, %v6243
      %v6316 = vmul.f32 %v1700, %v6244
      %v6317 = vmul.f32 %v1700, %v6245
      %v6318 = vmul.f32 %v1700, %v6246
      %v6319 = vmul.f32 %v1700, %v6247
      %v6320 = vmul.f32 %v1700, %v6248
      %v6321 = vmul.f32 %v1700, %v6249
      %v6322 = vmul.f32 %v1700, %v6250
      %v6323 = vrot.slane %v6315, 4
      %v6324 = vadd.f32 %v6315, %v6323
      %v6325 = vrot.slane %v6324, 2
      %v6326 = vadd.f32 %v6324, %v6325
      %v6327 = vrot.slane %v6326, 1
      %v6328 = vadd.f32 %v6326, %v6327
      %v6329 = vrot.slane %v6316, 4
      %v6330 = vadd.f32 %v6316, %v6329
      %v6331 = vrot.slane %v6330, 2
      %v6332 = vadd.f32 %v6330, %v6331
      %v6333 = vrot.slane %v6332, 1
      %v6334 = vadd.f32 %v6332, %v6333
      %v6335 = vrot.slane %v6317, 4
      %v6336 = vadd.f32 %v6317, %v6335
      %v6337 = vrot.slane %v6336, 2
      %v6338 = vadd.f32 %v6336, %v6337
      %v6339 = vrot.slane %v6338, 1
      %v6340 = vadd.f32 %v6338, %v6339
      %v6341 = vrot.slane %v6318, 4
      %v6342 = vadd.f32 %v6318, %v6341
      %v6343 = vrot.slane %v6342, 2
      %v6344 = vadd.f32 %v6342, %v6343
      %v6345 = vrot.slane %v6344, 1
      %v6346 = vadd.f32 %v6344, %v6345
      %v6347 = vrot.slane %v6319, 4
      %v6348 = vadd.f32 %v6319, %v6347
      %v6349 = vrot.slane %v6348, 2
      %v6350 = vadd.f32 %v6348, %v6349
      %v6351 = vrot.slane %v6350, 1
      %v6352 = vadd.f32 %v6350, %v6351
      %v6353 = vrot.slane %v6320, 4
      %v6354 = vadd.f32 %v6320, %v6353
      %v6355 = vrot.slane %v6354, 2
      %v6356 = vadd.f32 %v6354, %v6355
      %v6357 = vrot.slane %v6356, 1
      %v6358 = vadd.f32 %v6356, %v6357
      %v6359 = vrot.slane %v6321, 4
      %v6360 = vadd.f32 %v6321, %v6359
      %v6361 = vrot.slane %v6360, 2
      %v6362 = vadd.f32 %v6360, %v6361
      %v6363 = vrot.slane %v6362, 1
      %v6364 = vadd.f32 %v6362, %v6363
      %v6365 = vrot.slane %v6322, 4
      %v6366 = vadd.f32 %v6322, %v6365
      %v6367 = vrot.slane %v6366, 2
      %v6368 = vadd.f32 %v6366, %v6367
      %v6369 = vrot.slane %v6368, 1
      %v6370 = vadd.f32 %v6368, %v6369
      %v6371 = vadd.f32 %v6163, %v6328
      %v6372 = vadd.f32 %v6164, %v6334
      %v6373 = vadd.f32 %v6165, %v6340
      %v6374 = vadd.f32 %v6166, %v6346
      %v6375 = vadd.f32 %v6167, %v6352
      %v6376 = vadd.f32 %v6168, %v6358
      %v6377 = vadd.f32 %v6169, %v6364
      %v6378 = vadd.f32 %v6170, %v6370
      %v6379 = vmul.f32 %v534, %v5522
      %v6380 = vadd.f32 %v6379, %v1019
      %v6389 = vsel %vm1004, %v6372, %v6371
      %v6390 = vsel %vm1006, %v6373, %v6389
      %v6391 = vsel %vm1008, %v6374, %v6390
      %v6392 = vsel %vm1010, %v6375, %v6391
      %v6393 = vsel %vm1012, %v6376, %v6392
      %v6394 = vsel %vm1014, %v6377, %v6393
      %v6395 = vsel %vm1016, %v6378, %v6394
      %v6397 = vadd.f32 %v6380, %v6395
      %v6406 = vsel %vm1004, %v6308, %v6307
      %v6407 = vsel %vm1006, %v6309, %v6406
      %v6408 = vsel %vm1008, %v6310, %v6407
      %v6409 = vsel %vm1010, %v6311, %v6408
      %v6410 = vsel %vm1012, %v6312, %v6409
      %v6411 = vsel %vm1014, %v6313, %v6410
      %v6412 = vsel %vm1016, %v6314, %v6411
      %v6414 = vadd.f32 %v1036, %v6412
      %v6415 = vrcp.pop %v6414
      %v6416 = vmul.f32 %v6397, %v6415
      %6417 = vst [vmem:[%s506] sm:$0xff] %v6416
      %p6418 = scmp.lt.s32.totalorder %s26, 1
      %s6419 = scalar_select %p6418, %s26, 1
      %s6420 = smul.addr %s6419, 8
      %s6421 = scalar_lea.vmem %s15, %s6420
      // Predicated region
      $region81: #{ltc_cell_forward.1} parent=79 // pred_check
        %p6422 = pneg %p369
      $region82: #{ltc_cell_forward.1} parent=79 // pred_check_branch
        %6424 = sbr.rel (%p6422) target = $region84
      $region83: #{ltc_cell_forward.1} parent=79 // pred_region
        _
      $region84: #{ltc_cell_forward.1} parent=79 // pred_fallthru
        _
    $region80: #{ltc_cell_forward.1} parent=5 // pred_fallthru
      _
    %p6425 = scmp.le.s32.totalorder 2, %s21
    // Predicated region
    $region85: #{ltc_cell_forward.1} parent=5 // pred_check
      %p6426 = pneg %p6425
    $region86: #{ltc_cell_forward.1} parent=5 // pred_check_branch
      %6428 = sbr.rel (%p6426) target = $region88
    $region87: #{ltc_cell_forward.1} parent=5 // pred_region
      %s6429 = ssub.s32 %s21, 2
      // Predicated region
      $region89: #{ltc_cell_forward.1} parent=87 // pred_check
        %p6430 = pneg %p375
      $region90: #{ltc_cell_forward.1} parent=87 // pred_check_branch
        %6432 = sbr.rel (%p6430) target = $region92
      $region91: #{ltc_cell_forward.1} parent=87 // pred_region
        %p6433 = scmp.lt.s32.totalorder %s27, 1
        %s6434 = scalar_select %p6433, %s27, 1
        %s6435 = smul.addr %s6434, 8
        %s6436 = scalar_lea.vmem %s15, %s6435
      $region92: #{ltc_cell_forward.1} parent=87 // pred_fallthru
        _
    $region88: #{ltc_cell_forward.1} parent=5 // pred_fallthru
      _
  $region6: #{ltc_cell_forward.1} parent=0 // loop_footer
    %s25 = sadd.s32 1, %s21
  $region7: #{ltc_cell_forward.1} parent=0 // loop_footer_branch
    %20 = sbr.rel target = $region3
  $region8: #{ltc_cell_forward.1} parent=0 // loop_exit
    _

</llo_original>
